<compile_context>
chip_gen: v7x
topology: tpu7x:2x2x1
jax: 0.10.0
libtpu: 0.0.40
codegen_flags: <defaults>
</compile_context>

<pallas_src>
import functools

import jax
import jax.numpy as jnp
from jax.experimental import pallas as pl
from jax.experimental.pallas import tpu as pltpu


# ----------------------------- kernel ---------------------------------------

def _net_kernel(layers, x_ref, w_ref, b_ref, out_ref):
    """Whole residual-sine-MLP forward for one lane-tile of points.

    Transposed layout (features on sublanes, points on lanes):
      x_ref   : (layers[0], TILE_N)
      w_ref   : (L, D, D)   packed; W[k, :out_k, :in_k] valid, rest zero
      b_ref   : (L, D, 1)   packed; B[k, :out_k, 0] valid
      out_ref : (layers[-1], TILE_N)
    """
    hid_num = len(layers) - 2

    x = x_ref[...]                                        # (d_in, TILE_N)
    for i in range(hid_num):
        d_in, d_out = layers[i], layers[i + 1]
        w1 = w_ref[2 * i]                                 # (D, D)
        b1 = b_ref[2 * i]                                 # (D, 1)
        w2 = w_ref[2 * i + 1]
        b2 = b_ref[2 * i + 1]

        if d_in <= 4:
            # Tiny K: VPU broadcast FMAs instead of an almost-empty MXU pass.
            acc = b1[:d_out]                              # (d_out, 1) -> bcast
            for j in range(d_in):
                acc = acc + w1[:d_out, j:j + 1] * x[j:j + 1, :]
            h = jnp.sin(acc)
        else:
            h = jnp.sin(
                jnp.dot(w1[:d_out, :d_in], x,
                        preferred_element_type=jnp.float32) + b1[:d_out])

        h = jnp.sin(
            jnp.dot(w2[:d_out, :d_out], h,
                    preferred_element_type=jnp.float32) + b2[:d_out])

        # Residual x @ eye(d_in, d_out): in the transposed layout this keeps
        # the first min(d_in, d_out) feature rows of x, zero-padded to d_out.
        m = min(d_in, d_out)
        proj = x[:m, :]
        if d_out > m:
            proj = jnp.pad(proj, ((0, d_out - m), (0, 0)))
        x = h + proj

    d_last_in, d_last_out = layers[-2], layers[-1]
    w_last = w_ref[2 * hid_num][:d_last_out, :d_last_in]  # (d_out, d_in)
    b_last = b_ref[2 * hid_num][:d_last_out]              # (d_out, 1)
    out_ref[...] = (jnp.dot(w_last, x, preferred_element_type=jnp.float32)
                    + b_last)


# ----------------------------- wrapper ---------------------------------------

def net_forward(x, w_packed, b_packed, layers, *, tile_n=512):
    """x: (N, layers[0]) f32.  w_packed: (L, D, D), b_packed: (L, D, 1)."""
    N, d_in = x.shape
    assert d_in == layers[0]
    assert tile_n % 128 == 0, "tile_n must be lane-aligned"
    d_out = layers[-1]

    # Transpose so points sit on the lane axis; pad ragged N up to tile_n.
    xT = x.T                                              # (d_in, N)
    n_pad = (-N) % tile_n
    if n_pad:
        xT = jnp.pad(xT, ((0, 0), (0, n_pad)))
    n_total = N + n_pad
    grid = (n_total // tile_n,)

    kernel = functools.partial(_net_kernel, tuple(layers))

    outT = pl.pallas_call(
        kernel,
        out_shape=jax.ShapeDtypeStruct((d_out, n_total), jnp.float32),
        grid=grid,
        in_specs=[
            pl.BlockSpec((d_in, tile_n), lambda i: (0, i)),
            pl.BlockSpec(w_packed.shape, lambda i: (0, 0, 0)),
            pl.BlockSpec(b_packed.shape, lambda i: (0, 0, 0)),
        ],
        out_specs=pl.BlockSpec((d_out, tile_n), lambda i: (0, i)),
        compiler_params=pltpu.CompilerParams(
            dimension_semantics=("parallel",),
            # Everything here is KBs; make the budget explicit so scaling the
            # network never silently overshoots v7x's 64 MiB VMEM.
            vmem_limit_bytes=32 * 1024 * 1024,
        ),
    )(xT, w_packed, b_packed)

    return outT[:, :N].T                                  # (N, d_out)


# ------------------------- parameter construction ----------------------------

def init_params(key, layers):
    """Deterministic Linear params with torch.nn.Linear shapes: W (out, in), b (out,)."""
    hid_num = len(layers) - 2
    dims = []
    for i in range(hid_num):
        dims.append((layers[i + 1], layers[i]))
        dims.append((layers[i + 1], layers[i + 1]))
    dims.append((layers[-1], layers[-2]))

    Ws, bs = [], []
    for (fan_out, fan_in) in dims:
        key, kw, kb = jax.random.split(key, 3)
        bound = 1.0 / (fan_in ** 0.5)
        W = jax.random.uniform(kw, (fan_out, fan_in), jnp.float32, -bound, bound)
        b = jax.random.uniform(kb, (fan_out,), jnp.float32, -bound, bound)
        Ws.append(W)
        bs.append(b)
    return Ws, bs


def pack_params(Ws, bs, layers):
    """Pack all weights/biases into 2 zero-padded arrays (single DMA each)."""
    D = max(layers)
    L = len(Ws)
    w_packed = jnp.zeros((L, D, D), jnp.float32)
    b_packed = jnp.zeros((L, D, 1), jnp.float32)
    for k, (W, b) in enumerate(zip(Ws, bs)):
        o, i = W.shape
        w_packed = w_packed.at[k, :o, :i].set(W)
        b_packed = b_packed.at[k, :o, 0].set(b)
    return w_packed, b_packed


# --------------------------- pure-JAX reference -------------------------------

def net_forward_ref(x, Ws, bs, layers):
    hid_num = len(layers) - 2
    for i in range(hid_num):
        W1, b1, W2, b2 = Ws[2 * i], bs[2 * i], Ws[2 * i + 1], bs[2 * i + 1]
        h = jnp.sin(x @ W1.T + b1)
        h = jnp.sin(h @ W2.T + b2)
        eye = jnp.eye(x.shape[-1], layers[i + 1], dtype=x.dtype)
        x = h + x @ eye
    return x @ Ws[-1].T + bs[-1]


# --------------------------------- main ---------------------------------------

if __name__ == "__main__":
    layers = [2, 32, 32, 1]        # [input coords, hidden, hidden, output]
    N = 2048                       # collocation points (>= 2 grid steps for v7x)
    tile_n = 512                   # points per grid step (lane tile)

    key = jax.random.PRNGKey(0)
    key, kx = jax.random.split(key)
    x = jax.random.uniform(kx, (N, layers[0]), jnp.float32)   # points in [0,1]^2
    Ws, bs = init_params(key, layers)
    w_packed, b_packed = pack_params(Ws, bs, layers)

    out = net_forward(x, w_packed, b_packed, layers, tile_n=tile_n)
    out = jax.block_until_ready(out)

    ref = net_forward_ref(x, Ws, bs, layers)
    assert out.shape == (N, layers[-1])
    assert jnp.allclose(out, ref, atol=1e-5, rtol=1e-4), "mismatch vs reference"

    print("KERNEL_OK")
</pallas_src>

<mosaic_0001>
module attributes {stable_mosaic.version = 11 : i64} {
  func.func @_net_kernel(%arg0: i32, %arg1: memref<2x512xf32, #tpu.memory_space<vmem>>, %arg2: memref<5x32x32xf32, #tpu.memory_space<vmem>>, %arg3: memref<5x32x1xf32, #tpu.memory_space<vmem>>, %arg4: memref<1x512xf32, #tpu.memory_space<vmem>>) attributes {dimension_semantics = [#tpu.dimension_semantics<parallel>], iteration_bounds = array<i64: 4>, scalar_prefetch = 0 : i64, scratch_operands = 0 : i64, tpu.core_type = #tpu.core_type<tc>, window_params = [{transform_indices = @transform_0, window_bounds = array<i64: 2, 512>}, {pipeline_mode = #tpu.pipeline_mode<synchronous>, transform_indices = @transform_1, window_bounds = array<i64: 5, 32, 32>}, {pipeline_mode = #tpu.pipeline_mode<synchronous>, transform_indices = @transform_2, window_bounds = array<i64: 5, 32, 1>}, {transform_indices = @transform_3, window_bounds = array<i64: 1, 512>}]} {
    %c0 = arith.constant 0 : index
    %c0_0 = arith.constant 0 : index
    %0 = vector.load %arg1[%c0, %c0_0] : memref<2x512xf32, #tpu.memory_space<vmem>>, vector<2x512xf32>
    %c0_1 = arith.constant 0 : index
    %c0_2 = arith.constant 0 : index
    %c0_3 = arith.constant 0 : index
    %1 = vector.load %arg2[%c0_1, %c0_2, %c0_3] : memref<5x32x32xf32, #tpu.memory_space<vmem>>, vector<1x32x32xf32>
    %2 = vector.shape_cast %1 : vector<1x32x32xf32> to vector<32x32xf32>
    %c0_4 = arith.constant 0 : index
    %c0_5 = arith.constant 0 : index
    %c0_6 = arith.constant 0 : index
    %3 = vector.load %arg3[%c0_4, %c0_5, %c0_6] : memref<5x32x1xf32, #tpu.memory_space<vmem>>, vector<1x32x1xf32>
    %4 = vector.shape_cast %3 : vector<1x32x1xf32> to vector<32x1xf32>
    %c1 = arith.constant 1 : index
    %c0_7 = arith.constant 0 : index
    %c0_8 = arith.constant 0 : index
    %5 = vector.load %arg2[%c1, %c0_7, %c0_8] : memref<5x32x32xf32, #tpu.memory_space<vmem>>, vector<1x32x32xf32>
    %6 = vector.shape_cast %5 : vector<1x32x32xf32> to vector<32x32xf32>
    %c1_9 = arith.constant 1 : index
    %c0_10 = arith.constant 0 : index
    %c0_11 = arith.constant 0 : index
    %7 = vector.load %arg3[%c1_9, %c0_10, %c0_11] : memref<5x32x1xf32, #tpu.memory_space<vmem>>, vector<1x32x1xf32>
    %8 = vector.shape_cast %7 : vector<1x32x1xf32> to vector<32x1xf32>
    %9 = vector.extract_strided_slice %2 {offsets = [0, 0], sizes = [32, 1], strides = [1, 1]} : vector<32x32xf32> to vector<32x1xf32>
    %10 = vector.extract_strided_slice %0 {offsets = [0, 0], sizes = [1, 512], strides = [1, 1]} : vector<2x512xf32> to vector<1x512xf32>
    %11 = vector.broadcast %9 : vector<32x1xf32> to vector<32x512xf32>
    %12 = vector.broadcast %10 : vector<1x512xf32> to vector<32x512xf32>
    %13 = arith.mulf %11, %12 : vector<32x512xf32>
    %14 = vector.broadcast %4 : vector<32x1xf32> to vector<32x512xf32>
    %15 = arith.addf %14, %13 : vector<32x512xf32>
    %16 = vector.extract_strided_slice %2 {offsets = [0, 1], sizes = [32, 1], strides = [1, 1]} : vector<32x32xf32> to vector<32x1xf32>
    %17 = vector.extract_strided_slice %0 {offsets = [1, 0], sizes = [1, 512], strides = [1, 1]} : vector<2x512xf32> to vector<1x512xf32>
    %18 = vector.broadcast %16 : vector<32x1xf32> to vector<32x512xf32>
    %19 = vector.broadcast %17 : vector<1x512xf32> to vector<32x512xf32>
    %20 = arith.mulf %18, %19 : vector<32x512xf32>
    %21 = arith.addf %15, %20 : vector<32x512xf32>
    %22 = math.sin %21 : vector<32x512xf32>
    %cst = arith.constant dense<0.000000e+00> : vector<32x512xf32>
    %23 = tpu.matmul %6, %22, %cst {dimension_numbers = #tpu.dot_dimension_numbers<[1], [0], [0], [1], [0, 0, 1, 1], [], []>} : vector<32x32xf32>, vector<32x512xf32>, vector<32x512xf32> -> vector<32x512xf32>
    %24 = vector.broadcast %8 : vector<32x1xf32> to vector<32x512xf32>
    %25 = arith.addf %23, %24 : vector<32x512xf32>
    %26 = math.sin %25 : vector<32x512xf32>
    %c0_i32 = arith.constant 0 : i32
    %27 = arith.sitofp %c0_i32 : i32 to f32
    %28 = vector.broadcast %27 : f32 to vector<30x512xf32>
    %29 = tpu.concatenate %0, %28 in 0 : vector<2x512xf32>, vector<30x512xf32> -> vector<32x512xf32>
    %30 = arith.addf %26, %29 : vector<32x512xf32>
    %c2 = arith.constant 2 : index
    %c0_12 = arith.constant 0 : index
    %c0_13 = arith.constant 0 : index
    %31 = vector.load %arg2[%c2, %c0_12, %c0_13] : memref<5x32x32xf32, #tpu.memory_space<vmem>>, vector<1x32x32xf32>
    %32 = vector.shape_cast %31 : vector<1x32x32xf32> to vector<32x32xf32>
    %c2_14 = arith.constant 2 : index
    %c0_15 = arith.constant 0 : index
    %c0_16 = arith.constant 0 : index
    %33 = vector.load %arg3[%c2_14, %c0_15, %c0_16] : memref<5x32x1xf32, #tpu.memory_space<vmem>>, vector<1x32x1xf32>
    %34 = vector.shape_cast %33 : vector<1x32x1xf32> to vector<32x1xf32>
    %c3 = arith.constant 3 : index
    %c0_17 = arith.constant 0 : index
    %c0_18 = arith.constant 0 : index
    %35 = vector.load %arg2[%c3, %c0_17, %c0_18] : memref<5x32x32xf32, #tpu.memory_space<vmem>>, vector<1x32x32xf32>
    %36 = vector.shape_cast %35 : vector<1x32x32xf32> to vector<32x32xf32>
    %c3_19 = arith.constant 3 : index
    %c0_20 = arith.constant 0 : index
    %c0_21 = arith.constant 0 : index
    %37 = vector.load %arg3[%c3_19, %c0_20, %c0_21] : memref<5x32x1xf32, #tpu.memory_space<vmem>>, vector<1x32x1xf32>
    %38 = vector.shape_cast %37 : vector<1x32x1xf32> to vector<32x1xf32>
    %cst_22 = arith.constant dense<0.000000e+00> : vector<32x512xf32>
    %39 = tpu.matmul %32, %30, %cst_22 {dimension_numbers = #tpu.dot_dimension_numbers<[1], [0], [0], [1], [0, 0, 1, 1], [], []>} : vector<32x32xf32>, vector<32x512xf32>, vector<32x512xf32> -> vector<32x512xf32>
    %40 = vector.broadcast %34 : vector<32x1xf32> to vector<32x512xf32>
    %41 = arith.addf %39, %40 : vector<32x512xf32>
    %42 = math.sin %41 : vector<32x512xf32>
    %cst_23 = arith.constant dense<0.000000e+00> : vector<32x512xf32>
    %43 = tpu.matmul %36, %42, %cst_23 {dimension_numbers = #tpu.dot_dimension_numbers<[1], [0], [0], [1], [0, 0, 1, 1], [], []>} : vector<32x32xf32>, vector<32x512xf32>, vector<32x512xf32> -> vector<32x512xf32>
    %44 = vector.broadcast %38 : vector<32x1xf32> to vector<32x512xf32>
    %45 = arith.addf %43, %44 : vector<32x512xf32>
    %46 = math.sin %45 : vector<32x512xf32>
    %47 = arith.addf %46, %30 : vector<32x512xf32>
    %c4 = arith.constant 4 : index
    %c0_24 = arith.constant 0 : index
    %c0_25 = arith.constant 0 : index
    %48 = vector.load %arg2[%c4, %c0_24, %c0_25] : memref<5x32x32xf32, #tpu.memory_space<vmem>>, vector<1x32x32xf32>
    %49 = vector.shape_cast %48 : vector<1x32x32xf32> to vector<32x32xf32>
    %50 = vector.extract_strided_slice %49 {offsets = [0, 0], sizes = [1, 32], strides = [1, 1]} : vector<32x32xf32> to vector<1x32xf32>
    %c4_26 = arith.constant 4 : index
    %c0_27 = arith.constant 0 : index
    %c0_28 = arith.constant 0 : index
    %51 = vector.load %arg3[%c4_26, %c0_27, %c0_28] : memref<5x32x1xf32, #tpu.memory_space<vmem>>, vector<1x32x1xf32>
    %52 = vector.shape_cast %51 : vector<1x32x1xf32> to vector<32x1xf32>
    %53 = vector.extract_strided_slice %52 {offsets = [0, 0], sizes = [1, 1], strides = [1, 1]} : vector<32x1xf32> to vector<1x1xf32>
    %cst_29 = arith.constant dense<0.000000e+00> : vector<1x512xf32>
    %54 = tpu.matmul %50, %47, %cst_29 {dimension_numbers = #tpu.dot_dimension_numbers<[1], [0], [0], [1], [0, 0, 1, 1], [], []>} : vector<1x32xf32>, vector<32x512xf32>, vector<1x512xf32> -> vector<1x512xf32>
    %55 = vector.broadcast %53 : vector<1x1xf32> to vector<1x512xf32>
    %56 = arith.addf %54, %55 : vector<1x512xf32>
    %c0_30 = arith.constant 0 : index
    %c0_31 = arith.constant 0 : index
    %57 = vector.load %arg4[%c0_30, %c0_31] : memref<1x512xf32, #tpu.memory_space<vmem>>, vector<1x512xf32>
    tpu.vector_store %arg4[%c0_30, %c0_31], %56 {strides = array<i32>} : memref<1x512xf32, #tpu.memory_space<vmem>>, vector<1x512xf32>,
    return
  }
  func.func @transform_0(%arg0: i32) -> (i32, i32) {
    %c0_i32 = arith.constant 0 : i32
    %c0_i32_0 = arith.constant 0 : i32
    return %c0_i32, %arg0 : i32, i32
  }
  func.func @transform_1(%arg0: i32) -> (i32, i32, i32) {
    %c0_i32 = arith.constant 0 : i32
    %c0_i32_0 = arith.constant 0 : i32
    %c0_i32_1 = arith.constant 0 : i32
    %c0_i32_2 = arith.constant 0 : i32
    return %c0_i32, %c0_i32_0, %c0_i32_1 : i32, i32, i32
  }
  func.func @transform_2(%arg0: i32) -> (i32, i32, i32) {
    %c0_i32 = arith.constant 0 : i32
    %c0_i32_0 = arith.constant 0 : i32
    %c0_i32_1 = arith.constant 0 : i32
    %c0_i32_2 = arith.constant 0 : i32
    return %c0_i32, %c0_i32_0, %c0_i32_1 : i32, i32, i32
  }
  func.func @transform_3(%arg0: i32) -> (i32, i32) {
    %c0_i32 = arith.constant 0 : i32
    %c0_i32_0 = arith.constant 0 : i32
    return %c0_i32, %arg0 : i32, i32
  }
}

</mosaic_0001>

<llo_original>
// kernel: tpu_custom_call.1
$region0: #{tpu_custom_call.1}
  #allocation0 [shape = 'u32[]', space=smem, size = 0x4, offset = 0x4, fixed_abs, tag = 'smem constant byte address 0x4 - core index']
  #allocation1 [shape = 'u32[144,128]{1,0:T(1,128)}', space=vmem, size = 0x12000, scoped, tag = 'internal scratch']
  %s0 = inlined_call_operand.hbm [shape: f32[2,2048], index: 0, kind: input, shape index: {}]
  %s1 = inlined_call_operand.vmem [shape: f32[5,32,32], index: 1, kind: input, shape index: {}]
  %s2 = inlined_call_operand.vmem [shape: f32[5,32,1], index: 2, kind: input, shape index: {}]
  %s3 = inlined_call_operand.hbm [shape: f32[1,2048], index: 3, kind: output, shape index: {}]
  %s4 = sld [smem:[#allocation0]]
  $region49: #{tpu_custom_call.1} parent=0
    _
  %s6 = ssub.s32 1, %s4
  %s7 = scalar_select 0, %s6, %s4
  $region1: #{tpu_custom_call.1} parent=0
    #allocation2 [shape = 'u8[8192]{0}', space=vmem, size = 0x2000, scoped, tag = 'input window, operand 0']
    #allocation3 [shape = 's32[2]{0}', space=sflag, size = 0x8, scoped, tag = 'scoped memory for tpu_custom_call.1']
    #allocation4 [shape = 's32[2]{0}', space=sflag, size = 0x8, scoped, tag = 'scoped memory for tpu_custom_call.1']
    #allocation5 [shape = 'u8[4096]{0}', space=vmem, size = 0x1000, scoped, tag = 'output window, operand 0']
    %8 = vsyncpa [#allocation3], 0
    %s9 = scalar_lea.sflag [#allocation3], 1
    %10 = vsyncpa %s9, 0
    %11 = vsyncpa [#allocation4], 0
    %s12 = scalar_lea.sflag [#allocation4], 1
    %13 = vsyncpa %s12, 0
    loop: start=0, step=1, limit=6
    $region2: #{tpu_custom_call.1} parent=1 // loop_pre_header
      _
    $region3: #{tpu_custom_call.1} parent=1 // loop_header
      %s15 = sphi 0, %s19
      %p16 = scmp.ge.s32.totalorder %s15, 6
      %s25 = sphi 0, %s27
      %s28 = sphi 0, %s25
      %s29 = sphi 0, %s28
      %s45 = sphi 0, %s29
      %s49 = sphi 0, %s49
      %s51 = sphi 0, %s49
      %s52 = sphi 0, %s51
      %s66 = sphi 0, %s52
      %s70 = sphi 0, %s70
      %s72 = sphi 0, %s70
      %s73 = sphi 0, %s72
      %s87 = sphi 0, %s73
      %s93 = sphi 0, %s95
      %s96 = sphi 0, %s93
      %s97 = sphi 0, %s96
      %s113 = sphi 0, %s97
    $region4: #{tpu_custom_call.1} parent=1 // loop_header_branch
      %18 = sbr.rel (%p16) target = $region8
    $region5: #{tpu_custom_call.1} parent=1 // loop_body
      %s20 = ssub.s32 %s15, 1
      %s21 = ssub.s32 %s15, 2
      %s22 = sadd.s32 %s15, 1
      %s23 = ssub.s32 %s15, %s22
      %p24 = scmp.eq.s32.totalorder %s23, 0
      %s26 = sadd.s32 %s25, 1
      %s27 = scalar_select %p24, %s25, %s26
      %p30 = pneg %p24
      %p31 = scmp.eq.s32.totalorder %s15, 3
      %p32 = por %p30, %p31
      %p33 = scmp.ne.s32.totalorder %s25, %s28
      %p34 = scmp.eq.s32.totalorder %s15, 0
      %p35 = por %p33, %p34
      %p36 = scmp.ne.s32.totalorder %s25, %s28
      %p37 = scmp.eq.s32.totalorder %s20, 3
      %p38 = por %p36, %p37
      %p39 = scmp.ne.s32.totalorder %s28, %s29
      %p40 = scmp.eq.s32.totalorder %s20, 0
      %p41 = por %p39, %p40
      %p42 = scmp.ne.s32.totalorder %s28, %s29
      %p43 = scmp.eq.s32.totalorder %s21, 3
      %p44 = por %p42, %p43
      %p46 = scmp.ne.s32.totalorder %s29, %s45
      %p47 = scmp.eq.s32.totalorder %s21, 0
      %p48 = por %p46, %p47
      %s50 = sadd.s32 %s49, 1
      %p53 = scmp.eq.s32.totalorder %s15, 3
      %p54 = scmp.ne.s32.totalorder %s49, %s51
      %p55 = scmp.eq.s32.totalorder %s15, 0
      %p56 = por %p54, %p55
      %p57 = scmp.ne.s32.totalorder %s49, %s51
      %p58 = scmp.eq.s32.totalorder %s20, 3
      %p59 = por %p57, %p58
      %p60 = scmp.ne.s32.totalorder %s51, %s52
      %p61 = scmp.eq.s32.totalorder %s20, 0
      %p62 = por %p60, %p61
      %p63 = scmp.ne.s32.totalorder %s51, %s52
      %p64 = scmp.eq.s32.totalorder %s21, 3
      %p65 = por %p63, %p64
      %p67 = scmp.ne.s32.totalorder %s52, %s66
      %p68 = scmp.eq.s32.totalorder %s21, 0
      %p69 = por %p67, %p68
      %s71 = sadd.s32 %s70, 1
      %p74 = scmp.eq.s32.totalorder %s15, 3
      %p75 = scmp.ne.s32.totalorder %s70, %s72
      %p76 = scmp.eq.s32.totalorder %s15, 0
      %p77 = por %p75, %p76
      %p78 = scmp.ne.s32.totalorder %s70, %s72
      %p79 = scmp.eq.s32.totalorder %s20, 3
      %p80 = por %p78, %p79
      %p81 = scmp.ne.s32.totalorder %s72, %s73
      %p82 = scmp.eq.s32.totalorder %s20, 0
      %p83 = por %p81, %p82
      %p84 = scmp.ne.s32.totalorder %s72, %s73
      %p85 = scmp.eq.s32.totalorder %s21, 3
      %p86 = por %p84, %p85
      %p88 = scmp.ne.s32.totalorder %s73, %s87
      %p89 = scmp.eq.s32.totalorder %s21, 0
      %p90 = por %p88, %p89
      %s91 = ssub.s32 %s15, %s22
      %p92 = scmp.eq.s32.totalorder %s91, 0
      %s94 = sadd.s32 %s93, 1
      %s95 = scalar_select %p92, %s93, %s94
      %p98 = pneg %p92
      %p99 = scmp.eq.s32.totalorder %s15, 3
      %p100 = por %p98, %p99
      %p101 = scmp.ne.s32.totalorder %s93, %s96
      %p102 = scmp.eq.s32.totalorder %s15, 0
      %p103 = por %p101, %p102
      %p104 = scmp.ne.s32.totalorder %s93, %s96
      %p105 = scmp.eq.s32.totalorder %s20, 3
      %p106 = por %p104, %p105
      %p107 = scmp.ne.s32.totalorder %s96, %s97
      %p108 = scmp.eq.s32.totalorder %s20, 0
      %p109 = por %p107, %p108
      %p110 = scmp.ne.s32.totalorder %s96, %s97
      %p111 = scmp.eq.s32.totalorder %s21, 3
      %p112 = por %p110, %p111
      %p114 = scmp.ne.s32.totalorder %s97, %s113
      %p115 = scmp.eq.s32.totalorder %s21, 0
      %p116 = por %p114, %p115
      %p117 = scmp.le.s32.totalorder 1, %s15
      %p118 = scmp.lt.s32.totalorder %s15, 5
      %p119 = pnand %p117, %p118
      %p120 = pneg %p119
      // Predicated region
      $region9: #{tpu_custom_call.1} parent=5 // pred_check
        _
      $region10: #{tpu_custom_call.1} parent=5 // pred_check_branch
        %122 = sbr.rel (%p119) target = $region12
      $region11: #{tpu_custom_call.1} parent=5 // pred_region
        %s123 = ssub.s32 %s15, 1
        // Predicated region
        $region13: #{tpu_custom_call.1} parent=11 // pred_check
          %p124 = pneg %p62
        $region14: #{tpu_custom_call.1} parent=11 // pred_check_branch
          %126 = sbr.rel (%p124) target = $region16
        $region15: #{tpu_custom_call.1} parent=11 // pred_region
          _
        $region16: #{tpu_custom_call.1} parent=11 // pred_fallthru
          _
        // Predicated region
        $region17: #{tpu_custom_call.1} parent=11 // pred_check
          %p127 = pneg %p83
        $region18: #{tpu_custom_call.1} parent=11 // pred_check_branch
          %129 = sbr.rel (%p127) target = $region20
        $region19: #{tpu_custom_call.1} parent=11 // pred_region
          _
        $region20: #{tpu_custom_call.1} parent=11 // pred_fallthru
          _
      $region12: #{tpu_custom_call.1} parent=5 // pred_fallthru
        _
      %p130 = scmp.lt.s32.totalorder %s15, 4
      // Predicated region
      $region21: #{tpu_custom_call.1} parent=5 // pred_check
        %p131 = pneg %p130
      $region22: #{tpu_custom_call.1} parent=5 // pred_check_branch
        %133 = sbr.rel (%p131) target = $region24
      $region23: #{tpu_custom_call.1} parent=5 // pred_region
        // Predicated region
        $region25: #{tpu_custom_call.1} parent=23 // pred_check
          %p134 = pneg %p35
        $region26: #{tpu_custom_call.1} parent=23 // pred_check_branch
          %136 = sbr.rel (%p134) target = $region28
        $region27: #{tpu_custom_call.1} parent=23 // pred_region
          %s137 = sand.u32 %s25, 1
          %s138 = scalar_lea.sflag [#allocation3], %s137
          %s139 = sand.u32 %s25, 1
          %s140 = smul.addr %s139, 8
          %s141 = scalar_lea.vmem [#allocation2], %s140
          %s142 = smul.u32 4, %s15
          %s144 = ssub.s32 128, 128
          %145 = vsyncadd %s138, %s144
          %s146 = smul.addr %s142, 32
          %s147 = scalar_lea.hbm %s0, %s146
          %s149 = sshll.u32 %s141, 4
          %s150 = int_to_ptr.vmem [resolvable:$true] %s149
          %152 = dma.hbm_to_vmem [thread:$0]  %s147, 128, %s150, %s138
        $region28: #{tpu_custom_call.1} parent=23 // pred_fallthru
          _
      $region24: #{tpu_custom_call.1} parent=5 // pred_fallthru
        _
      %p153 = scmp.le.s32.totalorder 1, %s15
      %p154 = scmp.lt.s32.totalorder %s15, 5
      %p155 = pnand %p153, %p154
      %p156 = pneg %p155
      // Predicated region
      $region29: #{tpu_custom_call.1} parent=5 // pred_check
        _
      $region30: #{tpu_custom_call.1} parent=5 // pred_check_branch
        %158 = sbr.rel (%p155) target = $region32
      $region31: #{tpu_custom_call.1} parent=5 // pred_region
        %s159 = ssub.s32 %s15, 1
        %s160 = sand.u32 %s28, 1
        %s161 = scalar_lea.sflag [#allocation3], %s160
        %s162 = sand.u32 %s28, 1
        %s163 = smul.addr %s162, 8
        %s164 = scalar_lea.vmem [#allocation2], %s163
        // Predicated region
        $region33: #{tpu_custom_call.1} parent=31 // pred_check
          %p165 = pneg %p41
        $region34: #{tpu_custom_call.1} parent=31 // pred_check_branch
          %167 = sbr.rel (%p165) target = $region36
        $region35: #{tpu_custom_call.1} parent=31 // pred_region
          %168 = dma.done %s161, 128
        $region36: #{tpu_custom_call.1} parent=31 // pred_fallthru
          _
        %s169 = sand.u32 %s28, 1
        %s170 = scalar_lea.sflag [#allocation3], %s169
        %s171 = sand.u32 %s28, 1
        %s172 = smul.addr %s171, 8
        %s173 = scalar_lea.vmem [#allocation2], %s172
        %p174 = pneg %p41
        %p175 = pneg %p38
        %p176 = pneg %p62
        %p177 = pneg %p59
        %p178 = pneg %p83
        %p179 = pneg %p80
        %p180 = pneg %p109
        %p181 = pneg %p106
        %s182 = sand.u32 %s96, 1
        %s183 = scalar_lea.sflag [#allocation4], %s182
        %s184 = sand.u32 %s96, 1
        %s185 = smul.addr %s184, 4
        %s186 = scalar_lea.vmem [#allocation5], %s185
        %s187 = smul.u32 4, %s20
        %s188 = smul.u32 4, %s20
        %v189 = vld [vmem:[%s164] sm:$0xff]
        %v190 = vld [vmem:[%s1] sm:$0xff]
        %v191 = vld [vmem:[%s1 + $0x8] sm:$0xff]
        %v192 = vld [vmem:[%s1 + $0x10] sm:$0xff]
        %v193 = vld [vmem:[%s1 + $0x18] sm:$0xff]
        %v194 = vld [vmem:[%s2] sm:$0xff]
        %v195 = vld [vmem:[%s2 + $0x8] sm:$0xff]
        %v196 = vld [vmem:[%s2 + $0x10] sm:$0xff]
        %v197 = vld [vmem:[%s2 + $0x18] sm:$0xff]
        %s198 = scalar_lea.vmem %s1, 32
        %v199 = vld [vmem:[%s198] sm:$0xff]
        %v200 = vld [vmem:[%s198 + $0x8] sm:$0xff]
        %v201 = vld [vmem:[%s198 + $0x10] sm:$0xff]
        %v202 = vld [vmem:[%s198 + $0x18] sm:$0xff]
        %s203 = scalar_lea.vmem %s2, 32
        %v204 = vld [vmem:[%s203] sm:$0xff]
        %v205 = vld [vmem:[%s203 + $0x8] sm:$0xff]
        %v206 = vld [vmem:[%s203 + $0x10] sm:$0xff]
        %v207 = vld [vmem:[%s203 + $0x18] sm:$0xff]
        %209 = vset.pattern.permute.xlu0 0
        %210 = vperm.xlu0 %209, %v190
        %v211 = vpop.permute.xlu0 %210
        %214 = vset.pattern.permute.xlu0 0
        %215 = vperm.xlu0 %214, %v191
        %v216 = vpop.permute.xlu0 %215
        %219 = vset.pattern.permute.xlu0 0
        %220 = vperm.xlu0 %219, %v192
        %v221 = vpop.permute.xlu0 %220
        %224 = vset.pattern.permute.xlu0 0
        %225 = vperm.xlu0 %224, %v193
        %v226 = vpop.permute.xlu0 %225
        %v229 = vlaneseq
        %v230 = vshrl.u32 %v229, 7
        %v231 = vsub.s32 0, %v230
        %v232 = vrot.slane %v189, %v231
        %v233 = vlaneseq
        %v234 = vshrl.u32 %v233, 7
        %v235 = vsub.s32 2, %v234
        %v236 = vrot.slane %v189, %v235
        %v237 = vlaneseq
        %v238 = vshrl.u32 %v237, 7
        %v239 = vsub.s32 4, %v238
        %v240 = vrot.slane %v189, %v239
        %v241 = vlaneseq
        %v242 = vshrl.u32 %v241, 7
        %v243 = vsub.s32 6, %v242
        %v244 = vrot.slane %v189, %v243
        %v249 = vlaneseq
        %v250 = vshrl.u32 %v249, 7
        %v251 = vsub.s32 0, %v250
        %v252 = vrot.slane %v232, %v251
        %v253 = vlaneseq
        %v254 = vshrl.u32 %v253, 7
        %v255 = vsub.s32 0, %v254
        %v256 = vrot.slane %v236, %v255
        %v257 = vlaneseq
        %v258 = vshrl.u32 %v257, 7
        %v259 = vsub.s32 0, %v258
        %v260 = vrot.slane %v240, %v259
        %v261 = vlaneseq
        %v262 = vshrl.u32 %v261, 7
        %v263 = vsub.s32 0, %v262
        %v264 = vrot.slane %v244, %v263
        %v265 = vmul.f32 %v211, %v252
        %v266 = vmul.f32 %v211, %v256
        %v267 = vmul.f32 %v211, %v260
        %v268 = vmul.f32 %v211, %v264
        %v269 = vmul.f32 %v216, %v252
        %v270 = vmul.f32 %v216, %v256
        %v271 = vmul.f32 %v216, %v260
        %v272 = vmul.f32 %v216, %v264
        %v273 = vmul.f32 %v221, %v252
        %v274 = vmul.f32 %v221, %v256
        %v275 = vmul.f32 %v221, %v260
        %v276 = vmul.f32 %v221, %v264
        %v277 = vmul.f32 %v226, %v252
        %v278 = vmul.f32 %v226, %v256
        %v279 = vmul.f32 %v226, %v260
        %v280 = vmul.f32 %v226, %v264
        %282 = vset.pattern.permute.xlu0 0
        %283 = vperm.xlu0 %282, %v194
        %v284 = vpop.permute.xlu0 %283
        %287 = vset.pattern.permute.xlu0 0
        %288 = vperm.xlu0 %287, %v195
        %v289 = vpop.permute.xlu0 %288
        %292 = vset.pattern.permute.xlu0 0
        %293 = vperm.xlu0 %292, %v196
        %v294 = vpop.permute.xlu0 %293
        %297 = vset.pattern.permute.xlu0 0
        %298 = vperm.xlu0 %297, %v197
        %v299 = vpop.permute.xlu0 %298
        %v301 = vadd.f32 %v284, %v265
        %v302 = vadd.f32 %v284, %v266
        %v303 = vadd.f32 %v284, %v267
        %v304 = vadd.f32 %v284, %v268
        %v305 = vadd.f32 %v289, %v269
        %v306 = vadd.f32 %v289, %v270
        %v307 = vadd.f32 %v289, %v271
        %v308 = vadd.f32 %v289, %v272
        %v309 = vadd.f32 %v294, %v273
        %v310 = vadd.f32 %v294, %v274
        %v311 = vadd.f32 %v294, %v275
        %v312 = vadd.f32 %v294, %v276
        %v313 = vadd.f32 %v299, %v277
        %v314 = vadd.f32 %v299, %v278
        %v315 = vadd.f32 %v299, %v279
        %v316 = vadd.f32 %v299, %v280
        %317 = vset.pattern.permute.xlu0 1
        %318 = vperm.xlu0 %317, %v190
        %v319 = vpop.permute.xlu0 %318
        %321 = vset.pattern.permute.xlu0 1
        %322 = vperm.xlu0 %321, %v191
        %v323 = vpop.permute.xlu0 %322
        %325 = vset.pattern.permute.xlu0 1
        %326 = vperm.xlu0 %325, %v192
        %v327 = vpop.permute.xlu0 %326
        %329 = vset.pattern.permute.xlu0 1
        %330 = vperm.xlu0 %329, %v193
        %v331 = vpop.permute.xlu0 %330
        %v333 = vlaneseq
        %v334 = vshrl.u32 %v333, 7
        %v335 = vsub.s32 1, %v334
        %v336 = vrot.slane %v189, %v335
        %v337 = vlaneseq
        %v338 = vshrl.u32 %v337, 7
        %v339 = vsub.s32 3, %v338
        %v340 = vrot.slane %v189, %v339
        %v341 = vlaneseq
        %v342 = vshrl.u32 %v341, 7
        %v343 = vsub.s32 5, %v342
        %v344 = vrot.slane %v189, %v343
        %v345 = vlaneseq
        %v346 = vshrl.u32 %v345, 7
        %v347 = vsub.s32 7, %v346
        %v348 = vrot.slane %v189, %v347
        %v353 = vlaneseq
        %v354 = vshrl.u32 %v353, 7
        %v355 = vsub.s32 1, %v354
        %v356 = vrot.slane %v336, %v355
        %v357 = vlaneseq
        %v358 = vshrl.u32 %v357, 7
        %v359 = vsub.s32 1, %v358
        %v360 = vrot.slane %v340, %v359
        %v361 = vlaneseq
        %v362 = vshrl.u32 %v361, 7
        %v363 = vsub.s32 1, %v362
        %v364 = vrot.slane %v344, %v363
        %v365 = vlaneseq
        %v366 = vshrl.u32 %v365, 7
        %v367 = vsub.s32 1, %v366
        %v368 = vrot.slane %v348, %v367
        %v369 = vmul.f32 %v319, %v356
        %v370 = vmul.f32 %v319, %v360
        %v371 = vmul.f32 %v319, %v364
        %v372 = vmul.f32 %v319, %v368
        %v373 = vmul.f32 %v323, %v356
        %v374 = vmul.f32 %v323, %v360
        %v375 = vmul.f32 %v323, %v364
        %v376 = vmul.f32 %v323, %v368
        %v377 = vmul.f32 %v327, %v356
        %v378 = vmul.f32 %v327, %v360
        %v379 = vmul.f32 %v327, %v364
        %v380 = vmul.f32 %v327, %v368
        %v381 = vmul.f32 %v331, %v356
        %v382 = vmul.f32 %v331, %v360
        %v383 = vmul.f32 %v331, %v364
        %v384 = vmul.f32 %v331, %v368
        %v385 = vadd.f32 %v301, %v369
        %v386 = vadd.f32 %v302, %v370
        %v387 = vadd.f32 %v303, %v371
        %v388 = vadd.f32 %v304, %v372
        %v389 = vadd.f32 %v305, %v373
        %v390 = vadd.f32 %v306, %v374
        %v391 = vadd.f32 %v307, %v375
        %v392 = vadd.f32 %v308, %v376
        %v393 = vadd.f32 %v309, %v377
        %v394 = vadd.f32 %v310, %v378
        %v395 = vadd.f32 %v311, %v379
        %v396 = vadd.f32 %v312, %v380
        %v397 = vadd.f32 %v313, %v381
        %v398 = vadd.f32 %v314, %v382
        %v399 = vadd.f32 %v315, %v383
        %v400 = vadd.f32 %v316, %v384
        %v401 = vand.u32 2147483647, %v385
        %vm402 = vcmp.le.f32.partialorder %v401, 0.7853982
        %vm403 = vcmp.lt.s32.totalorder %v385, 0
        %v404 = vand.u32 %v385, 2139095040
        %v405 = vshrl.u32 %v404, 23
        %v406 = vsub.s32 %v405, 127
        %v407 = vand.u32 2147483647, %v385
        %v408 = vand.u32 %v407, 8388607
        %v409 = vor.u32 %v408, 8388608
        %v410 = vsub.s32 0, %v409
        %v411 = vadd.s32 %v406, 1
        %vm412 = vcmp.gt.s32.totalorder %v411, 0
        %v413 = vsel %vm412, %v411, 0
        %v414 = vshrl.u32 %v413, 5
        %v415 = vand.u32 %v413, 31
        %v416 = vsub.s32 32, %v415
        %v417 = vshrl.u32 683565275, %v416
        %v418 = vshll.u32 683565275, %v415
        %v419 = vshrl.u32 2475754826, %v416
        %v420 = vor.u32 %v418, %v419
        %v421 = vshll.u32 2475754826, %v415
        %v422 = vshrl.u32 2131351028, %v416
        %v423 = vor.u32 %v421, %v422
        %v424 = vshll.u32 2131351028, %v415
        %v425 = vshrl.u32 2102212464, %v416
        %v426 = vor.u32 %v424, %v425
        %v427 = vshll.u32 2102212464, %v415
        %v428 = vshrl.u32 920167782, %v416
        %v429 = vor.u32 %v427, %v428
        %v430 = vshll.u32 920167782, %v415
        %v431 = vshrl.u32 1326507024, %v416
        %v432 = vor.u32 %v430, %v431
        %vm433 = vcmp.lt.s32.totalorder %v414, 1
        %vm434 = vcmp.lt.s32.totalorder %v414, 2
        %vm435 = vcmp.lt.s32.totalorder %v414, 3
        %vm436 = vcmp.lt.s32.totalorder %v414, 4
        %v437 = vsel %vm433, %v417, %v420
        %v438 = vsel %vm436, %v426, 2102212464
        %v439 = vsel %vm435, %v423, %v438
        %v440 = vsel %vm434, %v437, %v439
        %v441 = vsel %vm433, %v420, %v423
        %v442 = vsel %vm436, %v429, 920167782
        %v443 = vsel %vm435, %v426, %v442
        %v444 = vsel %vm434, %v441, %v443
        %v445 = vsel %vm433, %v423, %v426
        %v446 = vsel %vm436, %v432, 1326507024
        %v447 = vsel %vm435, %v429, %v446
        %v448 = vsel %vm434, %v445, %v447
        %v449 = vshll.u32 %v409, 8
        %v450 = vmul.u32.u64.compose %v449, %v448
        %v451 = vextract.low.u32 %v450
        %v452 = vextract.high.u32 %v450
        %v453 = vmul.u32.u64.compose %v449, %v444
        %v454 = vextract.low.u32 %v453
        %v455 = vextract.high.u32 %v453
        %v456 = vmul.u32 %v449, %v440
        %v457 = vadd.s32 %v452, %v454
        %vm458 = vc.u32 %v452, %v454
        %v459 = vadd.s32 %v455, 1
        %v460 = vsel %vm458, %v459, %v455
        %v461 = vadd.s32 %v456, %v460
        %v462 = vadd.s32 %v461, 536870912
        %v463 = vshrl.u32 %v462, 30
        %v464 = vshll.u32 %v463, 30
        %v465 = vsub.s32 %v461, %v464
        %vm466 = vcmp.lt.s32.totalorder %v465, 0
        %v467 = vsub.s32 0, %v465
        %v468 = vsel %vm466, %v467, %v465
        %v469 = vclz %v468
        %v470 = vsub.s32 %v469, 2
        %vm471 = vcmp.gt.s32.totalorder 0, %v470
        %v472 = vsel %vm471, 0, %v470
        %v473 = vsub.s32 32, %v472
        %v474 = vshll.u32 %v465, %v472
        %v475 = vshrl.u32 %v457, %v473
        %v476 = vor.u32 %v474, %v475
        %v477 = vsub.s32 4294967266, %v472
        %v478 = vadd.s32 %v477, 127
        %v479 = vshll.u32 %v478, 23
        %v480 = vor.u32 4788187, %v479
        %v481 = vand.u32 2147483647, %v480
        %v483 = vcvt.s32.f32 %v476
        %v484 = vmul.f32 %v483, %v481
        %v485 = vxor.u32 %v484, 2147483648
        %v486 = vsel %vm403, %v485, %v484
        %v487 = vsub.s32 4, %v463
        %v488 = vsel %vm403, %v487, %v463
        %v489 = vsel %vm402, %v385, %v486
        %v490 = vsel %vm402, 0, %v488
        %v491 = vcosq.f32.pop %v489
        %v492 = vsinq.f32.pop %v489
        %vm493 = vweird.f32 %v385
        %v494 = vadd.s32 %v490, 3
        %v495 = vand.u32 %v494, 3
        %vm496 = vcmp.lt.s32.totalorder %v495, 2
        %vm497 = vcmp.eq.s32.totalorder %v495, 0
        %v498 = vxor.u32 %v492, 2147483648
        %v499 = vsel %vm497, %v491, %v498
        %vm500 = vcmp.eq.s32.totalorder %v495, 2
        %v501 = vxor.u32 %v491, 2147483648
        %v502 = vsel %vm500, %v501, %v492
        %v503 = vsel %vm496, %v499, %v502
        %v504 = vsel %vm493, nan, %v503
        %v505 = vand.u32 2147483647, %v386
        %vm506 = vcmp.le.f32.partialorder %v505, 0.7853982
        %vm507 = vcmp.lt.s32.totalorder %v386, 0
        %v508 = vand.u32 %v386, 2139095040
        %v509 = vshrl.u32 %v508, 23
        %v510 = vsub.s32 %v509, 127
        %v511 = vand.u32 2147483647, %v386
        %v512 = vand.u32 %v511, 8388607
        %v513 = vor.u32 %v512, 8388608
        %v514 = vsub.s32 0, %v513
        %v515 = vadd.s32 %v510, 1
        %vm516 = vcmp.gt.s32.totalorder %v515, 0
        %v517 = vsel %vm516, %v515, 0
        %v518 = vshrl.u32 %v517, 5
        %v519 = vand.u32 %v517, 31
        %v520 = vsub.s32 32, %v519
        %v521 = vshrl.u32 683565275, %v520
        %v522 = vshll.u32 683565275, %v519
        %v523 = vshrl.u32 2475754826, %v520
        %v524 = vor.u32 %v522, %v523
        %v525 = vshll.u32 2475754826, %v519
        %v526 = vshrl.u32 2131351028, %v520
        %v527 = vor.u32 %v525, %v526
        %v528 = vshll.u32 2131351028, %v519
        %v529 = vshrl.u32 2102212464, %v520
        %v530 = vor.u32 %v528, %v529
        %v531 = vshll.u32 2102212464, %v519
        %v532 = vshrl.u32 920167782, %v520
        %v533 = vor.u32 %v531, %v532
        %v534 = vshll.u32 920167782, %v519
        %v535 = vshrl.u32 1326507024, %v520
        %v536 = vor.u32 %v534, %v535
        %vm537 = vcmp.lt.s32.totalorder %v518, 1
        %vm538 = vcmp.lt.s32.totalorder %v518, 2
        %vm539 = vcmp.lt.s32.totalorder %v518, 3
        %vm540 = vcmp.lt.s32.totalorder %v518, 4
        %v541 = vsel %vm537, %v521, %v524
        %v542 = vsel %vm540, %v530, 2102212464
        %v543 = vsel %vm539, %v527, %v542
        %v544 = vsel %vm538, %v541, %v543
        %v545 = vsel %vm537, %v524, %v527
        %v546 = vsel %vm540, %v533, 920167782
        %v547 = vsel %vm539, %v530, %v546
        %v548 = vsel %vm538, %v545, %v547
        %v549 = vsel %vm537, %v527, %v530
        %v550 = vsel %vm540, %v536, 1326507024
        %v551 = vsel %vm539, %v533, %v550
        %v552 = vsel %vm538, %v549, %v551
        %v553 = vshll.u32 %v513, 8
        %v554 = vmul.u32.u64.compose %v553, %v552
        %v555 = vextract.low.u32 %v554
        %v556 = vextract.high.u32 %v554
        %v557 = vmul.u32.u64.compose %v553, %v548
        %v558 = vextract.low.u32 %v557
        %v559 = vextract.high.u32 %v557
        %v560 = vmul.u32 %v553, %v544
        %v561 = vadd.s32 %v556, %v558
        %vm562 = vc.u32 %v556, %v558
        %v563 = vadd.s32 %v559, 1
        %v564 = vsel %vm562, %v563, %v559
        %v565 = vadd.s32 %v560, %v564
        %v566 = vadd.s32 %v565, 536870912
        %v567 = vshrl.u32 %v566, 30
        %v568 = vshll.u32 %v567, 30
        %v569 = vsub.s32 %v565, %v568
        %vm570 = vcmp.lt.s32.totalorder %v569, 0
        %v571 = vsub.s32 0, %v569
        %v572 = vsel %vm570, %v571, %v569
        %v573 = vclz %v572
        %v574 = vsub.s32 %v573, 2
        %vm575 = vcmp.gt.s32.totalorder 0, %v574
        %v576 = vsel %vm575, 0, %v574
        %v577 = vsub.s32 32, %v576
        %v578 = vshll.u32 %v569, %v576
        %v579 = vshrl.u32 %v561, %v577
        %v580 = vor.u32 %v578, %v579
        %v581 = vsub.s32 4294967266, %v576
        %v582 = vadd.s32 %v581, 127
        %v583 = vshll.u32 %v582, 23
        %v584 = vor.u32 4788187, %v583
        %v585 = vand.u32 2147483647, %v584
        %v587 = vcvt.s32.f32 %v580
        %v588 = vmul.f32 %v587, %v585
        %v589 = vxor.u32 %v588, 2147483648
        %v590 = vsel %vm507, %v589, %v588
        %v591 = vsub.s32 4, %v567
        %v592 = vsel %vm507, %v591, %v567
        %v593 = vsel %vm506, %v386, %v590
        %v594 = vsel %vm506, 0, %v592
        %v595 = vcosq.f32.pop %v593
        %v596 = vsinq.f32.pop %v593
        %vm597 = vweird.f32 %v386
        %v598 = vadd.s32 %v594, 3
        %v599 = vand.u32 %v598, 3
        %vm600 = vcmp.lt.s32.totalorder %v599, 2
        %vm601 = vcmp.eq.s32.totalorder %v599, 0
        %v602 = vxor.u32 %v596, 2147483648
        %v603 = vsel %vm601, %v595, %v602
        %vm604 = vcmp.eq.s32.totalorder %v599, 2
        %v605 = vxor.u32 %v595, 2147483648
        %v606 = vsel %vm604, %v605, %v596
        %v607 = vsel %vm600, %v603, %v606
        %v608 = vsel %vm597, nan, %v607
        %v609 = vand.u32 2147483647, %v387
        %vm610 = vcmp.le.f32.partialorder %v609, 0.7853982
        %vm611 = vcmp.lt.s32.totalorder %v387, 0
        %v612 = vand.u32 %v387, 2139095040
        %v613 = vshrl.u32 %v612, 23
        %v614 = vsub.s32 %v613, 127
        %v615 = vand.u32 2147483647, %v387
        %v616 = vand.u32 %v615, 8388607
        %v617 = vor.u32 %v616, 8388608
        %v618 = vsub.s32 0, %v617
        %v619 = vadd.s32 %v614, 1
        %vm620 = vcmp.gt.s32.totalorder %v619, 0
        %v621 = vsel %vm620, %v619, 0
        %v622 = vshrl.u32 %v621, 5
        %v623 = vand.u32 %v621, 31
        %v624 = vsub.s32 32, %v623
        %v625 = vshrl.u32 683565275, %v624
        %v626 = vshll.u32 683565275, %v623
        %v627 = vshrl.u32 2475754826, %v624
        %v628 = vor.u32 %v626, %v627
        %v629 = vshll.u32 2475754826, %v623
        %v630 = vshrl.u32 2131351028, %v624
        %v631 = vor.u32 %v629, %v630
        %v632 = vshll.u32 2131351028, %v623
        %v633 = vshrl.u32 2102212464, %v624
        %v634 = vor.u32 %v632, %v633
        %v635 = vshll.u32 2102212464, %v623
        %v636 = vshrl.u32 920167782, %v624
        %v637 = vor.u32 %v635, %v636
        %v638 = vshll.u32 920167782, %v623
        %v639 = vshrl.u32 1326507024, %v624
        %v640 = vor.u32 %v638, %v639
        %vm641 = vcmp.lt.s32.totalorder %v622, 1
        %vm642 = vcmp.lt.s32.totalorder %v622, 2
        %vm643 = vcmp.lt.s32.totalorder %v622, 3
        %vm644 = vcmp.lt.s32.totalorder %v622, 4
        %v645 = vsel %vm641, %v625, %v628
        %v646 = vsel %vm644, %v634, 2102212464
        %v647 = vsel %vm643, %v631, %v646
        %v648 = vsel %vm642, %v645, %v647
        %v649 = vsel %vm641, %v628, %v631
        %v650 = vsel %vm644, %v637, 920167782
        %v651 = vsel %vm643, %v634, %v650
        %v652 = vsel %vm642, %v649, %v651
        %v653 = vsel %vm641, %v631, %v634
        %v654 = vsel %vm644, %v640, 1326507024
        %v655 = vsel %vm643, %v637, %v654
        %v656 = vsel %vm642, %v653, %v655
        %v657 = vshll.u32 %v617, 8
        %v658 = vmul.u32.u64.compose %v657, %v656
        %v659 = vextract.low.u32 %v658
        %v660 = vextract.high.u32 %v658
        %v661 = vmul.u32.u64.compose %v657, %v652
        %v662 = vextract.low.u32 %v661
        %v663 = vextract.high.u32 %v661
        %v664 = vmul.u32 %v657, %v648
        %v665 = vadd.s32 %v660, %v662
        %vm666 = vc.u32 %v660, %v662
        %v667 = vadd.s32 %v663, 1
        %v668 = vsel %vm666, %v667, %v663
        %v669 = vadd.s32 %v664, %v668
        %v670 = vadd.s32 %v669, 536870912
        %v671 = vshrl.u32 %v670, 30
        %v672 = vshll.u32 %v671, 30
        %v673 = vsub.s32 %v669, %v672
        %vm674 = vcmp.lt.s32.totalorder %v673, 0
        %v675 = vsub.s32 0, %v673
        %v676 = vsel %vm674, %v675, %v673
        %v677 = vclz %v676
        %v678 = vsub.s32 %v677, 2
        %vm679 = vcmp.gt.s32.totalorder 0, %v678
        %v680 = vsel %vm679, 0, %v678
        %v681 = vsub.s32 32, %v680
        %v682 = vshll.u32 %v673, %v680
        %v683 = vshrl.u32 %v665, %v681
        %v684 = vor.u32 %v682, %v683
        %v685 = vsub.s32 4294967266, %v680
        %v686 = vadd.s32 %v685, 127
        %v687 = vshll.u32 %v686, 23
        %v688 = vor.u32 4788187, %v687
        %v689 = vand.u32 2147483647, %v688
        %v691 = vcvt.s32.f32 %v684
        %v692 = vmul.f32 %v691, %v689
        %v693 = vxor.u32 %v692, 2147483648
        %v694 = vsel %vm611, %v693, %v692
        %v695 = vsub.s32 4, %v671
        %v696 = vsel %vm611, %v695, %v671
        %v697 = vsel %vm610, %v387, %v694
        %v698 = vsel %vm610, 0, %v696
        %v699 = vcosq.f32.pop %v697
        %v700 = vsinq.f32.pop %v697
        %vm701 = vweird.f32 %v387
        %v702 = vadd.s32 %v698, 3
        %v703 = vand.u32 %v702, 3
        %vm704 = vcmp.lt.s32.totalorder %v703, 2
        %vm705 = vcmp.eq.s32.totalorder %v703, 0
        %v706 = vxor.u32 %v700, 2147483648
        %v707 = vsel %vm705, %v699, %v706
        %vm708 = vcmp.eq.s32.totalorder %v703, 2
        %v709 = vxor.u32 %v699, 2147483648
        %v710 = vsel %vm708, %v709, %v700
        %v711 = vsel %vm704, %v707, %v710
        %v712 = vsel %vm701, nan, %v711
        %v713 = vand.u32 2147483647, %v388
        %vm714 = vcmp.le.f32.partialorder %v713, 0.7853982
        %vm715 = vcmp.lt.s32.totalorder %v388, 0
        %v716 = vand.u32 %v388, 2139095040
        %v717 = vshrl.u32 %v716, 23
        %v718 = vsub.s32 %v717, 127
        %v719 = vand.u32 2147483647, %v388
        %v720 = vand.u32 %v719, 8388607
        %v721 = vor.u32 %v720, 8388608
        %v722 = vsub.s32 0, %v721
        %v723 = vadd.s32 %v718, 1
        %vm724 = vcmp.gt.s32.totalorder %v723, 0
        %v725 = vsel %vm724, %v723, 0
        %v726 = vshrl.u32 %v725, 5
        %v727 = vand.u32 %v725, 31
        %v728 = vsub.s32 32, %v727
        %v729 = vshrl.u32 683565275, %v728
        %v730 = vshll.u32 683565275, %v727
        %v731 = vshrl.u32 2475754826, %v728
        %v732 = vor.u32 %v730, %v731
        %v733 = vshll.u32 2475754826, %v727
        %v734 = vshrl.u32 2131351028, %v728
        %v735 = vor.u32 %v733, %v734
        %v736 = vshll.u32 2131351028, %v727
        %v737 = vshrl.u32 2102212464, %v728
        %v738 = vor.u32 %v736, %v737
        %v739 = vshll.u32 2102212464, %v727
        %v740 = vshrl.u32 920167782, %v728
        %v741 = vor.u32 %v739, %v740
        %v742 = vshll.u32 920167782, %v727
        %v743 = vshrl.u32 1326507024, %v728
        %v744 = vor.u32 %v742, %v743
        %vm745 = vcmp.lt.s32.totalorder %v726, 1
        %vm746 = vcmp.lt.s32.totalorder %v726, 2
        %vm747 = vcmp.lt.s32.totalorder %v726, 3
        %vm748 = vcmp.lt.s32.totalorder %v726, 4
        %v749 = vsel %vm745, %v729, %v732
        %v750 = vsel %vm748, %v738, 2102212464
        %v751 = vsel %vm747, %v735, %v750
        %v752 = vsel %vm746, %v749, %v751
        %v753 = vsel %vm745, %v732, %v735
        %v754 = vsel %vm748, %v741, 920167782
        %v755 = vsel %vm747, %v738, %v754
        %v756 = vsel %vm746, %v753, %v755
        %v757 = vsel %vm745, %v735, %v738
        %v758 = vsel %vm748, %v744, 1326507024
        %v759 = vsel %vm747, %v741, %v758
        %v760 = vsel %vm746, %v757, %v759
        %v761 = vshll.u32 %v721, 8
        %v762 = vmul.u32.u64.compose %v761, %v760
        %v763 = vextract.low.u32 %v762
        %v764 = vextract.high.u32 %v762
        %v765 = vmul.u32.u64.compose %v761, %v756
        %v766 = vextract.low.u32 %v765
        %v767 = vextract.high.u32 %v765
        %v768 = vmul.u32 %v761, %v752
        %v769 = vadd.s32 %v764, %v766
        %vm770 = vc.u32 %v764, %v766
        %v771 = vadd.s32 %v767, 1
        %v772 = vsel %vm770, %v771, %v767
        %v773 = vadd.s32 %v768, %v772
        %v774 = vadd.s32 %v773, 536870912
        %v775 = vshrl.u32 %v774, 30
        %v776 = vshll.u32 %v775, 30
        %v777 = vsub.s32 %v773, %v776
        %vm778 = vcmp.lt.s32.totalorder %v777, 0
        %v779 = vsub.s32 0, %v777
        %v780 = vsel %vm778, %v779, %v777
        %v781 = vclz %v780
        %v782 = vsub.s32 %v781, 2
        %vm783 = vcmp.gt.s32.totalorder 0, %v782
        %v784 = vsel %vm783, 0, %v782
        %v785 = vsub.s32 32, %v784
        %v786 = vshll.u32 %v777, %v784
        %v787 = vshrl.u32 %v769, %v785
        %v788 = vor.u32 %v786, %v787
        %v789 = vsub.s32 4294967266, %v784
        %v790 = vadd.s32 %v789, 127
        %v791 = vshll.u32 %v790, 23
        %v792 = vor.u32 4788187, %v791
        %v793 = vand.u32 2147483647, %v792
        %v795 = vcvt.s32.f32 %v788
        %v796 = vmul.f32 %v795, %v793
        %v797 = vxor.u32 %v796, 2147483648
        %v798 = vsel %vm715, %v797, %v796
        %v799 = vsub.s32 4, %v775
        %v800 = vsel %vm715, %v799, %v775
        %v801 = vsel %vm714, %v388, %v798
        %v802 = vsel %vm714, 0, %v800
        %v803 = vcosq.f32.pop %v801
        %v804 = vsinq.f32.pop %v801
        %vm805 = vweird.f32 %v388
        %v806 = vadd.s32 %v802, 3
        %v807 = vand.u32 %v806, 3
        %vm808 = vcmp.lt.s32.totalorder %v807, 2
        %vm809 = vcmp.eq.s32.totalorder %v807, 0
        %v810 = vxor.u32 %v804, 2147483648
        %v811 = vsel %vm809, %v803, %v810
        %vm812 = vcmp.eq.s32.totalorder %v807, 2
        %v813 = vxor.u32 %v803, 2147483648
        %v814 = vsel %vm812, %v813, %v804
        %v815 = vsel %vm808, %v811, %v814
        %v816 = vsel %vm805, nan, %v815
        %v817 = vand.u32 2147483647, %v389
        %vm818 = vcmp.le.f32.partialorder %v817, 0.7853982
        %vm819 = vcmp.lt.s32.totalorder %v389, 0
        %v820 = vand.u32 %v389, 2139095040
        %v821 = vshrl.u32 %v820, 23
        %v822 = vsub.s32 %v821, 127
        %v823 = vand.u32 2147483647, %v389
        %v824 = vand.u32 %v823, 8388607
        %v825 = vor.u32 %v824, 8388608
        %v826 = vsub.s32 0, %v825
        %v827 = vadd.s32 %v822, 1
        %vm828 = vcmp.gt.s32.totalorder %v827, 0
        %v829 = vsel %vm828, %v827, 0
        %v830 = vshrl.u32 %v829, 5
        %v831 = vand.u32 %v829, 31
        %v832 = vsub.s32 32, %v831
        %v833 = vshrl.u32 683565275, %v832
        %v834 = vshll.u32 683565275, %v831
        %v835 = vshrl.u32 2475754826, %v832
        %v836 = vor.u32 %v834, %v835
        %v837 = vshll.u32 2475754826, %v831
        %v838 = vshrl.u32 2131351028, %v832
        %v839 = vor.u32 %v837, %v838
        %v840 = vshll.u32 2131351028, %v831
        %v841 = vshrl.u32 2102212464, %v832
        %v842 = vor.u32 %v840, %v841
        %v843 = vshll.u32 2102212464, %v831
        %v844 = vshrl.u32 920167782, %v832
        %v845 = vor.u32 %v843, %v844
        %v846 = vshll.u32 920167782, %v831
        %v847 = vshrl.u32 1326507024, %v832
        %v848 = vor.u32 %v846, %v847
        %vm849 = vcmp.lt.s32.totalorder %v830, 1
        %vm850 = vcmp.lt.s32.totalorder %v830, 2
        %vm851 = vcmp.lt.s32.totalorder %v830, 3
        %vm852 = vcmp.lt.s32.totalorder %v830, 4
        %v853 = vsel %vm849, %v833, %v836
        %v854 = vsel %vm852, %v842, 2102212464
        %v855 = vsel %vm851, %v839, %v854
        %v856 = vsel %vm850, %v853, %v855
        %v857 = vsel %vm849, %v836, %v839
        %v858 = vsel %vm852, %v845, 920167782
        %v859 = vsel %vm851, %v842, %v858
        %v860 = vsel %vm850, %v857, %v859
        %v861 = vsel %vm849, %v839, %v842
        %v862 = vsel %vm852, %v848, 1326507024
        %v863 = vsel %vm851, %v845, %v862
        %v864 = vsel %vm850, %v861, %v863
        %v865 = vshll.u32 %v825, 8
        %v866 = vmul.u32.u64.compose %v865, %v864
        %v867 = vextract.low.u32 %v866
        %v868 = vextract.high.u32 %v866
        %v869 = vmul.u32.u64.compose %v865, %v860
        %v870 = vextract.low.u32 %v869
        %v871 = vextract.high.u32 %v869
        %v872 = vmul.u32 %v865, %v856
        %v873 = vadd.s32 %v868, %v870
        %vm874 = vc.u32 %v868, %v870
        %v875 = vadd.s32 %v871, 1
        %v876 = vsel %vm874, %v875, %v871
        %v877 = vadd.s32 %v872, %v876
        %v878 = vadd.s32 %v877, 536870912
        %v879 = vshrl.u32 %v878, 30
        %v880 = vshll.u32 %v879, 30
        %v881 = vsub.s32 %v877, %v880
        %vm882 = vcmp.lt.s32.totalorder %v881, 0
        %v883 = vsub.s32 0, %v881
        %v884 = vsel %vm882, %v883, %v881
        %v885 = vclz %v884
        %v886 = vsub.s32 %v885, 2
        %vm887 = vcmp.gt.s32.totalorder 0, %v886
        %v888 = vsel %vm887, 0, %v886
        %v889 = vsub.s32 32, %v888
        %v890 = vshll.u32 %v881, %v888
        %v891 = vshrl.u32 %v873, %v889
        %v892 = vor.u32 %v890, %v891
        %v893 = vsub.s32 4294967266, %v888
        %v894 = vadd.s32 %v893, 127
        %v895 = vshll.u32 %v894, 23
        %v896 = vor.u32 4788187, %v895
        %v897 = vand.u32 2147483647, %v896
        %v899 = vcvt.s32.f32 %v892
        %v900 = vmul.f32 %v899, %v897
        %v901 = vxor.u32 %v900, 2147483648
        %v902 = vsel %vm819, %v901, %v900
        %v903 = vsub.s32 4, %v879
        %v904 = vsel %vm819, %v903, %v879
        %v905 = vsel %vm818, %v389, %v902
        %v906 = vsel %vm818, 0, %v904
        %v907 = vcosq.f32.pop %v905
        %v908 = vsinq.f32.pop %v905
        %vm909 = vweird.f32 %v389
        %v910 = vadd.s32 %v906, 3
        %v911 = vand.u32 %v910, 3
        %vm912 = vcmp.lt.s32.totalorder %v911, 2
        %vm913 = vcmp.eq.s32.totalorder %v911, 0
        %v914 = vxor.u32 %v908, 2147483648
        %v915 = vsel %vm913, %v907, %v914
        %vm916 = vcmp.eq.s32.totalorder %v911, 2
        %v917 = vxor.u32 %v907, 2147483648
        %v918 = vsel %vm916, %v917, %v908
        %v919 = vsel %vm912, %v915, %v918
        %v920 = vsel %vm909, nan, %v919
        %v921 = vand.u32 2147483647, %v390
        %vm922 = vcmp.le.f32.partialorder %v921, 0.7853982
        %vm923 = vcmp.lt.s32.totalorder %v390, 0
        %v924 = vand.u32 %v390, 2139095040
        %v925 = vshrl.u32 %v924, 23
        %v926 = vsub.s32 %v925, 127
        %v927 = vand.u32 2147483647, %v390
        %v928 = vand.u32 %v927, 8388607
        %v929 = vor.u32 %v928, 8388608
        %v930 = vsub.s32 0, %v929
        %v931 = vadd.s32 %v926, 1
        %vm932 = vcmp.gt.s32.totalorder %v931, 0
        %v933 = vsel %vm932, %v931, 0
        %v934 = vshrl.u32 %v933, 5
        %v935 = vand.u32 %v933, 31
        %v936 = vsub.s32 32, %v935
        %v937 = vshrl.u32 683565275, %v936
        %v938 = vshll.u32 683565275, %v935
        %v939 = vshrl.u32 2475754826, %v936
        %v940 = vor.u32 %v938, %v939
        %v941 = vshll.u32 2475754826, %v935
        %v942 = vshrl.u32 2131351028, %v936
        %v943 = vor.u32 %v941, %v942
        %v944 = vshll.u32 2131351028, %v935
        %v945 = vshrl.u32 2102212464, %v936
        %v946 = vor.u32 %v944, %v945
        %v947 = vshll.u32 2102212464, %v935
        %v948 = vshrl.u32 920167782, %v936
        %v949 = vor.u32 %v947, %v948
        %v950 = vshll.u32 920167782, %v935
        %v951 = vshrl.u32 1326507024, %v936
        %v952 = vor.u32 %v950, %v951
        %vm953 = vcmp.lt.s32.totalorder %v934, 1
        %vm954 = vcmp.lt.s32.totalorder %v934, 2
        %vm955 = vcmp.lt.s32.totalorder %v934, 3
        %vm956 = vcmp.lt.s32.totalorder %v934, 4
        %v957 = vsel %vm953, %v937, %v940
        %v958 = vsel %vm956, %v946, 2102212464
        %v959 = vsel %vm955, %v943, %v958
        %v960 = vsel %vm954, %v957, %v959
        %v961 = vsel %vm953, %v940, %v943
        %v962 = vsel %vm956, %v949, 920167782
        %v963 = vsel %vm955, %v946, %v962
        %v964 = vsel %vm954, %v961, %v963
        %v965 = vsel %vm953, %v943, %v946
        %v966 = vsel %vm956, %v952, 1326507024
        %v967 = vsel %vm955, %v949, %v966
        %v968 = vsel %vm954, %v965, %v967
        %v969 = vshll.u32 %v929, 8
        %v970 = vmul.u32.u64.compose %v969, %v968
        %v971 = vextract.low.u32 %v970
        %v972 = vextract.high.u32 %v970
        %v973 = vmul.u32.u64.compose %v969, %v964
        %v974 = vextract.low.u32 %v973
        %v975 = vextract.high.u32 %v973
        %v976 = vmul.u32 %v969, %v960
        %v977 = vadd.s32 %v972, %v974
        %vm978 = vc.u32 %v972, %v974
        %v979 = vadd.s32 %v975, 1
        %v980 = vsel %vm978, %v979, %v975
        %v981 = vadd.s32 %v976, %v980
        %v982 = vadd.s32 %v981, 536870912
        %v983 = vshrl.u32 %v982, 30
        %v984 = vshll.u32 %v983, 30
        %v985 = vsub.s32 %v981, %v984
        %vm986 = vcmp.lt.s32.totalorder %v985, 0
        %v987 = vsub.s32 0, %v985
        %v988 = vsel %vm986, %v987, %v985
        %v989 = vclz %v988
        %v990 = vsub.s32 %v989, 2
        %vm991 = vcmp.gt.s32.totalorder 0, %v990
        %v992 = vsel %vm991, 0, %v990
        %v993 = vsub.s32 32, %v992
        %v994 = vshll.u32 %v985, %v992
        %v995 = vshrl.u32 %v977, %v993
        %v996 = vor.u32 %v994, %v995
        %v997 = vsub.s32 4294967266, %v992
        %v998 = vadd.s32 %v997, 127
        %v999 = vshll.u32 %v998, 23
        %v1000 = vor.u32 4788187, %v999
        %v1001 = vand.u32 2147483647, %v1000
        %v1003 = vcvt.s32.f32 %v996
        %v1004 = vmul.f32 %v1003, %v1001
        %v1005 = vxor.u32 %v1004, 2147483648
        %v1006 = vsel %vm923, %v1005, %v1004
        %v1007 = vsub.s32 4, %v983
        %v1008 = vsel %vm923, %v1007, %v983
        %v1009 = vsel %vm922, %v390, %v1006
        %v1010 = vsel %vm922, 0, %v1008
        %v1011 = vcosq.f32.pop %v1009
        %v1012 = vsinq.f32.pop %v1009
        %vm1013 = vweird.f32 %v390
        %v1014 = vadd.s32 %v1010, 3
        %v1015 = vand.u32 %v1014, 3
        %vm1016 = vcmp.lt.s32.totalorder %v1015, 2
        %vm1017 = vcmp.eq.s32.totalorder %v1015, 0
        %v1018 = vxor.u32 %v1012, 2147483648
        %v1019 = vsel %vm1017, %v1011, %v1018
        %vm1020 = vcmp.eq.s32.totalorder %v1015, 2
        %v1021 = vxor.u32 %v1011, 2147483648
        %v1022 = vsel %vm1020, %v1021, %v1012
        %v1023 = vsel %vm1016, %v1019, %v1022
        %v1024 = vsel %vm1013, nan, %v1023
        %v1025 = vand.u32 2147483647, %v391
        %vm1026 = vcmp.le.f32.partialorder %v1025, 0.7853982
        %vm1027 = vcmp.lt.s32.totalorder %v391, 0
        %v1028 = vand.u32 %v391, 2139095040
        %v1029 = vshrl.u32 %v1028, 23
        %v1030 = vsub.s32 %v1029, 127
        %v1031 = vand.u32 2147483647, %v391
        %v1032 = vand.u32 %v1031, 8388607
        %v1033 = vor.u32 %v1032, 8388608
        %v1034 = vsub.s32 0, %v1033
        %v1035 = vadd.s32 %v1030, 1
        %vm1036 = vcmp.gt.s32.totalorder %v1035, 0
        %v1037 = vsel %vm1036, %v1035, 0
        %v1038 = vshrl.u32 %v1037, 5
        %v1039 = vand.u32 %v1037, 31
        %v1040 = vsub.s32 32, %v1039
        %v1041 = vshrl.u32 683565275, %v1040
        %v1042 = vshll.u32 683565275, %v1039
        %v1043 = vshrl.u32 2475754826, %v1040
        %v1044 = vor.u32 %v1042, %v1043
        %v1045 = vshll.u32 2475754826, %v1039
        %v1046 = vshrl.u32 2131351028, %v1040
        %v1047 = vor.u32 %v1045, %v1046
        %v1048 = vshll.u32 2131351028, %v1039
        %v1049 = vshrl.u32 2102212464, %v1040
        %v1050 = vor.u32 %v1048, %v1049
        %v1051 = vshll.u32 2102212464, %v1039
        %v1052 = vshrl.u32 920167782, %v1040
        %v1053 = vor.u32 %v1051, %v1052
        %v1054 = vshll.u32 920167782, %v1039
        %v1055 = vshrl.u32 1326507024, %v1040
        %v1056 = vor.u32 %v1054, %v1055
        %vm1057 = vcmp.lt.s32.totalorder %v1038, 1
        %vm1058 = vcmp.lt.s32.totalorder %v1038, 2
        %vm1059 = vcmp.lt.s32.totalorder %v1038, 3
        %vm1060 = vcmp.lt.s32.totalorder %v1038, 4
        %v1061 = vsel %vm1057, %v1041, %v1044
        %v1062 = vsel %vm1060, %v1050, 2102212464
        %v1063 = vsel %vm1059, %v1047, %v1062
        %v1064 = vsel %vm1058, %v1061, %v1063
        %v1065 = vsel %vm1057, %v1044, %v1047
        %v1066 = vsel %vm1060, %v1053, 920167782
        %v1067 = vsel %vm1059, %v1050, %v1066
        %v1068 = vsel %vm1058, %v1065, %v1067
        %v1069 = vsel %vm1057, %v1047, %v1050
        %v1070 = vsel %vm1060, %v1056, 1326507024
        %v1071 = vsel %vm1059, %v1053, %v1070
        %v1072 = vsel %vm1058, %v1069, %v1071
        %v1073 = vshll.u32 %v1033, 8
        %v1074 = vmul.u32.u64.compose %v1073, %v1072
        %v1075 = vextract.low.u32 %v1074
        %v1076 = vextract.high.u32 %v1074
        %v1077 = vmul.u32.u64.compose %v1073, %v1068
        %v1078 = vextract.low.u32 %v1077
        %v1079 = vextract.high.u32 %v1077
        %v1080 = vmul.u32 %v1073, %v1064
        %v1081 = vadd.s32 %v1076, %v1078
        %vm1082 = vc.u32 %v1076, %v1078
        %v1083 = vadd.s32 %v1079, 1
        %v1084 = vsel %vm1082, %v1083, %v1079
        %v1085 = vadd.s32 %v1080, %v1084
        %v1086 = vadd.s32 %v1085, 536870912
        %v1087 = vshrl.u32 %v1086, 30
        %v1088 = vshll.u32 %v1087, 30
        %v1089 = vsub.s32 %v1085, %v1088
        %vm1090 = vcmp.lt.s32.totalorder %v1089, 0
        %v1091 = vsub.s32 0, %v1089
        %v1092 = vsel %vm1090, %v1091, %v1089
        %v1093 = vclz %v1092
        %v1094 = vsub.s32 %v1093, 2
        %vm1095 = vcmp.gt.s32.totalorder 0, %v1094
        %v1096 = vsel %vm1095, 0, %v1094
        %v1097 = vsub.s32 32, %v1096
        %v1098 = vshll.u32 %v1089, %v1096
        %v1099 = vshrl.u32 %v1081, %v1097
        %v1100 = vor.u32 %v1098, %v1099
        %v1101 = vsub.s32 4294967266, %v1096
        %v1102 = vadd.s32 %v1101, 127
        %v1103 = vshll.u32 %v1102, 23
        %v1104 = vor.u32 4788187, %v1103
        %v1105 = vand.u32 2147483647, %v1104
        %v1107 = vcvt.s32.f32 %v1100
        %v1108 = vmul.f32 %v1107, %v1105
        %v1109 = vxor.u32 %v1108, 2147483648
        %v1110 = vsel %vm1027, %v1109, %v1108
        %v1111 = vsub.s32 4, %v1087
        %v1112 = vsel %vm1027, %v1111, %v1087
        %v1113 = vsel %vm1026, %v391, %v1110
        %v1114 = vsel %vm1026, 0, %v1112
        %v1115 = vcosq.f32.pop %v1113
        %v1116 = vsinq.f32.pop %v1113
        %vm1117 = vweird.f32 %v391
        %v1118 = vadd.s32 %v1114, 3
        %v1119 = vand.u32 %v1118, 3
        %vm1120 = vcmp.lt.s32.totalorder %v1119, 2
        %vm1121 = vcmp.eq.s32.totalorder %v1119, 0
        %v1122 = vxor.u32 %v1116, 2147483648
        %v1123 = vsel %vm1121, %v1115, %v1122
        %vm1124 = vcmp.eq.s32.totalorder %v1119, 2
        %v1125 = vxor.u32 %v1115, 2147483648
        %v1126 = vsel %vm1124, %v1125, %v1116
        %v1127 = vsel %vm1120, %v1123, %v1126
        %v1128 = vsel %vm1117, nan, %v1127
        %v1129 = vand.u32 2147483647, %v392
        %vm1130 = vcmp.le.f32.partialorder %v1129, 0.7853982
        %vm1131 = vcmp.lt.s32.totalorder %v392, 0
        %v1132 = vand.u32 %v392, 2139095040
        %v1133 = vshrl.u32 %v1132, 23
        %v1134 = vsub.s32 %v1133, 127
        %v1135 = vand.u32 2147483647, %v392
        %v1136 = vand.u32 %v1135, 8388607
        %v1137 = vor.u32 %v1136, 8388608
        %v1138 = vsub.s32 0, %v1137
        %v1139 = vadd.s32 %v1134, 1
        %vm1140 = vcmp.gt.s32.totalorder %v1139, 0
        %v1141 = vsel %vm1140, %v1139, 0
        %v1142 = vshrl.u32 %v1141, 5
        %v1143 = vand.u32 %v1141, 31
        %v1144 = vsub.s32 32, %v1143
        %v1145 = vshrl.u32 683565275, %v1144
        %v1146 = vshll.u32 683565275, %v1143
        %v1147 = vshrl.u32 2475754826, %v1144
        %v1148 = vor.u32 %v1146, %v1147
        %v1149 = vshll.u32 2475754826, %v1143
        %v1150 = vshrl.u32 2131351028, %v1144
        %v1151 = vor.u32 %v1149, %v1150
        %v1152 = vshll.u32 2131351028, %v1143
        %v1153 = vshrl.u32 2102212464, %v1144
        %v1154 = vor.u32 %v1152, %v1153
        %v1155 = vshll.u32 2102212464, %v1143
        %v1156 = vshrl.u32 920167782, %v1144
        %v1157 = vor.u32 %v1155, %v1156
        %v1158 = vshll.u32 920167782, %v1143
        %v1159 = vshrl.u32 1326507024, %v1144
        %v1160 = vor.u32 %v1158, %v1159
        %vm1161 = vcmp.lt.s32.totalorder %v1142, 1
        %vm1162 = vcmp.lt.s32.totalorder %v1142, 2
        %vm1163 = vcmp.lt.s32.totalorder %v1142, 3
        %vm1164 = vcmp.lt.s32.totalorder %v1142, 4
        %v1165 = vsel %vm1161, %v1145, %v1148
        %v1166 = vsel %vm1164, %v1154, 2102212464
        %v1167 = vsel %vm1163, %v1151, %v1166
        %v1168 = vsel %vm1162, %v1165, %v1167
        %v1169 = vsel %vm1161, %v1148, %v1151
        %v1170 = vsel %vm1164, %v1157, 920167782
        %v1171 = vsel %vm1163, %v1154, %v1170
        %v1172 = vsel %vm1162, %v1169, %v1171
        %v1173 = vsel %vm1161, %v1151, %v1154
        %v1174 = vsel %vm1164, %v1160, 1326507024
        %v1175 = vsel %vm1163, %v1157, %v1174
        %v1176 = vsel %vm1162, %v1173, %v1175
        %v1177 = vshll.u32 %v1137, 8
        %v1178 = vmul.u32.u64.compose %v1177, %v1176
        %v1179 = vextract.low.u32 %v1178
        %v1180 = vextract.high.u32 %v1178
        %v1181 = vmul.u32.u64.compose %v1177, %v1172
        %v1182 = vextract.low.u32 %v1181
        %v1183 = vextract.high.u32 %v1181
        %v1184 = vmul.u32 %v1177, %v1168
        %v1185 = vadd.s32 %v1180, %v1182
        %vm1186 = vc.u32 %v1180, %v1182
        %v1187 = vadd.s32 %v1183, 1
        %v1188 = vsel %vm1186, %v1187, %v1183
        %v1189 = vadd.s32 %v1184, %v1188
        %v1190 = vadd.s32 %v1189, 536870912
        %v1191 = vshrl.u32 %v1190, 30
        %v1192 = vshll.u32 %v1191, 30
        %v1193 = vsub.s32 %v1189, %v1192
        %vm1194 = vcmp.lt.s32.totalorder %v1193, 0
        %v1195 = vsub.s32 0, %v1193
        %v1196 = vsel %vm1194, %v1195, %v1193
        %v1197 = vclz %v1196
        %v1198 = vsub.s32 %v1197, 2
        %vm1199 = vcmp.gt.s32.totalorder 0, %v1198
        %v1200 = vsel %vm1199, 0, %v1198
        %v1201 = vsub.s32 32, %v1200
        %v1202 = vshll.u32 %v1193, %v1200
        %v1203 = vshrl.u32 %v1185, %v1201
        %v1204 = vor.u32 %v1202, %v1203
        %v1205 = vsub.s32 4294967266, %v1200
        %v1206 = vadd.s32 %v1205, 127
        %v1207 = vshll.u32 %v1206, 23
        %v1208 = vor.u32 4788187, %v1207
        %v1209 = vand.u32 2147483647, %v1208
        %v1211 = vcvt.s32.f32 %v1204
        %v1212 = vmul.f32 %v1211, %v1209
        %v1213 = vxor.u32 %v1212, 2147483648
        %v1214 = vsel %vm1131, %v1213, %v1212
        %v1215 = vsub.s32 4, %v1191
        %v1216 = vsel %vm1131, %v1215, %v1191
        %v1217 = vsel %vm1130, %v392, %v1214
        %v1218 = vsel %vm1130, 0, %v1216
        %v1219 = vcosq.f32.pop %v1217
        %v1220 = vsinq.f32.pop %v1217
        %vm1221 = vweird.f32 %v392
        %v1222 = vadd.s32 %v1218, 3
        %v1223 = vand.u32 %v1222, 3
        %vm1224 = vcmp.lt.s32.totalorder %v1223, 2
        %vm1225 = vcmp.eq.s32.totalorder %v1223, 0
        %v1226 = vxor.u32 %v1220, 2147483648
        %v1227 = vsel %vm1225, %v1219, %v1226
        %vm1228 = vcmp.eq.s32.totalorder %v1223, 2
        %v1229 = vxor.u32 %v1219, 2147483648
        %v1230 = vsel %vm1228, %v1229, %v1220
        %v1231 = vsel %vm1224, %v1227, %v1230
        %v1232 = vsel %vm1221, nan, %v1231
        %v1233 = vand.u32 2147483647, %v393
        %vm1234 = vcmp.le.f32.partialorder %v1233, 0.7853982
        %vm1235 = vcmp.lt.s32.totalorder %v393, 0
        %v1236 = vand.u32 %v393, 2139095040
        %v1237 = vshrl.u32 %v1236, 23
        %v1238 = vsub.s32 %v1237, 127
        %v1239 = vand.u32 2147483647, %v393
        %v1240 = vand.u32 %v1239, 8388607
        %v1241 = vor.u32 %v1240, 8388608
        %v1242 = vsub.s32 0, %v1241
        %v1243 = vadd.s32 %v1238, 1
        %vm1244 = vcmp.gt.s32.totalorder %v1243, 0
        %v1245 = vsel %vm1244, %v1243, 0
        %v1246 = vshrl.u32 %v1245, 5
        %v1247 = vand.u32 %v1245, 31
        %v1248 = vsub.s32 32, %v1247
        %v1249 = vshrl.u32 683565275, %v1248
        %v1250 = vshll.u32 683565275, %v1247
        %v1251 = vshrl.u32 2475754826, %v1248
        %v1252 = vor.u32 %v1250, %v1251
        %v1253 = vshll.u32 2475754826, %v1247
        %v1254 = vshrl.u32 2131351028, %v1248
        %v1255 = vor.u32 %v1253, %v1254
        %v1256 = vshll.u32 2131351028, %v1247
        %v1257 = vshrl.u32 2102212464, %v1248
        %v1258 = vor.u32 %v1256, %v1257
        %v1259 = vshll.u32 2102212464, %v1247
        %v1260 = vshrl.u32 920167782, %v1248
        %v1261 = vor.u32 %v1259, %v1260
        %v1262 = vshll.u32 920167782, %v1247
        %v1263 = vshrl.u32 1326507024, %v1248
        %v1264 = vor.u32 %v1262, %v1263
        %vm1265 = vcmp.lt.s32.totalorder %v1246, 1
        %vm1266 = vcmp.lt.s32.totalorder %v1246, 2
        %vm1267 = vcmp.lt.s32.totalorder %v1246, 3
        %vm1268 = vcmp.lt.s32.totalorder %v1246, 4
        %v1269 = vsel %vm1265, %v1249, %v1252
        %v1270 = vsel %vm1268, %v1258, 2102212464
        %v1271 = vsel %vm1267, %v1255, %v1270
        %v1272 = vsel %vm1266, %v1269, %v1271
        %v1273 = vsel %vm1265, %v1252, %v1255
        %v1274 = vsel %vm1268, %v1261, 920167782
        %v1275 = vsel %vm1267, %v1258, %v1274
        %v1276 = vsel %vm1266, %v1273, %v1275
        %v1277 = vsel %vm1265, %v1255, %v1258
        %v1278 = vsel %vm1268, %v1264, 1326507024
        %v1279 = vsel %vm1267, %v1261, %v1278
        %v1280 = vsel %vm1266, %v1277, %v1279
        %v1281 = vshll.u32 %v1241, 8
        %v1282 = vmul.u32.u64.compose %v1281, %v1280
        %v1283 = vextract.low.u32 %v1282
        %v1284 = vextract.high.u32 %v1282
        %v1285 = vmul.u32.u64.compose %v1281, %v1276
        %v1286 = vextract.low.u32 %v1285
        %v1287 = vextract.high.u32 %v1285
        %v1288 = vmul.u32 %v1281, %v1272
        %v1289 = vadd.s32 %v1284, %v1286
        %vm1290 = vc.u32 %v1284, %v1286
        %v1291 = vadd.s32 %v1287, 1
        %v1292 = vsel %vm1290, %v1291, %v1287
        %v1293 = vadd.s32 %v1288, %v1292
        %v1294 = vadd.s32 %v1293, 536870912
        %v1295 = vshrl.u32 %v1294, 30
        %v1296 = vshll.u32 %v1295, 30
        %v1297 = vsub.s32 %v1293, %v1296
        %vm1298 = vcmp.lt.s32.totalorder %v1297, 0
        %v1299 = vsub.s32 0, %v1297
        %v1300 = vsel %vm1298, %v1299, %v1297
        %v1301 = vclz %v1300
        %v1302 = vsub.s32 %v1301, 2
        %vm1303 = vcmp.gt.s32.totalorder 0, %v1302
        %v1304 = vsel %vm1303, 0, %v1302
        %v1305 = vsub.s32 32, %v1304
        %v1306 = vshll.u32 %v1297, %v1304
        %v1307 = vshrl.u32 %v1289, %v1305
        %v1308 = vor.u32 %v1306, %v1307
        %v1309 = vsub.s32 4294967266, %v1304
        %v1310 = vadd.s32 %v1309, 127
        %v1311 = vshll.u32 %v1310, 23
        %v1312 = vor.u32 4788187, %v1311
        %v1313 = vand.u32 2147483647, %v1312
        %v1315 = vcvt.s32.f32 %v1308
        %v1316 = vmul.f32 %v1315, %v1313
        %v1317 = vxor.u32 %v1316, 2147483648
        %v1318 = vsel %vm1235, %v1317, %v1316
        %v1319 = vsub.s32 4, %v1295
        %v1320 = vsel %vm1235, %v1319, %v1295
        %v1321 = vsel %vm1234, %v393, %v1318
        %v1322 = vsel %vm1234, 0, %v1320
        %v1323 = vcosq.f32.pop %v1321
        %v1324 = vsinq.f32.pop %v1321
        %vm1325 = vweird.f32 %v393
        %v1326 = vadd.s32 %v1322, 3
        %v1327 = vand.u32 %v1326, 3
        %vm1328 = vcmp.lt.s32.totalorder %v1327, 2
        %vm1329 = vcmp.eq.s32.totalorder %v1327, 0
        %v1330 = vxor.u32 %v1324, 2147483648
        %v1331 = vsel %vm1329, %v1323, %v1330
        %vm1332 = vcmp.eq.s32.totalorder %v1327, 2
        %v1333 = vxor.u32 %v1323, 2147483648
        %v1334 = vsel %vm1332, %v1333, %v1324
        %v1335 = vsel %vm1328, %v1331, %v1334
        %v1336 = vsel %vm1325, nan, %v1335
        %v1337 = vand.u32 2147483647, %v394
        %vm1338 = vcmp.le.f32.partialorder %v1337, 0.7853982
        %vm1339 = vcmp.lt.s32.totalorder %v394, 0
        %v1340 = vand.u32 %v394, 2139095040
        %v1341 = vshrl.u32 %v1340, 23
        %v1342 = vsub.s32 %v1341, 127
        %v1343 = vand.u32 2147483647, %v394
        %v1344 = vand.u32 %v1343, 8388607
        %v1345 = vor.u32 %v1344, 8388608
        %v1346 = vsub.s32 0, %v1345
        %v1347 = vadd.s32 %v1342, 1
        %vm1348 = vcmp.gt.s32.totalorder %v1347, 0
        %v1349 = vsel %vm1348, %v1347, 0
        %v1350 = vshrl.u32 %v1349, 5
        %v1351 = vand.u32 %v1349, 31
        %v1352 = vsub.s32 32, %v1351
        %v1353 = vshrl.u32 683565275, %v1352
        %v1354 = vshll.u32 683565275, %v1351
        %v1355 = vshrl.u32 2475754826, %v1352
        %v1356 = vor.u32 %v1354, %v1355
        %v1357 = vshll.u32 2475754826, %v1351
        %v1358 = vshrl.u32 2131351028, %v1352
        %v1359 = vor.u32 %v1357, %v1358
        %v1360 = vshll.u32 2131351028, %v1351
        %v1361 = vshrl.u32 2102212464, %v1352
        %v1362 = vor.u32 %v1360, %v1361
        %v1363 = vshll.u32 2102212464, %v1351
        %v1364 = vshrl.u32 920167782, %v1352
        %v1365 = vor.u32 %v1363, %v1364
        %v1366 = vshll.u32 920167782, %v1351
        %v1367 = vshrl.u32 1326507024, %v1352
        %v1368 = vor.u32 %v1366, %v1367
        %vm1369 = vcmp.lt.s32.totalorder %v1350, 1
        %vm1370 = vcmp.lt.s32.totalorder %v1350, 2
        %vm1371 = vcmp.lt.s32.totalorder %v1350, 3
        %vm1372 = vcmp.lt.s32.totalorder %v1350, 4
        %v1373 = vsel %vm1369, %v1353, %v1356
        %v1374 = vsel %vm1372, %v1362, 2102212464
        %v1375 = vsel %vm1371, %v1359, %v1374
        %v1376 = vsel %vm1370, %v1373, %v1375
        %v1377 = vsel %vm1369, %v1356, %v1359
        %v1378 = vsel %vm1372, %v1365, 920167782
        %v1379 = vsel %vm1371, %v1362, %v1378
        %v1380 = vsel %vm1370, %v1377, %v1379
        %v1381 = vsel %vm1369, %v1359, %v1362
        %v1382 = vsel %vm1372, %v1368, 1326507024
        %v1383 = vsel %vm1371, %v1365, %v1382
        %v1384 = vsel %vm1370, %v1381, %v1383
        %v1385 = vshll.u32 %v1345, 8
        %v1386 = vmul.u32.u64.compose %v1385, %v1384
        %v1387 = vextract.low.u32 %v1386
        %v1388 = vextract.high.u32 %v1386
        %v1389 = vmul.u32.u64.compose %v1385, %v1380
        %v1390 = vextract.low.u32 %v1389
        %v1391 = vextract.high.u32 %v1389
        %v1392 = vmul.u32 %v1385, %v1376
        %v1393 = vadd.s32 %v1388, %v1390
        %vm1394 = vc.u32 %v1388, %v1390
        %v1395 = vadd.s32 %v1391, 1
        %v1396 = vsel %vm1394, %v1395, %v1391
        %v1397 = vadd.s32 %v1392, %v1396
        %v1398 = vadd.s32 %v1397, 536870912
        %v1399 = vshrl.u32 %v1398, 30
        %v1400 = vshll.u32 %v1399, 30
        %v1401 = vsub.s32 %v1397, %v1400
        %vm1402 = vcmp.lt.s32.totalorder %v1401, 0
        %v1403 = vsub.s32 0, %v1401
        %v1404 = vsel %vm1402, %v1403, %v1401
        %v1405 = vclz %v1404
        %v1406 = vsub.s32 %v1405, 2
        %vm1407 = vcmp.gt.s32.totalorder 0, %v1406
        %v1408 = vsel %vm1407, 0, %v1406
        %v1409 = vsub.s32 32, %v1408
        %v1410 = vshll.u32 %v1401, %v1408
        %v1411 = vshrl.u32 %v1393, %v1409
        %v1412 = vor.u32 %v1410, %v1411
        %v1413 = vsub.s32 4294967266, %v1408
        %v1414 = vadd.s32 %v1413, 127
        %v1415 = vshll.u32 %v1414, 23
        %v1416 = vor.u32 4788187, %v1415
        %v1417 = vand.u32 2147483647, %v1416
        %v1419 = vcvt.s32.f32 %v1412
        %v1420 = vmul.f32 %v1419, %v1417
        %v1421 = vxor.u32 %v1420, 2147483648
        %v1422 = vsel %vm1339, %v1421, %v1420
        %v1423 = vsub.s32 4, %v1399
        %v1424 = vsel %vm1339, %v1423, %v1399
        %v1425 = vsel %vm1338, %v394, %v1422
        %v1426 = vsel %vm1338, 0, %v1424
        %v1427 = vcosq.f32.pop %v1425
        %v1428 = vsinq.f32.pop %v1425
        %vm1429 = vweird.f32 %v394
        %v1430 = vadd.s32 %v1426, 3
        %v1431 = vand.u32 %v1430, 3
        %vm1432 = vcmp.lt.s32.totalorder %v1431, 2
        %vm1433 = vcmp.eq.s32.totalorder %v1431, 0
        %v1434 = vxor.u32 %v1428, 2147483648
        %v1435 = vsel %vm1433, %v1427, %v1434
        %vm1436 = vcmp.eq.s32.totalorder %v1431, 2
        %v1437 = vxor.u32 %v1427, 2147483648
        %v1438 = vsel %vm1436, %v1437, %v1428
        %v1439 = vsel %vm1432, %v1435, %v1438
        %v1440 = vsel %vm1429, nan, %v1439
        %v1441 = vand.u32 2147483647, %v395
        %vm1442 = vcmp.le.f32.partialorder %v1441, 0.7853982
        %vm1443 = vcmp.lt.s32.totalorder %v395, 0
        %v1444 = vand.u32 %v395, 2139095040
        %v1445 = vshrl.u32 %v1444, 23
        %v1446 = vsub.s32 %v1445, 127
        %v1447 = vand.u32 2147483647, %v395
        %v1448 = vand.u32 %v1447, 8388607
        %v1449 = vor.u32 %v1448, 8388608
        %v1450 = vsub.s32 0, %v1449
        %v1451 = vadd.s32 %v1446, 1
        %vm1452 = vcmp.gt.s32.totalorder %v1451, 0
        %v1453 = vsel %vm1452, %v1451, 0
        %v1454 = vshrl.u32 %v1453, 5
        %v1455 = vand.u32 %v1453, 31
        %v1456 = vsub.s32 32, %v1455
        %v1457 = vshrl.u32 683565275, %v1456
        %v1458 = vshll.u32 683565275, %v1455
        %v1459 = vshrl.u32 2475754826, %v1456
        %v1460 = vor.u32 %v1458, %v1459
        %v1461 = vshll.u32 2475754826, %v1455
        %v1462 = vshrl.u32 2131351028, %v1456
        %v1463 = vor.u32 %v1461, %v1462
        %v1464 = vshll.u32 2131351028, %v1455
        %v1465 = vshrl.u32 2102212464, %v1456
        %v1466 = vor.u32 %v1464, %v1465
        %v1467 = vshll.u32 2102212464, %v1455
        %v1468 = vshrl.u32 920167782, %v1456
        %v1469 = vor.u32 %v1467, %v1468
        %v1470 = vshll.u32 920167782, %v1455
        %v1471 = vshrl.u32 1326507024, %v1456
        %v1472 = vor.u32 %v1470, %v1471
        %vm1473 = vcmp.lt.s32.totalorder %v1454, 1
        %vm1474 = vcmp.lt.s32.totalorder %v1454, 2
        %vm1475 = vcmp.lt.s32.totalorder %v1454, 3
        %vm1476 = vcmp.lt.s32.totalorder %v1454, 4
        %v1477 = vsel %vm1473, %v1457, %v1460
        %v1478 = vsel %vm1476, %v1466, 2102212464
        %v1479 = vsel %vm1475, %v1463, %v1478
        %v1480 = vsel %vm1474, %v1477, %v1479
        %v1481 = vsel %vm1473, %v1460, %v1463
        %v1482 = vsel %vm1476, %v1469, 920167782
        %v1483 = vsel %vm1475, %v1466, %v1482
        %v1484 = vsel %vm1474, %v1481, %v1483
        %v1485 = vsel %vm1473, %v1463, %v1466
        %v1486 = vsel %vm1476, %v1472, 1326507024
        %v1487 = vsel %vm1475, %v1469, %v1486
        %v1488 = vsel %vm1474, %v1485, %v1487
        %v1489 = vshll.u32 %v1449, 8
        %v1490 = vmul.u32.u64.compose %v1489, %v1488
        %v1491 = vextract.low.u32 %v1490
        %v1492 = vextract.high.u32 %v1490
        %v1493 = vmul.u32.u64.compose %v1489, %v1484
        %v1494 = vextract.low.u32 %v1493
        %v1495 = vextract.high.u32 %v1493
        %v1496 = vmul.u32 %v1489, %v1480
        %v1497 = vadd.s32 %v1492, %v1494
        %vm1498 = vc.u32 %v1492, %v1494
        %v1499 = vadd.s32 %v1495, 1
        %v1500 = vsel %vm1498, %v1499, %v1495
        %v1501 = vadd.s32 %v1496, %v1500
        %v1502 = vadd.s32 %v1501, 536870912
        %v1503 = vshrl.u32 %v1502, 30
        %v1504 = vshll.u32 %v1503, 30
        %v1505 = vsub.s32 %v1501, %v1504
        %vm1506 = vcmp.lt.s32.totalorder %v1505, 0
        %v1507 = vsub.s32 0, %v1505
        %v1508 = vsel %vm1506, %v1507, %v1505
        %v1509 = vclz %v1508
        %v1510 = vsub.s32 %v1509, 2
        %vm1511 = vcmp.gt.s32.totalorder 0, %v1510
        %v1512 = vsel %vm1511, 0, %v1510
        %v1513 = vsub.s32 32, %v1512
        %v1514 = vshll.u32 %v1505, %v1512
        %v1515 = vshrl.u32 %v1497, %v1513
        %v1516 = vor.u32 %v1514, %v1515
        %v1517 = vsub.s32 4294967266, %v1512
        %v1518 = vadd.s32 %v1517, 127
        %v1519 = vshll.u32 %v1518, 23
        %v1520 = vor.u32 4788187, %v1519
        %v1521 = vand.u32 2147483647, %v1520
        %v1523 = vcvt.s32.f32 %v1516
        %v1524 = vmul.f32 %v1523, %v1521
        %v1525 = vxor.u32 %v1524, 2147483648
        %v1526 = vsel %vm1443, %v1525, %v1524
        %v1527 = vsub.s32 4, %v1503
        %v1528 = vsel %vm1443, %v1527, %v1503
        %v1529 = vsel %vm1442, %v395, %v1526
        %v1530 = vsel %vm1442, 0, %v1528
        %v1531 = vcosq.f32.pop %v1529
        %v1532 = vsinq.f32.pop %v1529
        %vm1533 = vweird.f32 %v395
        %v1534 = vadd.s32 %v1530, 3
        %v1535 = vand.u32 %v1534, 3
        %vm1536 = vcmp.lt.s32.totalorder %v1535, 2
        %vm1537 = vcmp.eq.s32.totalorder %v1535, 0
        %v1538 = vxor.u32 %v1532, 2147483648
        %v1539 = vsel %vm1537, %v1531, %v1538
        %vm1540 = vcmp.eq.s32.totalorder %v1535, 2
        %v1541 = vxor.u32 %v1531, 2147483648
        %v1542 = vsel %vm1540, %v1541, %v1532
        %v1543 = vsel %vm1536, %v1539, %v1542
        %v1544 = vsel %vm1533, nan, %v1543
        %v1545 = vand.u32 2147483647, %v396
        %vm1546 = vcmp.le.f32.partialorder %v1545, 0.7853982
        %vm1547 = vcmp.lt.s32.totalorder %v396, 0
        %v1548 = vand.u32 %v396, 2139095040
        %v1549 = vshrl.u32 %v1548, 23
        %v1550 = vsub.s32 %v1549, 127
        %v1551 = vand.u32 2147483647, %v396
        %v1552 = vand.u32 %v1551, 8388607
        %v1553 = vor.u32 %v1552, 8388608
        %v1554 = vsub.s32 0, %v1553
        %v1555 = vadd.s32 %v1550, 1
        %vm1556 = vcmp.gt.s32.totalorder %v1555, 0
        %v1557 = vsel %vm1556, %v1555, 0
        %v1558 = vshrl.u32 %v1557, 5
        %v1559 = vand.u32 %v1557, 31
        %v1560 = vsub.s32 32, %v1559
        %v1561 = vshrl.u32 683565275, %v1560
        %v1562 = vshll.u32 683565275, %v1559
        %v1563 = vshrl.u32 2475754826, %v1560
        %v1564 = vor.u32 %v1562, %v1563
        %v1565 = vshll.u32 2475754826, %v1559
        %v1566 = vshrl.u32 2131351028, %v1560
        %v1567 = vor.u32 %v1565, %v1566
        %v1568 = vshll.u32 2131351028, %v1559
        %v1569 = vshrl.u32 2102212464, %v1560
        %v1570 = vor.u32 %v1568, %v1569
        %v1571 = vshll.u32 2102212464, %v1559
        %v1572 = vshrl.u32 920167782, %v1560
        %v1573 = vor.u32 %v1571, %v1572
        %v1574 = vshll.u32 920167782, %v1559
        %v1575 = vshrl.u32 1326507024, %v1560
        %v1576 = vor.u32 %v1574, %v1575
        %vm1577 = vcmp.lt.s32.totalorder %v1558, 1
        %vm1578 = vcmp.lt.s32.totalorder %v1558, 2
        %vm1579 = vcmp.lt.s32.totalorder %v1558, 3
        %vm1580 = vcmp.lt.s32.totalorder %v1558, 4
        %v1581 = vsel %vm1577, %v1561, %v1564
        %v1582 = vsel %vm1580, %v1570, 2102212464
        %v1583 = vsel %vm1579, %v1567, %v1582
        %v1584 = vsel %vm1578, %v1581, %v1583
        %v1585 = vsel %vm1577, %v1564, %v1567
        %v1586 = vsel %vm1580, %v1573, 920167782
        %v1587 = vsel %vm1579, %v1570, %v1586
        %v1588 = vsel %vm1578, %v1585, %v1587
        %v1589 = vsel %vm1577, %v1567, %v1570
        %v1590 = vsel %vm1580, %v1576, 1326507024
        %v1591 = vsel %vm1579, %v1573, %v1590
        %v1592 = vsel %vm1578, %v1589, %v1591
        %v1593 = vshll.u32 %v1553, 8
        %v1594 = vmul.u32.u64.compose %v1593, %v1592
        %v1595 = vextract.low.u32 %v1594
        %v1596 = vextract.high.u32 %v1594
        %v1597 = vmul.u32.u64.compose %v1593, %v1588
        %v1598 = vextract.low.u32 %v1597
        %v1599 = vextract.high.u32 %v1597
        %v1600 = vmul.u32 %v1593, %v1584
        %v1601 = vadd.s32 %v1596, %v1598
        %vm1602 = vc.u32 %v1596, %v1598
        %v1603 = vadd.s32 %v1599, 1
        %v1604 = vsel %vm1602, %v1603, %v1599
        %v1605 = vadd.s32 %v1600, %v1604
        %v1606 = vadd.s32 %v1605, 536870912
        %v1607 = vshrl.u32 %v1606, 30
        %v1608 = vshll.u32 %v1607, 30
        %v1609 = vsub.s32 %v1605, %v1608
        %vm1610 = vcmp.lt.s32.totalorder %v1609, 0
        %v1611 = vsub.s32 0, %v1609
        %v1612 = vsel %vm1610, %v1611, %v1609
        %v1613 = vclz %v1612
        %v1614 = vsub.s32 %v1613, 2
        %vm1615 = vcmp.gt.s32.totalorder 0, %v1614
        %v1616 = vsel %vm1615, 0, %v1614
        %v1617 = vsub.s32 32, %v1616
        %v1618 = vshll.u32 %v1609, %v1616
        %v1619 = vshrl.u32 %v1601, %v1617
        %v1620 = vor.u32 %v1618, %v1619
        %v1621 = vsub.s32 4294967266, %v1616
        %v1622 = vadd.s32 %v1621, 127
        %v1623 = vshll.u32 %v1622, 23
        %v1624 = vor.u32 4788187, %v1623
        %v1625 = vand.u32 2147483647, %v1624
        %v1627 = vcvt.s32.f32 %v1620
        %v1628 = vmul.f32 %v1627, %v1625
        %v1629 = vxor.u32 %v1628, 2147483648
        %v1630 = vsel %vm1547, %v1629, %v1628
        %v1631 = vsub.s32 4, %v1607
        %v1632 = vsel %vm1547, %v1631, %v1607
        %v1633 = vsel %vm1546, %v396, %v1630
        %v1634 = vsel %vm1546, 0, %v1632
        %v1635 = vcosq.f32.pop %v1633
        %v1636 = vsinq.f32.pop %v1633
        %vm1637 = vweird.f32 %v396
        %v1638 = vadd.s32 %v1634, 3
        %v1639 = vand.u32 %v1638, 3
        %vm1640 = vcmp.lt.s32.totalorder %v1639, 2
        %vm1641 = vcmp.eq.s32.totalorder %v1639, 0
        %v1642 = vxor.u32 %v1636, 2147483648
        %v1643 = vsel %vm1641, %v1635, %v1642
        %vm1644 = vcmp.eq.s32.totalorder %v1639, 2
        %v1645 = vxor.u32 %v1635, 2147483648
        %v1646 = vsel %vm1644, %v1645, %v1636
        %v1647 = vsel %vm1640, %v1643, %v1646
        %v1648 = vsel %vm1637, nan, %v1647
        %v1649 = vand.u32 2147483647, %v397
        %vm1650 = vcmp.le.f32.partialorder %v1649, 0.7853982
        %vm1651 = vcmp.lt.s32.totalorder %v397, 0
        %v1652 = vand.u32 %v397, 2139095040
        %v1653 = vshrl.u32 %v1652, 23
        %v1654 = vsub.s32 %v1653, 127
        %v1655 = vand.u32 2147483647, %v397
        %v1656 = vand.u32 %v1655, 8388607
        %v1657 = vor.u32 %v1656, 8388608
        %v1658 = vsub.s32 0, %v1657
        %v1659 = vadd.s32 %v1654, 1
        %vm1660 = vcmp.gt.s32.totalorder %v1659, 0
        %v1661 = vsel %vm1660, %v1659, 0
        %v1662 = vshrl.u32 %v1661, 5
        %v1663 = vand.u32 %v1661, 31
        %v1664 = vsub.s32 32, %v1663
        %v1665 = vshrl.u32 683565275, %v1664
        %v1666 = vshll.u32 683565275, %v1663
        %v1667 = vshrl.u32 2475754826, %v1664
        %v1668 = vor.u32 %v1666, %v1667
        %v1669 = vshll.u32 2475754826, %v1663
        %v1670 = vshrl.u32 2131351028, %v1664
        %v1671 = vor.u32 %v1669, %v1670
        %v1672 = vshll.u32 2131351028, %v1663
        %v1673 = vshrl.u32 2102212464, %v1664
        %v1674 = vor.u32 %v1672, %v1673
        %v1675 = vshll.u32 2102212464, %v1663
        %v1676 = vshrl.u32 920167782, %v1664
        %v1677 = vor.u32 %v1675, %v1676
        %v1678 = vshll.u32 920167782, %v1663
        %v1679 = vshrl.u32 1326507024, %v1664
        %v1680 = vor.u32 %v1678, %v1679
        %vm1681 = vcmp.lt.s32.totalorder %v1662, 1
        %vm1682 = vcmp.lt.s32.totalorder %v1662, 2
        %vm1683 = vcmp.lt.s32.totalorder %v1662, 3
        %vm1684 = vcmp.lt.s32.totalorder %v1662, 4
        %v1685 = vsel %vm1681, %v1665, %v1668
        %v1686 = vsel %vm1684, %v1674, 2102212464
        %v1687 = vsel %vm1683, %v1671, %v1686
        %v1688 = vsel %vm1682, %v1685, %v1687
        %v1689 = vsel %vm1681, %v1668, %v1671
        %v1690 = vsel %vm1684, %v1677, 920167782
        %v1691 = vsel %vm1683, %v1674, %v1690
        %v1692 = vsel %vm1682, %v1689, %v1691
        %v1693 = vsel %vm1681, %v1671, %v1674
        %v1694 = vsel %vm1684, %v1680, 1326507024
        %v1695 = vsel %vm1683, %v1677, %v1694
        %v1696 = vsel %vm1682, %v1693, %v1695
        %v1697 = vshll.u32 %v1657, 8
        %v1698 = vmul.u32.u64.compose %v1697, %v1696
        %v1699 = vextract.low.u32 %v1698
        %v1700 = vextract.high.u32 %v1698
        %v1701 = vmul.u32.u64.compose %v1697, %v1692
        %v1702 = vextract.low.u32 %v1701
        %v1703 = vextract.high.u32 %v1701
        %v1704 = vmul.u32 %v1697, %v1688
        %v1705 = vadd.s32 %v1700, %v1702
        %vm1706 = vc.u32 %v1700, %v1702
        %v1707 = vadd.s32 %v1703, 1
        %v1708 = vsel %vm1706, %v1707, %v1703
        %v1709 = vadd.s32 %v1704, %v1708
        %v1710 = vadd.s32 %v1709, 536870912
        %v1711 = vshrl.u32 %v1710, 30
        %v1712 = vshll.u32 %v1711, 30
        %v1713 = vsub.s32 %v1709, %v1712
        %vm1714 = vcmp.lt.s32.totalorder %v1713, 0
        %v1715 = vsub.s32 0, %v1713
        %v1716 = vsel %vm1714, %v1715, %v1713
        %v1717 = vclz %v1716
        %v1718 = vsub.s32 %v1717, 2
        %vm1719 = vcmp.gt.s32.totalorder 0, %v1718
        %v1720 = vsel %vm1719, 0, %v1718
        %v1721 = vsub.s32 32, %v1720
        %v1722 = vshll.u32 %v1713, %v1720
        %v1723 = vshrl.u32 %v1705, %v1721
        %v1724 = vor.u32 %v1722, %v1723
        %v1725 = vsub.s32 4294967266, %v1720
        %v1726 = vadd.s32 %v1725, 127
        %v1727 = vshll.u32 %v1726, 23
        %v1728 = vor.u32 4788187, %v1727
        %v1729 = vand.u32 2147483647, %v1728
        %v1731 = vcvt.s32.f32 %v1724
        %v1732 = vmul.f32 %v1731, %v1729
        %v1733 = vxor.u32 %v1732, 2147483648
        %v1734 = vsel %vm1651, %v1733, %v1732
        %v1735 = vsub.s32 4, %v1711
        %v1736 = vsel %vm1651, %v1735, %v1711
        %v1737 = vsel %vm1650, %v397, %v1734
        %v1738 = vsel %vm1650, 0, %v1736
        %v1739 = vcosq.f32.pop %v1737
        %v1740 = vsinq.f32.pop %v1737
        %vm1741 = vweird.f32 %v397
        %v1742 = vadd.s32 %v1738, 3
        %v1743 = vand.u32 %v1742, 3
        %vm1744 = vcmp.lt.s32.totalorder %v1743, 2
        %vm1745 = vcmp.eq.s32.totalorder %v1743, 0
        %v1746 = vxor.u32 %v1740, 2147483648
        %v1747 = vsel %vm1745, %v1739, %v1746
        %vm1748 = vcmp.eq.s32.totalorder %v1743, 2
        %v1749 = vxor.u32 %v1739, 2147483648
        %v1750 = vsel %vm1748, %v1749, %v1740
        %v1751 = vsel %vm1744, %v1747, %v1750
        %v1752 = vsel %vm1741, nan, %v1751
        %v1753 = vand.u32 2147483647, %v398
        %vm1754 = vcmp.le.f32.partialorder %v1753, 0.7853982
        %vm1755 = vcmp.lt.s32.totalorder %v398, 0
        %v1756 = vand.u32 %v398, 2139095040
        %v1757 = vshrl.u32 %v1756, 23
        %v1758 = vsub.s32 %v1757, 127
        %v1759 = vand.u32 2147483647, %v398
        %v1760 = vand.u32 %v1759, 8388607
        %v1761 = vor.u32 %v1760, 8388608
        %v1762 = vsub.s32 0, %v1761
        %v1763 = vadd.s32 %v1758, 1
        %vm1764 = vcmp.gt.s32.totalorder %v1763, 0
        %v1765 = vsel %vm1764, %v1763, 0
        %v1766 = vshrl.u32 %v1765, 5
        %v1767 = vand.u32 %v1765, 31
        %v1768 = vsub.s32 32, %v1767
        %v1769 = vshrl.u32 683565275, %v1768
        %v1770 = vshll.u32 683565275, %v1767
        %v1771 = vshrl.u32 2475754826, %v1768
        %v1772 = vor.u32 %v1770, %v1771
        %v1773 = vshll.u32 2475754826, %v1767
        %v1774 = vshrl.u32 2131351028, %v1768
        %v1775 = vor.u32 %v1773, %v1774
        %v1776 = vshll.u32 2131351028, %v1767
        %v1777 = vshrl.u32 2102212464, %v1768
        %v1778 = vor.u32 %v1776, %v1777
        %v1779 = vshll.u32 2102212464, %v1767
        %v1780 = vshrl.u32 920167782, %v1768
        %v1781 = vor.u32 %v1779, %v1780
        %v1782 = vshll.u32 920167782, %v1767
        %v1783 = vshrl.u32 1326507024, %v1768
        %v1784 = vor.u32 %v1782, %v1783
        %vm1785 = vcmp.lt.s32.totalorder %v1766, 1
        %vm1786 = vcmp.lt.s32.totalorder %v1766, 2
        %vm1787 = vcmp.lt.s32.totalorder %v1766, 3
        %vm1788 = vcmp.lt.s32.totalorder %v1766, 4
        %v1789 = vsel %vm1785, %v1769, %v1772
        %v1790 = vsel %vm1788, %v1778, 2102212464
        %v1791 = vsel %vm1787, %v1775, %v1790
        %v1792 = vsel %vm1786, %v1789, %v1791
        %v1793 = vsel %vm1785, %v1772, %v1775
        %v1794 = vsel %vm1788, %v1781, 920167782
        %v1795 = vsel %vm1787, %v1778, %v1794
        %v1796 = vsel %vm1786, %v1793, %v1795
        %v1797 = vsel %vm1785, %v1775, %v1778
        %v1798 = vsel %vm1788, %v1784, 1326507024
        %v1799 = vsel %vm1787, %v1781, %v1798
        %v1800 = vsel %vm1786, %v1797, %v1799
        %v1801 = vshll.u32 %v1761, 8
        %v1802 = vmul.u32.u64.compose %v1801, %v1800
        %v1803 = vextract.low.u32 %v1802
        %v1804 = vextract.high.u32 %v1802
        %v1805 = vmul.u32.u64.compose %v1801, %v1796
        %v1806 = vextract.low.u32 %v1805
        %v1807 = vextract.high.u32 %v1805
        %v1808 = vmul.u32 %v1801, %v1792
        %v1809 = vadd.s32 %v1804, %v1806
        %vm1810 = vc.u32 %v1804, %v1806
        %v1811 = vadd.s32 %v1807, 1
        %v1812 = vsel %vm1810, %v1811, %v1807
        %v1813 = vadd.s32 %v1808, %v1812
        %v1814 = vadd.s32 %v1813, 536870912
        %v1815 = vshrl.u32 %v1814, 30
        %v1816 = vshll.u32 %v1815, 30
        %v1817 = vsub.s32 %v1813, %v1816
        %vm1818 = vcmp.lt.s32.totalorder %v1817, 0
        %v1819 = vsub.s32 0, %v1817
        %v1820 = vsel %vm1818, %v1819, %v1817
        %v1821 = vclz %v1820
        %v1822 = vsub.s32 %v1821, 2
        %vm1823 = vcmp.gt.s32.totalorder 0, %v1822
        %v1824 = vsel %vm1823, 0, %v1822
        %v1825 = vsub.s32 32, %v1824
        %v1826 = vshll.u32 %v1817, %v1824
        %v1827 = vshrl.u32 %v1809, %v1825
        %v1828 = vor.u32 %v1826, %v1827
        %v1829 = vsub.s32 4294967266, %v1824
        %v1830 = vadd.s32 %v1829, 127
        %v1831 = vshll.u32 %v1830, 23
        %v1832 = vor.u32 4788187, %v1831
        %v1833 = vand.u32 2147483647, %v1832
        %v1835 = vcvt.s32.f32 %v1828
        %v1836 = vmul.f32 %v1835, %v1833
        %v1837 = vxor.u32 %v1836, 2147483648
        %v1838 = vsel %vm1755, %v1837, %v1836
        %v1839 = vsub.s32 4, %v1815
        %v1840 = vsel %vm1755, %v1839, %v1815
        %v1841 = vsel %vm1754, %v398, %v1838
        %v1842 = vsel %vm1754, 0, %v1840
        %v1843 = vcosq.f32.pop %v1841
        %v1844 = vsinq.f32.pop %v1841
        %vm1845 = vweird.f32 %v398
        %v1846 = vadd.s32 %v1842, 3
        %v1847 = vand.u32 %v1846, 3
        %vm1848 = vcmp.lt.s32.totalorder %v1847, 2
        %vm1849 = vcmp.eq.s32.totalorder %v1847, 0
        %v1850 = vxor.u32 %v1844, 2147483648
        %v1851 = vsel %vm1849, %v1843, %v1850
        %vm1852 = vcmp.eq.s32.totalorder %v1847, 2
        %v1853 = vxor.u32 %v1843, 2147483648
        %v1854 = vsel %vm1852, %v1853, %v1844
        %v1855 = vsel %vm1848, %v1851, %v1854
        %v1856 = vsel %vm1845, nan, %v1855
        %v1857 = vand.u32 2147483647, %v399
        %vm1858 = vcmp.le.f32.partialorder %v1857, 0.7853982
        %vm1859 = vcmp.lt.s32.totalorder %v399, 0
        %v1860 = vand.u32 %v399, 2139095040
        %v1861 = vshrl.u32 %v1860, 23
        %v1862 = vsub.s32 %v1861, 127
        %v1863 = vand.u32 2147483647, %v399
        %v1864 = vand.u32 %v1863, 8388607
        %v1865 = vor.u32 %v1864, 8388608
        %v1866 = vsub.s32 0, %v1865
        %v1867 = vadd.s32 %v1862, 1
        %vm1868 = vcmp.gt.s32.totalorder %v1867, 0
        %v1869 = vsel %vm1868, %v1867, 0
        %v1870 = vshrl.u32 %v1869, 5
        %v1871 = vand.u32 %v1869, 31
        %v1872 = vsub.s32 32, %v1871
        %v1873 = vshrl.u32 683565275, %v1872
        %v1874 = vshll.u32 683565275, %v1871
        %v1875 = vshrl.u32 2475754826, %v1872
        %v1876 = vor.u32 %v1874, %v1875
        %v1877 = vshll.u32 2475754826, %v1871
        %v1878 = vshrl.u32 2131351028, %v1872
        %v1879 = vor.u32 %v1877, %v1878
        %v1880 = vshll.u32 2131351028, %v1871
        %v1881 = vshrl.u32 2102212464, %v1872
        %v1882 = vor.u32 %v1880, %v1881
        %v1883 = vshll.u32 2102212464, %v1871
        %v1884 = vshrl.u32 920167782, %v1872
        %v1885 = vor.u32 %v1883, %v1884
        %v1886 = vshll.u32 920167782, %v1871
        %v1887 = vshrl.u32 1326507024, %v1872
        %v1888 = vor.u32 %v1886, %v1887
        %vm1889 = vcmp.lt.s32.totalorder %v1870, 1
        %vm1890 = vcmp.lt.s32.totalorder %v1870, 2
        %vm1891 = vcmp.lt.s32.totalorder %v1870, 3
        %vm1892 = vcmp.lt.s32.totalorder %v1870, 4
        %v1893 = vsel %vm1889, %v1873, %v1876
        %v1894 = vsel %vm1892, %v1882, 2102212464
        %v1895 = vsel %vm1891, %v1879, %v1894
        %v1896 = vsel %vm1890, %v1893, %v1895
        %v1897 = vsel %vm1889, %v1876, %v1879
        %v1898 = vsel %vm1892, %v1885, 920167782
        %v1899 = vsel %vm1891, %v1882, %v1898
        %v1900 = vsel %vm1890, %v1897, %v1899
        %v1901 = vsel %vm1889, %v1879, %v1882
        %v1902 = vsel %vm1892, %v1888, 1326507024
        %v1903 = vsel %vm1891, %v1885, %v1902
        %v1904 = vsel %vm1890, %v1901, %v1903
        %v1905 = vshll.u32 %v1865, 8
        %v1906 = vmul.u32.u64.compose %v1905, %v1904
        %v1907 = vextract.low.u32 %v1906
        %v1908 = vextract.high.u32 %v1906
        %v1909 = vmul.u32.u64.compose %v1905, %v1900
        %v1910 = vextract.low.u32 %v1909
        %v1911 = vextract.high.u32 %v1909
        %v1912 = vmul.u32 %v1905, %v1896
        %v1913 = vadd.s32 %v1908, %v1910
        %vm1914 = vc.u32 %v1908, %v1910
        %v1915 = vadd.s32 %v1911, 1
        %v1916 = vsel %vm1914, %v1915, %v1911
        %v1917 = vadd.s32 %v1912, %v1916
        %v1918 = vadd.s32 %v1917, 536870912
        %v1919 = vshrl.u32 %v1918, 30
        %v1920 = vshll.u32 %v1919, 30
        %v1921 = vsub.s32 %v1917, %v1920
        %vm1922 = vcmp.lt.s32.totalorder %v1921, 0
        %v1923 = vsub.s32 0, %v1921
        %v1924 = vsel %vm1922, %v1923, %v1921
        %v1925 = vclz %v1924
        %v1926 = vsub.s32 %v1925, 2
        %vm1927 = vcmp.gt.s32.totalorder 0, %v1926
        %v1928 = vsel %vm1927, 0, %v1926
        %v1929 = vsub.s32 32, %v1928
        %v1930 = vshll.u32 %v1921, %v1928
        %v1931 = vshrl.u32 %v1913, %v1929
        %v1932 = vor.u32 %v1930, %v1931
        %v1933 = vsub.s32 4294967266, %v1928
        %v1934 = vadd.s32 %v1933, 127
        %v1935 = vshll.u32 %v1934, 23
        %v1936 = vor.u32 4788187, %v1935
        %v1937 = vand.u32 2147483647, %v1936
        %v1939 = vcvt.s32.f32 %v1932
        %v1940 = vmul.f32 %v1939, %v1937
        %v1941 = vxor.u32 %v1940, 2147483648
        %v1942 = vsel %vm1859, %v1941, %v1940
        %v1943 = vsub.s32 4, %v1919
        %v1944 = vsel %vm1859, %v1943, %v1919
        %v1945 = vsel %vm1858, %v399, %v1942
        %v1946 = vsel %vm1858, 0, %v1944
        %v1947 = vcosq.f32.pop %v1945
        %v1948 = vsinq.f32.pop %v1945
        %vm1949 = vweird.f32 %v399
        %v1950 = vadd.s32 %v1946, 3
        %v1951 = vand.u32 %v1950, 3
        %vm1952 = vcmp.lt.s32.totalorder %v1951, 2
        %vm1953 = vcmp.eq.s32.totalorder %v1951, 0
        %v1954 = vxor.u32 %v1948, 2147483648
        %v1955 = vsel %vm1953, %v1947, %v1954
        %vm1956 = vcmp.eq.s32.totalorder %v1951, 2
        %v1957 = vxor.u32 %v1947, 2147483648
        %v1958 = vsel %vm1956, %v1957, %v1948
        %v1959 = vsel %vm1952, %v1955, %v1958
        %v1960 = vsel %vm1949, nan, %v1959
        %v1961 = vand.u32 2147483647, %v400
        %vm1962 = vcmp.le.f32.partialorder %v1961, 0.7853982
        %vm1963 = vcmp.lt.s32.totalorder %v400, 0
        %v1964 = vand.u32 %v400, 2139095040
        %v1965 = vshrl.u32 %v1964, 23
        %v1966 = vsub.s32 %v1965, 127
        %v1967 = vand.u32 2147483647, %v400
        %v1968 = vand.u32 %v1967, 8388607
        %v1969 = vor.u32 %v1968, 8388608
        %v1970 = vsub.s32 0, %v1969
        %v1971 = vadd.s32 %v1966, 1
        %vm1972 = vcmp.gt.s32.totalorder %v1971, 0
        %v1973 = vsel %vm1972, %v1971, 0
        %v1974 = vshrl.u32 %v1973, 5
        %v1975 = vand.u32 %v1973, 31
        %v1976 = vsub.s32 32, %v1975
        %v1977 = vshrl.u32 683565275, %v1976
        %v1978 = vshll.u32 683565275, %v1975
        %v1979 = vshrl.u32 2475754826, %v1976
        %v1980 = vor.u32 %v1978, %v1979
        %v1981 = vshll.u32 2475754826, %v1975
        %v1982 = vshrl.u32 2131351028, %v1976
        %v1983 = vor.u32 %v1981, %v1982
        %v1984 = vshll.u32 2131351028, %v1975
        %v1985 = vshrl.u32 2102212464, %v1976
        %v1986 = vor.u32 %v1984, %v1985
        %v1987 = vshll.u32 2102212464, %v1975
        %v1988 = vshrl.u32 920167782, %v1976
        %v1989 = vor.u32 %v1987, %v1988
        %v1990 = vshll.u32 920167782, %v1975
        %v1991 = vshrl.u32 1326507024, %v1976
        %v1992 = vor.u32 %v1990, %v1991
        %vm1993 = vcmp.lt.s32.totalorder %v1974, 1
        %vm1994 = vcmp.lt.s32.totalorder %v1974, 2
        %vm1995 = vcmp.lt.s32.totalorder %v1974, 3
        %vm1996 = vcmp.lt.s32.totalorder %v1974, 4
        %v1997 = vsel %vm1993, %v1977, %v1980
        %v1998 = vsel %vm1996, %v1986, 2102212464
        %v1999 = vsel %vm1995, %v1983, %v1998
        %v2000 = vsel %vm1994, %v1997, %v1999
        %v2001 = vsel %vm1993, %v1980, %v1983
        %v2002 = vsel %vm1996, %v1989, 920167782
        %v2003 = vsel %vm1995, %v1986, %v2002
        %v2004 = vsel %vm1994, %v2001, %v2003
        %v2005 = vsel %vm1993, %v1983, %v1986
        %v2006 = vsel %vm1996, %v1992, 1326507024
        %v2007 = vsel %vm1995, %v1989, %v2006
        %v2008 = vsel %vm1994, %v2005, %v2007
        %v2009 = vshll.u32 %v1969, 8
        %v2010 = vmul.u32.u64.compose %v2009, %v2008
        %v2011 = vextract.low.u32 %v2010
        %v2012 = vextract.high.u32 %v2010
        %v2013 = vmul.u32.u64.compose %v2009, %v2004
        %v2014 = vextract.low.u32 %v2013
        %v2015 = vextract.high.u32 %v2013
        %v2016 = vmul.u32 %v2009, %v2000
        %v2017 = vadd.s32 %v2012, %v2014
        %vm2018 = vc.u32 %v2012, %v2014
        %v2019 = vadd.s32 %v2015, 1
        %v2020 = vsel %vm2018, %v2019, %v2015
        %v2021 = vadd.s32 %v2016, %v2020
        %v2022 = vadd.s32 %v2021, 536870912
        %v2023 = vshrl.u32 %v2022, 30
        %v2024 = vshll.u32 %v2023, 30
        %v2025 = vsub.s32 %v2021, %v2024
        %vm2026 = vcmp.lt.s32.totalorder %v2025, 0
        %v2027 = vsub.s32 0, %v2025
        %v2028 = vsel %vm2026, %v2027, %v2025
        %v2029 = vclz %v2028
        %v2030 = vsub.s32 %v2029, 2
        %vm2031 = vcmp.gt.s32.totalorder 0, %v2030
        %v2032 = vsel %vm2031, 0, %v2030
        %v2033 = vsub.s32 32, %v2032
        %v2034 = vshll.u32 %v2025, %v2032
        %v2035 = vshrl.u32 %v2017, %v2033
        %v2036 = vor.u32 %v2034, %v2035
        %v2037 = vsub.s32 4294967266, %v2032
        %v2038 = vadd.s32 %v2037, 127
        %v2039 = vshll.u32 %v2038, 23
        %v2040 = vor.u32 4788187, %v2039
        %v2041 = vand.u32 2147483647, %v2040
        %v2043 = vcvt.s32.f32 %v2036
        %v2044 = vmul.f32 %v2043, %v2041
        %v2045 = vxor.u32 %v2044, 2147483648
        %v2046 = vsel %vm1963, %v2045, %v2044
        %v2047 = vsub.s32 4, %v2023
        %v2048 = vsel %vm1963, %v2047, %v2023
        %v2049 = vsel %vm1962, %v400, %v2046
        %v2050 = vsel %vm1962, 0, %v2048
        %v2051 = vcosq.f32.pop %v2049
        %v2052 = vsinq.f32.pop %v2049
        %vm2053 = vweird.f32 %v400
        %v2054 = vadd.s32 %v2050, 3
        %v2055 = vand.u32 %v2054, 3
        %vm2056 = vcmp.lt.s32.totalorder %v2055, 2
        %vm2057 = vcmp.eq.s32.totalorder %v2055, 0
        %v2058 = vxor.u32 %v2052, 2147483648
        %v2059 = vsel %vm2057, %v2051, %v2058
        %vm2060 = vcmp.eq.s32.totalorder %v2055, 2
        %v2061 = vxor.u32 %v2051, 2147483648
        %v2062 = vsel %vm2060, %v2061, %v2052
        %v2063 = vsel %vm2056, %v2059, %v2062
        %v2064 = vsel %vm2053, nan, %v2063
        %2066 = vset.pattern.permute.xlu0 0
        %2067 = vperm.xlu0 %2066, %v204
        %v2068 = vpop.permute.xlu0 %2067
        %2071 = vset.pattern.permute.xlu0 0
        %2072 = vperm.xlu0 %2071, %v205
        %v2073 = vpop.permute.xlu0 %2072
        %2076 = vset.pattern.permute.xlu0 0
        %2077 = vperm.xlu0 %2076, %v206
        %v2078 = vpop.permute.xlu0 %2077
        %2081 = vset.pattern.permute.xlu0 0
        %2082 = vperm.xlu0 %2081, %v207
        %v2083 = vpop.permute.xlu0 %2082
        %vm2085 = vcmask 261120
        %v2087 = vsel %vm2085, %v199, 0
        %v2090 = vsel %vm2085, %v200, 0
        %v2093 = vsel %vm2085, %v201, 0
        %v2096 = vsel %vm2085, %v202, 0
        %2098 = vmatprep.subr.mxu0 %v608
        %2099 = vmatpush1.msra.mxu0 %v504
        %2100 = vmatprep.subr.mxu0 %v1024
        %2101 = vmatpush1.msra.mxu0 %v920
        %2102 = vmatprep.subr.mxu0 %v1440
        %2103 = vmatpush1.msra.mxu0 %v1336
        %2104 = vmatprep.subr.mxu0 %v1856
        %2105 = vmatpush1.msra.mxu0 %v1752
        %2106 = vmatprep.subr.mxu0 0.0
        %2107 = vmatpush1.msra.mxu0 0.0
        %2108 = vmatprep.subr.mxu0 0.0
        %2109 = vmatpush1.msra.mxu0 0.0
        %2110 = vmatprep.subr.mxu0 0.0
        %2111 = vmatpush1.msra.mxu0 0.0
        %2112 = vmatprep.subr.mxu0 0.0
        %2113 = vmatpush1.msra.mxu0 0.0
        %2114 = vmatprep.subr.mxu0 0.0
        %2115 = vmatpush1.msra.mxu0 0.0
        %2116 = vmatprep.subr.mxu0 0.0
        %2117 = vmatpush1.msra.mxu0 0.0
        %2118 = vmatprep.subr.mxu0 0.0
        %2119 = vmatpush1.msra.mxu0 0.0
        %2120 = vmatprep.subr.mxu0 0.0
        %2121 = vmatpush1.msra.mxu0 0.0
        %2122 = vmatprep.subr.mxu0 0.0
        %2123 = vmatpush1.msra.mxu0 0.0
        %2124 = vmatprep.subr.mxu0 0.0
        %2125 = vmatpush1.msra.mxu0 0.0
        %2126 = vmatprep.subr.mxu0 0.0
        %2127 = vmatpush1.msra.mxu0 0.0
        %2128 = vmatprep.subr.mxu0 0.0
        %2129 = vmatpush1.msra.mxu0 0.0
        %2130 = vmatprep.subr.mxu0 0.0
        %2131 = vmatpush1.msra.mxu0 0.0
        %2132 = vmatprep.subr.mxu0 0.0
        %2133 = vmatpush1.msra.mxu0 0.0
        %2134 = vmatprep.subr.mxu0 0.0
        %2135 = vmatpush1.msra.mxu0 0.0
        %2136 = vmatprep.subr.mxu0 0.0
        %2137 = vmatpush1.msra.mxu0 0.0
        %2138 = vmatprep.subr.mxu0 0.0
        %2139 = vmatpush1.msra.mxu0 0.0
        %2140 = vmatprep.subr.mxu0 0.0
        %2141 = vmatpush1.msra.mxu0 0.0
        %2142 = vmatprep.subr.mxu0 0.0
        %2143 = vmatpush1.msra.mxu0 0.0
        %2144 = vmatprep.subr.mxu0 0.0
        %2145 = vmatpush1.msra.mxu0 0.0
        %2146 = vmatprep.subr.mxu0 0.0
        %2147 = vmatpush1.msra.mxu0 0.0
        %2148 = vmatprep.subr.mxu0 0.0
        %2149 = vmatpush1.msra.mxu0 0.0
        %2150 = vmatprep.subr.mxu0 0.0
        %2151 = vmatpush1.msra.mxu0 0.0
        %2152 = vmatprep.subr.mxu0 0.0
        %2153 = vmatpush1.msra.mxu0 0.0
        %2154 = vmatprep.subr.mxu0 0.0
        %2155 = vmatpush1.msra.mxu0 0.0
        %2156 = vmatprep.subr.mxu0 0.0
        %2157 = vmatpush1.msra.mxu0 0.0
        %2158 = vmatprep.subr.mxu0 0.0
        %2159 = vmatpush1.msra.mxu0 0.0
        %2160 = vmatprep.subr.mxu0 0.0
        %2161 = vmatpush1.msra.mxu0 0.0
        %2162 = vmatprep.mubr.f32.mxu0 0.0
        %2163 = vmatmul.mubr.f32.gmra.mrb[0].mxu0 %v2087
        %v2164 = vpop.f32.mrb[0].mxu0
        %v2165 = vadd.f32 %v2068, %v2164
        %v2166 = vpop.f32.mrb[0].mxu0
        %v2167 = vadd.f32 %v2068, %v2166
        %2168 = vmatprep.mubr.f32.mxu0 0.0
        %2169 = vmatmul.mubr.f32.gmra.mrb[0].mxu0 %v2090
        %v2170 = vpop.f32.mrb[0].mxu0
        %v2171 = vadd.f32 %v2073, %v2170
        %v2172 = vpop.f32.mrb[0].mxu0
        %v2173 = vadd.f32 %v2073, %v2172
        %2174 = vmatprep.mubr.f32.mxu0 0.0
        %2175 = vmatmul.mubr.f32.gmra.mrb[0].mxu0 %v2093
        %v2176 = vpop.f32.mrb[0].mxu0
        %v2177 = vadd.f32 %v2078, %v2176
        %v2178 = vpop.f32.mrb[0].mxu0
        %v2179 = vadd.f32 %v2078, %v2178
        %2180 = vmatprep.mubr.f32.mxu0 0.0
        %2181 = vmatmul.mubr.f32.gmra.mrb[0].mxu0 %v2096
        %v2182 = vpop.f32.mrb[0].mxu0
        %v2183 = vadd.f32 %v2083, %v2182
        %v2184 = vpop.f32.mrb[0].mxu0
        %v2185 = vadd.f32 %v2083, %v2184
        %2186 = vdwg.mxu0
        %2187 = vmatprep.subr.mxu0 %v816
        %2188 = vmatpush1.msra.mxu0 %v712
        %2189 = vmatprep.subr.mxu0 %v1232
        %2190 = vmatpush1.msra.mxu0 %v1128
        %2191 = vmatprep.subr.mxu0 %v1648
        %2192 = vmatpush1.msra.mxu0 %v1544
        %2193 = vmatprep.subr.mxu0 %v2064
        %2194 = vmatpush1.msra.mxu0 %v1960
        %2195 = vmatprep.subr.mxu0 0.0
        %2196 = vmatpush1.msra.mxu0 0.0
        %2197 = vmatprep.subr.mxu0 0.0
        %2198 = vmatpush1.msra.mxu0 0.0
        %2199 = vmatprep.subr.mxu0 0.0
        %2200 = vmatpush1.msra.mxu0 0.0
        %2201 = vmatprep.subr.mxu0 0.0
        %2202 = vmatpush1.msra.mxu0 0.0
        %2203 = vmatprep.subr.mxu0 0.0
        %2204 = vmatpush1.msra.mxu0 0.0
        %2205 = vmatprep.subr.mxu0 0.0
        %2206 = vmatpush1.msra.mxu0 0.0
        %2207 = vmatprep.subr.mxu0 0.0
        %2208 = vmatpush1.msra.mxu0 0.0
        %2209 = vmatprep.subr.mxu0 0.0
        %2210 = vmatpush1.msra.mxu0 0.0
        %2211 = vmatprep.subr.mxu0 0.0
        %2212 = vmatpush1.msra.mxu0 0.0
        %2213 = vmatprep.subr.mxu0 0.0
        %2214 = vmatpush1.msra.mxu0 0.0
        %2215 = vmatprep.subr.mxu0 0.0
        %2216 = vmatpush1.msra.mxu0 0.0
        %2217 = vmatprep.subr.mxu0 0.0
        %2218 = vmatpush1.msra.mxu0 0.0
        %2219 = vmatprep.subr.mxu0 0.0
        %2220 = vmatpush1.msra.mxu0 0.0
        %2221 = vmatprep.subr.mxu0 0.0
        %2222 = vmatpush1.msra.mxu0 0.0
        %2223 = vmatprep.subr.mxu0 0.0
        %2224 = vmatpush1.msra.mxu0 0.0
        %2225 = vmatprep.subr.mxu0 0.0
        %2226 = vmatpush1.msra.mxu0 0.0
        %2227 = vmatprep.subr.mxu0 0.0
        %2228 = vmatpush1.msra.mxu0 0.0
        %2229 = vmatprep.subr.mxu0 0.0
        %2230 = vmatpush1.msra.mxu0 0.0
        %2231 = vmatprep.subr.mxu0 0.0
        %2232 = vmatpush1.msra.mxu0 0.0
        %2233 = vmatprep.subr.mxu0 0.0
        %2234 = vmatpush1.msra.mxu0 0.0
        %2235 = vmatprep.subr.mxu0 0.0
        %2236 = vmatpush1.msra.mxu0 0.0
        %2237 = vmatprep.subr.mxu0 0.0
        %2238 = vmatpush1.msra.mxu0 0.0
        %2239 = vmatprep.subr.mxu0 0.0
        %2240 = vmatpush1.msra.mxu0 0.0
        %2241 = vmatprep.subr.mxu0 0.0
        %2242 = vmatpush1.msra.mxu0 0.0
        %2243 = vmatprep.subr.mxu0 0.0
        %2244 = vmatpush1.msra.mxu0 0.0
        %2245 = vmatprep.subr.mxu0 0.0
        %2246 = vmatpush1.msra.mxu0 0.0
        %2247 = vmatprep.subr.mxu0 0.0
        %2248 = vmatpush1.msra.mxu0 0.0
        %2249 = vmatprep.subr.mxu0 0.0
        %2250 = vmatpush1.msra.mxu0 0.0
        %2251 = vmatprep.mubr.f32.mxu0 0.0
        %2252 = vmatmul.mubr.f32.gmra.mrb[0].mxu0 %v2087
        %v2253 = vpop.f32.mrb[0].mxu0
        %v2254 = vadd.f32 %v2068, %v2253
        %v2255 = vpop.f32.mrb[0].mxu0
        %v2256 = vadd.f32 %v2068, %v2255
        %2257 = vmatprep.mubr.f32.mxu0 0.0
        %2258 = vmatmul.mubr.f32.gmra.mrb[0].mxu0 %v2090
        %v2259 = vpop.f32.mrb[0].mxu0
        %v2260 = vadd.f32 %v2073, %v2259
        %v2261 = vpop.f32.mrb[0].mxu0
        %v2262 = vadd.f32 %v2073, %v2261
        %2263 = vmatprep.mubr.f32.mxu0 0.0
        %2264 = vmatmul.mubr.f32.gmra.mrb[0].mxu0 %v2093
        %v2265 = vpop.f32.mrb[0].mxu0
        %v2266 = vadd.f32 %v2078, %v2265
        %v2267 = vpop.f32.mrb[0].mxu0
        %v2268 = vadd.f32 %v2078, %v2267
        %2269 = vmatprep.mubr.f32.mxu0 0.0
        %2270 = vmatmul.mubr.f32.gmra.mrb[0].mxu0 %v2096
        %v2271 = vpop.f32.mrb[0].mxu0
        %v2272 = vadd.f32 %v2083, %v2271
        %v2273 = vpop.f32.mrb[0].mxu0
        %v2274 = vadd.f32 %v2083, %v2273
        %2275 = vdwg.mxu0
        %v2276 = vand.u32 2147483647, %v2165
        %vm2277 = vcmp.le.f32.partialorder %v2276, 0.7853982
        %vm2278 = vcmp.lt.s32.totalorder %v2165, 0
        %v2279 = vand.u32 %v2165, 2139095040
        %v2280 = vshrl.u32 %v2279, 23
        %v2281 = vsub.s32 %v2280, 127
        %v2282 = vand.u32 2147483647, %v2165
        %v2283 = vand.u32 %v2282, 8388607
        %v2284 = vor.u32 %v2283, 8388608
        %v2285 = vsub.s32 0, %v2284
        %v2286 = vadd.s32 %v2281, 1
        %vm2287 = vcmp.gt.s32.totalorder %v2286, 0
        %v2288 = vsel %vm2287, %v2286, 0
        %v2289 = vshrl.u32 %v2288, 5
        %v2290 = vand.u32 %v2288, 31
        %v2291 = vsub.s32 32, %v2290
        %v2292 = vshrl.u32 683565275, %v2291
        %v2293 = vshll.u32 683565275, %v2290
        %v2294 = vshrl.u32 2475754826, %v2291
        %v2295 = vor.u32 %v2293, %v2294
        %v2296 = vshll.u32 2475754826, %v2290
        %v2297 = vshrl.u32 2131351028, %v2291
        %v2298 = vor.u32 %v2296, %v2297
        %v2299 = vshll.u32 2131351028, %v2290
        %v2300 = vshrl.u32 2102212464, %v2291
        %v2301 = vor.u32 %v2299, %v2300
        %v2302 = vshll.u32 2102212464, %v2290
        %v2303 = vshrl.u32 920167782, %v2291
        %v2304 = vor.u32 %v2302, %v2303
        %v2305 = vshll.u32 920167782, %v2290
        %v2306 = vshrl.u32 1326507024, %v2291
        %v2307 = vor.u32 %v2305, %v2306
        %vm2308 = vcmp.lt.s32.totalorder %v2289, 1
        %vm2309 = vcmp.lt.s32.totalorder %v2289, 2
        %vm2310 = vcmp.lt.s32.totalorder %v2289, 3
        %vm2311 = vcmp.lt.s32.totalorder %v2289, 4
        %v2312 = vsel %vm2308, %v2292, %v2295
        %v2313 = vsel %vm2311, %v2301, 2102212464
        %v2314 = vsel %vm2310, %v2298, %v2313
        %v2315 = vsel %vm2309, %v2312, %v2314
        %v2316 = vsel %vm2308, %v2295, %v2298
        %v2317 = vsel %vm2311, %v2304, 920167782
        %v2318 = vsel %vm2310, %v2301, %v2317
        %v2319 = vsel %vm2309, %v2316, %v2318
        %v2320 = vsel %vm2308, %v2298, %v2301
        %v2321 = vsel %vm2311, %v2307, 1326507024
        %v2322 = vsel %vm2310, %v2304, %v2321
        %v2323 = vsel %vm2309, %v2320, %v2322
        %v2324 = vshll.u32 %v2284, 8
        %v2325 = vmul.u32.u64.compose %v2324, %v2323
        %v2326 = vextract.low.u32 %v2325
        %v2327 = vextract.high.u32 %v2325
        %v2328 = vmul.u32.u64.compose %v2324, %v2319
        %v2329 = vextract.low.u32 %v2328
        %v2330 = vextract.high.u32 %v2328
        %v2331 = vmul.u32 %v2324, %v2315
        %v2332 = vadd.s32 %v2327, %v2329
        %vm2333 = vc.u32 %v2327, %v2329
        %v2334 = vadd.s32 %v2330, 1
        %v2335 = vsel %vm2333, %v2334, %v2330
        %v2336 = vadd.s32 %v2331, %v2335
        %v2337 = vadd.s32 %v2336, 536870912
        %v2338 = vshrl.u32 %v2337, 30
        %v2339 = vshll.u32 %v2338, 30
        %v2340 = vsub.s32 %v2336, %v2339
        %vm2341 = vcmp.lt.s32.totalorder %v2340, 0
        %v2342 = vsub.s32 0, %v2340
        %v2343 = vsel %vm2341, %v2342, %v2340
        %v2344 = vclz %v2343
        %v2345 = vsub.s32 %v2344, 2
        %vm2346 = vcmp.gt.s32.totalorder 0, %v2345
        %v2347 = vsel %vm2346, 0, %v2345
        %v2348 = vsub.s32 32, %v2347
        %v2349 = vshll.u32 %v2340, %v2347
        %v2350 = vshrl.u32 %v2332, %v2348
        %v2351 = vor.u32 %v2349, %v2350
        %v2352 = vsub.s32 4294967266, %v2347
        %v2353 = vadd.s32 %v2352, 127
        %v2354 = vshll.u32 %v2353, 23
        %v2355 = vor.u32 4788187, %v2354
        %v2356 = vand.u32 2147483647, %v2355
        %v2358 = vcvt.s32.f32 %v2351
        %v2359 = vmul.f32 %v2358, %v2356
        %v2360 = vxor.u32 %v2359, 2147483648
        %v2361 = vsel %vm2278, %v2360, %v2359
        %v2362 = vsub.s32 4, %v2338
        %v2363 = vsel %vm2278, %v2362, %v2338
        %v2364 = vsel %vm2277, %v2165, %v2361
        %v2365 = vsel %vm2277, 0, %v2363
        %v2366 = vcosq.f32.pop %v2364
        %v2367 = vsinq.f32.pop %v2364
        %vm2368 = vweird.f32 %v2165
        %v2369 = vadd.s32 %v2365, 3
        %v2370 = vand.u32 %v2369, 3
        %vm2371 = vcmp.lt.s32.totalorder %v2370, 2
        %vm2372 = vcmp.eq.s32.totalorder %v2370, 0
        %v2373 = vxor.u32 %v2367, 2147483648
        %v2374 = vsel %vm2372, %v2366, %v2373
        %vm2375 = vcmp.eq.s32.totalorder %v2370, 2
        %v2376 = vxor.u32 %v2366, 2147483648
        %v2377 = vsel %vm2375, %v2376, %v2367
        %v2378 = vsel %vm2371, %v2374, %v2377
        %v2379 = vsel %vm2368, nan, %v2378
        %v2380 = vand.u32 2147483647, %v2167
        %vm2381 = vcmp.le.f32.partialorder %v2380, 0.7853982
        %vm2382 = vcmp.lt.s32.totalorder %v2167, 0
        %v2383 = vand.u32 %v2167, 2139095040
        %v2384 = vshrl.u32 %v2383, 23
        %v2385 = vsub.s32 %v2384, 127
        %v2386 = vand.u32 2147483647, %v2167
        %v2387 = vand.u32 %v2386, 8388607
        %v2388 = vor.u32 %v2387, 8388608
        %v2389 = vsub.s32 0, %v2388
        %v2390 = vadd.s32 %v2385, 1
        %vm2391 = vcmp.gt.s32.totalorder %v2390, 0
        %v2392 = vsel %vm2391, %v2390, 0
        %v2393 = vshrl.u32 %v2392, 5
        %v2394 = vand.u32 %v2392, 31
        %v2395 = vsub.s32 32, %v2394
        %v2396 = vshrl.u32 683565275, %v2395
        %v2397 = vshll.u32 683565275, %v2394
        %v2398 = vshrl.u32 2475754826, %v2395
        %v2399 = vor.u32 %v2397, %v2398
        %v2400 = vshll.u32 2475754826, %v2394
        %v2401 = vshrl.u32 2131351028, %v2395
        %v2402 = vor.u32 %v2400, %v2401
        %v2403 = vshll.u32 2131351028, %v2394
        %v2404 = vshrl.u32 2102212464, %v2395
        %v2405 = vor.u32 %v2403, %v2404
        %v2406 = vshll.u32 2102212464, %v2394
        %v2407 = vshrl.u32 920167782, %v2395
        %v2408 = vor.u32 %v2406, %v2407
        %v2409 = vshll.u32 920167782, %v2394
        %v2410 = vshrl.u32 1326507024, %v2395
        %v2411 = vor.u32 %v2409, %v2410
        %vm2412 = vcmp.lt.s32.totalorder %v2393, 1
        %vm2413 = vcmp.lt.s32.totalorder %v2393, 2
        %vm2414 = vcmp.lt.s32.totalorder %v2393, 3
        %vm2415 = vcmp.lt.s32.totalorder %v2393, 4
        %v2416 = vsel %vm2412, %v2396, %v2399
        %v2417 = vsel %vm2415, %v2405, 2102212464
        %v2418 = vsel %vm2414, %v2402, %v2417
        %v2419 = vsel %vm2413, %v2416, %v2418
        %v2420 = vsel %vm2412, %v2399, %v2402
        %v2421 = vsel %vm2415, %v2408, 920167782
        %v2422 = vsel %vm2414, %v2405, %v2421
        %v2423 = vsel %vm2413, %v2420, %v2422
        %v2424 = vsel %vm2412, %v2402, %v2405
        %v2425 = vsel %vm2415, %v2411, 1326507024
        %v2426 = vsel %vm2414, %v2408, %v2425
        %v2427 = vsel %vm2413, %v2424, %v2426
        %v2428 = vshll.u32 %v2388, 8
        %v2429 = vmul.u32.u64.compose %v2428, %v2427
        %v2430 = vextract.low.u32 %v2429
        %v2431 = vextract.high.u32 %v2429
        %v2432 = vmul.u32.u64.compose %v2428, %v2423
        %v2433 = vextract.low.u32 %v2432
        %v2434 = vextract.high.u32 %v2432
        %v2435 = vmul.u32 %v2428, %v2419
        %v2436 = vadd.s32 %v2431, %v2433
        %vm2437 = vc.u32 %v2431, %v2433
        %v2438 = vadd.s32 %v2434, 1
        %v2439 = vsel %vm2437, %v2438, %v2434
        %v2440 = vadd.s32 %v2435, %v2439
        %v2441 = vadd.s32 %v2440, 536870912
        %v2442 = vshrl.u32 %v2441, 30
        %v2443 = vshll.u32 %v2442, 30
        %v2444 = vsub.s32 %v2440, %v2443
        %vm2445 = vcmp.lt.s32.totalorder %v2444, 0
        %v2446 = vsub.s32 0, %v2444
        %v2447 = vsel %vm2445, %v2446, %v2444
        %v2448 = vclz %v2447
        %v2449 = vsub.s32 %v2448, 2
        %vm2450 = vcmp.gt.s32.totalorder 0, %v2449
        %v2451 = vsel %vm2450, 0, %v2449
        %v2452 = vsub.s32 32, %v2451
        %v2453 = vshll.u32 %v2444, %v2451
        %v2454 = vshrl.u32 %v2436, %v2452
        %v2455 = vor.u32 %v2453, %v2454
        %v2456 = vsub.s32 4294967266, %v2451
        %v2457 = vadd.s32 %v2456, 127
        %v2458 = vshll.u32 %v2457, 23
        %v2459 = vor.u32 4788187, %v2458
        %v2460 = vand.u32 2147483647, %v2459
        %v2462 = vcvt.s32.f32 %v2455
        %v2463 = vmul.f32 %v2462, %v2460
        %v2464 = vxor.u32 %v2463, 2147483648
        %v2465 = vsel %vm2382, %v2464, %v2463
        %v2466 = vsub.s32 4, %v2442
        %v2467 = vsel %vm2382, %v2466, %v2442
        %v2468 = vsel %vm2381, %v2167, %v2465
        %v2469 = vsel %vm2381, 0, %v2467
        %v2470 = vcosq.f32.pop %v2468
        %v2471 = vsinq.f32.pop %v2468
        %vm2472 = vweird.f32 %v2167
        %v2473 = vadd.s32 %v2469, 3
        %v2474 = vand.u32 %v2473, 3
        %vm2475 = vcmp.lt.s32.totalorder %v2474, 2
        %vm2476 = vcmp.eq.s32.totalorder %v2474, 0
        %v2477 = vxor.u32 %v2471, 2147483648
        %v2478 = vsel %vm2476, %v2470, %v2477
        %vm2479 = vcmp.eq.s32.totalorder %v2474, 2
        %v2480 = vxor.u32 %v2470, 2147483648
        %v2481 = vsel %vm2479, %v2480, %v2471
        %v2482 = vsel %vm2475, %v2478, %v2481
        %v2483 = vsel %vm2472, nan, %v2482
        %v2484 = vand.u32 2147483647, %v2254
        %vm2485 = vcmp.le.f32.partialorder %v2484, 0.7853982
        %vm2486 = vcmp.lt.s32.totalorder %v2254, 0
        %v2487 = vand.u32 %v2254, 2139095040
        %v2488 = vshrl.u32 %v2487, 23
        %v2489 = vsub.s32 %v2488, 127
        %v2490 = vand.u32 2147483647, %v2254
        %v2491 = vand.u32 %v2490, 8388607
        %v2492 = vor.u32 %v2491, 8388608
        %v2493 = vsub.s32 0, %v2492
        %v2494 = vadd.s32 %v2489, 1
        %vm2495 = vcmp.gt.s32.totalorder %v2494, 0
        %v2496 = vsel %vm2495, %v2494, 0
        %v2497 = vshrl.u32 %v2496, 5
        %v2498 = vand.u32 %v2496, 31
        %v2499 = vsub.s32 32, %v2498
        %v2500 = vshrl.u32 683565275, %v2499
        %v2501 = vshll.u32 683565275, %v2498
        %v2502 = vshrl.u32 2475754826, %v2499
        %v2503 = vor.u32 %v2501, %v2502
        %v2504 = vshll.u32 2475754826, %v2498
        %v2505 = vshrl.u32 2131351028, %v2499
        %v2506 = vor.u32 %v2504, %v2505
        %v2507 = vshll.u32 2131351028, %v2498
        %v2508 = vshrl.u32 2102212464, %v2499
        %v2509 = vor.u32 %v2507, %v2508
        %v2510 = vshll.u32 2102212464, %v2498
        %v2511 = vshrl.u32 920167782, %v2499
        %v2512 = vor.u32 %v2510, %v2511
        %v2513 = vshll.u32 920167782, %v2498
        %v2514 = vshrl.u32 1326507024, %v2499
        %v2515 = vor.u32 %v2513, %v2514
        %vm2516 = vcmp.lt.s32.totalorder %v2497, 1
        %vm2517 = vcmp.lt.s32.totalorder %v2497, 2
        %vm2518 = vcmp.lt.s32.totalorder %v2497, 3
        %vm2519 = vcmp.lt.s32.totalorder %v2497, 4
        %v2520 = vsel %vm2516, %v2500, %v2503
        %v2521 = vsel %vm2519, %v2509, 2102212464
        %v2522 = vsel %vm2518, %v2506, %v2521
        %v2523 = vsel %vm2517, %v2520, %v2522
        %v2524 = vsel %vm2516, %v2503, %v2506
        %v2525 = vsel %vm2519, %v2512, 920167782
        %v2526 = vsel %vm2518, %v2509, %v2525
        %v2527 = vsel %vm2517, %v2524, %v2526
        %v2528 = vsel %vm2516, %v2506, %v2509
        %v2529 = vsel %vm2519, %v2515, 1326507024
        %v2530 = vsel %vm2518, %v2512, %v2529
        %v2531 = vsel %vm2517, %v2528, %v2530
        %v2532 = vshll.u32 %v2492, 8
        %v2533 = vmul.u32.u64.compose %v2532, %v2531
        %v2534 = vextract.low.u32 %v2533
        %v2535 = vextract.high.u32 %v2533
        %v2536 = vmul.u32.u64.compose %v2532, %v2527
        %v2537 = vextract.low.u32 %v2536
        %v2538 = vextract.high.u32 %v2536
        %v2539 = vmul.u32 %v2532, %v2523
        %v2540 = vadd.s32 %v2535, %v2537
        %vm2541 = vc.u32 %v2535, %v2537
        %v2542 = vadd.s32 %v2538, 1
        %v2543 = vsel %vm2541, %v2542, %v2538
        %v2544 = vadd.s32 %v2539, %v2543
        %v2545 = vadd.s32 %v2544, 536870912
        %v2546 = vshrl.u32 %v2545, 30
        %v2547 = vshll.u32 %v2546, 30
        %v2548 = vsub.s32 %v2544, %v2547
        %vm2549 = vcmp.lt.s32.totalorder %v2548, 0
        %v2550 = vsub.s32 0, %v2548
        %v2551 = vsel %vm2549, %v2550, %v2548
        %v2552 = vclz %v2551
        %v2553 = vsub.s32 %v2552, 2
        %vm2554 = vcmp.gt.s32.totalorder 0, %v2553
        %v2555 = vsel %vm2554, 0, %v2553
        %v2556 = vsub.s32 32, %v2555
        %v2557 = vshll.u32 %v2548, %v2555
        %v2558 = vshrl.u32 %v2540, %v2556
        %v2559 = vor.u32 %v2557, %v2558
        %v2560 = vsub.s32 4294967266, %v2555
        %v2561 = vadd.s32 %v2560, 127
        %v2562 = vshll.u32 %v2561, 23
        %v2563 = vor.u32 4788187, %v2562
        %v2564 = vand.u32 2147483647, %v2563
        %v2566 = vcvt.s32.f32 %v2559
        %v2567 = vmul.f32 %v2566, %v2564
        %v2568 = vxor.u32 %v2567, 2147483648
        %v2569 = vsel %vm2486, %v2568, %v2567
        %v2570 = vsub.s32 4, %v2546
        %v2571 = vsel %vm2486, %v2570, %v2546
        %v2572 = vsel %vm2485, %v2254, %v2569
        %v2573 = vsel %vm2485, 0, %v2571
        %v2574 = vcosq.f32.pop %v2572
        %v2575 = vsinq.f32.pop %v2572
        %vm2576 = vweird.f32 %v2254
        %v2577 = vadd.s32 %v2573, 3
        %v2578 = vand.u32 %v2577, 3
        %vm2579 = vcmp.lt.s32.totalorder %v2578, 2
        %vm2580 = vcmp.eq.s32.totalorder %v2578, 0
        %v2581 = vxor.u32 %v2575, 2147483648
        %v2582 = vsel %vm2580, %v2574, %v2581
        %vm2583 = vcmp.eq.s32.totalorder %v2578, 2
        %v2584 = vxor.u32 %v2574, 2147483648
        %v2585 = vsel %vm2583, %v2584, %v2575
        %v2586 = vsel %vm2579, %v2582, %v2585
        %v2587 = vsel %vm2576, nan, %v2586
        %v2588 = vand.u32 2147483647, %v2256
        %vm2589 = vcmp.le.f32.partialorder %v2588, 0.7853982
        %vm2590 = vcmp.lt.s32.totalorder %v2256, 0
        %v2591 = vand.u32 %v2256, 2139095040
        %v2592 = vshrl.u32 %v2591, 23
        %v2593 = vsub.s32 %v2592, 127
        %v2594 = vand.u32 2147483647, %v2256
        %v2595 = vand.u32 %v2594, 8388607
        %v2596 = vor.u32 %v2595, 8388608
        %v2597 = vsub.s32 0, %v2596
        %v2598 = vadd.s32 %v2593, 1
        %vm2599 = vcmp.gt.s32.totalorder %v2598, 0
        %v2600 = vsel %vm2599, %v2598, 0
        %v2601 = vshrl.u32 %v2600, 5
        %v2602 = vand.u32 %v2600, 31
        %v2603 = vsub.s32 32, %v2602
        %v2604 = vshrl.u32 683565275, %v2603
        %v2605 = vshll.u32 683565275, %v2602
        %v2606 = vshrl.u32 2475754826, %v2603
        %v2607 = vor.u32 %v2605, %v2606
        %v2608 = vshll.u32 2475754826, %v2602
        %v2609 = vshrl.u32 2131351028, %v2603
        %v2610 = vor.u32 %v2608, %v2609
        %v2611 = vshll.u32 2131351028, %v2602
        %v2612 = vshrl.u32 2102212464, %v2603
        %v2613 = vor.u32 %v2611, %v2612
        %v2614 = vshll.u32 2102212464, %v2602
        %v2615 = vshrl.u32 920167782, %v2603
        %v2616 = vor.u32 %v2614, %v2615
        %v2617 = vshll.u32 920167782, %v2602
        %v2618 = vshrl.u32 1326507024, %v2603
        %v2619 = vor.u32 %v2617, %v2618
        %vm2620 = vcmp.lt.s32.totalorder %v2601, 1
        %vm2621 = vcmp.lt.s32.totalorder %v2601, 2
        %vm2622 = vcmp.lt.s32.totalorder %v2601, 3
        %vm2623 = vcmp.lt.s32.totalorder %v2601, 4
        %v2624 = vsel %vm2620, %v2604, %v2607
        %v2625 = vsel %vm2623, %v2613, 2102212464
        %v2626 = vsel %vm2622, %v2610, %v2625
        %v2627 = vsel %vm2621, %v2624, %v2626
        %v2628 = vsel %vm2620, %v2607, %v2610
        %v2629 = vsel %vm2623, %v2616, 920167782
        %v2630 = vsel %vm2622, %v2613, %v2629
        %v2631 = vsel %vm2621, %v2628, %v2630
        %v2632 = vsel %vm2620, %v2610, %v2613
        %v2633 = vsel %vm2623, %v2619, 1326507024
        %v2634 = vsel %vm2622, %v2616, %v2633
        %v2635 = vsel %vm2621, %v2632, %v2634
        %v2636 = vshll.u32 %v2596, 8
        %v2637 = vmul.u32.u64.compose %v2636, %v2635
        %v2638 = vextract.low.u32 %v2637
        %v2639 = vextract.high.u32 %v2637
        %v2640 = vmul.u32.u64.compose %v2636, %v2631
        %v2641 = vextract.low.u32 %v2640
        %v2642 = vextract.high.u32 %v2640
        %v2643 = vmul.u32 %v2636, %v2627
        %v2644 = vadd.s32 %v2639, %v2641
        %vm2645 = vc.u32 %v2639, %v2641
        %v2646 = vadd.s32 %v2642, 1
        %v2647 = vsel %vm2645, %v2646, %v2642
        %v2648 = vadd.s32 %v2643, %v2647
        %v2649 = vadd.s32 %v2648, 536870912
        %v2650 = vshrl.u32 %v2649, 30
        %v2651 = vshll.u32 %v2650, 30
        %v2652 = vsub.s32 %v2648, %v2651
        %vm2653 = vcmp.lt.s32.totalorder %v2652, 0
        %v2654 = vsub.s32 0, %v2652
        %v2655 = vsel %vm2653, %v2654, %v2652
        %v2656 = vclz %v2655
        %v2657 = vsub.s32 %v2656, 2
        %vm2658 = vcmp.gt.s32.totalorder 0, %v2657
        %v2659 = vsel %vm2658, 0, %v2657
        %v2660 = vsub.s32 32, %v2659
        %v2661 = vshll.u32 %v2652, %v2659
        %v2662 = vshrl.u32 %v2644, %v2660
        %v2663 = vor.u32 %v2661, %v2662
        %v2664 = vsub.s32 4294967266, %v2659
        %v2665 = vadd.s32 %v2664, 127
        %v2666 = vshll.u32 %v2665, 23
        %v2667 = vor.u32 4788187, %v2666
        %v2668 = vand.u32 2147483647, %v2667
        %v2670 = vcvt.s32.f32 %v2663
        %v2671 = vmul.f32 %v2670, %v2668
        %v2672 = vxor.u32 %v2671, 2147483648
        %v2673 = vsel %vm2590, %v2672, %v2671
        %v2674 = vsub.s32 4, %v2650
        %v2675 = vsel %vm2590, %v2674, %v2650
        %v2676 = vsel %vm2589, %v2256, %v2673
        %v2677 = vsel %vm2589, 0, %v2675
        %v2678 = vcosq.f32.pop %v2676
        %v2679 = vsinq.f32.pop %v2676
        %vm2680 = vweird.f32 %v2256
        %v2681 = vadd.s32 %v2677, 3
        %v2682 = vand.u32 %v2681, 3
        %vm2683 = vcmp.lt.s32.totalorder %v2682, 2
        %vm2684 = vcmp.eq.s32.totalorder %v2682, 0
        %v2685 = vxor.u32 %v2679, 2147483648
        %v2686 = vsel %vm2684, %v2678, %v2685
        %vm2687 = vcmp.eq.s32.totalorder %v2682, 2
        %v2688 = vxor.u32 %v2678, 2147483648
        %v2689 = vsel %vm2687, %v2688, %v2679
        %v2690 = vsel %vm2683, %v2686, %v2689
        %v2691 = vsel %vm2680, nan, %v2690
        %v2692 = vand.u32 2147483647, %v2171
        %vm2693 = vcmp.le.f32.partialorder %v2692, 0.7853982
        %vm2694 = vcmp.lt.s32.totalorder %v2171, 0
        %v2695 = vand.u32 %v2171, 2139095040
        %v2696 = vshrl.u32 %v2695, 23
        %v2697 = vsub.s32 %v2696, 127
        %v2698 = vand.u32 2147483647, %v2171
        %v2699 = vand.u32 %v2698, 8388607
        %v2700 = vor.u32 %v2699, 8388608
        %v2701 = vsub.s32 0, %v2700
        %v2702 = vadd.s32 %v2697, 1
        %vm2703 = vcmp.gt.s32.totalorder %v2702, 0
        %v2704 = vsel %vm2703, %v2702, 0
        %v2705 = vshrl.u32 %v2704, 5
        %v2706 = vand.u32 %v2704, 31
        %v2707 = vsub.s32 32, %v2706
        %v2708 = vshrl.u32 683565275, %v2707
        %v2709 = vshll.u32 683565275, %v2706
        %v2710 = vshrl.u32 2475754826, %v2707
        %v2711 = vor.u32 %v2709, %v2710
        %v2712 = vshll.u32 2475754826, %v2706
        %v2713 = vshrl.u32 2131351028, %v2707
        %v2714 = vor.u32 %v2712, %v2713
        %v2715 = vshll.u32 2131351028, %v2706
        %v2716 = vshrl.u32 2102212464, %v2707
        %v2717 = vor.u32 %v2715, %v2716
        %v2718 = vshll.u32 2102212464, %v2706
        %v2719 = vshrl.u32 920167782, %v2707
        %v2720 = vor.u32 %v2718, %v2719
        %v2721 = vshll.u32 920167782, %v2706
        %v2722 = vshrl.u32 1326507024, %v2707
        %v2723 = vor.u32 %v2721, %v2722
        %vm2724 = vcmp.lt.s32.totalorder %v2705, 1
        %vm2725 = vcmp.lt.s32.totalorder %v2705, 2
        %vm2726 = vcmp.lt.s32.totalorder %v2705, 3
        %vm2727 = vcmp.lt.s32.totalorder %v2705, 4
        %v2728 = vsel %vm2724, %v2708, %v2711
        %v2729 = vsel %vm2727, %v2717, 2102212464
        %v2730 = vsel %vm2726, %v2714, %v2729
        %v2731 = vsel %vm2725, %v2728, %v2730
        %v2732 = vsel %vm2724, %v2711, %v2714
        %v2733 = vsel %vm2727, %v2720, 920167782
        %v2734 = vsel %vm2726, %v2717, %v2733
        %v2735 = vsel %vm2725, %v2732, %v2734
        %v2736 = vsel %vm2724, %v2714, %v2717
        %v2737 = vsel %vm2727, %v2723, 1326507024
        %v2738 = vsel %vm2726, %v2720, %v2737
        %v2739 = vsel %vm2725, %v2736, %v2738
        %v2740 = vshll.u32 %v2700, 8
        %v2741 = vmul.u32.u64.compose %v2740, %v2739
        %v2742 = vextract.low.u32 %v2741
        %v2743 = vextract.high.u32 %v2741
        %v2744 = vmul.u32.u64.compose %v2740, %v2735
        %v2745 = vextract.low.u32 %v2744
        %v2746 = vextract.high.u32 %v2744
        %v2747 = vmul.u32 %v2740, %v2731
        %v2748 = vadd.s32 %v2743, %v2745
        %vm2749 = vc.u32 %v2743, %v2745
        %v2750 = vadd.s32 %v2746, 1
        %v2751 = vsel %vm2749, %v2750, %v2746
        %v2752 = vadd.s32 %v2747, %v2751
        %v2753 = vadd.s32 %v2752, 536870912
        %v2754 = vshrl.u32 %v2753, 30
        %v2755 = vshll.u32 %v2754, 30
        %v2756 = vsub.s32 %v2752, %v2755
        %vm2757 = vcmp.lt.s32.totalorder %v2756, 0
        %v2758 = vsub.s32 0, %v2756
        %v2759 = vsel %vm2757, %v2758, %v2756
        %v2760 = vclz %v2759
        %v2761 = vsub.s32 %v2760, 2
        %vm2762 = vcmp.gt.s32.totalorder 0, %v2761
        %v2763 = vsel %vm2762, 0, %v2761
        %v2764 = vsub.s32 32, %v2763
        %v2765 = vshll.u32 %v2756, %v2763
        %v2766 = vshrl.u32 %v2748, %v2764
        %v2767 = vor.u32 %v2765, %v2766
        %v2768 = vsub.s32 4294967266, %v2763
        %v2769 = vadd.s32 %v2768, 127
        %v2770 = vshll.u32 %v2769, 23
        %v2771 = vor.u32 4788187, %v2770
        %v2772 = vand.u32 2147483647, %v2771
        %v2774 = vcvt.s32.f32 %v2767
        %v2775 = vmul.f32 %v2774, %v2772
        %v2776 = vxor.u32 %v2775, 2147483648
        %v2777 = vsel %vm2694, %v2776, %v2775
        %v2778 = vsub.s32 4, %v2754
        %v2779 = vsel %vm2694, %v2778, %v2754
        %v2780 = vsel %vm2693, %v2171, %v2777
        %v2781 = vsel %vm2693, 0, %v2779
        %v2782 = vcosq.f32.pop %v2780
        %v2783 = vsinq.f32.pop %v2780
        %vm2784 = vweird.f32 %v2171
        %v2785 = vadd.s32 %v2781, 3
        %v2786 = vand.u32 %v2785, 3
        %vm2787 = vcmp.lt.s32.totalorder %v2786, 2
        %vm2788 = vcmp.eq.s32.totalorder %v2786, 0
        %v2789 = vxor.u32 %v2783, 2147483648
        %v2790 = vsel %vm2788, %v2782, %v2789
        %vm2791 = vcmp.eq.s32.totalorder %v2786, 2
        %v2792 = vxor.u32 %v2782, 2147483648
        %v2793 = vsel %vm2791, %v2792, %v2783
        %v2794 = vsel %vm2787, %v2790, %v2793
        %v2795 = vsel %vm2784, nan, %v2794
        %v2796 = vand.u32 2147483647, %v2173
        %vm2797 = vcmp.le.f32.partialorder %v2796, 0.7853982
        %vm2798 = vcmp.lt.s32.totalorder %v2173, 0
        %v2799 = vand.u32 %v2173, 2139095040
        %v2800 = vshrl.u32 %v2799, 23
        %v2801 = vsub.s32 %v2800, 127
        %v2802 = vand.u32 2147483647, %v2173
        %v2803 = vand.u32 %v2802, 8388607
        %v2804 = vor.u32 %v2803, 8388608
        %v2805 = vsub.s32 0, %v2804
        %v2806 = vadd.s32 %v2801, 1
        %vm2807 = vcmp.gt.s32.totalorder %v2806, 0
        %v2808 = vsel %vm2807, %v2806, 0
        %v2809 = vshrl.u32 %v2808, 5
        %v2810 = vand.u32 %v2808, 31
        %v2811 = vsub.s32 32, %v2810
        %v2812 = vshrl.u32 683565275, %v2811
        %v2813 = vshll.u32 683565275, %v2810
        %v2814 = vshrl.u32 2475754826, %v2811
        %v2815 = vor.u32 %v2813, %v2814
        %v2816 = vshll.u32 2475754826, %v2810
        %v2817 = vshrl.u32 2131351028, %v2811
        %v2818 = vor.u32 %v2816, %v2817
        %v2819 = vshll.u32 2131351028, %v2810
        %v2820 = vshrl.u32 2102212464, %v2811
        %v2821 = vor.u32 %v2819, %v2820
        %v2822 = vshll.u32 2102212464, %v2810
        %v2823 = vshrl.u32 920167782, %v2811
        %v2824 = vor.u32 %v2822, %v2823
        %v2825 = vshll.u32 920167782, %v2810
        %v2826 = vshrl.u32 1326507024, %v2811
        %v2827 = vor.u32 %v2825, %v2826
        %vm2828 = vcmp.lt.s32.totalorder %v2809, 1
        %vm2829 = vcmp.lt.s32.totalorder %v2809, 2
        %vm2830 = vcmp.lt.s32.totalorder %v2809, 3
        %vm2831 = vcmp.lt.s32.totalorder %v2809, 4
        %v2832 = vsel %vm2828, %v2812, %v2815
        %v2833 = vsel %vm2831, %v2821, 2102212464
        %v2834 = vsel %vm2830, %v2818, %v2833
        %v2835 = vsel %vm2829, %v2832, %v2834
        %v2836 = vsel %vm2828, %v2815, %v2818
        %v2837 = vsel %vm2831, %v2824, 920167782
        %v2838 = vsel %vm2830, %v2821, %v2837
        %v2839 = vsel %vm2829, %v2836, %v2838
        %v2840 = vsel %vm2828, %v2818, %v2821
        %v2841 = vsel %vm2831, %v2827, 1326507024
        %v2842 = vsel %vm2830, %v2824, %v2841
        %v2843 = vsel %vm2829, %v2840, %v2842
        %v2844 = vshll.u32 %v2804, 8
        %v2845 = vmul.u32.u64.compose %v2844, %v2843
        %v2846 = vextract.low.u32 %v2845
        %v2847 = vextract.high.u32 %v2845
        %v2848 = vmul.u32.u64.compose %v2844, %v2839
        %v2849 = vextract.low.u32 %v2848
        %v2850 = vextract.high.u32 %v2848
        %v2851 = vmul.u32 %v2844, %v2835
        %v2852 = vadd.s32 %v2847, %v2849
        %vm2853 = vc.u32 %v2847, %v2849
        %v2854 = vadd.s32 %v2850, 1
        %v2855 = vsel %vm2853, %v2854, %v2850
        %v2856 = vadd.s32 %v2851, %v2855
        %v2857 = vadd.s32 %v2856, 536870912
        %v2858 = vshrl.u32 %v2857, 30
        %v2859 = vshll.u32 %v2858, 30
        %v2860 = vsub.s32 %v2856, %v2859
        %vm2861 = vcmp.lt.s32.totalorder %v2860, 0
        %v2862 = vsub.s32 0, %v2860
        %v2863 = vsel %vm2861, %v2862, %v2860
        %v2864 = vclz %v2863
        %v2865 = vsub.s32 %v2864, 2
        %vm2866 = vcmp.gt.s32.totalorder 0, %v2865
        %v2867 = vsel %vm2866, 0, %v2865
        %v2868 = vsub.s32 32, %v2867
        %v2869 = vshll.u32 %v2860, %v2867
        %v2870 = vshrl.u32 %v2852, %v2868
        %v2871 = vor.u32 %v2869, %v2870
        %v2872 = vsub.s32 4294967266, %v2867
        %v2873 = vadd.s32 %v2872, 127
        %v2874 = vshll.u32 %v2873, 23
        %v2875 = vor.u32 4788187, %v2874
        %v2876 = vand.u32 2147483647, %v2875
        %v2878 = vcvt.s32.f32 %v2871
        %v2879 = vmul.f32 %v2878, %v2876
        %v2880 = vxor.u32 %v2879, 2147483648
        %v2881 = vsel %vm2798, %v2880, %v2879
        %v2882 = vsub.s32 4, %v2858
        %v2883 = vsel %vm2798, %v2882, %v2858
        %v2884 = vsel %vm2797, %v2173, %v2881
        %v2885 = vsel %vm2797, 0, %v2883
        %v2886 = vcosq.f32.pop %v2884
        %v2887 = vsinq.f32.pop %v2884
        %vm2888 = vweird.f32 %v2173
        %v2889 = vadd.s32 %v2885, 3
        %v2890 = vand.u32 %v2889, 3
        %vm2891 = vcmp.lt.s32.totalorder %v2890, 2
        %vm2892 = vcmp.eq.s32.totalorder %v2890, 0
        %v2893 = vxor.u32 %v2887, 2147483648
        %v2894 = vsel %vm2892, %v2886, %v2893
        %vm2895 = vcmp.eq.s32.totalorder %v2890, 2
        %v2896 = vxor.u32 %v2886, 2147483648
        %v2897 = vsel %vm2895, %v2896, %v2887
        %v2898 = vsel %vm2891, %v2894, %v2897
        %v2899 = vsel %vm2888, nan, %v2898
        %v2900 = vand.u32 2147483647, %v2260
        %vm2901 = vcmp.le.f32.partialorder %v2900, 0.7853982
        %vm2902 = vcmp.lt.s32.totalorder %v2260, 0
        %v2903 = vand.u32 %v2260, 2139095040
        %v2904 = vshrl.u32 %v2903, 23
        %v2905 = vsub.s32 %v2904, 127
        %v2906 = vand.u32 2147483647, %v2260
        %v2907 = vand.u32 %v2906, 8388607
        %v2908 = vor.u32 %v2907, 8388608
        %v2909 = vsub.s32 0, %v2908
        %v2910 = vadd.s32 %v2905, 1
        %vm2911 = vcmp.gt.s32.totalorder %v2910, 0
        %v2912 = vsel %vm2911, %v2910, 0
        %v2913 = vshrl.u32 %v2912, 5
        %v2914 = vand.u32 %v2912, 31
        %v2915 = vsub.s32 32, %v2914
        %v2916 = vshrl.u32 683565275, %v2915
        %v2917 = vshll.u32 683565275, %v2914
        %v2918 = vshrl.u32 2475754826, %v2915
        %v2919 = vor.u32 %v2917, %v2918
        %v2920 = vshll.u32 2475754826, %v2914
        %v2921 = vshrl.u32 2131351028, %v2915
        %v2922 = vor.u32 %v2920, %v2921
        %v2923 = vshll.u32 2131351028, %v2914
        %v2924 = vshrl.u32 2102212464, %v2915
        %v2925 = vor.u32 %v2923, %v2924
        %v2926 = vshll.u32 2102212464, %v2914
        %v2927 = vshrl.u32 920167782, %v2915
        %v2928 = vor.u32 %v2926, %v2927
        %v2929 = vshll.u32 920167782, %v2914
        %v2930 = vshrl.u32 1326507024, %v2915
        %v2931 = vor.u32 %v2929, %v2930
        %vm2932 = vcmp.lt.s32.totalorder %v2913, 1
        %vm2933 = vcmp.lt.s32.totalorder %v2913, 2
        %vm2934 = vcmp.lt.s32.totalorder %v2913, 3
        %vm2935 = vcmp.lt.s32.totalorder %v2913, 4
        %v2936 = vsel %vm2932, %v2916, %v2919
        %v2937 = vsel %vm2935, %v2925, 2102212464
        %v2938 = vsel %vm2934, %v2922, %v2937
        %v2939 = vsel %vm2933, %v2936, %v2938
        %v2940 = vsel %vm2932, %v2919, %v2922
        %v2941 = vsel %vm2935, %v2928, 920167782
        %v2942 = vsel %vm2934, %v2925, %v2941
        %v2943 = vsel %vm2933, %v2940, %v2942
        %v2944 = vsel %vm2932, %v2922, %v2925
        %v2945 = vsel %vm2935, %v2931, 1326507024
        %v2946 = vsel %vm2934, %v2928, %v2945
        %v2947 = vsel %vm2933, %v2944, %v2946
        %v2948 = vshll.u32 %v2908, 8
        %v2949 = vmul.u32.u64.compose %v2948, %v2947
        %v2950 = vextract.low.u32 %v2949
        %v2951 = vextract.high.u32 %v2949
        %v2952 = vmul.u32.u64.compose %v2948, %v2943
        %v2953 = vextract.low.u32 %v2952
        %v2954 = vextract.high.u32 %v2952
        %v2955 = vmul.u32 %v2948, %v2939
        %v2956 = vadd.s32 %v2951, %v2953
        %vm2957 = vc.u32 %v2951, %v2953
        %v2958 = vadd.s32 %v2954, 1
        %v2959 = vsel %vm2957, %v2958, %v2954
        %v2960 = vadd.s32 %v2955, %v2959
        %v2961 = vadd.s32 %v2960, 536870912
        %v2962 = vshrl.u32 %v2961, 30
        %v2963 = vshll.u32 %v2962, 30
        %v2964 = vsub.s32 %v2960, %v2963
        %vm2965 = vcmp.lt.s32.totalorder %v2964, 0
        %v2966 = vsub.s32 0, %v2964
        %v2967 = vsel %vm2965, %v2966, %v2964
        %v2968 = vclz %v2967
        %v2969 = vsub.s32 %v2968, 2
        %vm2970 = vcmp.gt.s32.totalorder 0, %v2969
        %v2971 = vsel %vm2970, 0, %v2969
        %v2972 = vsub.s32 32, %v2971
        %v2973 = vshll.u32 %v2964, %v2971
        %v2974 = vshrl.u32 %v2956, %v2972
        %v2975 = vor.u32 %v2973, %v2974
        %v2976 = vsub.s32 4294967266, %v2971
        %v2977 = vadd.s32 %v2976, 127
        %v2978 = vshll.u32 %v2977, 23
        %v2979 = vor.u32 4788187, %v2978
        %v2980 = vand.u32 2147483647, %v2979
        %v2982 = vcvt.s32.f32 %v2975
        %v2983 = vmul.f32 %v2982, %v2980
        %v2984 = vxor.u32 %v2983, 2147483648
        %v2985 = vsel %vm2902, %v2984, %v2983
        %v2986 = vsub.s32 4, %v2962
        %v2987 = vsel %vm2902, %v2986, %v2962
        %v2988 = vsel %vm2901, %v2260, %v2985
        %v2989 = vsel %vm2901, 0, %v2987
        %v2990 = vcosq.f32.pop %v2988
        %v2991 = vsinq.f32.pop %v2988
        %vm2992 = vweird.f32 %v2260
        %v2993 = vadd.s32 %v2989, 3
        %v2994 = vand.u32 %v2993, 3
        %vm2995 = vcmp.lt.s32.totalorder %v2994, 2
        %vm2996 = vcmp.eq.s32.totalorder %v2994, 0
        %v2997 = vxor.u32 %v2991, 2147483648
        %v2998 = vsel %vm2996, %v2990, %v2997
        %vm2999 = vcmp.eq.s32.totalorder %v2994, 2
        %v3000 = vxor.u32 %v2990, 2147483648
        %v3001 = vsel %vm2999, %v3000, %v2991
        %v3002 = vsel %vm2995, %v2998, %v3001
        %v3003 = vsel %vm2992, nan, %v3002
        %v3004 = vand.u32 2147483647, %v2262
        %vm3005 = vcmp.le.f32.partialorder %v3004, 0.7853982
        %vm3006 = vcmp.lt.s32.totalorder %v2262, 0
        %v3007 = vand.u32 %v2262, 2139095040
        %v3008 = vshrl.u32 %v3007, 23
        %v3009 = vsub.s32 %v3008, 127
        %v3010 = vand.u32 2147483647, %v2262
        %v3011 = vand.u32 %v3010, 8388607
        %v3012 = vor.u32 %v3011, 8388608
        %v3013 = vsub.s32 0, %v3012
        %v3014 = vadd.s32 %v3009, 1
        %vm3015 = vcmp.gt.s32.totalorder %v3014, 0
        %v3016 = vsel %vm3015, %v3014, 0
        %v3017 = vshrl.u32 %v3016, 5
        %v3018 = vand.u32 %v3016, 31
        %v3019 = vsub.s32 32, %v3018
        %v3020 = vshrl.u32 683565275, %v3019
        %v3021 = vshll.u32 683565275, %v3018
        %v3022 = vshrl.u32 2475754826, %v3019
        %v3023 = vor.u32 %v3021, %v3022
        %v3024 = vshll.u32 2475754826, %v3018
        %v3025 = vshrl.u32 2131351028, %v3019
        %v3026 = vor.u32 %v3024, %v3025
        %v3027 = vshll.u32 2131351028, %v3018
        %v3028 = vshrl.u32 2102212464, %v3019
        %v3029 = vor.u32 %v3027, %v3028
        %v3030 = vshll.u32 2102212464, %v3018
        %v3031 = vshrl.u32 920167782, %v3019
        %v3032 = vor.u32 %v3030, %v3031
        %v3033 = vshll.u32 920167782, %v3018
        %v3034 = vshrl.u32 1326507024, %v3019
        %v3035 = vor.u32 %v3033, %v3034
        %vm3036 = vcmp.lt.s32.totalorder %v3017, 1
        %vm3037 = vcmp.lt.s32.totalorder %v3017, 2
        %vm3038 = vcmp.lt.s32.totalorder %v3017, 3
        %vm3039 = vcmp.lt.s32.totalorder %v3017, 4
        %v3040 = vsel %vm3036, %v3020, %v3023
        %v3041 = vsel %vm3039, %v3029, 2102212464
        %v3042 = vsel %vm3038, %v3026, %v3041
        %v3043 = vsel %vm3037, %v3040, %v3042
        %v3044 = vsel %vm3036, %v3023, %v3026
        %v3045 = vsel %vm3039, %v3032, 920167782
        %v3046 = vsel %vm3038, %v3029, %v3045
        %v3047 = vsel %vm3037, %v3044, %v3046
        %v3048 = vsel %vm3036, %v3026, %v3029
        %v3049 = vsel %vm3039, %v3035, 1326507024
        %v3050 = vsel %vm3038, %v3032, %v3049
        %v3051 = vsel %vm3037, %v3048, %v3050
        %v3052 = vshll.u32 %v3012, 8
        %v3053 = vmul.u32.u64.compose %v3052, %v3051
        %v3054 = vextract.low.u32 %v3053
        %v3055 = vextract.high.u32 %v3053
        %v3056 = vmul.u32.u64.compose %v3052, %v3047
        %v3057 = vextract.low.u32 %v3056
        %v3058 = vextract.high.u32 %v3056
        %v3059 = vmul.u32 %v3052, %v3043
        %v3060 = vadd.s32 %v3055, %v3057
        %vm3061 = vc.u32 %v3055, %v3057
        %v3062 = vadd.s32 %v3058, 1
        %v3063 = vsel %vm3061, %v3062, %v3058
        %v3064 = vadd.s32 %v3059, %v3063
        %v3065 = vadd.s32 %v3064, 536870912
        %v3066 = vshrl.u32 %v3065, 30
        %v3067 = vshll.u32 %v3066, 30
        %v3068 = vsub.s32 %v3064, %v3067
        %vm3069 = vcmp.lt.s32.totalorder %v3068, 0
        %v3070 = vsub.s32 0, %v3068
        %v3071 = vsel %vm3069, %v3070, %v3068
        %v3072 = vclz %v3071
        %v3073 = vsub.s32 %v3072, 2
        %vm3074 = vcmp.gt.s32.totalorder 0, %v3073
        %v3075 = vsel %vm3074, 0, %v3073
        %v3076 = vsub.s32 32, %v3075
        %v3077 = vshll.u32 %v3068, %v3075
        %v3078 = vshrl.u32 %v3060, %v3076
        %v3079 = vor.u32 %v3077, %v3078
        %v3080 = vsub.s32 4294967266, %v3075
        %v3081 = vadd.s32 %v3080, 127
        %v3082 = vshll.u32 %v3081, 23
        %v3083 = vor.u32 4788187, %v3082
        %v3084 = vand.u32 2147483647, %v3083
        %v3086 = vcvt.s32.f32 %v3079
        %v3087 = vmul.f32 %v3086, %v3084
        %v3088 = vxor.u32 %v3087, 2147483648
        %v3089 = vsel %vm3006, %v3088, %v3087
        %v3090 = vsub.s32 4, %v3066
        %v3091 = vsel %vm3006, %v3090, %v3066
        %v3092 = vsel %vm3005, %v2262, %v3089
        %v3093 = vsel %vm3005, 0, %v3091
        %v3094 = vcosq.f32.pop %v3092
        %v3095 = vsinq.f32.pop %v3092
        %vm3096 = vweird.f32 %v2262
        %v3097 = vadd.s32 %v3093, 3
        %v3098 = vand.u32 %v3097, 3
        %vm3099 = vcmp.lt.s32.totalorder %v3098, 2
        %vm3100 = vcmp.eq.s32.totalorder %v3098, 0
        %v3101 = vxor.u32 %v3095, 2147483648
        %v3102 = vsel %vm3100, %v3094, %v3101
        %vm3103 = vcmp.eq.s32.totalorder %v3098, 2
        %v3104 = vxor.u32 %v3094, 2147483648
        %v3105 = vsel %vm3103, %v3104, %v3095
        %v3106 = vsel %vm3099, %v3102, %v3105
        %v3107 = vsel %vm3096, nan, %v3106
        %v3108 = vand.u32 2147483647, %v2177
        %vm3109 = vcmp.le.f32.partialorder %v3108, 0.7853982
        %vm3110 = vcmp.lt.s32.totalorder %v2177, 0
        %v3111 = vand.u32 %v2177, 2139095040
        %v3112 = vshrl.u32 %v3111, 23
        %v3113 = vsub.s32 %v3112, 127
        %v3114 = vand.u32 2147483647, %v2177
        %v3115 = vand.u32 %v3114, 8388607
        %v3116 = vor.u32 %v3115, 8388608
        %v3117 = vsub.s32 0, %v3116
        %v3118 = vadd.s32 %v3113, 1
        %vm3119 = vcmp.gt.s32.totalorder %v3118, 0
        %v3120 = vsel %vm3119, %v3118, 0
        %v3121 = vshrl.u32 %v3120, 5
        %v3122 = vand.u32 %v3120, 31
        %v3123 = vsub.s32 32, %v3122
        %v3124 = vshrl.u32 683565275, %v3123
        %v3125 = vshll.u32 683565275, %v3122
        %v3126 = vshrl.u32 2475754826, %v3123
        %v3127 = vor.u32 %v3125, %v3126
        %v3128 = vshll.u32 2475754826, %v3122
        %v3129 = vshrl.u32 2131351028, %v3123
        %v3130 = vor.u32 %v3128, %v3129
        %v3131 = vshll.u32 2131351028, %v3122
        %v3132 = vshrl.u32 2102212464, %v3123
        %v3133 = vor.u32 %v3131, %v3132
        %v3134 = vshll.u32 2102212464, %v3122
        %v3135 = vshrl.u32 920167782, %v3123
        %v3136 = vor.u32 %v3134, %v3135
        %v3137 = vshll.u32 920167782, %v3122
        %v3138 = vshrl.u32 1326507024, %v3123
        %v3139 = vor.u32 %v3137, %v3138
        %vm3140 = vcmp.lt.s32.totalorder %v3121, 1
        %vm3141 = vcmp.lt.s32.totalorder %v3121, 2
        %vm3142 = vcmp.lt.s32.totalorder %v3121, 3
        %vm3143 = vcmp.lt.s32.totalorder %v3121, 4
        %v3144 = vsel %vm3140, %v3124, %v3127
        %v3145 = vsel %vm3143, %v3133, 2102212464
        %v3146 = vsel %vm3142, %v3130, %v3145
        %v3147 = vsel %vm3141, %v3144, %v3146
        %v3148 = vsel %vm3140, %v3127, %v3130
        %v3149 = vsel %vm3143, %v3136, 920167782
        %v3150 = vsel %vm3142, %v3133, %v3149
        %v3151 = vsel %vm3141, %v3148, %v3150
        %v3152 = vsel %vm3140, %v3130, %v3133
        %v3153 = vsel %vm3143, %v3139, 1326507024
        %v3154 = vsel %vm3142, %v3136, %v3153
        %v3155 = vsel %vm3141, %v3152, %v3154
        %v3156 = vshll.u32 %v3116, 8
        %v3157 = vmul.u32.u64.compose %v3156, %v3155
        %v3158 = vextract.low.u32 %v3157
        %v3159 = vextract.high.u32 %v3157
        %v3160 = vmul.u32.u64.compose %v3156, %v3151
        %v3161 = vextract.low.u32 %v3160
        %v3162 = vextract.high.u32 %v3160
        %v3163 = vmul.u32 %v3156, %v3147
        %v3164 = vadd.s32 %v3159, %v3161
        %vm3165 = vc.u32 %v3159, %v3161
        %v3166 = vadd.s32 %v3162, 1
        %v3167 = vsel %vm3165, %v3166, %v3162
        %v3168 = vadd.s32 %v3163, %v3167
        %v3169 = vadd.s32 %v3168, 536870912
        %v3170 = vshrl.u32 %v3169, 30
        %v3171 = vshll.u32 %v3170, 30
        %v3172 = vsub.s32 %v3168, %v3171
        %vm3173 = vcmp.lt.s32.totalorder %v3172, 0
        %v3174 = vsub.s32 0, %v3172
        %v3175 = vsel %vm3173, %v3174, %v3172
        %v3176 = vclz %v3175
        %v3177 = vsub.s32 %v3176, 2
        %vm3178 = vcmp.gt.s32.totalorder 0, %v3177
        %v3179 = vsel %vm3178, 0, %v3177
        %v3180 = vsub.s32 32, %v3179
        %v3181 = vshll.u32 %v3172, %v3179
        %v3182 = vshrl.u32 %v3164, %v3180
        %v3183 = vor.u32 %v3181, %v3182
        %v3184 = vsub.s32 4294967266, %v3179
        %v3185 = vadd.s32 %v3184, 127
        %v3186 = vshll.u32 %v3185, 23
        %v3187 = vor.u32 4788187, %v3186
        %v3188 = vand.u32 2147483647, %v3187
        %v3190 = vcvt.s32.f32 %v3183
        %v3191 = vmul.f32 %v3190, %v3188
        %v3192 = vxor.u32 %v3191, 2147483648
        %v3193 = vsel %vm3110, %v3192, %v3191
        %v3194 = vsub.s32 4, %v3170
        %v3195 = vsel %vm3110, %v3194, %v3170
        %v3196 = vsel %vm3109, %v2177, %v3193
        %v3197 = vsel %vm3109, 0, %v3195
        %v3198 = vcosq.f32.pop %v3196
        %v3199 = vsinq.f32.pop %v3196
        %vm3200 = vweird.f32 %v2177
        %v3201 = vadd.s32 %v3197, 3
        %v3202 = vand.u32 %v3201, 3
        %vm3203 = vcmp.lt.s32.totalorder %v3202, 2
        %vm3204 = vcmp.eq.s32.totalorder %v3202, 0
        %v3205 = vxor.u32 %v3199, 2147483648
        %v3206 = vsel %vm3204, %v3198, %v3205
        %vm3207 = vcmp.eq.s32.totalorder %v3202, 2
        %v3208 = vxor.u32 %v3198, 2147483648
        %v3209 = vsel %vm3207, %v3208, %v3199
        %v3210 = vsel %vm3203, %v3206, %v3209
        %v3211 = vsel %vm3200, nan, %v3210
        %v3212 = vand.u32 2147483647, %v2179
        %vm3213 = vcmp.le.f32.partialorder %v3212, 0.7853982
        %vm3214 = vcmp.lt.s32.totalorder %v2179, 0
        %v3215 = vand.u32 %v2179, 2139095040
        %v3216 = vshrl.u32 %v3215, 23
        %v3217 = vsub.s32 %v3216, 127
        %v3218 = vand.u32 2147483647, %v2179
        %v3219 = vand.u32 %v3218, 8388607
        %v3220 = vor.u32 %v3219, 8388608
        %v3221 = vsub.s32 0, %v3220
        %v3222 = vadd.s32 %v3217, 1
        %vm3223 = vcmp.gt.s32.totalorder %v3222, 0
        %v3224 = vsel %vm3223, %v3222, 0
        %v3225 = vshrl.u32 %v3224, 5
        %v3226 = vand.u32 %v3224, 31
        %v3227 = vsub.s32 32, %v3226
        %v3228 = vshrl.u32 683565275, %v3227
        %v3229 = vshll.u32 683565275, %v3226
        %v3230 = vshrl.u32 2475754826, %v3227
        %v3231 = vor.u32 %v3229, %v3230
        %v3232 = vshll.u32 2475754826, %v3226
        %v3233 = vshrl.u32 2131351028, %v3227
        %v3234 = vor.u32 %v3232, %v3233
        %v3235 = vshll.u32 2131351028, %v3226
        %v3236 = vshrl.u32 2102212464, %v3227
        %v3237 = vor.u32 %v3235, %v3236
        %v3238 = vshll.u32 2102212464, %v3226
        %v3239 = vshrl.u32 920167782, %v3227
        %v3240 = vor.u32 %v3238, %v3239
        %v3241 = vshll.u32 920167782, %v3226
        %v3242 = vshrl.u32 1326507024, %v3227
        %v3243 = vor.u32 %v3241, %v3242
        %vm3244 = vcmp.lt.s32.totalorder %v3225, 1
        %vm3245 = vcmp.lt.s32.totalorder %v3225, 2
        %vm3246 = vcmp.lt.s32.totalorder %v3225, 3
        %vm3247 = vcmp.lt.s32.totalorder %v3225, 4
        %v3248 = vsel %vm3244, %v3228, %v3231
        %v3249 = vsel %vm3247, %v3237, 2102212464
        %v3250 = vsel %vm3246, %v3234, %v3249
        %v3251 = vsel %vm3245, %v3248, %v3250
        %v3252 = vsel %vm3244, %v3231, %v3234
        %v3253 = vsel %vm3247, %v3240, 920167782
        %v3254 = vsel %vm3246, %v3237, %v3253
        %v3255 = vsel %vm3245, %v3252, %v3254
        %v3256 = vsel %vm3244, %v3234, %v3237
        %v3257 = vsel %vm3247, %v3243, 1326507024
        %v3258 = vsel %vm3246, %v3240, %v3257
        %v3259 = vsel %vm3245, %v3256, %v3258
        %v3260 = vshll.u32 %v3220, 8
        %v3261 = vmul.u32.u64.compose %v3260, %v3259
        %v3262 = vextract.low.u32 %v3261
        %v3263 = vextract.high.u32 %v3261
        %v3264 = vmul.u32.u64.compose %v3260, %v3255
        %v3265 = vextract.low.u32 %v3264
        %v3266 = vextract.high.u32 %v3264
        %v3267 = vmul.u32 %v3260, %v3251
        %v3268 = vadd.s32 %v3263, %v3265
        %vm3269 = vc.u32 %v3263, %v3265
        %v3270 = vadd.s32 %v3266, 1
        %v3271 = vsel %vm3269, %v3270, %v3266
        %v3272 = vadd.s32 %v3267, %v3271
        %v3273 = vadd.s32 %v3272, 536870912
        %v3274 = vshrl.u32 %v3273, 30
        %v3275 = vshll.u32 %v3274, 30
        %v3276 = vsub.s32 %v3272, %v3275
        %vm3277 = vcmp.lt.s32.totalorder %v3276, 0
        %v3278 = vsub.s32 0, %v3276
        %v3279 = vsel %vm3277, %v3278, %v3276
        %v3280 = vclz %v3279
        %v3281 = vsub.s32 %v3280, 2
        %vm3282 = vcmp.gt.s32.totalorder 0, %v3281
        %v3283 = vsel %vm3282, 0, %v3281
        %v3284 = vsub.s32 32, %v3283
        %v3285 = vshll.u32 %v3276, %v3283
        %v3286 = vshrl.u32 %v3268, %v3284
        %v3287 = vor.u32 %v3285, %v3286
        %v3288 = vsub.s32 4294967266, %v3283
        %v3289 = vadd.s32 %v3288, 127
        %v3290 = vshll.u32 %v3289, 23
        %v3291 = vor.u32 4788187, %v3290
        %v3292 = vand.u32 2147483647, %v3291
        %v3294 = vcvt.s32.f32 %v3287
        %v3295 = vmul.f32 %v3294, %v3292
        %v3296 = vxor.u32 %v3295, 2147483648
        %v3297 = vsel %vm3214, %v3296, %v3295
        %v3298 = vsub.s32 4, %v3274
        %v3299 = vsel %vm3214, %v3298, %v3274
        %v3300 = vsel %vm3213, %v2179, %v3297
        %v3301 = vsel %vm3213, 0, %v3299
        %v3302 = vcosq.f32.pop %v3300
        %v3303 = vsinq.f32.pop %v3300
        %vm3304 = vweird.f32 %v2179
        %v3305 = vadd.s32 %v3301, 3
        %v3306 = vand.u32 %v3305, 3
        %vm3307 = vcmp.lt.s32.totalorder %v3306, 2
        %vm3308 = vcmp.eq.s32.totalorder %v3306, 0
        %v3309 = vxor.u32 %v3303, 2147483648
        %v3310 = vsel %vm3308, %v3302, %v3309
        %vm3311 = vcmp.eq.s32.totalorder %v3306, 2
        %v3312 = vxor.u32 %v3302, 2147483648
        %v3313 = vsel %vm3311, %v3312, %v3303
        %v3314 = vsel %vm3307, %v3310, %v3313
        %v3315 = vsel %vm3304, nan, %v3314
        %v3316 = vand.u32 2147483647, %v2266
        %vm3317 = vcmp.le.f32.partialorder %v3316, 0.7853982
        %vm3318 = vcmp.lt.s32.totalorder %v2266, 0
        %v3319 = vand.u32 %v2266, 2139095040
        %v3320 = vshrl.u32 %v3319, 23
        %v3321 = vsub.s32 %v3320, 127
        %v3322 = vand.u32 2147483647, %v2266
        %v3323 = vand.u32 %v3322, 8388607
        %v3324 = vor.u32 %v3323, 8388608
        %v3325 = vsub.s32 0, %v3324
        %v3326 = vadd.s32 %v3321, 1
        %vm3327 = vcmp.gt.s32.totalorder %v3326, 0
        %v3328 = vsel %vm3327, %v3326, 0
        %v3329 = vshrl.u32 %v3328, 5
        %v3330 = vand.u32 %v3328, 31
        %v3331 = vsub.s32 32, %v3330
        %v3332 = vshrl.u32 683565275, %v3331
        %v3333 = vshll.u32 683565275, %v3330
        %v3334 = vshrl.u32 2475754826, %v3331
        %v3335 = vor.u32 %v3333, %v3334
        %v3336 = vshll.u32 2475754826, %v3330
        %v3337 = vshrl.u32 2131351028, %v3331
        %v3338 = vor.u32 %v3336, %v3337
        %v3339 = vshll.u32 2131351028, %v3330
        %v3340 = vshrl.u32 2102212464, %v3331
        %v3341 = vor.u32 %v3339, %v3340
        %v3342 = vshll.u32 2102212464, %v3330
        %v3343 = vshrl.u32 920167782, %v3331
        %v3344 = vor.u32 %v3342, %v3343
        %v3345 = vshll.u32 920167782, %v3330
        %v3346 = vshrl.u32 1326507024, %v3331
        %v3347 = vor.u32 %v3345, %v3346
        %vm3348 = vcmp.lt.s32.totalorder %v3329, 1
        %vm3349 = vcmp.lt.s32.totalorder %v3329, 2
        %vm3350 = vcmp.lt.s32.totalorder %v3329, 3
        %vm3351 = vcmp.lt.s32.totalorder %v3329, 4
        %v3352 = vsel %vm3348, %v3332, %v3335
        %v3353 = vsel %vm3351, %v3341, 2102212464
        %v3354 = vsel %vm3350, %v3338, %v3353
        %v3355 = vsel %vm3349, %v3352, %v3354
        %v3356 = vsel %vm3348, %v3335, %v3338
        %v3357 = vsel %vm3351, %v3344, 920167782
        %v3358 = vsel %vm3350, %v3341, %v3357
        %v3359 = vsel %vm3349, %v3356, %v3358
        %v3360 = vsel %vm3348, %v3338, %v3341
        %v3361 = vsel %vm3351, %v3347, 1326507024
        %v3362 = vsel %vm3350, %v3344, %v3361
        %v3363 = vsel %vm3349, %v3360, %v3362
        %v3364 = vshll.u32 %v3324, 8
        %v3365 = vmul.u32.u64.compose %v3364, %v3363
        %v3366 = vextract.low.u32 %v3365
        %v3367 = vextract.high.u32 %v3365
        %v3368 = vmul.u32.u64.compose %v3364, %v3359
        %v3369 = vextract.low.u32 %v3368
        %v3370 = vextract.high.u32 %v3368
        %v3371 = vmul.u32 %v3364, %v3355
        %v3372 = vadd.s32 %v3367, %v3369
        %vm3373 = vc.u32 %v3367, %v3369
        %v3374 = vadd.s32 %v3370, 1
        %v3375 = vsel %vm3373, %v3374, %v3370
        %v3376 = vadd.s32 %v3371, %v3375
        %v3377 = vadd.s32 %v3376, 536870912
        %v3378 = vshrl.u32 %v3377, 30
        %v3379 = vshll.u32 %v3378, 30
        %v3380 = vsub.s32 %v3376, %v3379
        %vm3381 = vcmp.lt.s32.totalorder %v3380, 0
        %v3382 = vsub.s32 0, %v3380
        %v3383 = vsel %vm3381, %v3382, %v3380
        %v3384 = vclz %v3383
        %v3385 = vsub.s32 %v3384, 2
        %vm3386 = vcmp.gt.s32.totalorder 0, %v3385
        %v3387 = vsel %vm3386, 0, %v3385
        %v3388 = vsub.s32 32, %v3387
        %v3389 = vshll.u32 %v3380, %v3387
        %v3390 = vshrl.u32 %v3372, %v3388
        %v3391 = vor.u32 %v3389, %v3390
        %v3392 = vsub.s32 4294967266, %v3387
        %v3393 = vadd.s32 %v3392, 127
        %v3394 = vshll.u32 %v3393, 23
        %v3395 = vor.u32 4788187, %v3394
        %v3396 = vand.u32 2147483647, %v3395
        %v3398 = vcvt.s32.f32 %v3391
        %v3399 = vmul.f32 %v3398, %v3396
        %v3400 = vxor.u32 %v3399, 2147483648
        %v3401 = vsel %vm3318, %v3400, %v3399
        %v3402 = vsub.s32 4, %v3378
        %v3403 = vsel %vm3318, %v3402, %v3378
        %v3404 = vsel %vm3317, %v2266, %v3401
        %v3405 = vsel %vm3317, 0, %v3403
        %v3406 = vcosq.f32.pop %v3404
        %v3407 = vsinq.f32.pop %v3404
        %vm3408 = vweird.f32 %v2266
        %v3409 = vadd.s32 %v3405, 3
        %v3410 = vand.u32 %v3409, 3
        %vm3411 = vcmp.lt.s32.totalorder %v3410, 2
        %vm3412 = vcmp.eq.s32.totalorder %v3410, 0
        %v3413 = vxor.u32 %v3407, 2147483648
        %v3414 = vsel %vm3412, %v3406, %v3413
        %vm3415 = vcmp.eq.s32.totalorder %v3410, 2
        %v3416 = vxor.u32 %v3406, 2147483648
        %v3417 = vsel %vm3415, %v3416, %v3407
        %v3418 = vsel %vm3411, %v3414, %v3417
        %v3419 = vsel %vm3408, nan, %v3418
        %v3420 = vand.u32 2147483647, %v2268
        %vm3421 = vcmp.le.f32.partialorder %v3420, 0.7853982
        %vm3422 = vcmp.lt.s32.totalorder %v2268, 0
        %v3423 = vand.u32 %v2268, 2139095040
        %v3424 = vshrl.u32 %v3423, 23
        %v3425 = vsub.s32 %v3424, 127
        %v3426 = vand.u32 2147483647, %v2268
        %v3427 = vand.u32 %v3426, 8388607
        %v3428 = vor.u32 %v3427, 8388608
        %v3429 = vsub.s32 0, %v3428
        %v3430 = vadd.s32 %v3425, 1
        %vm3431 = vcmp.gt.s32.totalorder %v3430, 0
        %v3432 = vsel %vm3431, %v3430, 0
        %v3433 = vshrl.u32 %v3432, 5
        %v3434 = vand.u32 %v3432, 31
        %v3435 = vsub.s32 32, %v3434
        %v3436 = vshrl.u32 683565275, %v3435
        %v3437 = vshll.u32 683565275, %v3434
        %v3438 = vshrl.u32 2475754826, %v3435
        %v3439 = vor.u32 %v3437, %v3438
        %v3440 = vshll.u32 2475754826, %v3434
        %v3441 = vshrl.u32 2131351028, %v3435
        %v3442 = vor.u32 %v3440, %v3441
        %v3443 = vshll.u32 2131351028, %v3434
        %v3444 = vshrl.u32 2102212464, %v3435
        %v3445 = vor.u32 %v3443, %v3444
        %v3446 = vshll.u32 2102212464, %v3434
        %v3447 = vshrl.u32 920167782, %v3435
        %v3448 = vor.u32 %v3446, %v3447
        %v3449 = vshll.u32 920167782, %v3434
        %v3450 = vshrl.u32 1326507024, %v3435
        %v3451 = vor.u32 %v3449, %v3450
        %vm3452 = vcmp.lt.s32.totalorder %v3433, 1
        %vm3453 = vcmp.lt.s32.totalorder %v3433, 2
        %vm3454 = vcmp.lt.s32.totalorder %v3433, 3
        %vm3455 = vcmp.lt.s32.totalorder %v3433, 4
        %v3456 = vsel %vm3452, %v3436, %v3439
        %v3457 = vsel %vm3455, %v3445, 2102212464
        %v3458 = vsel %vm3454, %v3442, %v3457
        %v3459 = vsel %vm3453, %v3456, %v3458
        %v3460 = vsel %vm3452, %v3439, %v3442
        %v3461 = vsel %vm3455, %v3448, 920167782
        %v3462 = vsel %vm3454, %v3445, %v3461
        %v3463 = vsel %vm3453, %v3460, %v3462
        %v3464 = vsel %vm3452, %v3442, %v3445
        %v3465 = vsel %vm3455, %v3451, 1326507024
        %v3466 = vsel %vm3454, %v3448, %v3465
        %v3467 = vsel %vm3453, %v3464, %v3466
        %v3468 = vshll.u32 %v3428, 8
        %v3469 = vmul.u32.u64.compose %v3468, %v3467
        %v3470 = vextract.low.u32 %v3469
        %v3471 = vextract.high.u32 %v3469
        %v3472 = vmul.u32.u64.compose %v3468, %v3463
        %v3473 = vextract.low.u32 %v3472
        %v3474 = vextract.high.u32 %v3472
        %v3475 = vmul.u32 %v3468, %v3459
        %v3476 = vadd.s32 %v3471, %v3473
        %vm3477 = vc.u32 %v3471, %v3473
        %v3478 = vadd.s32 %v3474, 1
        %v3479 = vsel %vm3477, %v3478, %v3474
        %v3480 = vadd.s32 %v3475, %v3479
        %v3481 = vadd.s32 %v3480, 536870912
        %v3482 = vshrl.u32 %v3481, 30
        %v3483 = vshll.u32 %v3482, 30
        %v3484 = vsub.s32 %v3480, %v3483
        %vm3485 = vcmp.lt.s32.totalorder %v3484, 0
        %v3486 = vsub.s32 0, %v3484
        %v3487 = vsel %vm3485, %v3486, %v3484
        %v3488 = vclz %v3487
        %v3489 = vsub.s32 %v3488, 2
        %vm3490 = vcmp.gt.s32.totalorder 0, %v3489
        %v3491 = vsel %vm3490, 0, %v3489
        %v3492 = vsub.s32 32, %v3491
        %v3493 = vshll.u32 %v3484, %v3491
        %v3494 = vshrl.u32 %v3476, %v3492
        %v3495 = vor.u32 %v3493, %v3494
        %v3496 = vsub.s32 4294967266, %v3491
        %v3497 = vadd.s32 %v3496, 127
        %v3498 = vshll.u32 %v3497, 23
        %v3499 = vor.u32 4788187, %v3498
        %v3500 = vand.u32 2147483647, %v3499
        %v3502 = vcvt.s32.f32 %v3495
        %v3503 = vmul.f32 %v3502, %v3500
        %v3504 = vxor.u32 %v3503, 2147483648
        %v3505 = vsel %vm3422, %v3504, %v3503
        %v3506 = vsub.s32 4, %v3482
        %v3507 = vsel %vm3422, %v3506, %v3482
        %v3508 = vsel %vm3421, %v2268, %v3505
        %v3509 = vsel %vm3421, 0, %v3507
        %v3510 = vcosq.f32.pop %v3508
        %v3511 = vsinq.f32.pop %v3508
        %vm3512 = vweird.f32 %v2268
        %v3513 = vadd.s32 %v3509, 3
        %v3514 = vand.u32 %v3513, 3
        %vm3515 = vcmp.lt.s32.totalorder %v3514, 2
        %vm3516 = vcmp.eq.s32.totalorder %v3514, 0
        %v3517 = vxor.u32 %v3511, 2147483648
        %v3518 = vsel %vm3516, %v3510, %v3517
        %vm3519 = vcmp.eq.s32.totalorder %v3514, 2
        %v3520 = vxor.u32 %v3510, 2147483648
        %v3521 = vsel %vm3519, %v3520, %v3511
        %v3522 = vsel %vm3515, %v3518, %v3521
        %v3523 = vsel %vm3512, nan, %v3522
        %v3524 = vand.u32 2147483647, %v2183
        %vm3525 = vcmp.le.f32.partialorder %v3524, 0.7853982
        %vm3526 = vcmp.lt.s32.totalorder %v2183, 0
        %v3527 = vand.u32 %v2183, 2139095040
        %v3528 = vshrl.u32 %v3527, 23
        %v3529 = vsub.s32 %v3528, 127
        %v3530 = vand.u32 2147483647, %v2183
        %v3531 = vand.u32 %v3530, 8388607
        %v3532 = vor.u32 %v3531, 8388608
        %v3533 = vsub.s32 0, %v3532
        %v3534 = vadd.s32 %v3529, 1
        %vm3535 = vcmp.gt.s32.totalorder %v3534, 0
        %v3536 = vsel %vm3535, %v3534, 0
        %v3537 = vshrl.u32 %v3536, 5
        %v3538 = vand.u32 %v3536, 31
        %v3539 = vsub.s32 32, %v3538
        %v3540 = vshrl.u32 683565275, %v3539
        %v3541 = vshll.u32 683565275, %v3538
        %v3542 = vshrl.u32 2475754826, %v3539
        %v3543 = vor.u32 %v3541, %v3542
        %v3544 = vshll.u32 2475754826, %v3538
        %v3545 = vshrl.u32 2131351028, %v3539
        %v3546 = vor.u32 %v3544, %v3545
        %v3547 = vshll.u32 2131351028, %v3538
        %v3548 = vshrl.u32 2102212464, %v3539
        %v3549 = vor.u32 %v3547, %v3548
        %v3550 = vshll.u32 2102212464, %v3538
        %v3551 = vshrl.u32 920167782, %v3539
        %v3552 = vor.u32 %v3550, %v3551
        %v3553 = vshll.u32 920167782, %v3538
        %v3554 = vshrl.u32 1326507024, %v3539
        %v3555 = vor.u32 %v3553, %v3554
        %vm3556 = vcmp.lt.s32.totalorder %v3537, 1
        %vm3557 = vcmp.lt.s32.totalorder %v3537, 2
        %vm3558 = vcmp.lt.s32.totalorder %v3537, 3
        %vm3559 = vcmp.lt.s32.totalorder %v3537, 4
        %v3560 = vsel %vm3556, %v3540, %v3543
        %v3561 = vsel %vm3559, %v3549, 2102212464
        %v3562 = vsel %vm3558, %v3546, %v3561
        %v3563 = vsel %vm3557, %v3560, %v3562
        %v3564 = vsel %vm3556, %v3543, %v3546
        %v3565 = vsel %vm3559, %v3552, 920167782
        %v3566 = vsel %vm3558, %v3549, %v3565
        %v3567 = vsel %vm3557, %v3564, %v3566
        %v3568 = vsel %vm3556, %v3546, %v3549
        %v3569 = vsel %vm3559, %v3555, 1326507024
        %v3570 = vsel %vm3558, %v3552, %v3569
        %v3571 = vsel %vm3557, %v3568, %v3570
        %v3572 = vshll.u32 %v3532, 8
        %v3573 = vmul.u32.u64.compose %v3572, %v3571
        %v3574 = vextract.low.u32 %v3573
        %v3575 = vextract.high.u32 %v3573
        %v3576 = vmul.u32.u64.compose %v3572, %v3567
        %v3577 = vextract.low.u32 %v3576
        %v3578 = vextract.high.u32 %v3576
        %v3579 = vmul.u32 %v3572, %v3563
        %v3580 = vadd.s32 %v3575, %v3577
        %vm3581 = vc.u32 %v3575, %v3577
        %v3582 = vadd.s32 %v3578, 1
        %v3583 = vsel %vm3581, %v3582, %v3578
        %v3584 = vadd.s32 %v3579, %v3583
        %v3585 = vadd.s32 %v3584, 536870912
        %v3586 = vshrl.u32 %v3585, 30
        %v3587 = vshll.u32 %v3586, 30
        %v3588 = vsub.s32 %v3584, %v3587
        %vm3589 = vcmp.lt.s32.totalorder %v3588, 0
        %v3590 = vsub.s32 0, %v3588
        %v3591 = vsel %vm3589, %v3590, %v3588
        %v3592 = vclz %v3591
        %v3593 = vsub.s32 %v3592, 2
        %vm3594 = vcmp.gt.s32.totalorder 0, %v3593
        %v3595 = vsel %vm3594, 0, %v3593
        %v3596 = vsub.s32 32, %v3595
        %v3597 = vshll.u32 %v3588, %v3595
        %v3598 = vshrl.u32 %v3580, %v3596
        %v3599 = vor.u32 %v3597, %v3598
        %v3600 = vsub.s32 4294967266, %v3595
        %v3601 = vadd.s32 %v3600, 127
        %v3602 = vshll.u32 %v3601, 23
        %v3603 = vor.u32 4788187, %v3602
        %v3604 = vand.u32 2147483647, %v3603
        %v3606 = vcvt.s32.f32 %v3599
        %v3607 = vmul.f32 %v3606, %v3604
        %v3608 = vxor.u32 %v3607, 2147483648
        %v3609 = vsel %vm3526, %v3608, %v3607
        %v3610 = vsub.s32 4, %v3586
        %v3611 = vsel %vm3526, %v3610, %v3586
        %v3612 = vsel %vm3525, %v2183, %v3609
        %v3613 = vsel %vm3525, 0, %v3611
        %v3614 = vcosq.f32.pop %v3612
        %v3615 = vsinq.f32.pop %v3612
        %vm3616 = vweird.f32 %v2183
        %v3617 = vadd.s32 %v3613, 3
        %v3618 = vand.u32 %v3617, 3
        %vm3619 = vcmp.lt.s32.totalorder %v3618, 2
        %vm3620 = vcmp.eq.s32.totalorder %v3618, 0
        %v3621 = vxor.u32 %v3615, 2147483648
        %v3622 = vsel %vm3620, %v3614, %v3621
        %vm3623 = vcmp.eq.s32.totalorder %v3618, 2
        %v3624 = vxor.u32 %v3614, 2147483648
        %v3625 = vsel %vm3623, %v3624, %v3615
        %v3626 = vsel %vm3619, %v3622, %v3625
        %v3627 = vsel %vm3616, nan, %v3626
        %v3628 = vand.u32 2147483647, %v2185
        %vm3629 = vcmp.le.f32.partialorder %v3628, 0.7853982
        %vm3630 = vcmp.lt.s32.totalorder %v2185, 0
        %v3631 = vand.u32 %v2185, 2139095040
        %v3632 = vshrl.u32 %v3631, 23
        %v3633 = vsub.s32 %v3632, 127
        %v3634 = vand.u32 2147483647, %v2185
        %v3635 = vand.u32 %v3634, 8388607
        %v3636 = vor.u32 %v3635, 8388608
        %v3637 = vsub.s32 0, %v3636
        %v3638 = vadd.s32 %v3633, 1
        %vm3639 = vcmp.gt.s32.totalorder %v3638, 0
        %v3640 = vsel %vm3639, %v3638, 0
        %v3641 = vshrl.u32 %v3640, 5
        %v3642 = vand.u32 %v3640, 31
        %v3643 = vsub.s32 32, %v3642
        %v3644 = vshrl.u32 683565275, %v3643
        %v3645 = vshll.u32 683565275, %v3642
        %v3646 = vshrl.u32 2475754826, %v3643
        %v3647 = vor.u32 %v3645, %v3646
        %v3648 = vshll.u32 2475754826, %v3642
        %v3649 = vshrl.u32 2131351028, %v3643
        %v3650 = vor.u32 %v3648, %v3649
        %v3651 = vshll.u32 2131351028, %v3642
        %v3652 = vshrl.u32 2102212464, %v3643
        %v3653 = vor.u32 %v3651, %v3652
        %v3654 = vshll.u32 2102212464, %v3642
        %v3655 = vshrl.u32 920167782, %v3643
        %v3656 = vor.u32 %v3654, %v3655
        %v3657 = vshll.u32 920167782, %v3642
        %v3658 = vshrl.u32 1326507024, %v3643
        %v3659 = vor.u32 %v3657, %v3658
        %vm3660 = vcmp.lt.s32.totalorder %v3641, 1
        %vm3661 = vcmp.lt.s32.totalorder %v3641, 2
        %vm3662 = vcmp.lt.s32.totalorder %v3641, 3
        %vm3663 = vcmp.lt.s32.totalorder %v3641, 4
        %v3664 = vsel %vm3660, %v3644, %v3647
        %v3665 = vsel %vm3663, %v3653, 2102212464
        %v3666 = vsel %vm3662, %v3650, %v3665
        %v3667 = vsel %vm3661, %v3664, %v3666
        %v3668 = vsel %vm3660, %v3647, %v3650
        %v3669 = vsel %vm3663, %v3656, 920167782
        %v3670 = vsel %vm3662, %v3653, %v3669
        %v3671 = vsel %vm3661, %v3668, %v3670
        %v3672 = vsel %vm3660, %v3650, %v3653
        %v3673 = vsel %vm3663, %v3659, 1326507024
        %v3674 = vsel %vm3662, %v3656, %v3673
        %v3675 = vsel %vm3661, %v3672, %v3674
        %v3676 = vshll.u32 %v3636, 8
        %v3677 = vmul.u32.u64.compose %v3676, %v3675
        %v3678 = vextract.low.u32 %v3677
        %v3679 = vextract.high.u32 %v3677
        %v3680 = vmul.u32.u64.compose %v3676, %v3671
        %v3681 = vextract.low.u32 %v3680
        %v3682 = vextract.high.u32 %v3680
        %v3683 = vmul.u32 %v3676, %v3667
        %v3684 = vadd.s32 %v3679, %v3681
        %vm3685 = vc.u32 %v3679, %v3681
        %v3686 = vadd.s32 %v3682, 1
        %v3687 = vsel %vm3685, %v3686, %v3682
        %v3688 = vadd.s32 %v3683, %v3687
        %v3689 = vadd.s32 %v3688, 536870912
        %v3690 = vshrl.u32 %v3689, 30
        %v3691 = vshll.u32 %v3690, 30
        %v3692 = vsub.s32 %v3688, %v3691
        %vm3693 = vcmp.lt.s32.totalorder %v3692, 0
        %v3694 = vsub.s32 0, %v3692
        %v3695 = vsel %vm3693, %v3694, %v3692
        %v3696 = vclz %v3695
        %v3697 = vsub.s32 %v3696, 2
        %vm3698 = vcmp.gt.s32.totalorder 0, %v3697
        %v3699 = vsel %vm3698, 0, %v3697
        %v3700 = vsub.s32 32, %v3699
        %v3701 = vshll.u32 %v3692, %v3699
        %v3702 = vshrl.u32 %v3684, %v3700
        %v3703 = vor.u32 %v3701, %v3702
        %v3704 = vsub.s32 4294967266, %v3699
        %v3705 = vadd.s32 %v3704, 127
        %v3706 = vshll.u32 %v3705, 23
        %v3707 = vor.u32 4788187, %v3706
        %v3708 = vand.u32 2147483647, %v3707
        %v3710 = vcvt.s32.f32 %v3703
        %v3711 = vmul.f32 %v3710, %v3708
        %v3712 = vxor.u32 %v3711, 2147483648
        %v3713 = vsel %vm3630, %v3712, %v3711
        %v3714 = vsub.s32 4, %v3690
        %v3715 = vsel %vm3630, %v3714, %v3690
        %v3716 = vsel %vm3629, %v2185, %v3713
        %v3717 = vsel %vm3629, 0, %v3715
        %v3718 = vcosq.f32.pop %v3716
        %v3719 = vsinq.f32.pop %v3716
        %vm3720 = vweird.f32 %v2185
        %v3721 = vadd.s32 %v3717, 3
        %v3722 = vand.u32 %v3721, 3
        %vm3723 = vcmp.lt.s32.totalorder %v3722, 2
        %vm3724 = vcmp.eq.s32.totalorder %v3722, 0
        %v3725 = vxor.u32 %v3719, 2147483648
        %v3726 = vsel %vm3724, %v3718, %v3725
        %vm3727 = vcmp.eq.s32.totalorder %v3722, 2
        %v3728 = vxor.u32 %v3718, 2147483648
        %v3729 = vsel %vm3727, %v3728, %v3719
        %v3730 = vsel %vm3723, %v3726, %v3729
        %v3731 = vsel %vm3720, nan, %v3730
        %v3732 = vand.u32 2147483647, %v2272
        %vm3733 = vcmp.le.f32.partialorder %v3732, 0.7853982
        %vm3734 = vcmp.lt.s32.totalorder %v2272, 0
        %v3735 = vand.u32 %v2272, 2139095040
        %v3736 = vshrl.u32 %v3735, 23
        %v3737 = vsub.s32 %v3736, 127
        %v3738 = vand.u32 2147483647, %v2272
        %v3739 = vand.u32 %v3738, 8388607
        %v3740 = vor.u32 %v3739, 8388608
        %v3741 = vsub.s32 0, %v3740
        %v3742 = vadd.s32 %v3737, 1
        %vm3743 = vcmp.gt.s32.totalorder %v3742, 0
        %v3744 = vsel %vm3743, %v3742, 0
        %v3745 = vshrl.u32 %v3744, 5
        %v3746 = vand.u32 %v3744, 31
        %v3747 = vsub.s32 32, %v3746
        %v3748 = vshrl.u32 683565275, %v3747
        %v3749 = vshll.u32 683565275, %v3746
        %v3750 = vshrl.u32 2475754826, %v3747
        %v3751 = vor.u32 %v3749, %v3750
        %v3752 = vshll.u32 2475754826, %v3746
        %v3753 = vshrl.u32 2131351028, %v3747
        %v3754 = vor.u32 %v3752, %v3753
        %v3755 = vshll.u32 2131351028, %v3746
        %v3756 = vshrl.u32 2102212464, %v3747
        %v3757 = vor.u32 %v3755, %v3756
        %v3758 = vshll.u32 2102212464, %v3746
        %v3759 = vshrl.u32 920167782, %v3747
        %v3760 = vor.u32 %v3758, %v3759
        %v3761 = vshll.u32 920167782, %v3746
        %v3762 = vshrl.u32 1326507024, %v3747
        %v3763 = vor.u32 %v3761, %v3762
        %vm3764 = vcmp.lt.s32.totalorder %v3745, 1
        %vm3765 = vcmp.lt.s32.totalorder %v3745, 2
        %vm3766 = vcmp.lt.s32.totalorder %v3745, 3
        %vm3767 = vcmp.lt.s32.totalorder %v3745, 4
        %v3768 = vsel %vm3764, %v3748, %v3751
        %v3769 = vsel %vm3767, %v3757, 2102212464
        %v3770 = vsel %vm3766, %v3754, %v3769
        %v3771 = vsel %vm3765, %v3768, %v3770
        %v3772 = vsel %vm3764, %v3751, %v3754
        %v3773 = vsel %vm3767, %v3760, 920167782
        %v3774 = vsel %vm3766, %v3757, %v3773
        %v3775 = vsel %vm3765, %v3772, %v3774
        %v3776 = vsel %vm3764, %v3754, %v3757
        %v3777 = vsel %vm3767, %v3763, 1326507024
        %v3778 = vsel %vm3766, %v3760, %v3777
        %v3779 = vsel %vm3765, %v3776, %v3778
        %v3780 = vshll.u32 %v3740, 8
        %v3781 = vmul.u32.u64.compose %v3780, %v3779
        %v3782 = vextract.low.u32 %v3781
        %v3783 = vextract.high.u32 %v3781
        %v3784 = vmul.u32.u64.compose %v3780, %v3775
        %v3785 = vextract.low.u32 %v3784
        %v3786 = vextract.high.u32 %v3784
        %v3787 = vmul.u32 %v3780, %v3771
        %v3788 = vadd.s32 %v3783, %v3785
        %vm3789 = vc.u32 %v3783, %v3785
        %v3790 = vadd.s32 %v3786, 1
        %v3791 = vsel %vm3789, %v3790, %v3786
        %v3792 = vadd.s32 %v3787, %v3791
        %v3793 = vadd.s32 %v3792, 536870912
        %v3794 = vshrl.u32 %v3793, 30
        %v3795 = vshll.u32 %v3794, 30
        %v3796 = vsub.s32 %v3792, %v3795
        %vm3797 = vcmp.lt.s32.totalorder %v3796, 0
        %v3798 = vsub.s32 0, %v3796
        %v3799 = vsel %vm3797, %v3798, %v3796
        %v3800 = vclz %v3799
        %v3801 = vsub.s32 %v3800, 2
        %vm3802 = vcmp.gt.s32.totalorder 0, %v3801
        %v3803 = vsel %vm3802, 0, %v3801
        %v3804 = vsub.s32 32, %v3803
        %v3805 = vshll.u32 %v3796, %v3803
        %v3806 = vshrl.u32 %v3788, %v3804
        %v3807 = vor.u32 %v3805, %v3806
        %v3808 = vsub.s32 4294967266, %v3803
        %v3809 = vadd.s32 %v3808, 127
        %v3810 = vshll.u32 %v3809, 23
        %v3811 = vor.u32 4788187, %v3810
        %v3812 = vand.u32 2147483647, %v3811
        %v3814 = vcvt.s32.f32 %v3807
        %v3815 = vmul.f32 %v3814, %v3812
        %v3816 = vxor.u32 %v3815, 2147483648
        %v3817 = vsel %vm3734, %v3816, %v3815
        %v3818 = vsub.s32 4, %v3794
        %v3819 = vsel %vm3734, %v3818, %v3794
        %v3820 = vsel %vm3733, %v2272, %v3817
        %v3821 = vsel %vm3733, 0, %v3819
        %v3822 = vcosq.f32.pop %v3820
        %v3823 = vsinq.f32.pop %v3820
        %vm3824 = vweird.f32 %v2272
        %v3825 = vadd.s32 %v3821, 3
        %v3826 = vand.u32 %v3825, 3
        %vm3827 = vcmp.lt.s32.totalorder %v3826, 2
        %vm3828 = vcmp.eq.s32.totalorder %v3826, 0
        %v3829 = vxor.u32 %v3823, 2147483648
        %v3830 = vsel %vm3828, %v3822, %v3829
        %vm3831 = vcmp.eq.s32.totalorder %v3826, 2
        %v3832 = vxor.u32 %v3822, 2147483648
        %v3833 = vsel %vm3831, %v3832, %v3823
        %v3834 = vsel %vm3827, %v3830, %v3833
        %v3835 = vsel %vm3824, nan, %v3834
        %v3836 = vand.u32 2147483647, %v2274
        %vm3837 = vcmp.le.f32.partialorder %v3836, 0.7853982
        %vm3838 = vcmp.lt.s32.totalorder %v2274, 0
        %v3839 = vand.u32 %v2274, 2139095040
        %v3840 = vshrl.u32 %v3839, 23
        %v3841 = vsub.s32 %v3840, 127
        %v3842 = vand.u32 2147483647, %v2274
        %v3843 = vand.u32 %v3842, 8388607
        %v3844 = vor.u32 %v3843, 8388608
        %v3845 = vsub.s32 0, %v3844
        %v3846 = vadd.s32 %v3841, 1
        %vm3847 = vcmp.gt.s32.totalorder %v3846, 0
        %v3848 = vsel %vm3847, %v3846, 0
        %v3849 = vshrl.u32 %v3848, 5
        %v3850 = vand.u32 %v3848, 31
        %v3851 = vsub.s32 32, %v3850
        %v3852 = vshrl.u32 683565275, %v3851
        %v3853 = vshll.u32 683565275, %v3850
        %v3854 = vshrl.u32 2475754826, %v3851
        %v3855 = vor.u32 %v3853, %v3854
        %v3856 = vshll.u32 2475754826, %v3850
        %v3857 = vshrl.u32 2131351028, %v3851
        %v3858 = vor.u32 %v3856, %v3857
        %v3859 = vshll.u32 2131351028, %v3850
        %v3860 = vshrl.u32 2102212464, %v3851
        %v3861 = vor.u32 %v3859, %v3860
        %v3862 = vshll.u32 2102212464, %v3850
        %v3863 = vshrl.u32 920167782, %v3851
        %v3864 = vor.u32 %v3862, %v3863
        %v3865 = vshll.u32 920167782, %v3850
        %v3866 = vshrl.u32 1326507024, %v3851
        %v3867 = vor.u32 %v3865, %v3866
        %vm3868 = vcmp.lt.s32.totalorder %v3849, 1
        %vm3869 = vcmp.lt.s32.totalorder %v3849, 2
        %vm3870 = vcmp.lt.s32.totalorder %v3849, 3
        %vm3871 = vcmp.lt.s32.totalorder %v3849, 4
        %v3872 = vsel %vm3868, %v3852, %v3855
        %v3873 = vsel %vm3871, %v3861, 2102212464
        %v3874 = vsel %vm3870, %v3858, %v3873
        %v3875 = vsel %vm3869, %v3872, %v3874
        %v3876 = vsel %vm3868, %v3855, %v3858
        %v3877 = vsel %vm3871, %v3864, 920167782
        %v3878 = vsel %vm3870, %v3861, %v3877
        %v3879 = vsel %vm3869, %v3876, %v3878
        %v3880 = vsel %vm3868, %v3858, %v3861
        %v3881 = vsel %vm3871, %v3867, 1326507024
        %v3882 = vsel %vm3870, %v3864, %v3881
        %v3883 = vsel %vm3869, %v3880, %v3882
        %v3884 = vshll.u32 %v3844, 8
        %v3885 = vmul.u32.u64.compose %v3884, %v3883
        %v3886 = vextract.low.u32 %v3885
        %v3887 = vextract.high.u32 %v3885
        %v3888 = vmul.u32.u64.compose %v3884, %v3879
        %v3889 = vextract.low.u32 %v3888
        %v3890 = vextract.high.u32 %v3888
        %v3891 = vmul.u32 %v3884, %v3875
        %v3892 = vadd.s32 %v3887, %v3889
        %vm3893 = vc.u32 %v3887, %v3889
        %v3894 = vadd.s32 %v3890, 1
        %v3895 = vsel %vm3893, %v3894, %v3890
        %v3896 = vadd.s32 %v3891, %v3895
        %v3897 = vadd.s32 %v3896, 536870912
        %v3898 = vshrl.u32 %v3897, 30
        %v3899 = vshll.u32 %v3898, 30
        %v3900 = vsub.s32 %v3896, %v3899
        %vm3901 = vcmp.lt.s32.totalorder %v3900, 0
        %v3902 = vsub.s32 0, %v3900
        %v3903 = vsel %vm3901, %v3902, %v3900
        %v3904 = vclz %v3903
        %v3905 = vsub.s32 %v3904, 2
        %vm3906 = vcmp.gt.s32.totalorder 0, %v3905
        %v3907 = vsel %vm3906, 0, %v3905
        %v3908 = vsub.s32 32, %v3907
        %v3909 = vshll.u32 %v3900, %v3907
        %v3910 = vshrl.u32 %v3892, %v3908
        %v3911 = vor.u32 %v3909, %v3910
        %v3912 = vsub.s32 4294967266, %v3907
        %v3913 = vadd.s32 %v3912, 127
        %v3914 = vshll.u32 %v3913, 23
        %v3915 = vor.u32 4788187, %v3914
        %v3916 = vand.u32 2147483647, %v3915
        %v3918 = vcvt.s32.f32 %v3911
        %v3919 = vmul.f32 %v3918, %v3916
        %v3920 = vxor.u32 %v3919, 2147483648
        %v3921 = vsel %vm3838, %v3920, %v3919
        %v3922 = vsub.s32 4, %v3898
        %v3923 = vsel %vm3838, %v3922, %v3898
        %v3924 = vsel %vm3837, %v2274, %v3921
        %v3925 = vsel %vm3837, 0, %v3923
        %v3926 = vcosq.f32.pop %v3924
        %v3927 = vsinq.f32.pop %v3924
        %vm3928 = vweird.f32 %v2274
        %v3929 = vadd.s32 %v3925, 3
        %v3930 = vand.u32 %v3929, 3
        %vm3931 = vcmp.lt.s32.totalorder %v3930, 2
        %vm3932 = vcmp.eq.s32.totalorder %v3930, 0
        %v3933 = vxor.u32 %v3927, 2147483648
        %v3934 = vsel %vm3932, %v3926, %v3933
        %vm3935 = vcmp.eq.s32.totalorder %v3930, 2
        %v3936 = vxor.u32 %v3926, 2147483648
        %v3937 = vsel %vm3935, %v3936, %v3927
        %v3938 = vsel %vm3931, %v3934, %v3937
        %v3939 = vsel %vm3928, nan, %v3938
        %v3940 = vcombine.high %v189, %v189
        %v3942 = vunpack.c.l.s4 1983009808
        %v3943 = vunpack.c.0.s8 %v3942
        %v3944 = vlaneseq
        %v3945 = vshrl.u32 %v3944, 7
        %v3946 = vsub.s32 %v3943, %v3945
        %v3947 = vrot.slane %v189, %v3946
        %v3949 = vunpack.c.l.s4 1983009808
        %v3950 = vunpack.c.0.s8 %v3949
        %v3951 = vlaneseq
        %v3952 = vshrl.u32 %v3951, 7
        %v3953 = vsub.s32 %v3950, %v3952
        %v3954 = vrot.slane %v3940, %v3953
        %v3955 = vcombine.high %v3947, %v3947
        %v3956 = vcombine.high %v3954, %v3954
        %vm3961 = vcmask 1041408
        %v3962 = vsel %vm3961, %v3947, 0.0
        %v3963 = vsel %vm3961, %v3955, 0.0
        %v3964 = vsel %vm3961, %v3954, 0.0
        %v3965 = vsel %vm3961, %v3956, 0.0
        %v3966 = vadd.f32 %v2379, %v3962
        %v3967 = vadd.f32 %v2483, %v3963
        %v3968 = vadd.f32 %v2587, %v3964
        %v3969 = vadd.f32 %v2691, %v3965
        %v3970 = vadd.f32 %v2795, 0.0
        %v3971 = vadd.f32 %v2899, 0.0
        %v3972 = vadd.f32 %v3003, 0.0
        %v3973 = vadd.f32 %v3107, 0.0
        %v3974 = vadd.f32 %v3211, 0.0
        %v3975 = vadd.f32 %v3315, 0.0
        %v3976 = vadd.f32 %v3419, 0.0
        %v3977 = vadd.f32 %v3523, 0.0
        %v3978 = vadd.f32 %v3627, 0.0
        %v3979 = vadd.f32 %v3731, 0.0
        %v3980 = vadd.f32 %v3835, 0.0
        %v3981 = vadd.f32 %v3939, 0.0
        %s3982 = scalar_lea.vmem %s1, 64
        %v3983 = vld [vmem:[%s3982] sm:$0xff]
        %v3984 = vld [vmem:[%s3982 + $0x8] sm:$0xff]
        %v3985 = vld [vmem:[%s3982 + $0x10] sm:$0xff]
        %v3986 = vld [vmem:[%s3982 + $0x18] sm:$0xff]
        %s3987 = scalar_lea.vmem %s2, 64
        %v3988 = vld [vmem:[%s3987] sm:$0xff]
        %v3989 = vld [vmem:[%s3987 + $0x8] sm:$0xff]
        %v3990 = vld [vmem:[%s3987 + $0x10] sm:$0xff]
        %v3991 = vld [vmem:[%s3987 + $0x18] sm:$0xff]
        %s3992 = scalar_lea.vmem %s1, 96
        %v3993 = vld [vmem:[%s3992] sm:$0xff]
        %v3994 = vld [vmem:[%s3992 + $0x8] sm:$0xff]
        %v3995 = vld [vmem:[%s3992 + $0x10] sm:$0xff]
        %v3996 = vld [vmem:[%s3992 + $0x18] sm:$0xff]
        %s3997 = scalar_lea.vmem %s2, 96
        %v3998 = vld [vmem:[%s3997] sm:$0xff]
        %v3999 = vld [vmem:[%s3997 + $0x8] sm:$0xff]
        %v4000 = vld [vmem:[%s3997 + $0x10] sm:$0xff]
        %v4001 = vld [vmem:[%s3997 + $0x18] sm:$0xff]
        %4003 = vset.pattern.permute.xlu0 0
        %4004 = vperm.xlu0 %4003, %v3988
        %v4005 = vpop.permute.xlu0 %4004
        %4008 = vset.pattern.permute.xlu0 0
        %4009 = vperm.xlu0 %4008, %v3989
        %v4010 = vpop.permute.xlu0 %4009
        %4013 = vset.pattern.permute.xlu0 0
        %4014 = vperm.xlu0 %4013, %v3990
        %v4015 = vpop.permute.xlu0 %4014
        %4018 = vset.pattern.permute.xlu0 0
        %4019 = vperm.xlu0 %4018, %v3991
        %v4020 = vpop.permute.xlu0 %4019
        %v4023 = vsel %vm2085, %v3983, 0
        %v4026 = vsel %vm2085, %v3984, 0
        %v4029 = vsel %vm2085, %v3985, 0
        %v4032 = vsel %vm2085, %v3986, 0
        %4034 = vmatprep.subr.mxu0 %v3967
        %4035 = vmatpush1.msra.mxu0 %v3966
        %4036 = vmatprep.subr.mxu0 %v3971
        %4037 = vmatpush1.msra.mxu0 %v3970
        %4038 = vmatprep.subr.mxu0 %v3975
        %4039 = vmatpush1.msra.mxu0 %v3974
        %4040 = vmatprep.subr.mxu0 %v3979
        %4041 = vmatpush1.msra.mxu0 %v3978
        %4042 = vmatprep.subr.mxu0 0.0
        %4043 = vmatpush1.msra.mxu0 0.0
        %4044 = vmatprep.subr.mxu0 0.0
        %4045 = vmatpush1.msra.mxu0 0.0
        %4046 = vmatprep.subr.mxu0 0.0
        %4047 = vmatpush1.msra.mxu0 0.0
        %4048 = vmatprep.subr.mxu0 0.0
        %4049 = vmatpush1.msra.mxu0 0.0
        %4050 = vmatprep.subr.mxu0 0.0
        %4051 = vmatpush1.msra.mxu0 0.0
        %4052 = vmatprep.subr.mxu0 0.0
        %4053 = vmatpush1.msra.mxu0 0.0
        %4054 = vmatprep.subr.mxu0 0.0
        %4055 = vmatpush1.msra.mxu0 0.0
        %4056 = vmatprep.subr.mxu0 0.0
        %4057 = vmatpush1.msra.mxu0 0.0
        %4058 = vmatprep.subr.mxu0 0.0
        %4059 = vmatpush1.msra.mxu0 0.0
        %4060 = vmatprep.subr.mxu0 0.0
        %4061 = vmatpush1.msra.mxu0 0.0
        %4062 = vmatprep.subr.mxu0 0.0
        %4063 = vmatpush1.msra.mxu0 0.0
        %4064 = vmatprep.subr.mxu0 0.0
        %4065 = vmatpush1.msra.mxu0 0.0
        %4066 = vmatprep.subr.mxu0 0.0
        %4067 = vmatpush1.msra.mxu0 0.0
        %4068 = vmatprep.subr.mxu0 0.0
        %4069 = vmatpush1.msra.mxu0 0.0
        %4070 = vmatprep.subr.mxu0 0.0
        %4071 = vmatpush1.msra.mxu0 0.0
        %4072 = vmatprep.subr.mxu0 0.0
        %4073 = vmatpush1.msra.mxu0 0.0
        %4074 = vmatprep.subr.mxu0 0.0
        %4075 = vmatpush1.msra.mxu0 0.0
        %4076 = vmatprep.subr.mxu0 0.0
        %4077 = vmatpush1.msra.mxu0 0.0
        %4078 = vmatprep.subr.mxu0 0.0
        %4079 = vmatpush1.msra.mxu0 0.0
        %4080 = vmatprep.subr.mxu0 0.0
        %4081 = vmatpush1.msra.mxu0 0.0
        %4082 = vmatprep.subr.mxu0 0.0
        %4083 = vmatpush1.msra.mxu0 0.0
        %4084 = vmatprep.subr.mxu0 0.0
        %4085 = vmatpush1.msra.mxu0 0.0
        %4086 = vmatprep.subr.mxu0 0.0
        %4087 = vmatpush1.msra.mxu0 0.0
        %4088 = vmatprep.subr.mxu0 0.0
        %4089 = vmatpush1.msra.mxu0 0.0
        %4090 = vmatprep.subr.mxu0 0.0
        %4091 = vmatpush1.msra.mxu0 0.0
        %4092 = vmatprep.subr.mxu0 0.0
        %4093 = vmatpush1.msra.mxu0 0.0
        %4094 = vmatprep.subr.mxu0 0.0
        %4095 = vmatpush1.msra.mxu0 0.0
        %4096 = vmatprep.subr.mxu0 0.0
        %4097 = vmatpush1.msra.mxu0 0.0
        %4098 = vmatprep.mubr.f32.mxu0 0.0
        %4099 = vmatmul.mubr.f32.gmra.mrb[0].mxu0 %v4023
        %v4100 = vpop.f32.mrb[0].mxu0
        %v4101 = vadd.f32 %v4005, %v4100
        %v4102 = vpop.f32.mrb[0].mxu0
        %v4103 = vadd.f32 %v4005, %v4102
        %4104 = vmatprep.mubr.f32.mxu0 0.0
        %4105 = vmatmul.mubr.f32.gmra.mrb[0].mxu0 %v4026
        %v4106 = vpop.f32.mrb[0].mxu0
        %v4107 = vadd.f32 %v4010, %v4106
        %v4108 = vpop.f32.mrb[0].mxu0
        %v4109 = vadd.f32 %v4010, %v4108
        %4110 = vmatprep.mubr.f32.mxu0 0.0
        %4111 = vmatmul.mubr.f32.gmra.mrb[0].mxu0 %v4029
        %v4112 = vpop.f32.mrb[0].mxu0
        %v4113 = vadd.f32 %v4015, %v4112
        %v4114 = vpop.f32.mrb[0].mxu0
        %v4115 = vadd.f32 %v4015, %v4114
        %4116 = vmatprep.mubr.f32.mxu0 0.0
        %4117 = vmatmul.mubr.f32.gmra.mrb[0].mxu0 %v4032
        %v4118 = vpop.f32.mrb[0].mxu0
        %v4119 = vadd.f32 %v4020, %v4118
        %v4120 = vpop.f32.mrb[0].mxu0
        %v4121 = vadd.f32 %v4020, %v4120
        %4122 = vdwg.mxu0
        %4123 = vmatprep.subr.mxu0 %v3969
        %4124 = vmatpush1.msra.mxu0 %v3968
        %4125 = vmatprep.subr.mxu0 %v3973
        %4126 = vmatpush1.msra.mxu0 %v3972
        %4127 = vmatprep.subr.mxu0 %v3977
        %4128 = vmatpush1.msra.mxu0 %v3976
        %4129 = vmatprep.subr.mxu0 %v3981
        %4130 = vmatpush1.msra.mxu0 %v3980
        %4131 = vmatprep.subr.mxu0 0.0
        %4132 = vmatpush1.msra.mxu0 0.0
        %4133 = vmatprep.subr.mxu0 0.0
        %4134 = vmatpush1.msra.mxu0 0.0
        %4135 = vmatprep.subr.mxu0 0.0
        %4136 = vmatpush1.msra.mxu0 0.0
        %4137 = vmatprep.subr.mxu0 0.0
        %4138 = vmatpush1.msra.mxu0 0.0
        %4139 = vmatprep.subr.mxu0 0.0
        %4140 = vmatpush1.msra.mxu0 0.0
        %4141 = vmatprep.subr.mxu0 0.0
        %4142 = vmatpush1.msra.mxu0 0.0
        %4143 = vmatprep.subr.mxu0 0.0
        %4144 = vmatpush1.msra.mxu0 0.0
        %4145 = vmatprep.subr.mxu0 0.0
        %4146 = vmatpush1.msra.mxu0 0.0
        %4147 = vmatprep.subr.mxu0 0.0
        %4148 = vmatpush1.msra.mxu0 0.0
        %4149 = vmatprep.subr.mxu0 0.0
        %4150 = vmatpush1.msra.mxu0 0.0
        %4151 = vmatprep.subr.mxu0 0.0
        %4152 = vmatpush1.msra.mxu0 0.0
        %4153 = vmatprep.subr.mxu0 0.0
        %4154 = vmatpush1.msra.mxu0 0.0
        %4155 = vmatprep.subr.mxu0 0.0
        %4156 = vmatpush1.msra.mxu0 0.0
        %4157 = vmatprep.subr.mxu0 0.0
        %4158 = vmatpush1.msra.mxu0 0.0
        %4159 = vmatprep.subr.mxu0 0.0
        %4160 = vmatpush1.msra.mxu0 0.0
        %4161 = vmatprep.subr.mxu0 0.0
        %4162 = vmatpush1.msra.mxu0 0.0
        %4163 = vmatprep.subr.mxu0 0.0
        %4164 = vmatpush1.msra.mxu0 0.0
        %4165 = vmatprep.subr.mxu0 0.0
        %4166 = vmatpush1.msra.mxu0 0.0
        %4167 = vmatprep.subr.mxu0 0.0
        %4168 = vmatpush1.msra.mxu0 0.0
        %4169 = vmatprep.subr.mxu0 0.0
        %4170 = vmatpush1.msra.mxu0 0.0
        %4171 = vmatprep.subr.mxu0 0.0
        %4172 = vmatpush1.msra.mxu0 0.0
        %4173 = vmatprep.subr.mxu0 0.0
        %4174 = vmatpush1.msra.mxu0 0.0
        %4175 = vmatprep.subr.mxu0 0.0
        %4176 = vmatpush1.msra.mxu0 0.0
        %4177 = vmatprep.subr.mxu0 0.0
        %4178 = vmatpush1.msra.mxu0 0.0
        %4179 = vmatprep.subr.mxu0 0.0
        %4180 = vmatpush1.msra.mxu0 0.0
        %4181 = vmatprep.subr.mxu0 0.0
        %4182 = vmatpush1.msra.mxu0 0.0
        %4183 = vmatprep.subr.mxu0 0.0
        %4184 = vmatpush1.msra.mxu0 0.0
        %4185 = vmatprep.subr.mxu0 0.0
        %4186 = vmatpush1.msra.mxu0 0.0
        %4187 = vmatprep.mubr.f32.mxu0 0.0
        %4188 = vmatmul.mubr.f32.gmra.mrb[0].mxu0 %v4023
        %v4189 = vpop.f32.mrb[0].mxu0
        %v4190 = vadd.f32 %v4005, %v4189
        %v4191 = vpop.f32.mrb[0].mxu0
        %v4192 = vadd.f32 %v4005, %v4191
        %4193 = vmatprep.mubr.f32.mxu0 0.0
        %4194 = vmatmul.mubr.f32.gmra.mrb[0].mxu0 %v4026
        %v4195 = vpop.f32.mrb[0].mxu0
        %v4196 = vadd.f32 %v4010, %v4195
        %v4197 = vpop.f32.mrb[0].mxu0
        %v4198 = vadd.f32 %v4010, %v4197
        %4199 = vmatprep.mubr.f32.mxu0 0.0
        %4200 = vmatmul.mubr.f32.gmra.mrb[0].mxu0 %v4029
        %v4201 = vpop.f32.mrb[0].mxu0
        %v4202 = vadd.f32 %v4015, %v4201
        %v4203 = vpop.f32.mrb[0].mxu0
        %v4204 = vadd.f32 %v4015, %v4203
        %4205 = vmatprep.mubr.f32.mxu0 0.0
        %4206 = vmatmul.mubr.f32.gmra.mrb[0].mxu0 %v4032
        %v4207 = vpop.f32.mrb[0].mxu0
        %v4208 = vadd.f32 %v4020, %v4207
        %v4209 = vpop.f32.mrb[0].mxu0
        %v4210 = vadd.f32 %v4020, %v4209
        %4211 = vdwg.mxu0
        %v4212 = vand.u32 2147483647, %v4101
        %vm4213 = vcmp.le.f32.partialorder %v4212, 0.7853982
        %vm4214 = vcmp.lt.s32.totalorder %v4101, 0
        %v4215 = vand.u32 %v4101, 2139095040
        %v4216 = vshrl.u32 %v4215, 23
        %v4217 = vsub.s32 %v4216, 127
        %v4218 = vand.u32 2147483647, %v4101
        %v4219 = vand.u32 %v4218, 8388607
        %v4220 = vor.u32 %v4219, 8388608
        %v4221 = vsub.s32 0, %v4220
        %v4222 = vadd.s32 %v4217, 1
        %vm4223 = vcmp.gt.s32.totalorder %v4222, 0
        %v4224 = vsel %vm4223, %v4222, 0
        %v4225 = vshrl.u32 %v4224, 5
        %v4226 = vand.u32 %v4224, 31
        %v4227 = vsub.s32 32, %v4226
        %v4228 = vshrl.u32 683565275, %v4227
        %v4229 = vshll.u32 683565275, %v4226
        %v4230 = vshrl.u32 2475754826, %v4227
        %v4231 = vor.u32 %v4229, %v4230
        %v4232 = vshll.u32 2475754826, %v4226
        %v4233 = vshrl.u32 2131351028, %v4227
        %v4234 = vor.u32 %v4232, %v4233
        %v4235 = vshll.u32 2131351028, %v4226
        %v4236 = vshrl.u32 2102212464, %v4227
        %v4237 = vor.u32 %v4235, %v4236
        %v4238 = vshll.u32 2102212464, %v4226
        %v4239 = vshrl.u32 920167782, %v4227
        %v4240 = vor.u32 %v4238, %v4239
        %v4241 = vshll.u32 920167782, %v4226
        %v4242 = vshrl.u32 1326507024, %v4227
        %v4243 = vor.u32 %v4241, %v4242
        %vm4244 = vcmp.lt.s32.totalorder %v4225, 1
        %vm4245 = vcmp.lt.s32.totalorder %v4225, 2
        %vm4246 = vcmp.lt.s32.totalorder %v4225, 3
        %vm4247 = vcmp.lt.s32.totalorder %v4225, 4
        %v4248 = vsel %vm4244, %v4228, %v4231
        %v4249 = vsel %vm4247, %v4237, 2102212464
        %v4250 = vsel %vm4246, %v4234, %v4249
        %v4251 = vsel %vm4245, %v4248, %v4250
        %v4252 = vsel %vm4244, %v4231, %v4234
        %v4253 = vsel %vm4247, %v4240, 920167782
        %v4254 = vsel %vm4246, %v4237, %v4253
        %v4255 = vsel %vm4245, %v4252, %v4254
        %v4256 = vsel %vm4244, %v4234, %v4237
        %v4257 = vsel %vm4247, %v4243, 1326507024
        %v4258 = vsel %vm4246, %v4240, %v4257
        %v4259 = vsel %vm4245, %v4256, %v4258
        %v4260 = vshll.u32 %v4220, 8
        %v4261 = vmul.u32.u64.compose %v4260, %v4259
        %v4262 = vextract.low.u32 %v4261
        %v4263 = vextract.high.u32 %v4261
        %v4264 = vmul.u32.u64.compose %v4260, %v4255
        %v4265 = vextract.low.u32 %v4264
        %v4266 = vextract.high.u32 %v4264
        %v4267 = vmul.u32 %v4260, %v4251
        %v4268 = vadd.s32 %v4263, %v4265
        %vm4269 = vc.u32 %v4263, %v4265
        %v4270 = vadd.s32 %v4266, 1
        %v4271 = vsel %vm4269, %v4270, %v4266
        %v4272 = vadd.s32 %v4267, %v4271
        %v4273 = vadd.s32 %v4272, 536870912
        %v4274 = vshrl.u32 %v4273, 30
        %v4275 = vshll.u32 %v4274, 30
        %v4276 = vsub.s32 %v4272, %v4275
        %vm4277 = vcmp.lt.s32.totalorder %v4276, 0
        %v4278 = vsub.s32 0, %v4276
        %v4279 = vsel %vm4277, %v4278, %v4276
        %v4280 = vclz %v4279
        %v4281 = vsub.s32 %v4280, 2
        %vm4282 = vcmp.gt.s32.totalorder 0, %v4281
        %v4283 = vsel %vm4282, 0, %v4281
        %v4284 = vsub.s32 32, %v4283
        %v4285 = vshll.u32 %v4276, %v4283
        %v4286 = vshrl.u32 %v4268, %v4284
        %v4287 = vor.u32 %v4285, %v4286
        %v4288 = vsub.s32 4294967266, %v4283
        %v4289 = vadd.s32 %v4288, 127
        %v4290 = vshll.u32 %v4289, 23
        %v4291 = vor.u32 4788187, %v4290
        %v4292 = vand.u32 2147483647, %v4291
        %v4294 = vcvt.s32.f32 %v4287
        %v4295 = vmul.f32 %v4294, %v4292
        %v4296 = vxor.u32 %v4295, 2147483648
        %v4297 = vsel %vm4214, %v4296, %v4295
        %v4298 = vsub.s32 4, %v4274
        %v4299 = vsel %vm4214, %v4298, %v4274
        %v4300 = vsel %vm4213, %v4101, %v4297
        %v4301 = vsel %vm4213, 0, %v4299
        %v4302 = vcosq.f32.pop %v4300
        %v4303 = vsinq.f32.pop %v4300
        %vm4304 = vweird.f32 %v4101
        %v4305 = vadd.s32 %v4301, 3
        %v4306 = vand.u32 %v4305, 3
        %vm4307 = vcmp.lt.s32.totalorder %v4306, 2
        %vm4308 = vcmp.eq.s32.totalorder %v4306, 0
        %v4309 = vxor.u32 %v4303, 2147483648
        %v4310 = vsel %vm4308, %v4302, %v4309
        %vm4311 = vcmp.eq.s32.totalorder %v4306, 2
        %v4312 = vxor.u32 %v4302, 2147483648
        %v4313 = vsel %vm4311, %v4312, %v4303
        %v4314 = vsel %vm4307, %v4310, %v4313
        %v4315 = vsel %vm4304, nan, %v4314
        %v4316 = vand.u32 2147483647, %v4103
        %vm4317 = vcmp.le.f32.partialorder %v4316, 0.7853982
        %vm4318 = vcmp.lt.s32.totalorder %v4103, 0
        %v4319 = vand.u32 %v4103, 2139095040
        %v4320 = vshrl.u32 %v4319, 23
        %v4321 = vsub.s32 %v4320, 127
        %v4322 = vand.u32 2147483647, %v4103
        %v4323 = vand.u32 %v4322, 8388607
        %v4324 = vor.u32 %v4323, 8388608
        %v4325 = vsub.s32 0, %v4324
        %v4326 = vadd.s32 %v4321, 1
        %vm4327 = vcmp.gt.s32.totalorder %v4326, 0
        %v4328 = vsel %vm4327, %v4326, 0
        %v4329 = vshrl.u32 %v4328, 5
        %v4330 = vand.u32 %v4328, 31
        %v4331 = vsub.s32 32, %v4330
        %v4332 = vshrl.u32 683565275, %v4331
        %v4333 = vshll.u32 683565275, %v4330
        %v4334 = vshrl.u32 2475754826, %v4331
        %v4335 = vor.u32 %v4333, %v4334
        %v4336 = vshll.u32 2475754826, %v4330
        %v4337 = vshrl.u32 2131351028, %v4331
        %v4338 = vor.u32 %v4336, %v4337
        %v4339 = vshll.u32 2131351028, %v4330
        %v4340 = vshrl.u32 2102212464, %v4331
        %v4341 = vor.u32 %v4339, %v4340
        %v4342 = vshll.u32 2102212464, %v4330
        %v4343 = vshrl.u32 920167782, %v4331
        %v4344 = vor.u32 %v4342, %v4343
        %v4345 = vshll.u32 920167782, %v4330
        %v4346 = vshrl.u32 1326507024, %v4331
        %v4347 = vor.u32 %v4345, %v4346
        %vm4348 = vcmp.lt.s32.totalorder %v4329, 1
        %vm4349 = vcmp.lt.s32.totalorder %v4329, 2
        %vm4350 = vcmp.lt.s32.totalorder %v4329, 3
        %vm4351 = vcmp.lt.s32.totalorder %v4329, 4
        %v4352 = vsel %vm4348, %v4332, %v4335
        %v4353 = vsel %vm4351, %v4341, 2102212464
        %v4354 = vsel %vm4350, %v4338, %v4353
        %v4355 = vsel %vm4349, %v4352, %v4354
        %v4356 = vsel %vm4348, %v4335, %v4338
        %v4357 = vsel %vm4351, %v4344, 920167782
        %v4358 = vsel %vm4350, %v4341, %v4357
        %v4359 = vsel %vm4349, %v4356, %v4358
        %v4360 = vsel %vm4348, %v4338, %v4341
        %v4361 = vsel %vm4351, %v4347, 1326507024
        %v4362 = vsel %vm4350, %v4344, %v4361
        %v4363 = vsel %vm4349, %v4360, %v4362
        %v4364 = vshll.u32 %v4324, 8
        %v4365 = vmul.u32.u64.compose %v4364, %v4363
        %v4366 = vextract.low.u32 %v4365
        %v4367 = vextract.high.u32 %v4365
        %v4368 = vmul.u32.u64.compose %v4364, %v4359
        %v4369 = vextract.low.u32 %v4368
        %v4370 = vextract.high.u32 %v4368
        %v4371 = vmul.u32 %v4364, %v4355
        %v4372 = vadd.s32 %v4367, %v4369
        %vm4373 = vc.u32 %v4367, %v4369
        %v4374 = vadd.s32 %v4370, 1
        %v4375 = vsel %vm4373, %v4374, %v4370
        %v4376 = vadd.s32 %v4371, %v4375
        %v4377 = vadd.s32 %v4376, 536870912
        %v4378 = vshrl.u32 %v4377, 30
        %v4379 = vshll.u32 %v4378, 30
        %v4380 = vsub.s32 %v4376, %v4379
        %vm4381 = vcmp.lt.s32.totalorder %v4380, 0
        %v4382 = vsub.s32 0, %v4380
        %v4383 = vsel %vm4381, %v4382, %v4380
        %v4384 = vclz %v4383
        %v4385 = vsub.s32 %v4384, 2
        %vm4386 = vcmp.gt.s32.totalorder 0, %v4385
        %v4387 = vsel %vm4386, 0, %v4385
        %v4388 = vsub.s32 32, %v4387
        %v4389 = vshll.u32 %v4380, %v4387
        %v4390 = vshrl.u32 %v4372, %v4388
        %v4391 = vor.u32 %v4389, %v4390
        %v4392 = vsub.s32 4294967266, %v4387
        %v4393 = vadd.s32 %v4392, 127
        %v4394 = vshll.u32 %v4393, 23
        %v4395 = vor.u32 4788187, %v4394
        %v4396 = vand.u32 2147483647, %v4395
        %v4398 = vcvt.s32.f32 %v4391
        %v4399 = vmul.f32 %v4398, %v4396
        %v4400 = vxor.u32 %v4399, 2147483648
        %v4401 = vsel %vm4318, %v4400, %v4399
        %v4402 = vsub.s32 4, %v4378
        %v4403 = vsel %vm4318, %v4402, %v4378
        %v4404 = vsel %vm4317, %v4103, %v4401
        %v4405 = vsel %vm4317, 0, %v4403
        %v4406 = vcosq.f32.pop %v4404
        %v4407 = vsinq.f32.pop %v4404
        %vm4408 = vweird.f32 %v4103
        %v4409 = vadd.s32 %v4405, 3
        %v4410 = vand.u32 %v4409, 3
        %vm4411 = vcmp.lt.s32.totalorder %v4410, 2
        %vm4412 = vcmp.eq.s32.totalorder %v4410, 0
        %v4413 = vxor.u32 %v4407, 2147483648
        %v4414 = vsel %vm4412, %v4406, %v4413
        %vm4415 = vcmp.eq.s32.totalorder %v4410, 2
        %v4416 = vxor.u32 %v4406, 2147483648
        %v4417 = vsel %vm4415, %v4416, %v4407
        %v4418 = vsel %vm4411, %v4414, %v4417
        %v4419 = vsel %vm4408, nan, %v4418
        %v4420 = vand.u32 2147483647, %v4190
        %vm4421 = vcmp.le.f32.partialorder %v4420, 0.7853982
        %vm4422 = vcmp.lt.s32.totalorder %v4190, 0
        %v4423 = vand.u32 %v4190, 2139095040
        %v4424 = vshrl.u32 %v4423, 23
        %v4425 = vsub.s32 %v4424, 127
        %v4426 = vand.u32 2147483647, %v4190
        %v4427 = vand.u32 %v4426, 8388607
        %v4428 = vor.u32 %v4427, 8388608
        %v4429 = vsub.s32 0, %v4428
        %v4430 = vadd.s32 %v4425, 1
        %vm4431 = vcmp.gt.s32.totalorder %v4430, 0
        %v4432 = vsel %vm4431, %v4430, 0
        %v4433 = vshrl.u32 %v4432, 5
        %v4434 = vand.u32 %v4432, 31
        %v4435 = vsub.s32 32, %v4434
        %v4436 = vshrl.u32 683565275, %v4435
        %v4437 = vshll.u32 683565275, %v4434
        %v4438 = vshrl.u32 2475754826, %v4435
        %v4439 = vor.u32 %v4437, %v4438
        %v4440 = vshll.u32 2475754826, %v4434
        %v4441 = vshrl.u32 2131351028, %v4435
        %v4442 = vor.u32 %v4440, %v4441
        %v4443 = vshll.u32 2131351028, %v4434
        %v4444 = vshrl.u32 2102212464, %v4435
        %v4445 = vor.u32 %v4443, %v4444
        %v4446 = vshll.u32 2102212464, %v4434
        %v4447 = vshrl.u32 920167782, %v4435
        %v4448 = vor.u32 %v4446, %v4447
        %v4449 = vshll.u32 920167782, %v4434
        %v4450 = vshrl.u32 1326507024, %v4435
        %v4451 = vor.u32 %v4449, %v4450
        %vm4452 = vcmp.lt.s32.totalorder %v4433, 1
        %vm4453 = vcmp.lt.s32.totalorder %v4433, 2
        %vm4454 = vcmp.lt.s32.totalorder %v4433, 3
        %vm4455 = vcmp.lt.s32.totalorder %v4433, 4
        %v4456 = vsel %vm4452, %v4436, %v4439
        %v4457 = vsel %vm4455, %v4445, 2102212464
        %v4458 = vsel %vm4454, %v4442, %v4457
        %v4459 = vsel %vm4453, %v4456, %v4458
        %v4460 = vsel %vm4452, %v4439, %v4442
        %v4461 = vsel %vm4455, %v4448, 920167782
        %v4462 = vsel %vm4454, %v4445, %v4461
        %v4463 = vsel %vm4453, %v4460, %v4462
        %v4464 = vsel %vm4452, %v4442, %v4445
        %v4465 = vsel %vm4455, %v4451, 1326507024
        %v4466 = vsel %vm4454, %v4448, %v4465
        %v4467 = vsel %vm4453, %v4464, %v4466
        %v4468 = vshll.u32 %v4428, 8
        %v4469 = vmul.u32.u64.compose %v4468, %v4467
        %v4470 = vextract.low.u32 %v4469
        %v4471 = vextract.high.u32 %v4469
        %v4472 = vmul.u32.u64.compose %v4468, %v4463
        %v4473 = vextract.low.u32 %v4472
        %v4474 = vextract.high.u32 %v4472
        %v4475 = vmul.u32 %v4468, %v4459
        %v4476 = vadd.s32 %v4471, %v4473
        %vm4477 = vc.u32 %v4471, %v4473
        %v4478 = vadd.s32 %v4474, 1
        %v4479 = vsel %vm4477, %v4478, %v4474
        %v4480 = vadd.s32 %v4475, %v4479
        %v4481 = vadd.s32 %v4480, 536870912
        %v4482 = vshrl.u32 %v4481, 30
        %v4483 = vshll.u32 %v4482, 30
        %v4484 = vsub.s32 %v4480, %v4483
        %vm4485 = vcmp.lt.s32.totalorder %v4484, 0
        %v4486 = vsub.s32 0, %v4484
        %v4487 = vsel %vm4485, %v4486, %v4484
        %v4488 = vclz %v4487
        %v4489 = vsub.s32 %v4488, 2
        %vm4490 = vcmp.gt.s32.totalorder 0, %v4489
        %v4491 = vsel %vm4490, 0, %v4489
        %v4492 = vsub.s32 32, %v4491
        %v4493 = vshll.u32 %v4484, %v4491
        %v4494 = vshrl.u32 %v4476, %v4492
        %v4495 = vor.u32 %v4493, %v4494
        %v4496 = vsub.s32 4294967266, %v4491
        %v4497 = vadd.s32 %v4496, 127
        %v4498 = vshll.u32 %v4497, 23
        %v4499 = vor.u32 4788187, %v4498
        %v4500 = vand.u32 2147483647, %v4499
        %v4502 = vcvt.s32.f32 %v4495
        %v4503 = vmul.f32 %v4502, %v4500
        %v4504 = vxor.u32 %v4503, 2147483648
        %v4505 = vsel %vm4422, %v4504, %v4503
        %v4506 = vsub.s32 4, %v4482
        %v4507 = vsel %vm4422, %v4506, %v4482
        %v4508 = vsel %vm4421, %v4190, %v4505
        %v4509 = vsel %vm4421, 0, %v4507
        %v4510 = vcosq.f32.pop %v4508
        %v4511 = vsinq.f32.pop %v4508
        %vm4512 = vweird.f32 %v4190
        %v4513 = vadd.s32 %v4509, 3
        %v4514 = vand.u32 %v4513, 3
        %vm4515 = vcmp.lt.s32.totalorder %v4514, 2
        %vm4516 = vcmp.eq.s32.totalorder %v4514, 0
        %v4517 = vxor.u32 %v4511, 2147483648
        %v4518 = vsel %vm4516, %v4510, %v4517
        %vm4519 = vcmp.eq.s32.totalorder %v4514, 2
        %v4520 = vxor.u32 %v4510, 2147483648
        %v4521 = vsel %vm4519, %v4520, %v4511
        %v4522 = vsel %vm4515, %v4518, %v4521
        %v4523 = vsel %vm4512, nan, %v4522
        %v4524 = vand.u32 2147483647, %v4192
        %vm4525 = vcmp.le.f32.partialorder %v4524, 0.7853982
        %vm4526 = vcmp.lt.s32.totalorder %v4192, 0
        %v4527 = vand.u32 %v4192, 2139095040
        %v4528 = vshrl.u32 %v4527, 23
        %v4529 = vsub.s32 %v4528, 127
        %v4530 = vand.u32 2147483647, %v4192
        %v4531 = vand.u32 %v4530, 8388607
        %v4532 = vor.u32 %v4531, 8388608
        %v4533 = vsub.s32 0, %v4532
        %v4534 = vadd.s32 %v4529, 1
        %vm4535 = vcmp.gt.s32.totalorder %v4534, 0
        %v4536 = vsel %vm4535, %v4534, 0
        %v4537 = vshrl.u32 %v4536, 5
        %v4538 = vand.u32 %v4536, 31
        %v4539 = vsub.s32 32, %v4538
        %v4540 = vshrl.u32 683565275, %v4539
        %v4541 = vshll.u32 683565275, %v4538
        %v4542 = vshrl.u32 2475754826, %v4539
        %v4543 = vor.u32 %v4541, %v4542
        %v4544 = vshll.u32 2475754826, %v4538
        %v4545 = vshrl.u32 2131351028, %v4539
        %v4546 = vor.u32 %v4544, %v4545
        %v4547 = vshll.u32 2131351028, %v4538
        %v4548 = vshrl.u32 2102212464, %v4539
        %v4549 = vor.u32 %v4547, %v4548
        %v4550 = vshll.u32 2102212464, %v4538
        %v4551 = vshrl.u32 920167782, %v4539
        %v4552 = vor.u32 %v4550, %v4551
        %v4553 = vshll.u32 920167782, %v4538
        %v4554 = vshrl.u32 1326507024, %v4539
        %v4555 = vor.u32 %v4553, %v4554
        %vm4556 = vcmp.lt.s32.totalorder %v4537, 1
        %vm4557 = vcmp.lt.s32.totalorder %v4537, 2
        %vm4558 = vcmp.lt.s32.totalorder %v4537, 3
        %vm4559 = vcmp.lt.s32.totalorder %v4537, 4
        %v4560 = vsel %vm4556, %v4540, %v4543
        %v4561 = vsel %vm4559, %v4549, 2102212464
        %v4562 = vsel %vm4558, %v4546, %v4561
        %v4563 = vsel %vm4557, %v4560, %v4562
        %v4564 = vsel %vm4556, %v4543, %v4546
        %v4565 = vsel %vm4559, %v4552, 920167782
        %v4566 = vsel %vm4558, %v4549, %v4565
        %v4567 = vsel %vm4557, %v4564, %v4566
        %v4568 = vsel %vm4556, %v4546, %v4549
        %v4569 = vsel %vm4559, %v4555, 1326507024
        %v4570 = vsel %vm4558, %v4552, %v4569
        %v4571 = vsel %vm4557, %v4568, %v4570
        %v4572 = vshll.u32 %v4532, 8
        %v4573 = vmul.u32.u64.compose %v4572, %v4571
        %v4574 = vextract.low.u32 %v4573
        %v4575 = vextract.high.u32 %v4573
        %v4576 = vmul.u32.u64.compose %v4572, %v4567
        %v4577 = vextract.low.u32 %v4576
        %v4578 = vextract.high.u32 %v4576
        %v4579 = vmul.u32 %v4572, %v4563
        %v4580 = vadd.s32 %v4575, %v4577
        %vm4581 = vc.u32 %v4575, %v4577
        %v4582 = vadd.s32 %v4578, 1
        %v4583 = vsel %vm4581, %v4582, %v4578
        %v4584 = vadd.s32 %v4579, %v4583
        %v4585 = vadd.s32 %v4584, 536870912
        %v4586 = vshrl.u32 %v4585, 30
        %v4587 = vshll.u32 %v4586, 30
        %v4588 = vsub.s32 %v4584, %v4587
        %vm4589 = vcmp.lt.s32.totalorder %v4588, 0
        %v4590 = vsub.s32 0, %v4588
        %v4591 = vsel %vm4589, %v4590, %v4588
        %v4592 = vclz %v4591
        %v4593 = vsub.s32 %v4592, 2
        %vm4594 = vcmp.gt.s32.totalorder 0, %v4593
        %v4595 = vsel %vm4594, 0, %v4593
        %v4596 = vsub.s32 32, %v4595
        %v4597 = vshll.u32 %v4588, %v4595
        %v4598 = vshrl.u32 %v4580, %v4596
        %v4599 = vor.u32 %v4597, %v4598
        %v4600 = vsub.s32 4294967266, %v4595
        %v4601 = vadd.s32 %v4600, 127
        %v4602 = vshll.u32 %v4601, 23
        %v4603 = vor.u32 4788187, %v4602
        %v4604 = vand.u32 2147483647, %v4603
        %v4606 = vcvt.s32.f32 %v4599
        %v4607 = vmul.f32 %v4606, %v4604
        %v4608 = vxor.u32 %v4607, 2147483648
        %v4609 = vsel %vm4526, %v4608, %v4607
        %v4610 = vsub.s32 4, %v4586
        %v4611 = vsel %vm4526, %v4610, %v4586
        %v4612 = vsel %vm4525, %v4192, %v4609
        %v4613 = vsel %vm4525, 0, %v4611
        %v4614 = vcosq.f32.pop %v4612
        %v4615 = vsinq.f32.pop %v4612
        %vm4616 = vweird.f32 %v4192
        %v4617 = vadd.s32 %v4613, 3
        %v4618 = vand.u32 %v4617, 3
        %vm4619 = vcmp.lt.s32.totalorder %v4618, 2
        %vm4620 = vcmp.eq.s32.totalorder %v4618, 0
        %v4621 = vxor.u32 %v4615, 2147483648
        %v4622 = vsel %vm4620, %v4614, %v4621
        %vm4623 = vcmp.eq.s32.totalorder %v4618, 2
        %v4624 = vxor.u32 %v4614, 2147483648
        %v4625 = vsel %vm4623, %v4624, %v4615
        %v4626 = vsel %vm4619, %v4622, %v4625
        %v4627 = vsel %vm4616, nan, %v4626
        %v4628 = vand.u32 2147483647, %v4107
        %vm4629 = vcmp.le.f32.partialorder %v4628, 0.7853982
        %vm4630 = vcmp.lt.s32.totalorder %v4107, 0
        %v4631 = vand.u32 %v4107, 2139095040
        %v4632 = vshrl.u32 %v4631, 23
        %v4633 = vsub.s32 %v4632, 127
        %v4634 = vand.u32 2147483647, %v4107
        %v4635 = vand.u32 %v4634, 8388607
        %v4636 = vor.u32 %v4635, 8388608
        %v4637 = vsub.s32 0, %v4636
        %v4638 = vadd.s32 %v4633, 1
        %vm4639 = vcmp.gt.s32.totalorder %v4638, 0
        %v4640 = vsel %vm4639, %v4638, 0
        %v4641 = vshrl.u32 %v4640, 5
        %v4642 = vand.u32 %v4640, 31
        %v4643 = vsub.s32 32, %v4642
        %v4644 = vshrl.u32 683565275, %v4643
        %v4645 = vshll.u32 683565275, %v4642
        %v4646 = vshrl.u32 2475754826, %v4643
        %v4647 = vor.u32 %v4645, %v4646
        %v4648 = vshll.u32 2475754826, %v4642
        %v4649 = vshrl.u32 2131351028, %v4643
        %v4650 = vor.u32 %v4648, %v4649
        %v4651 = vshll.u32 2131351028, %v4642
        %v4652 = vshrl.u32 2102212464, %v4643
        %v4653 = vor.u32 %v4651, %v4652
        %v4654 = vshll.u32 2102212464, %v4642
        %v4655 = vshrl.u32 920167782, %v4643
        %v4656 = vor.u32 %v4654, %v4655
        %v4657 = vshll.u32 920167782, %v4642
        %v4658 = vshrl.u32 1326507024, %v4643
        %v4659 = vor.u32 %v4657, %v4658
        %vm4660 = vcmp.lt.s32.totalorder %v4641, 1
        %vm4661 = vcmp.lt.s32.totalorder %v4641, 2
        %vm4662 = vcmp.lt.s32.totalorder %v4641, 3
        %vm4663 = vcmp.lt.s32.totalorder %v4641, 4
        %v4664 = vsel %vm4660, %v4644, %v4647
        %v4665 = vsel %vm4663, %v4653, 2102212464
        %v4666 = vsel %vm4662, %v4650, %v4665
        %v4667 = vsel %vm4661, %v4664, %v4666
        %v4668 = vsel %vm4660, %v4647, %v4650
        %v4669 = vsel %vm4663, %v4656, 920167782
        %v4670 = vsel %vm4662, %v4653, %v4669
        %v4671 = vsel %vm4661, %v4668, %v4670
        %v4672 = vsel %vm4660, %v4650, %v4653
        %v4673 = vsel %vm4663, %v4659, 1326507024
        %v4674 = vsel %vm4662, %v4656, %v4673
        %v4675 = vsel %vm4661, %v4672, %v4674
        %v4676 = vshll.u32 %v4636, 8
        %v4677 = vmul.u32.u64.compose %v4676, %v4675
        %v4678 = vextract.low.u32 %v4677
        %v4679 = vextract.high.u32 %v4677
        %v4680 = vmul.u32.u64.compose %v4676, %v4671
        %v4681 = vextract.low.u32 %v4680
        %v4682 = vextract.high.u32 %v4680
        %v4683 = vmul.u32 %v4676, %v4667
        %v4684 = vadd.s32 %v4679, %v4681
        %vm4685 = vc.u32 %v4679, %v4681
        %v4686 = vadd.s32 %v4682, 1
        %v4687 = vsel %vm4685, %v4686, %v4682
        %v4688 = vadd.s32 %v4683, %v4687
        %v4689 = vadd.s32 %v4688, 536870912
        %v4690 = vshrl.u32 %v4689, 30
        %v4691 = vshll.u32 %v4690, 30
        %v4692 = vsub.s32 %v4688, %v4691
        %vm4693 = vcmp.lt.s32.totalorder %v4692, 0
        %v4694 = vsub.s32 0, %v4692
        %v4695 = vsel %vm4693, %v4694, %v4692
        %v4696 = vclz %v4695
        %v4697 = vsub.s32 %v4696, 2
        %vm4698 = vcmp.gt.s32.totalorder 0, %v4697
        %v4699 = vsel %vm4698, 0, %v4697
        %v4700 = vsub.s32 32, %v4699
        %v4701 = vshll.u32 %v4692, %v4699
        %v4702 = vshrl.u32 %v4684, %v4700
        %v4703 = vor.u32 %v4701, %v4702
        %v4704 = vsub.s32 4294967266, %v4699
        %v4705 = vadd.s32 %v4704, 127
        %v4706 = vshll.u32 %v4705, 23
        %v4707 = vor.u32 4788187, %v4706
        %v4708 = vand.u32 2147483647, %v4707
        %v4710 = vcvt.s32.f32 %v4703
        %v4711 = vmul.f32 %v4710, %v4708
        %v4712 = vxor.u32 %v4711, 2147483648
        %v4713 = vsel %vm4630, %v4712, %v4711
        %v4714 = vsub.s32 4, %v4690
        %v4715 = vsel %vm4630, %v4714, %v4690
        %v4716 = vsel %vm4629, %v4107, %v4713
        %v4717 = vsel %vm4629, 0, %v4715
        %v4718 = vcosq.f32.pop %v4716
        %v4719 = vsinq.f32.pop %v4716
        %vm4720 = vweird.f32 %v4107
        %v4721 = vadd.s32 %v4717, 3
        %v4722 = vand.u32 %v4721, 3
        %vm4723 = vcmp.lt.s32.totalorder %v4722, 2
        %vm4724 = vcmp.eq.s32.totalorder %v4722, 0
        %v4725 = vxor.u32 %v4719, 2147483648
        %v4726 = vsel %vm4724, %v4718, %v4725
        %vm4727 = vcmp.eq.s32.totalorder %v4722, 2
        %v4728 = vxor.u32 %v4718, 2147483648
        %v4729 = vsel %vm4727, %v4728, %v4719
        %v4730 = vsel %vm4723, %v4726, %v4729
        %v4731 = vsel %vm4720, nan, %v4730
        %v4732 = vand.u32 2147483647, %v4109
        %vm4733 = vcmp.le.f32.partialorder %v4732, 0.7853982
        %vm4734 = vcmp.lt.s32.totalorder %v4109, 0
        %v4735 = vand.u32 %v4109, 2139095040
        %v4736 = vshrl.u32 %v4735, 23
        %v4737 = vsub.s32 %v4736, 127
        %v4738 = vand.u32 2147483647, %v4109
        %v4739 = vand.u32 %v4738, 8388607
        %v4740 = vor.u32 %v4739, 8388608
        %v4741 = vsub.s32 0, %v4740
        %v4742 = vadd.s32 %v4737, 1
        %vm4743 = vcmp.gt.s32.totalorder %v4742, 0
        %v4744 = vsel %vm4743, %v4742, 0
        %v4745 = vshrl.u32 %v4744, 5
        %v4746 = vand.u32 %v4744, 31
        %v4747 = vsub.s32 32, %v4746
        %v4748 = vshrl.u32 683565275, %v4747
        %v4749 = vshll.u32 683565275, %v4746
        %v4750 = vshrl.u32 2475754826, %v4747
        %v4751 = vor.u32 %v4749, %v4750
        %v4752 = vshll.u32 2475754826, %v4746
        %v4753 = vshrl.u32 2131351028, %v4747
        %v4754 = vor.u32 %v4752, %v4753
        %v4755 = vshll.u32 2131351028, %v4746
        %v4756 = vshrl.u32 2102212464, %v4747
        %v4757 = vor.u32 %v4755, %v4756
        %v4758 = vshll.u32 2102212464, %v4746
        %v4759 = vshrl.u32 920167782, %v4747
        %v4760 = vor.u32 %v4758, %v4759
        %v4761 = vshll.u32 920167782, %v4746
        %v4762 = vshrl.u32 1326507024, %v4747
        %v4763 = vor.u32 %v4761, %v4762
        %vm4764 = vcmp.lt.s32.totalorder %v4745, 1
        %vm4765 = vcmp.lt.s32.totalorder %v4745, 2
        %vm4766 = vcmp.lt.s32.totalorder %v4745, 3
        %vm4767 = vcmp.lt.s32.totalorder %v4745, 4
        %v4768 = vsel %vm4764, %v4748, %v4751
        %v4769 = vsel %vm4767, %v4757, 2102212464
        %v4770 = vsel %vm4766, %v4754, %v4769
        %v4771 = vsel %vm4765, %v4768, %v4770
        %v4772 = vsel %vm4764, %v4751, %v4754
        %v4773 = vsel %vm4767, %v4760, 920167782
        %v4774 = vsel %vm4766, %v4757, %v4773
        %v4775 = vsel %vm4765, %v4772, %v4774
        %v4776 = vsel %vm4764, %v4754, %v4757
        %v4777 = vsel %vm4767, %v4763, 1326507024
        %v4778 = vsel %vm4766, %v4760, %v4777
        %v4779 = vsel %vm4765, %v4776, %v4778
        %v4780 = vshll.u32 %v4740, 8
        %v4781 = vmul.u32.u64.compose %v4780, %v4779
        %v4782 = vextract.low.u32 %v4781
        %v4783 = vextract.high.u32 %v4781
        %v4784 = vmul.u32.u64.compose %v4780, %v4775
        %v4785 = vextract.low.u32 %v4784
        %v4786 = vextract.high.u32 %v4784
        %v4787 = vmul.u32 %v4780, %v4771
        %v4788 = vadd.s32 %v4783, %v4785
        %vm4789 = vc.u32 %v4783, %v4785
        %v4790 = vadd.s32 %v4786, 1
        %v4791 = vsel %vm4789, %v4790, %v4786
        %v4792 = vadd.s32 %v4787, %v4791
        %v4793 = vadd.s32 %v4792, 536870912
        %v4794 = vshrl.u32 %v4793, 30
        %v4795 = vshll.u32 %v4794, 30
        %v4796 = vsub.s32 %v4792, %v4795
        %vm4797 = vcmp.lt.s32.totalorder %v4796, 0
        %v4798 = vsub.s32 0, %v4796
        %v4799 = vsel %vm4797, %v4798, %v4796
        %v4800 = vclz %v4799
        %v4801 = vsub.s32 %v4800, 2
        %vm4802 = vcmp.gt.s32.totalorder 0, %v4801
        %v4803 = vsel %vm4802, 0, %v4801
        %v4804 = vsub.s32 32, %v4803
        %v4805 = vshll.u32 %v4796, %v4803
        %v4806 = vshrl.u32 %v4788, %v4804
        %v4807 = vor.u32 %v4805, %v4806
        %v4808 = vsub.s32 4294967266, %v4803
        %v4809 = vadd.s32 %v4808, 127
        %v4810 = vshll.u32 %v4809, 23
        %v4811 = vor.u32 4788187, %v4810
        %v4812 = vand.u32 2147483647, %v4811
        %v4814 = vcvt.s32.f32 %v4807
        %v4815 = vmul.f32 %v4814, %v4812
        %v4816 = vxor.u32 %v4815, 2147483648
        %v4817 = vsel %vm4734, %v4816, %v4815
        %v4818 = vsub.s32 4, %v4794
        %v4819 = vsel %vm4734, %v4818, %v4794
        %v4820 = vsel %vm4733, %v4109, %v4817
        %v4821 = vsel %vm4733, 0, %v4819
        %v4822 = vcosq.f32.pop %v4820
        %v4823 = vsinq.f32.pop %v4820
        %vm4824 = vweird.f32 %v4109
        %v4825 = vadd.s32 %v4821, 3
        %v4826 = vand.u32 %v4825, 3
        %vm4827 = vcmp.lt.s32.totalorder %v4826, 2
        %vm4828 = vcmp.eq.s32.totalorder %v4826, 0
        %v4829 = vxor.u32 %v4823, 2147483648
        %v4830 = vsel %vm4828, %v4822, %v4829
        %vm4831 = vcmp.eq.s32.totalorder %v4826, 2
        %v4832 = vxor.u32 %v4822, 2147483648
        %v4833 = vsel %vm4831, %v4832, %v4823
        %v4834 = vsel %vm4827, %v4830, %v4833
        %v4835 = vsel %vm4824, nan, %v4834
        %v4836 = vand.u32 2147483647, %v4196
        %vm4837 = vcmp.le.f32.partialorder %v4836, 0.7853982
        %vm4838 = vcmp.lt.s32.totalorder %v4196, 0
        %v4839 = vand.u32 %v4196, 2139095040
        %v4840 = vshrl.u32 %v4839, 23
        %v4841 = vsub.s32 %v4840, 127
        %v4842 = vand.u32 2147483647, %v4196
        %v4843 = vand.u32 %v4842, 8388607
        %v4844 = vor.u32 %v4843, 8388608
        %v4845 = vsub.s32 0, %v4844
        %v4846 = vadd.s32 %v4841, 1
        %vm4847 = vcmp.gt.s32.totalorder %v4846, 0
        %v4848 = vsel %vm4847, %v4846, 0
        %v4849 = vshrl.u32 %v4848, 5
        %v4850 = vand.u32 %v4848, 31
        %v4851 = vsub.s32 32, %v4850
        %v4852 = vshrl.u32 683565275, %v4851
        %v4853 = vshll.u32 683565275, %v4850
        %v4854 = vshrl.u32 2475754826, %v4851
        %v4855 = vor.u32 %v4853, %v4854
        %v4856 = vshll.u32 2475754826, %v4850
        %v4857 = vshrl.u32 2131351028, %v4851
        %v4858 = vor.u32 %v4856, %v4857
        %v4859 = vshll.u32 2131351028, %v4850
        %v4860 = vshrl.u32 2102212464, %v4851
        %v4861 = vor.u32 %v4859, %v4860
        %v4862 = vshll.u32 2102212464, %v4850
        %v4863 = vshrl.u32 920167782, %v4851
        %v4864 = vor.u32 %v4862, %v4863
        %v4865 = vshll.u32 920167782, %v4850
        %v4866 = vshrl.u32 1326507024, %v4851
        %v4867 = vor.u32 %v4865, %v4866
        %vm4868 = vcmp.lt.s32.totalorder %v4849, 1
        %vm4869 = vcmp.lt.s32.totalorder %v4849, 2
        %vm4870 = vcmp.lt.s32.totalorder %v4849, 3
        %vm4871 = vcmp.lt.s32.totalorder %v4849, 4
        %v4872 = vsel %vm4868, %v4852, %v4855
        %v4873 = vsel %vm4871, %v4861, 2102212464
        %v4874 = vsel %vm4870, %v4858, %v4873
        %v4875 = vsel %vm4869, %v4872, %v4874
        %v4876 = vsel %vm4868, %v4855, %v4858
        %v4877 = vsel %vm4871, %v4864, 920167782
        %v4878 = vsel %vm4870, %v4861, %v4877
        %v4879 = vsel %vm4869, %v4876, %v4878
        %v4880 = vsel %vm4868, %v4858, %v4861
        %v4881 = vsel %vm4871, %v4867, 1326507024
        %v4882 = vsel %vm4870, %v4864, %v4881
        %v4883 = vsel %vm4869, %v4880, %v4882
        %v4884 = vshll.u32 %v4844, 8
        %v4885 = vmul.u32.u64.compose %v4884, %v4883
        %v4886 = vextract.low.u32 %v4885
        %v4887 = vextract.high.u32 %v4885
        %v4888 = vmul.u32.u64.compose %v4884, %v4879
        %v4889 = vextract.low.u32 %v4888
        %v4890 = vextract.high.u32 %v4888
        %v4891 = vmul.u32 %v4884, %v4875
        %v4892 = vadd.s32 %v4887, %v4889
        %vm4893 = vc.u32 %v4887, %v4889
        %v4894 = vadd.s32 %v4890, 1
        %v4895 = vsel %vm4893, %v4894, %v4890
        %v4896 = vadd.s32 %v4891, %v4895
        %v4897 = vadd.s32 %v4896, 536870912
        %v4898 = vshrl.u32 %v4897, 30
        %v4899 = vshll.u32 %v4898, 30
        %v4900 = vsub.s32 %v4896, %v4899
        %vm4901 = vcmp.lt.s32.totalorder %v4900, 0
        %v4902 = vsub.s32 0, %v4900
        %v4903 = vsel %vm4901, %v4902, %v4900
        %v4904 = vclz %v4903
        %v4905 = vsub.s32 %v4904, 2
        %vm4906 = vcmp.gt.s32.totalorder 0, %v4905
        %v4907 = vsel %vm4906, 0, %v4905
        %v4908 = vsub.s32 32, %v4907
        %v4909 = vshll.u32 %v4900, %v4907
        %v4910 = vshrl.u32 %v4892, %v4908
        %v4911 = vor.u32 %v4909, %v4910
        %v4912 = vsub.s32 4294967266, %v4907
        %v4913 = vadd.s32 %v4912, 127
        %v4914 = vshll.u32 %v4913, 23
        %v4915 = vor.u32 4788187, %v4914
        %v4916 = vand.u32 2147483647, %v4915
        %v4918 = vcvt.s32.f32 %v4911
        %v4919 = vmul.f32 %v4918, %v4916
        %v4920 = vxor.u32 %v4919, 2147483648
        %v4921 = vsel %vm4838, %v4920, %v4919
        %v4922 = vsub.s32 4, %v4898
        %v4923 = vsel %vm4838, %v4922, %v4898
        %v4924 = vsel %vm4837, %v4196, %v4921
        %v4925 = vsel %vm4837, 0, %v4923
        %v4926 = vcosq.f32.pop %v4924
        %v4927 = vsinq.f32.pop %v4924
        %vm4928 = vweird.f32 %v4196
        %v4929 = vadd.s32 %v4925, 3
        %v4930 = vand.u32 %v4929, 3
        %vm4931 = vcmp.lt.s32.totalorder %v4930, 2
        %vm4932 = vcmp.eq.s32.totalorder %v4930, 0
        %v4933 = vxor.u32 %v4927, 2147483648
        %v4934 = vsel %vm4932, %v4926, %v4933
        %vm4935 = vcmp.eq.s32.totalorder %v4930, 2
        %v4936 = vxor.u32 %v4926, 2147483648
        %v4937 = vsel %vm4935, %v4936, %v4927
        %v4938 = vsel %vm4931, %v4934, %v4937
        %v4939 = vsel %vm4928, nan, %v4938
        %v4940 = vand.u32 2147483647, %v4198
        %vm4941 = vcmp.le.f32.partialorder %v4940, 0.7853982
        %vm4942 = vcmp.lt.s32.totalorder %v4198, 0
        %v4943 = vand.u32 %v4198, 2139095040
        %v4944 = vshrl.u32 %v4943, 23
        %v4945 = vsub.s32 %v4944, 127
        %v4946 = vand.u32 2147483647, %v4198
        %v4947 = vand.u32 %v4946, 8388607
        %v4948 = vor.u32 %v4947, 8388608
        %v4949 = vsub.s32 0, %v4948
        %v4950 = vadd.s32 %v4945, 1
        %vm4951 = vcmp.gt.s32.totalorder %v4950, 0
        %v4952 = vsel %vm4951, %v4950, 0
        %v4953 = vshrl.u32 %v4952, 5
        %v4954 = vand.u32 %v4952, 31
        %v4955 = vsub.s32 32, %v4954
        %v4956 = vshrl.u32 683565275, %v4955
        %v4957 = vshll.u32 683565275, %v4954
        %v4958 = vshrl.u32 2475754826, %v4955
        %v4959 = vor.u32 %v4957, %v4958
        %v4960 = vshll.u32 2475754826, %v4954
        %v4961 = vshrl.u32 2131351028, %v4955
        %v4962 = vor.u32 %v4960, %v4961
        %v4963 = vshll.u32 2131351028, %v4954
        %v4964 = vshrl.u32 2102212464, %v4955
        %v4965 = vor.u32 %v4963, %v4964
        %v4966 = vshll.u32 2102212464, %v4954
        %v4967 = vshrl.u32 920167782, %v4955
        %v4968 = vor.u32 %v4966, %v4967
        %v4969 = vshll.u32 920167782, %v4954
        %v4970 = vshrl.u32 1326507024, %v4955
        %v4971 = vor.u32 %v4969, %v4970
        %vm4972 = vcmp.lt.s32.totalorder %v4953, 1
        %vm4973 = vcmp.lt.s32.totalorder %v4953, 2
        %vm4974 = vcmp.lt.s32.totalorder %v4953, 3
        %vm4975 = vcmp.lt.s32.totalorder %v4953, 4
        %v4976 = vsel %vm4972, %v4956, %v4959
        %v4977 = vsel %vm4975, %v4965, 2102212464
        %v4978 = vsel %vm4974, %v4962, %v4977
        %v4979 = vsel %vm4973, %v4976, %v4978
        %v4980 = vsel %vm4972, %v4959, %v4962
        %v4981 = vsel %vm4975, %v4968, 920167782
        %v4982 = vsel %vm4974, %v4965, %v4981
        %v4983 = vsel %vm4973, %v4980, %v4982
        %v4984 = vsel %vm4972, %v4962, %v4965
        %v4985 = vsel %vm4975, %v4971, 1326507024
        %v4986 = vsel %vm4974, %v4968, %v4985
        %v4987 = vsel %vm4973, %v4984, %v4986
        %v4988 = vshll.u32 %v4948, 8
        %v4989 = vmul.u32.u64.compose %v4988, %v4987
        %v4990 = vextract.low.u32 %v4989
        %v4991 = vextract.high.u32 %v4989
        %v4992 = vmul.u32.u64.compose %v4988, %v4983
        %v4993 = vextract.low.u32 %v4992
        %v4994 = vextract.high.u32 %v4992
        %v4995 = vmul.u32 %v4988, %v4979
        %v4996 = vadd.s32 %v4991, %v4993
        %vm4997 = vc.u32 %v4991, %v4993
        %v4998 = vadd.s32 %v4994, 1
        %v4999 = vsel %vm4997, %v4998, %v4994
        %v5000 = vadd.s32 %v4995, %v4999
        %v5001 = vadd.s32 %v5000, 536870912
        %v5002 = vshrl.u32 %v5001, 30
        %v5003 = vshll.u32 %v5002, 30
        %v5004 = vsub.s32 %v5000, %v5003
        %vm5005 = vcmp.lt.s32.totalorder %v5004, 0
        %v5006 = vsub.s32 0, %v5004
        %v5007 = vsel %vm5005, %v5006, %v5004
        %v5008 = vclz %v5007
        %v5009 = vsub.s32 %v5008, 2
        %vm5010 = vcmp.gt.s32.totalorder 0, %v5009
        %v5011 = vsel %vm5010, 0, %v5009
        %v5012 = vsub.s32 32, %v5011
        %v5013 = vshll.u32 %v5004, %v5011
        %v5014 = vshrl.u32 %v4996, %v5012
        %v5015 = vor.u32 %v5013, %v5014
        %v5016 = vsub.s32 4294967266, %v5011
        %v5017 = vadd.s32 %v5016, 127
        %v5018 = vshll.u32 %v5017, 23
        %v5019 = vor.u32 4788187, %v5018
        %v5020 = vand.u32 2147483647, %v5019
        %v5022 = vcvt.s32.f32 %v5015
        %v5023 = vmul.f32 %v5022, %v5020
        %v5024 = vxor.u32 %v5023, 2147483648
        %v5025 = vsel %vm4942, %v5024, %v5023
        %v5026 = vsub.s32 4, %v5002
        %v5027 = vsel %vm4942, %v5026, %v5002
        %v5028 = vsel %vm4941, %v4198, %v5025
        %v5029 = vsel %vm4941, 0, %v5027
        %v5030 = vcosq.f32.pop %v5028
        %v5031 = vsinq.f32.pop %v5028
        %vm5032 = vweird.f32 %v4198
        %v5033 = vadd.s32 %v5029, 3
        %v5034 = vand.u32 %v5033, 3
        %vm5035 = vcmp.lt.s32.totalorder %v5034, 2
        %vm5036 = vcmp.eq.s32.totalorder %v5034, 0
        %v5037 = vxor.u32 %v5031, 2147483648
        %v5038 = vsel %vm5036, %v5030, %v5037
        %vm5039 = vcmp.eq.s32.totalorder %v5034, 2
        %v5040 = vxor.u32 %v5030, 2147483648
        %v5041 = vsel %vm5039, %v5040, %v5031
        %v5042 = vsel %vm5035, %v5038, %v5041
        %v5043 = vsel %vm5032, nan, %v5042
        %v5044 = vand.u32 2147483647, %v4113
        %vm5045 = vcmp.le.f32.partialorder %v5044, 0.7853982
        %vm5046 = vcmp.lt.s32.totalorder %v4113, 0
        %v5047 = vand.u32 %v4113, 2139095040
        %v5048 = vshrl.u32 %v5047, 23
        %v5049 = vsub.s32 %v5048, 127
        %v5050 = vand.u32 2147483647, %v4113
        %v5051 = vand.u32 %v5050, 8388607
        %v5052 = vor.u32 %v5051, 8388608
        %v5053 = vsub.s32 0, %v5052
        %v5054 = vadd.s32 %v5049, 1
        %vm5055 = vcmp.gt.s32.totalorder %v5054, 0
        %v5056 = vsel %vm5055, %v5054, 0
        %v5057 = vshrl.u32 %v5056, 5
        %v5058 = vand.u32 %v5056, 31
        %v5059 = vsub.s32 32, %v5058
        %v5060 = vshrl.u32 683565275, %v5059
        %v5061 = vshll.u32 683565275, %v5058
        %v5062 = vshrl.u32 2475754826, %v5059
        %v5063 = vor.u32 %v5061, %v5062
        %v5064 = vshll.u32 2475754826, %v5058
        %v5065 = vshrl.u32 2131351028, %v5059
        %v5066 = vor.u32 %v5064, %v5065
        %v5067 = vshll.u32 2131351028, %v5058
        %v5068 = vshrl.u32 2102212464, %v5059
        %v5069 = vor.u32 %v5067, %v5068
        %v5070 = vshll.u32 2102212464, %v5058
        %v5071 = vshrl.u32 920167782, %v5059
        %v5072 = vor.u32 %v5070, %v5071
        %v5073 = vshll.u32 920167782, %v5058
        %v5074 = vshrl.u32 1326507024, %v5059
        %v5075 = vor.u32 %v5073, %v5074
        %vm5076 = vcmp.lt.s32.totalorder %v5057, 1
        %vm5077 = vcmp.lt.s32.totalorder %v5057, 2
        %vm5078 = vcmp.lt.s32.totalorder %v5057, 3
        %vm5079 = vcmp.lt.s32.totalorder %v5057, 4
        %v5080 = vsel %vm5076, %v5060, %v5063
        %v5081 = vsel %vm5079, %v5069, 2102212464
        %v5082 = vsel %vm5078, %v5066, %v5081
        %v5083 = vsel %vm5077, %v5080, %v5082
        %v5084 = vsel %vm5076, %v5063, %v5066
        %v5085 = vsel %vm5079, %v5072, 920167782
        %v5086 = vsel %vm5078, %v5069, %v5085
        %v5087 = vsel %vm5077, %v5084, %v5086
        %v5088 = vsel %vm5076, %v5066, %v5069
        %v5089 = vsel %vm5079, %v5075, 1326507024
        %v5090 = vsel %vm5078, %v5072, %v5089
        %v5091 = vsel %vm5077, %v5088, %v5090
        %v5092 = vshll.u32 %v5052, 8
        %v5093 = vmul.u32.u64.compose %v5092, %v5091
        %v5094 = vextract.low.u32 %v5093
        %v5095 = vextract.high.u32 %v5093
        %v5096 = vmul.u32.u64.compose %v5092, %v5087
        %v5097 = vextract.low.u32 %v5096
        %v5098 = vextract.high.u32 %v5096
        %v5099 = vmul.u32 %v5092, %v5083
        %v5100 = vadd.s32 %v5095, %v5097
        %vm5101 = vc.u32 %v5095, %v5097
        %v5102 = vadd.s32 %v5098, 1
        %v5103 = vsel %vm5101, %v5102, %v5098
        %v5104 = vadd.s32 %v5099, %v5103
        %v5105 = vadd.s32 %v5104, 536870912
        %v5106 = vshrl.u32 %v5105, 30
        %v5107 = vshll.u32 %v5106, 30
        %v5108 = vsub.s32 %v5104, %v5107
        %vm5109 = vcmp.lt.s32.totalorder %v5108, 0
        %v5110 = vsub.s32 0, %v5108
        %v5111 = vsel %vm5109, %v5110, %v5108
        %v5112 = vclz %v5111
        %v5113 = vsub.s32 %v5112, 2
        %vm5114 = vcmp.gt.s32.totalorder 0, %v5113
        %v5115 = vsel %vm5114, 0, %v5113
        %v5116 = vsub.s32 32, %v5115
        %v5117 = vshll.u32 %v5108, %v5115
        %v5118 = vshrl.u32 %v5100, %v5116
        %v5119 = vor.u32 %v5117, %v5118
        %v5120 = vsub.s32 4294967266, %v5115
        %v5121 = vadd.s32 %v5120, 127
        %v5122 = vshll.u32 %v5121, 23
        %v5123 = vor.u32 4788187, %v5122
        %v5124 = vand.u32 2147483647, %v5123
        %v5126 = vcvt.s32.f32 %v5119
        %v5127 = vmul.f32 %v5126, %v5124
        %v5128 = vxor.u32 %v5127, 2147483648
        %v5129 = vsel %vm5046, %v5128, %v5127
        %v5130 = vsub.s32 4, %v5106
        %v5131 = vsel %vm5046, %v5130, %v5106
        %v5132 = vsel %vm5045, %v4113, %v5129
        %v5133 = vsel %vm5045, 0, %v5131
        %v5134 = vcosq.f32.pop %v5132
        %v5135 = vsinq.f32.pop %v5132
        %vm5136 = vweird.f32 %v4113
        %v5137 = vadd.s32 %v5133, 3
        %v5138 = vand.u32 %v5137, 3
        %vm5139 = vcmp.lt.s32.totalorder %v5138, 2
        %vm5140 = vcmp.eq.s32.totalorder %v5138, 0
        %v5141 = vxor.u32 %v5135, 2147483648
        %v5142 = vsel %vm5140, %v5134, %v5141
        %vm5143 = vcmp.eq.s32.totalorder %v5138, 2
        %v5144 = vxor.u32 %v5134, 2147483648
        %v5145 = vsel %vm5143, %v5144, %v5135
        %v5146 = vsel %vm5139, %v5142, %v5145
        %v5147 = vsel %vm5136, nan, %v5146
        %v5148 = vand.u32 2147483647, %v4115
        %vm5149 = vcmp.le.f32.partialorder %v5148, 0.7853982
        %vm5150 = vcmp.lt.s32.totalorder %v4115, 0
        %v5151 = vand.u32 %v4115, 2139095040
        %v5152 = vshrl.u32 %v5151, 23
        %v5153 = vsub.s32 %v5152, 127
        %v5154 = vand.u32 2147483647, %v4115
        %v5155 = vand.u32 %v5154, 8388607
        %v5156 = vor.u32 %v5155, 8388608
        %v5157 = vsub.s32 0, %v5156
        %v5158 = vadd.s32 %v5153, 1
        %vm5159 = vcmp.gt.s32.totalorder %v5158, 0
        %v5160 = vsel %vm5159, %v5158, 0
        %v5161 = vshrl.u32 %v5160, 5
        %v5162 = vand.u32 %v5160, 31
        %v5163 = vsub.s32 32, %v5162
        %v5164 = vshrl.u32 683565275, %v5163
        %v5165 = vshll.u32 683565275, %v5162
        %v5166 = vshrl.u32 2475754826, %v5163
        %v5167 = vor.u32 %v5165, %v5166
        %v5168 = vshll.u32 2475754826, %v5162
        %v5169 = vshrl.u32 2131351028, %v5163
        %v5170 = vor.u32 %v5168, %v5169
        %v5171 = vshll.u32 2131351028, %v5162
        %v5172 = vshrl.u32 2102212464, %v5163
        %v5173 = vor.u32 %v5171, %v5172
        %v5174 = vshll.u32 2102212464, %v5162
        %v5175 = vshrl.u32 920167782, %v5163
        %v5176 = vor.u32 %v5174, %v5175
        %v5177 = vshll.u32 920167782, %v5162
        %v5178 = vshrl.u32 1326507024, %v5163
        %v5179 = vor.u32 %v5177, %v5178
        %vm5180 = vcmp.lt.s32.totalorder %v5161, 1
        %vm5181 = vcmp.lt.s32.totalorder %v5161, 2
        %vm5182 = vcmp.lt.s32.totalorder %v5161, 3
        %vm5183 = vcmp.lt.s32.totalorder %v5161, 4
        %v5184 = vsel %vm5180, %v5164, %v5167
        %v5185 = vsel %vm5183, %v5173, 2102212464
        %v5186 = vsel %vm5182, %v5170, %v5185
        %v5187 = vsel %vm5181, %v5184, %v5186
        %v5188 = vsel %vm5180, %v5167, %v5170
        %v5189 = vsel %vm5183, %v5176, 920167782
        %v5190 = vsel %vm5182, %v5173, %v5189
        %v5191 = vsel %vm5181, %v5188, %v5190
        %v5192 = vsel %vm5180, %v5170, %v5173
        %v5193 = vsel %vm5183, %v5179, 1326507024
        %v5194 = vsel %vm5182, %v5176, %v5193
        %v5195 = vsel %vm5181, %v5192, %v5194
        %v5196 = vshll.u32 %v5156, 8
        %v5197 = vmul.u32.u64.compose %v5196, %v5195
        %v5198 = vextract.low.u32 %v5197
        %v5199 = vextract.high.u32 %v5197
        %v5200 = vmul.u32.u64.compose %v5196, %v5191
        %v5201 = vextract.low.u32 %v5200
        %v5202 = vextract.high.u32 %v5200
        %v5203 = vmul.u32 %v5196, %v5187
        %v5204 = vadd.s32 %v5199, %v5201
        %vm5205 = vc.u32 %v5199, %v5201
        %v5206 = vadd.s32 %v5202, 1
        %v5207 = vsel %vm5205, %v5206, %v5202
        %v5208 = vadd.s32 %v5203, %v5207
        %v5209 = vadd.s32 %v5208, 536870912
        %v5210 = vshrl.u32 %v5209, 30
        %v5211 = vshll.u32 %v5210, 30
        %v5212 = vsub.s32 %v5208, %v5211
        %vm5213 = vcmp.lt.s32.totalorder %v5212, 0
        %v5214 = vsub.s32 0, %v5212
        %v5215 = vsel %vm5213, %v5214, %v5212
        %v5216 = vclz %v5215
        %v5217 = vsub.s32 %v5216, 2
        %vm5218 = vcmp.gt.s32.totalorder 0, %v5217
        %v5219 = vsel %vm5218, 0, %v5217
        %v5220 = vsub.s32 32, %v5219
        %v5221 = vshll.u32 %v5212, %v5219
        %v5222 = vshrl.u32 %v5204, %v5220
        %v5223 = vor.u32 %v5221, %v5222
        %v5224 = vsub.s32 4294967266, %v5219
        %v5225 = vadd.s32 %v5224, 127
        %v5226 = vshll.u32 %v5225, 23
        %v5227 = vor.u32 4788187, %v5226
        %v5228 = vand.u32 2147483647, %v5227
        %v5230 = vcvt.s32.f32 %v5223
        %v5231 = vmul.f32 %v5230, %v5228
        %v5232 = vxor.u32 %v5231, 2147483648
        %v5233 = vsel %vm5150, %v5232, %v5231
        %v5234 = vsub.s32 4, %v5210
        %v5235 = vsel %vm5150, %v5234, %v5210
        %v5236 = vsel %vm5149, %v4115, %v5233
        %v5237 = vsel %vm5149, 0, %v5235
        %v5238 = vcosq.f32.pop %v5236
        %v5239 = vsinq.f32.pop %v5236
        %vm5240 = vweird.f32 %v4115
        %v5241 = vadd.s32 %v5237, 3
        %v5242 = vand.u32 %v5241, 3
        %vm5243 = vcmp.lt.s32.totalorder %v5242, 2
        %vm5244 = vcmp.eq.s32.totalorder %v5242, 0
        %v5245 = vxor.u32 %v5239, 2147483648
        %v5246 = vsel %vm5244, %v5238, %v5245
        %vm5247 = vcmp.eq.s32.totalorder %v5242, 2
        %v5248 = vxor.u32 %v5238, 2147483648
        %v5249 = vsel %vm5247, %v5248, %v5239
        %v5250 = vsel %vm5243, %v5246, %v5249
        %v5251 = vsel %vm5240, nan, %v5250
        %v5252 = vand.u32 2147483647, %v4202
        %vm5253 = vcmp.le.f32.partialorder %v5252, 0.7853982
        %vm5254 = vcmp.lt.s32.totalorder %v4202, 0
        %v5255 = vand.u32 %v4202, 2139095040
        %v5256 = vshrl.u32 %v5255, 23
        %v5257 = vsub.s32 %v5256, 127
        %v5258 = vand.u32 2147483647, %v4202
        %v5259 = vand.u32 %v5258, 8388607
        %v5260 = vor.u32 %v5259, 8388608
        %v5261 = vsub.s32 0, %v5260
        %v5262 = vadd.s32 %v5257, 1
        %vm5263 = vcmp.gt.s32.totalorder %v5262, 0
        %v5264 = vsel %vm5263, %v5262, 0
        %v5265 = vshrl.u32 %v5264, 5
        %v5266 = vand.u32 %v5264, 31
        %v5267 = vsub.s32 32, %v5266
        %v5268 = vshrl.u32 683565275, %v5267
        %v5269 = vshll.u32 683565275, %v5266
        %v5270 = vshrl.u32 2475754826, %v5267
        %v5271 = vor.u32 %v5269, %v5270
        %v5272 = vshll.u32 2475754826, %v5266
        %v5273 = vshrl.u32 2131351028, %v5267
        %v5274 = vor.u32 %v5272, %v5273
        %v5275 = vshll.u32 2131351028, %v5266
        %v5276 = vshrl.u32 2102212464, %v5267
        %v5277 = vor.u32 %v5275, %v5276
        %v5278 = vshll.u32 2102212464, %v5266
        %v5279 = vshrl.u32 920167782, %v5267
        %v5280 = vor.u32 %v5278, %v5279
        %v5281 = vshll.u32 920167782, %v5266
        %v5282 = vshrl.u32 1326507024, %v5267
        %v5283 = vor.u32 %v5281, %v5282
        %vm5284 = vcmp.lt.s32.totalorder %v5265, 1
        %vm5285 = vcmp.lt.s32.totalorder %v5265, 2
        %vm5286 = vcmp.lt.s32.totalorder %v5265, 3
        %vm5287 = vcmp.lt.s32.totalorder %v5265, 4
        %v5288 = vsel %vm5284, %v5268, %v5271
        %v5289 = vsel %vm5287, %v5277, 2102212464
        %v5290 = vsel %vm5286, %v5274, %v5289
        %v5291 = vsel %vm5285, %v5288, %v5290
        %v5292 = vsel %vm5284, %v5271, %v5274
        %v5293 = vsel %vm5287, %v5280, 920167782
        %v5294 = vsel %vm5286, %v5277, %v5293
        %v5295 = vsel %vm5285, %v5292, %v5294
        %v5296 = vsel %vm5284, %v5274, %v5277
        %v5297 = vsel %vm5287, %v5283, 1326507024
        %v5298 = vsel %vm5286, %v5280, %v5297
        %v5299 = vsel %vm5285, %v5296, %v5298
        %v5300 = vshll.u32 %v5260, 8
        %v5301 = vmul.u32.u64.compose %v5300, %v5299
        %v5302 = vextract.low.u32 %v5301
        %v5303 = vextract.high.u32 %v5301
        %v5304 = vmul.u32.u64.compose %v5300, %v5295
        %v5305 = vextract.low.u32 %v5304
        %v5306 = vextract.high.u32 %v5304
        %v5307 = vmul.u32 %v5300, %v5291
        %v5308 = vadd.s32 %v5303, %v5305
        %vm5309 = vc.u32 %v5303, %v5305
        %v5310 = vadd.s32 %v5306, 1
        %v5311 = vsel %vm5309, %v5310, %v5306
        %v5312 = vadd.s32 %v5307, %v5311
        %v5313 = vadd.s32 %v5312, 536870912
        %v5314 = vshrl.u32 %v5313, 30
        %v5315 = vshll.u32 %v5314, 30
        %v5316 = vsub.s32 %v5312, %v5315
        %vm5317 = vcmp.lt.s32.totalorder %v5316, 0
        %v5318 = vsub.s32 0, %v5316
        %v5319 = vsel %vm5317, %v5318, %v5316
        %v5320 = vclz %v5319
        %v5321 = vsub.s32 %v5320, 2
        %vm5322 = vcmp.gt.s32.totalorder 0, %v5321
        %v5323 = vsel %vm5322, 0, %v5321
        %v5324 = vsub.s32 32, %v5323
        %v5325 = vshll.u32 %v5316, %v5323
        %v5326 = vshrl.u32 %v5308, %v5324
        %v5327 = vor.u32 %v5325, %v5326
        %v5328 = vsub.s32 4294967266, %v5323
        %v5329 = vadd.s32 %v5328, 127
        %v5330 = vshll.u32 %v5329, 23
        %v5331 = vor.u32 4788187, %v5330
        %v5332 = vand.u32 2147483647, %v5331
        %v5334 = vcvt.s32.f32 %v5327
        %v5335 = vmul.f32 %v5334, %v5332
        %v5336 = vxor.u32 %v5335, 2147483648
        %v5337 = vsel %vm5254, %v5336, %v5335
        %v5338 = vsub.s32 4, %v5314
        %v5339 = vsel %vm5254, %v5338, %v5314
        %v5340 = vsel %vm5253, %v4202, %v5337
        %v5341 = vsel %vm5253, 0, %v5339
        %v5342 = vcosq.f32.pop %v5340
        %v5343 = vsinq.f32.pop %v5340
        %vm5344 = vweird.f32 %v4202
        %v5345 = vadd.s32 %v5341, 3
        %v5346 = vand.u32 %v5345, 3
        %vm5347 = vcmp.lt.s32.totalorder %v5346, 2
        %vm5348 = vcmp.eq.s32.totalorder %v5346, 0
        %v5349 = vxor.u32 %v5343, 2147483648
        %v5350 = vsel %vm5348, %v5342, %v5349
        %vm5351 = vcmp.eq.s32.totalorder %v5346, 2
        %v5352 = vxor.u32 %v5342, 2147483648
        %v5353 = vsel %vm5351, %v5352, %v5343
        %v5354 = vsel %vm5347, %v5350, %v5353
        %v5355 = vsel %vm5344, nan, %v5354
        %v5356 = vand.u32 2147483647, %v4204
        %vm5357 = vcmp.le.f32.partialorder %v5356, 0.7853982
        %vm5358 = vcmp.lt.s32.totalorder %v4204, 0
        %v5359 = vand.u32 %v4204, 2139095040
        %v5360 = vshrl.u32 %v5359, 23
        %v5361 = vsub.s32 %v5360, 127
        %v5362 = vand.u32 2147483647, %v4204
        %v5363 = vand.u32 %v5362, 8388607
        %v5364 = vor.u32 %v5363, 8388608
        %v5365 = vsub.s32 0, %v5364
        %v5366 = vadd.s32 %v5361, 1
        %vm5367 = vcmp.gt.s32.totalorder %v5366, 0
        %v5368 = vsel %vm5367, %v5366, 0
        %v5369 = vshrl.u32 %v5368, 5
        %v5370 = vand.u32 %v5368, 31
        %v5371 = vsub.s32 32, %v5370
        %v5372 = vshrl.u32 683565275, %v5371
        %v5373 = vshll.u32 683565275, %v5370
        %v5374 = vshrl.u32 2475754826, %v5371
        %v5375 = vor.u32 %v5373, %v5374
        %v5376 = vshll.u32 2475754826, %v5370
        %v5377 = vshrl.u32 2131351028, %v5371
        %v5378 = vor.u32 %v5376, %v5377
        %v5379 = vshll.u32 2131351028, %v5370
        %v5380 = vshrl.u32 2102212464, %v5371
        %v5381 = vor.u32 %v5379, %v5380
        %v5382 = vshll.u32 2102212464, %v5370
        %v5383 = vshrl.u32 920167782, %v5371
        %v5384 = vor.u32 %v5382, %v5383
        %v5385 = vshll.u32 920167782, %v5370
        %v5386 = vshrl.u32 1326507024, %v5371
        %v5387 = vor.u32 %v5385, %v5386
        %vm5388 = vcmp.lt.s32.totalorder %v5369, 1
        %vm5389 = vcmp.lt.s32.totalorder %v5369, 2
        %vm5390 = vcmp.lt.s32.totalorder %v5369, 3
        %vm5391 = vcmp.lt.s32.totalorder %v5369, 4
        %v5392 = vsel %vm5388, %v5372, %v5375
        %v5393 = vsel %vm5391, %v5381, 2102212464
        %v5394 = vsel %vm5390, %v5378, %v5393
        %v5395 = vsel %vm5389, %v5392, %v5394
        %v5396 = vsel %vm5388, %v5375, %v5378
        %v5397 = vsel %vm5391, %v5384, 920167782
        %v5398 = vsel %vm5390, %v5381, %v5397
        %v5399 = vsel %vm5389, %v5396, %v5398
        %v5400 = vsel %vm5388, %v5378, %v5381
        %v5401 = vsel %vm5391, %v5387, 1326507024
        %v5402 = vsel %vm5390, %v5384, %v5401
        %v5403 = vsel %vm5389, %v5400, %v5402
        %v5404 = vshll.u32 %v5364, 8
        %v5405 = vmul.u32.u64.compose %v5404, %v5403
        %v5406 = vextract.low.u32 %v5405
        %v5407 = vextract.high.u32 %v5405
        %v5408 = vmul.u32.u64.compose %v5404, %v5399
        %v5409 = vextract.low.u32 %v5408
        %v5410 = vextract.high.u32 %v5408
        %v5411 = vmul.u32 %v5404, %v5395
        %v5412 = vadd.s32 %v5407, %v5409
        %vm5413 = vc.u32 %v5407, %v5409
        %v5414 = vadd.s32 %v5410, 1
        %v5415 = vsel %vm5413, %v5414, %v5410
        %v5416 = vadd.s32 %v5411, %v5415
        %v5417 = vadd.s32 %v5416, 536870912
        %v5418 = vshrl.u32 %v5417, 30
        %v5419 = vshll.u32 %v5418, 30
        %v5420 = vsub.s32 %v5416, %v5419
        %vm5421 = vcmp.lt.s32.totalorder %v5420, 0
        %v5422 = vsub.s32 0, %v5420
        %v5423 = vsel %vm5421, %v5422, %v5420
        %v5424 = vclz %v5423
        %v5425 = vsub.s32 %v5424, 2
        %vm5426 = vcmp.gt.s32.totalorder 0, %v5425
        %v5427 = vsel %vm5426, 0, %v5425
        %v5428 = vsub.s32 32, %v5427
        %v5429 = vshll.u32 %v5420, %v5427
        %v5430 = vshrl.u32 %v5412, %v5428
        %v5431 = vor.u32 %v5429, %v5430
        %v5432 = vsub.s32 4294967266, %v5427
        %v5433 = vadd.s32 %v5432, 127
        %v5434 = vshll.u32 %v5433, 23
        %v5435 = vor.u32 4788187, %v5434
        %v5436 = vand.u32 2147483647, %v5435
        %v5438 = vcvt.s32.f32 %v5431
        %v5439 = vmul.f32 %v5438, %v5436
        %v5440 = vxor.u32 %v5439, 2147483648
        %v5441 = vsel %vm5358, %v5440, %v5439
        %v5442 = vsub.s32 4, %v5418
        %v5443 = vsel %vm5358, %v5442, %v5418
        %v5444 = vsel %vm5357, %v4204, %v5441
        %v5445 = vsel %vm5357, 0, %v5443
        %v5446 = vcosq.f32.pop %v5444
        %v5447 = vsinq.f32.pop %v5444
        %vm5448 = vweird.f32 %v4204
        %v5449 = vadd.s32 %v5445, 3
        %v5450 = vand.u32 %v5449, 3
        %vm5451 = vcmp.lt.s32.totalorder %v5450, 2
        %vm5452 = vcmp.eq.s32.totalorder %v5450, 0
        %v5453 = vxor.u32 %v5447, 2147483648
        %v5454 = vsel %vm5452, %v5446, %v5453
        %vm5455 = vcmp.eq.s32.totalorder %v5450, 2
        %v5456 = vxor.u32 %v5446, 2147483648
        %v5457 = vsel %vm5455, %v5456, %v5447
        %v5458 = vsel %vm5451, %v5454, %v5457
        %v5459 = vsel %vm5448, nan, %v5458
        %v5460 = vand.u32 2147483647, %v4119
        %vm5461 = vcmp.le.f32.partialorder %v5460, 0.7853982
        %vm5462 = vcmp.lt.s32.totalorder %v4119, 0
        %v5463 = vand.u32 %v4119, 2139095040
        %v5464 = vshrl.u32 %v5463, 23
        %v5465 = vsub.s32 %v5464, 127
        %v5466 = vand.u32 2147483647, %v4119
        %v5467 = vand.u32 %v5466, 8388607
        %v5468 = vor.u32 %v5467, 8388608
        %v5469 = vsub.s32 0, %v5468
        %v5470 = vadd.s32 %v5465, 1
        %vm5471 = vcmp.gt.s32.totalorder %v5470, 0
        %v5472 = vsel %vm5471, %v5470, 0
        %v5473 = vshrl.u32 %v5472, 5
        %v5474 = vand.u32 %v5472, 31
        %v5475 = vsub.s32 32, %v5474
        %v5476 = vshrl.u32 683565275, %v5475
        %v5477 = vshll.u32 683565275, %v5474
        %v5478 = vshrl.u32 2475754826, %v5475
        %v5479 = vor.u32 %v5477, %v5478
        %v5480 = vshll.u32 2475754826, %v5474
        %v5481 = vshrl.u32 2131351028, %v5475
        %v5482 = vor.u32 %v5480, %v5481
        %v5483 = vshll.u32 2131351028, %v5474
        %v5484 = vshrl.u32 2102212464, %v5475
        %v5485 = vor.u32 %v5483, %v5484
        %v5486 = vshll.u32 2102212464, %v5474
        %v5487 = vshrl.u32 920167782, %v5475
        %v5488 = vor.u32 %v5486, %v5487
        %v5489 = vshll.u32 920167782, %v5474
        %v5490 = vshrl.u32 1326507024, %v5475
        %v5491 = vor.u32 %v5489, %v5490
        %vm5492 = vcmp.lt.s32.totalorder %v5473, 1
        %vm5493 = vcmp.lt.s32.totalorder %v5473, 2
        %vm5494 = vcmp.lt.s32.totalorder %v5473, 3
        %vm5495 = vcmp.lt.s32.totalorder %v5473, 4
        %v5496 = vsel %vm5492, %v5476, %v5479
        %v5497 = vsel %vm5495, %v5485, 2102212464
        %v5498 = vsel %vm5494, %v5482, %v5497
        %v5499 = vsel %vm5493, %v5496, %v5498
        %v5500 = vsel %vm5492, %v5479, %v5482
        %v5501 = vsel %vm5495, %v5488, 920167782
        %v5502 = vsel %vm5494, %v5485, %v5501
        %v5503 = vsel %vm5493, %v5500, %v5502
        %v5504 = vsel %vm5492, %v5482, %v5485
        %v5505 = vsel %vm5495, %v5491, 1326507024
        %v5506 = vsel %vm5494, %v5488, %v5505
        %v5507 = vsel %vm5493, %v5504, %v5506
        %v5508 = vshll.u32 %v5468, 8
        %v5509 = vmul.u32.u64.compose %v5508, %v5507
        %v5510 = vextract.low.u32 %v5509
        %v5511 = vextract.high.u32 %v5509
        %v5512 = vmul.u32.u64.compose %v5508, %v5503
        %v5513 = vextract.low.u32 %v5512
        %v5514 = vextract.high.u32 %v5512
        %v5515 = vmul.u32 %v5508, %v5499
        %v5516 = vadd.s32 %v5511, %v5513
        %vm5517 = vc.u32 %v5511, %v5513
        %v5518 = vadd.s32 %v5514, 1
        %v5519 = vsel %vm5517, %v5518, %v5514
        %v5520 = vadd.s32 %v5515, %v5519
        %v5521 = vadd.s32 %v5520, 536870912
        %v5522 = vshrl.u32 %v5521, 30
        %v5523 = vshll.u32 %v5522, 30
        %v5524 = vsub.s32 %v5520, %v5523
        %vm5525 = vcmp.lt.s32.totalorder %v5524, 0
        %v5526 = vsub.s32 0, %v5524
        %v5527 = vsel %vm5525, %v5526, %v5524
        %v5528 = vclz %v5527
        %v5529 = vsub.s32 %v5528, 2
        %vm5530 = vcmp.gt.s32.totalorder 0, %v5529
        %v5531 = vsel %vm5530, 0, %v5529
        %v5532 = vsub.s32 32, %v5531
        %v5533 = vshll.u32 %v5524, %v5531
        %v5534 = vshrl.u32 %v5516, %v5532
        %v5535 = vor.u32 %v5533, %v5534
        %v5536 = vsub.s32 4294967266, %v5531
        %v5537 = vadd.s32 %v5536, 127
        %v5538 = vshll.u32 %v5537, 23
        %v5539 = vor.u32 4788187, %v5538
        %v5540 = vand.u32 2147483647, %v5539
        %v5542 = vcvt.s32.f32 %v5535
        %v5543 = vmul.f32 %v5542, %v5540
        %v5544 = vxor.u32 %v5543, 2147483648
        %v5545 = vsel %vm5462, %v5544, %v5543
        %v5546 = vsub.s32 4, %v5522
        %v5547 = vsel %vm5462, %v5546, %v5522
        %v5548 = vsel %vm5461, %v4119, %v5545
        %v5549 = vsel %vm5461, 0, %v5547
        %v5550 = vcosq.f32.pop %v5548
        %v5551 = vsinq.f32.pop %v5548
        %vm5552 = vweird.f32 %v4119
        %v5553 = vadd.s32 %v5549, 3
        %v5554 = vand.u32 %v5553, 3
        %vm5555 = vcmp.lt.s32.totalorder %v5554, 2
        %vm5556 = vcmp.eq.s32.totalorder %v5554, 0
        %v5557 = vxor.u32 %v5551, 2147483648
        %v5558 = vsel %vm5556, %v5550, %v5557
        %vm5559 = vcmp.eq.s32.totalorder %v5554, 2
        %v5560 = vxor.u32 %v5550, 2147483648
        %v5561 = vsel %vm5559, %v5560, %v5551
        %v5562 = vsel %vm5555, %v5558, %v5561
        %v5563 = vsel %vm5552, nan, %v5562
        %v5564 = vand.u32 2147483647, %v4121
        %vm5565 = vcmp.le.f32.partialorder %v5564, 0.7853982
        %vm5566 = vcmp.lt.s32.totalorder %v4121, 0
        %v5567 = vand.u32 %v4121, 2139095040
        %v5568 = vshrl.u32 %v5567, 23
        %v5569 = vsub.s32 %v5568, 127
        %v5570 = vand.u32 2147483647, %v4121
        %v5571 = vand.u32 %v5570, 8388607
        %v5572 = vor.u32 %v5571, 8388608
        %v5573 = vsub.s32 0, %v5572
        %v5574 = vadd.s32 %v5569, 1
        %vm5575 = vcmp.gt.s32.totalorder %v5574, 0
        %v5576 = vsel %vm5575, %v5574, 0
        %v5577 = vshrl.u32 %v5576, 5
        %v5578 = vand.u32 %v5576, 31
        %v5579 = vsub.s32 32, %v5578
        %v5580 = vshrl.u32 683565275, %v5579
        %v5581 = vshll.u32 683565275, %v5578
        %v5582 = vshrl.u32 2475754826, %v5579
        %v5583 = vor.u32 %v5581, %v5582
        %v5584 = vshll.u32 2475754826, %v5578
        %v5585 = vshrl.u32 2131351028, %v5579
        %v5586 = vor.u32 %v5584, %v5585
        %v5587 = vshll.u32 2131351028, %v5578
        %v5588 = vshrl.u32 2102212464, %v5579
        %v5589 = vor.u32 %v5587, %v5588
        %v5590 = vshll.u32 2102212464, %v5578
        %v5591 = vshrl.u32 920167782, %v5579
        %v5592 = vor.u32 %v5590, %v5591
        %v5593 = vshll.u32 920167782, %v5578
        %v5594 = vshrl.u32 1326507024, %v5579
        %v5595 = vor.u32 %v5593, %v5594
        %vm5596 = vcmp.lt.s32.totalorder %v5577, 1
        %vm5597 = vcmp.lt.s32.totalorder %v5577, 2
        %vm5598 = vcmp.lt.s32.totalorder %v5577, 3
        %vm5599 = vcmp.lt.s32.totalorder %v5577, 4
        %v5600 = vsel %vm5596, %v5580, %v5583
        %v5601 = vsel %vm5599, %v5589, 2102212464
        %v5602 = vsel %vm5598, %v5586, %v5601
        %v5603 = vsel %vm5597, %v5600, %v5602
        %v5604 = vsel %vm5596, %v5583, %v5586
        %v5605 = vsel %vm5599, %v5592, 920167782
        %v5606 = vsel %vm5598, %v5589, %v5605
        %v5607 = vsel %vm5597, %v5604, %v5606
        %v5608 = vsel %vm5596, %v5586, %v5589
        %v5609 = vsel %vm5599, %v5595, 1326507024
        %v5610 = vsel %vm5598, %v5592, %v5609
        %v5611 = vsel %vm5597, %v5608, %v5610
        %v5612 = vshll.u32 %v5572, 8
        %v5613 = vmul.u32.u64.compose %v5612, %v5611
        %v5614 = vextract.low.u32 %v5613
        %v5615 = vextract.high.u32 %v5613
        %v5616 = vmul.u32.u64.compose %v5612, %v5607
        %v5617 = vextract.low.u32 %v5616
        %v5618 = vextract.high.u32 %v5616
        %v5619 = vmul.u32 %v5612, %v5603
        %v5620 = vadd.s32 %v5615, %v5617
        %vm5621 = vc.u32 %v5615, %v5617
        %v5622 = vadd.s32 %v5618, 1
        %v5623 = vsel %vm5621, %v5622, %v5618
        %v5624 = vadd.s32 %v5619, %v5623
        %v5625 = vadd.s32 %v5624, 536870912
        %v5626 = vshrl.u32 %v5625, 30
        %v5627 = vshll.u32 %v5626, 30
        %v5628 = vsub.s32 %v5624, %v5627
        %vm5629 = vcmp.lt.s32.totalorder %v5628, 0
        %v5630 = vsub.s32 0, %v5628
        %v5631 = vsel %vm5629, %v5630, %v5628
        %v5632 = vclz %v5631
        %v5633 = vsub.s32 %v5632, 2
        %vm5634 = vcmp.gt.s32.totalorder 0, %v5633
        %v5635 = vsel %vm5634, 0, %v5633
        %v5636 = vsub.s32 32, %v5635
        %v5637 = vshll.u32 %v5628, %v5635
        %v5638 = vshrl.u32 %v5620, %v5636
        %v5639 = vor.u32 %v5637, %v5638
        %v5640 = vsub.s32 4294967266, %v5635
        %v5641 = vadd.s32 %v5640, 127
        %v5642 = vshll.u32 %v5641, 23
        %v5643 = vor.u32 4788187, %v5642
        %v5644 = vand.u32 2147483647, %v5643
        %v5646 = vcvt.s32.f32 %v5639
        %v5647 = vmul.f32 %v5646, %v5644
        %v5648 = vxor.u32 %v5647, 2147483648
        %v5649 = vsel %vm5566, %v5648, %v5647
        %v5650 = vsub.s32 4, %v5626
        %v5651 = vsel %vm5566, %v5650, %v5626
        %v5652 = vsel %vm5565, %v4121, %v5649
        %v5653 = vsel %vm5565, 0, %v5651
        %v5654 = vcosq.f32.pop %v5652
        %v5655 = vsinq.f32.pop %v5652
        %vm5656 = vweird.f32 %v4121
        %v5657 = vadd.s32 %v5653, 3
        %v5658 = vand.u32 %v5657, 3
        %vm5659 = vcmp.lt.s32.totalorder %v5658, 2
        %vm5660 = vcmp.eq.s32.totalorder %v5658, 0
        %v5661 = vxor.u32 %v5655, 2147483648
        %v5662 = vsel %vm5660, %v5654, %v5661
        %vm5663 = vcmp.eq.s32.totalorder %v5658, 2
        %v5664 = vxor.u32 %v5654, 2147483648
        %v5665 = vsel %vm5663, %v5664, %v5655
        %v5666 = vsel %vm5659, %v5662, %v5665
        %v5667 = vsel %vm5656, nan, %v5666
        %v5668 = vand.u32 2147483647, %v4208
        %vm5669 = vcmp.le.f32.partialorder %v5668, 0.7853982
        %vm5670 = vcmp.lt.s32.totalorder %v4208, 0
        %v5671 = vand.u32 %v4208, 2139095040
        %v5672 = vshrl.u32 %v5671, 23
        %v5673 = vsub.s32 %v5672, 127
        %v5674 = vand.u32 2147483647, %v4208
        %v5675 = vand.u32 %v5674, 8388607
        %v5676 = vor.u32 %v5675, 8388608
        %v5677 = vsub.s32 0, %v5676
        %v5678 = vadd.s32 %v5673, 1
        %vm5679 = vcmp.gt.s32.totalorder %v5678, 0
        %v5680 = vsel %vm5679, %v5678, 0
        %v5681 = vshrl.u32 %v5680, 5
        %v5682 = vand.u32 %v5680, 31
        %v5683 = vsub.s32 32, %v5682
        %v5684 = vshrl.u32 683565275, %v5683
        %v5685 = vshll.u32 683565275, %v5682
        %v5686 = vshrl.u32 2475754826, %v5683
        %v5687 = vor.u32 %v5685, %v5686
        %v5688 = vshll.u32 2475754826, %v5682
        %v5689 = vshrl.u32 2131351028, %v5683
        %v5690 = vor.u32 %v5688, %v5689
        %v5691 = vshll.u32 2131351028, %v5682
        %v5692 = vshrl.u32 2102212464, %v5683
        %v5693 = vor.u32 %v5691, %v5692
        %v5694 = vshll.u32 2102212464, %v5682
        %v5695 = vshrl.u32 920167782, %v5683
        %v5696 = vor.u32 %v5694, %v5695
        %v5697 = vshll.u32 920167782, %v5682
        %v5698 = vshrl.u32 1326507024, %v5683
        %v5699 = vor.u32 %v5697, %v5698
        %vm5700 = vcmp.lt.s32.totalorder %v5681, 1
        %vm5701 = vcmp.lt.s32.totalorder %v5681, 2
        %vm5702 = vcmp.lt.s32.totalorder %v5681, 3
        %vm5703 = vcmp.lt.s32.totalorder %v5681, 4
        %v5704 = vsel %vm5700, %v5684, %v5687
        %v5705 = vsel %vm5703, %v5693, 2102212464
        %v5706 = vsel %vm5702, %v5690, %v5705
        %v5707 = vsel %vm5701, %v5704, %v5706
        %v5708 = vsel %vm5700, %v5687, %v5690
        %v5709 = vsel %vm5703, %v5696, 920167782
        %v5710 = vsel %vm5702, %v5693, %v5709
        %v5711 = vsel %vm5701, %v5708, %v5710
        %v5712 = vsel %vm5700, %v5690, %v5693
        %v5713 = vsel %vm5703, %v5699, 1326507024
        %v5714 = vsel %vm5702, %v5696, %v5713
        %v5715 = vsel %vm5701, %v5712, %v5714
        %v5716 = vshll.u32 %v5676, 8
        %v5717 = vmul.u32.u64.compose %v5716, %v5715
        %v5718 = vextract.low.u32 %v5717
        %v5719 = vextract.high.u32 %v5717
        %v5720 = vmul.u32.u64.compose %v5716, %v5711
        %v5721 = vextract.low.u32 %v5720
        %v5722 = vextract.high.u32 %v5720
        %v5723 = vmul.u32 %v5716, %v5707
        %v5724 = vadd.s32 %v5719, %v5721
        %vm5725 = vc.u32 %v5719, %v5721
        %v5726 = vadd.s32 %v5722, 1
        %v5727 = vsel %vm5725, %v5726, %v5722
        %v5728 = vadd.s32 %v5723, %v5727
        %v5729 = vadd.s32 %v5728, 536870912
        %v5730 = vshrl.u32 %v5729, 30
        %v5731 = vshll.u32 %v5730, 30
        %v5732 = vsub.s32 %v5728, %v5731
        %vm5733 = vcmp.lt.s32.totalorder %v5732, 0
        %v5734 = vsub.s32 0, %v5732
        %v5735 = vsel %vm5733, %v5734, %v5732
        %v5736 = vclz %v5735
        %v5737 = vsub.s32 %v5736, 2
        %vm5738 = vcmp.gt.s32.totalorder 0, %v5737
        %v5739 = vsel %vm5738, 0, %v5737
        %v5740 = vsub.s32 32, %v5739
        %v5741 = vshll.u32 %v5732, %v5739
        %v5742 = vshrl.u32 %v5724, %v5740
        %v5743 = vor.u32 %v5741, %v5742
        %v5744 = vsub.s32 4294967266, %v5739
        %v5745 = vadd.s32 %v5744, 127
        %v5746 = vshll.u32 %v5745, 23
        %v5747 = vor.u32 4788187, %v5746
        %v5748 = vand.u32 2147483647, %v5747
        %v5750 = vcvt.s32.f32 %v5743
        %v5751 = vmul.f32 %v5750, %v5748
        %v5752 = vxor.u32 %v5751, 2147483648
        %v5753 = vsel %vm5670, %v5752, %v5751
        %v5754 = vsub.s32 4, %v5730
        %v5755 = vsel %vm5670, %v5754, %v5730
        %v5756 = vsel %vm5669, %v4208, %v5753
        %v5757 = vsel %vm5669, 0, %v5755
        %v5758 = vcosq.f32.pop %v5756
        %v5759 = vsinq.f32.pop %v5756
        %vm5760 = vweird.f32 %v4208
        %v5761 = vadd.s32 %v5757, 3
        %v5762 = vand.u32 %v5761, 3
        %vm5763 = vcmp.lt.s32.totalorder %v5762, 2
        %vm5764 = vcmp.eq.s32.totalorder %v5762, 0
        %v5765 = vxor.u32 %v5759, 2147483648
        %v5766 = vsel %vm5764, %v5758, %v5765
        %vm5767 = vcmp.eq.s32.totalorder %v5762, 2
        %v5768 = vxor.u32 %v5758, 2147483648
        %v5769 = vsel %vm5767, %v5768, %v5759
        %v5770 = vsel %vm5763, %v5766, %v5769
        %v5771 = vsel %vm5760, nan, %v5770
        %v5772 = vand.u32 2147483647, %v4210
        %vm5773 = vcmp.le.f32.partialorder %v5772, 0.7853982
        %vm5774 = vcmp.lt.s32.totalorder %v4210, 0
        %v5775 = vand.u32 %v4210, 2139095040
        %v5776 = vshrl.u32 %v5775, 23
        %v5777 = vsub.s32 %v5776, 127
        %v5778 = vand.u32 2147483647, %v4210
        %v5779 = vand.u32 %v5778, 8388607
        %v5780 = vor.u32 %v5779, 8388608
        %v5781 = vsub.s32 0, %v5780
        %v5782 = vadd.s32 %v5777, 1
        %vm5783 = vcmp.gt.s32.totalorder %v5782, 0
        %v5784 = vsel %vm5783, %v5782, 0
        %v5785 = vshrl.u32 %v5784, 5
        %v5786 = vand.u32 %v5784, 31
        %v5787 = vsub.s32 32, %v5786
        %v5788 = vshrl.u32 683565275, %v5787
        %v5789 = vshll.u32 683565275, %v5786
        %v5790 = vshrl.u32 2475754826, %v5787
        %v5791 = vor.u32 %v5789, %v5790
        %v5792 = vshll.u32 2475754826, %v5786
        %v5793 = vshrl.u32 2131351028, %v5787
        %v5794 = vor.u32 %v5792, %v5793
        %v5795 = vshll.u32 2131351028, %v5786
        %v5796 = vshrl.u32 2102212464, %v5787
        %v5797 = vor.u32 %v5795, %v5796
        %v5798 = vshll.u32 2102212464, %v5786
        %v5799 = vshrl.u32 920167782, %v5787
        %v5800 = vor.u32 %v5798, %v5799
        %v5801 = vshll.u32 920167782, %v5786
        %v5802 = vshrl.u32 1326507024, %v5787
        %v5803 = vor.u32 %v5801, %v5802
        %vm5804 = vcmp.lt.s32.totalorder %v5785, 1
        %vm5805 = vcmp.lt.s32.totalorder %v5785, 2
        %vm5806 = vcmp.lt.s32.totalorder %v5785, 3
        %vm5807 = vcmp.lt.s32.totalorder %v5785, 4
        %v5808 = vsel %vm5804, %v5788, %v5791
        %v5809 = vsel %vm5807, %v5797, 2102212464
        %v5810 = vsel %vm5806, %v5794, %v5809
        %v5811 = vsel %vm5805, %v5808, %v5810
        %v5812 = vsel %vm5804, %v5791, %v5794
        %v5813 = vsel %vm5807, %v5800, 920167782
        %v5814 = vsel %vm5806, %v5797, %v5813
        %v5815 = vsel %vm5805, %v5812, %v5814
        %v5816 = vsel %vm5804, %v5794, %v5797
        %v5817 = vsel %vm5807, %v5803, 1326507024
        %v5818 = vsel %vm5806, %v5800, %v5817
        %v5819 = vsel %vm5805, %v5816, %v5818
        %v5820 = vshll.u32 %v5780, 8
        %v5821 = vmul.u32.u64.compose %v5820, %v5819
        %v5822 = vextract.low.u32 %v5821
        %v5823 = vextract.high.u32 %v5821
        %v5824 = vmul.u32.u64.compose %v5820, %v5815
        %v5825 = vextract.low.u32 %v5824
        %v5826 = vextract.high.u32 %v5824
        %v5827 = vmul.u32 %v5820, %v5811
        %v5828 = vadd.s32 %v5823, %v5825
        %vm5829 = vc.u32 %v5823, %v5825
        %v5830 = vadd.s32 %v5826, 1
        %v5831 = vsel %vm5829, %v5830, %v5826
        %v5832 = vadd.s32 %v5827, %v5831
        %v5833 = vadd.s32 %v5832, 536870912
        %v5834 = vshrl.u32 %v5833, 30
        %v5835 = vshll.u32 %v5834, 30
        %v5836 = vsub.s32 %v5832, %v5835
        %vm5837 = vcmp.lt.s32.totalorder %v5836, 0
        %v5838 = vsub.s32 0, %v5836
        %v5839 = vsel %vm5837, %v5838, %v5836
        %v5840 = vclz %v5839
        %v5841 = vsub.s32 %v5840, 2
        %vm5842 = vcmp.gt.s32.totalorder 0, %v5841
        %v5843 = vsel %vm5842, 0, %v5841
        %v5844 = vsub.s32 32, %v5843
        %v5845 = vshll.u32 %v5836, %v5843
        %v5846 = vshrl.u32 %v5828, %v5844
        %v5847 = vor.u32 %v5845, %v5846
        %v5848 = vsub.s32 4294967266, %v5843
        %v5849 = vadd.s32 %v5848, 127
        %v5850 = vshll.u32 %v5849, 23
        %v5851 = vor.u32 4788187, %v5850
        %v5852 = vand.u32 2147483647, %v5851
        %v5854 = vcvt.s32.f32 %v5847
        %v5855 = vmul.f32 %v5854, %v5852
        %v5856 = vxor.u32 %v5855, 2147483648
        %v5857 = vsel %vm5774, %v5856, %v5855
        %v5858 = vsub.s32 4, %v5834
        %v5859 = vsel %vm5774, %v5858, %v5834
        %v5860 = vsel %vm5773, %v4210, %v5857
        %v5861 = vsel %vm5773, 0, %v5859
        %v5862 = vcosq.f32.pop %v5860
        %v5863 = vsinq.f32.pop %v5860
        %vm5864 = vweird.f32 %v4210
        %v5865 = vadd.s32 %v5861, 3
        %v5866 = vand.u32 %v5865, 3
        %vm5867 = vcmp.lt.s32.totalorder %v5866, 2
        %vm5868 = vcmp.eq.s32.totalorder %v5866, 0
        %v5869 = vxor.u32 %v5863, 2147483648
        %v5870 = vsel %vm5868, %v5862, %v5869
        %vm5871 = vcmp.eq.s32.totalorder %v5866, 2
        %v5872 = vxor.u32 %v5862, 2147483648
        %v5873 = vsel %vm5871, %v5872, %v5863
        %v5874 = vsel %vm5867, %v5870, %v5873
        %v5875 = vsel %vm5864, nan, %v5874
        %5877 = vset.pattern.permute.xlu0 0
        %5878 = vperm.xlu0 %5877, %v3998
        %v5879 = vpop.permute.xlu0 %5878
        %5882 = vset.pattern.permute.xlu0 0
        %5883 = vperm.xlu0 %5882, %v3999
        %v5884 = vpop.permute.xlu0 %5883
        %5887 = vset.pattern.permute.xlu0 0
        %5888 = vperm.xlu0 %5887, %v4000
        %v5889 = vpop.permute.xlu0 %5888
        %5892 = vset.pattern.permute.xlu0 0
        %5893 = vperm.xlu0 %5892, %v4001
        %v5894 = vpop.permute.xlu0 %5893
        %v5897 = vsel %vm2085, %v3993, 0
        %v5900 = vsel %vm2085, %v3994, 0
        %v5903 = vsel %vm2085, %v3995, 0
        %v5906 = vsel %vm2085, %v3996, 0
        %5908 = vmatprep.subr.mxu0 %v4419
        %5909 = vmatpush1.msra.mxu0 %v4315
        %5910 = vmatprep.subr.mxu0 %v4835
        %5911 = vmatpush1.msra.mxu0 %v4731
        %5912 = vmatprep.subr.mxu0 %v5251
        %5913 = vmatpush1.msra.mxu0 %v5147
        %5914 = vmatprep.subr.mxu0 %v5667
        %5915 = vmatpush1.msra.mxu0 %v5563
        %5916 = vmatprep.subr.mxu0 0.0
        %5917 = vmatpush1.msra.mxu0 0.0
        %5918 = vmatprep.subr.mxu0 0.0
        %5919 = vmatpush1.msra.mxu0 0.0
        %5920 = vmatprep.subr.mxu0 0.0
        %5921 = vmatpush1.msra.mxu0 0.0
        %5922 = vmatprep.subr.mxu0 0.0
        %5923 = vmatpush1.msra.mxu0 0.0
        %5924 = vmatprep.subr.mxu0 0.0
        %5925 = vmatpush1.msra.mxu0 0.0
        %5926 = vmatprep.subr.mxu0 0.0
        %5927 = vmatpush1.msra.mxu0 0.0
        %5928 = vmatprep.subr.mxu0 0.0
        %5929 = vmatpush1.msra.mxu0 0.0
        %5930 = vmatprep.subr.mxu0 0.0
        %5931 = vmatpush1.msra.mxu0 0.0
        %5932 = vmatprep.subr.mxu0 0.0
        %5933 = vmatpush1.msra.mxu0 0.0
        %5934 = vmatprep.subr.mxu0 0.0
        %5935 = vmatpush1.msra.mxu0 0.0
        %5936 = vmatprep.subr.mxu0 0.0
        %5937 = vmatpush1.msra.mxu0 0.0
        %5938 = vmatprep.subr.mxu0 0.0
        %5939 = vmatpush1.msra.mxu0 0.0
        %5940 = vmatprep.subr.mxu0 0.0
        %5941 = vmatpush1.msra.mxu0 0.0
        %5942 = vmatprep.subr.mxu0 0.0
        %5943 = vmatpush1.msra.mxu0 0.0
        %5944 = vmatprep.subr.mxu0 0.0
        %5945 = vmatpush1.msra.mxu0 0.0
        %5946 = vmatprep.subr.mxu0 0.0
        %5947 = vmatpush1.msra.mxu0 0.0
        %5948 = vmatprep.subr.mxu0 0.0
        %5949 = vmatpush1.msra.mxu0 0.0
        %5950 = vmatprep.subr.mxu0 0.0
        %5951 = vmatpush1.msra.mxu0 0.0
        %5952 = vmatprep.subr.mxu0 0.0
        %5953 = vmatpush1.msra.mxu0 0.0
        %5954 = vmatprep.subr.mxu0 0.0
        %5955 = vmatpush1.msra.mxu0 0.0
        %5956 = vmatprep.subr.mxu0 0.0
        %5957 = vmatpush1.msra.mxu0 0.0
        %5958 = vmatprep.subr.mxu0 0.0
        %5959 = vmatpush1.msra.mxu0 0.0
        %5960 = vmatprep.subr.mxu0 0.0
        %5961 = vmatpush1.msra.mxu0 0.0
        %5962 = vmatprep.subr.mxu0 0.0
        %5963 = vmatpush1.msra.mxu0 0.0
        %5964 = vmatprep.subr.mxu0 0.0
        %5965 = vmatpush1.msra.mxu0 0.0
        %5966 = vmatprep.subr.mxu0 0.0
        %5967 = vmatpush1.msra.mxu0 0.0
        %5968 = vmatprep.subr.mxu0 0.0
        %5969 = vmatpush1.msra.mxu0 0.0
        %5970 = vmatprep.subr.mxu0 0.0
        %5971 = vmatpush1.msra.mxu0 0.0
        %5972 = vmatprep.mubr.f32.mxu0 0.0
        %5973 = vmatmul.mubr.f32.gmra.mrb[0].mxu0 %v5897
        %v5974 = vpop.f32.mrb[0].mxu0
        %v5975 = vadd.f32 %v5879, %v5974
        %v5976 = vpop.f32.mrb[0].mxu0
        %v5977 = vadd.f32 %v5879, %v5976
        %5978 = vmatprep.mubr.f32.mxu0 0.0
        %5979 = vmatmul.mubr.f32.gmra.mrb[0].mxu0 %v5900
        %v5980 = vpop.f32.mrb[0].mxu0
        %v5981 = vadd.f32 %v5884, %v5980
        %v5982 = vpop.f32.mrb[0].mxu0
        %v5983 = vadd.f32 %v5884, %v5982
        %5984 = vmatprep.mubr.f32.mxu0 0.0
        %5985 = vmatmul.mubr.f32.gmra.mrb[0].mxu0 %v5903
        %v5986 = vpop.f32.mrb[0].mxu0
        %v5987 = vadd.f32 %v5889, %v5986
        %v5988 = vpop.f32.mrb[0].mxu0
        %v5989 = vadd.f32 %v5889, %v5988
        %5990 = vmatprep.mubr.f32.mxu0 0.0
        %5991 = vmatmul.mubr.f32.gmra.mrb[0].mxu0 %v5906
        %v5992 = vpop.f32.mrb[0].mxu0
        %v5993 = vadd.f32 %v5894, %v5992
        %v5994 = vpop.f32.mrb[0].mxu0
        %v5995 = vadd.f32 %v5894, %v5994
        %5996 = vdwg.mxu0
        %5997 = vmatprep.subr.mxu0 %v4627
        %5998 = vmatpush1.msra.mxu0 %v4523
        %5999 = vmatprep.subr.mxu0 %v5043
        %6000 = vmatpush1.msra.mxu0 %v4939
        %6001 = vmatprep.subr.mxu0 %v5459
        %6002 = vmatpush1.msra.mxu0 %v5355
        %6003 = vmatprep.subr.mxu0 %v5875
        %6004 = vmatpush1.msra.mxu0 %v5771
        %6005 = vmatprep.subr.mxu0 0.0
        %6006 = vmatpush1.msra.mxu0 0.0
        %6007 = vmatprep.subr.mxu0 0.0
        %6008 = vmatpush1.msra.mxu0 0.0
        %6009 = vmatprep.subr.mxu0 0.0
        %6010 = vmatpush1.msra.mxu0 0.0
        %6011 = vmatprep.subr.mxu0 0.0
        %6012 = vmatpush1.msra.mxu0 0.0
        %6013 = vmatprep.subr.mxu0 0.0
        %6014 = vmatpush1.msra.mxu0 0.0
        %6015 = vmatprep.subr.mxu0 0.0
        %6016 = vmatpush1.msra.mxu0 0.0
        %6017 = vmatprep.subr.mxu0 0.0
        %6018 = vmatpush1.msra.mxu0 0.0
        %6019 = vmatprep.subr.mxu0 0.0
        %6020 = vmatpush1.msra.mxu0 0.0
        %6021 = vmatprep.subr.mxu0 0.0
        %6022 = vmatpush1.msra.mxu0 0.0
        %6023 = vmatprep.subr.mxu0 0.0
        %6024 = vmatpush1.msra.mxu0 0.0
        %6025 = vmatprep.subr.mxu0 0.0
        %6026 = vmatpush1.msra.mxu0 0.0
        %6027 = vmatprep.subr.mxu0 0.0
        %6028 = vmatpush1.msra.mxu0 0.0
        %6029 = vmatprep.subr.mxu0 0.0
        %6030 = vmatpush1.msra.mxu0 0.0
        %6031 = vmatprep.subr.mxu0 0.0
        %6032 = vmatpush1.msra.mxu0 0.0
        %6033 = vmatprep.subr.mxu0 0.0
        %6034 = vmatpush1.msra.mxu0 0.0
        %6035 = vmatprep.subr.mxu0 0.0
        %6036 = vmatpush1.msra.mxu0 0.0
        %6037 = vmatprep.subr.mxu0 0.0
        %6038 = vmatpush1.msra.mxu0 0.0
        %6039 = vmatprep.subr.mxu0 0.0
        %6040 = vmatpush1.msra.mxu0 0.0
        %6041 = vmatprep.subr.mxu0 0.0
        %6042 = vmatpush1.msra.mxu0 0.0
        %6043 = vmatprep.subr.mxu0 0.0
        %6044 = vmatpush1.msra.mxu0 0.0
        %6045 = vmatprep.subr.mxu0 0.0
        %6046 = vmatpush1.msra.mxu0 0.0
        %6047 = vmatprep.subr.mxu0 0.0
        %6048 = vmatpush1.msra.mxu0 0.0
        %6049 = vmatprep.subr.mxu0 0.0
        %6050 = vmatpush1.msra.mxu0 0.0
        %6051 = vmatprep.subr.mxu0 0.0
        %6052 = vmatpush1.msra.mxu0 0.0
        %6053 = vmatprep.subr.mxu0 0.0
        %6054 = vmatpush1.msra.mxu0 0.0
        %6055 = vmatprep.subr.mxu0 0.0
        %6056 = vmatpush1.msra.mxu0 0.0
        %6057 = vmatprep.subr.mxu0 0.0
        %6058 = vmatpush1.msra.mxu0 0.0
        %6059 = vmatprep.subr.mxu0 0.0
        %6060 = vmatpush1.msra.mxu0 0.0
        %6061 = vmatprep.mubr.f32.mxu0 0.0
        %6062 = vmatmul.mubr.f32.gmra.mrb[0].mxu0 %v5897
        %v6063 = vpop.f32.mrb[0].mxu0
        %v6064 = vadd.f32 %v5879, %v6063
        %v6065 = vpop.f32.mrb[0].mxu0
        %v6066 = vadd.f32 %v5879, %v6065
        %6067 = vmatprep.mubr.f32.mxu0 0.0
        %6068 = vmatmul.mubr.f32.gmra.mrb[0].mxu0 %v5900
        %v6069 = vpop.f32.mrb[0].mxu0
        %v6070 = vadd.f32 %v5884, %v6069
        %v6071 = vpop.f32.mrb[0].mxu0
        %v6072 = vadd.f32 %v5884, %v6071
        %6073 = vmatprep.mubr.f32.mxu0 0.0
        %6074 = vmatmul.mubr.f32.gmra.mrb[0].mxu0 %v5903
        %v6075 = vpop.f32.mrb[0].mxu0
        %v6076 = vadd.f32 %v5889, %v6075
        %v6077 = vpop.f32.mrb[0].mxu0
        %v6078 = vadd.f32 %v5889, %v6077
        %6079 = vmatprep.mubr.f32.mxu0 0.0
        %6080 = vmatmul.mubr.f32.gmra.mrb[0].mxu0 %v5906
        %v6081 = vpop.f32.mrb[0].mxu0
        %v6082 = vadd.f32 %v5894, %v6081
        %v6083 = vpop.f32.mrb[0].mxu0
        %v6084 = vadd.f32 %v5894, %v6083
        %6085 = vdwg.mxu0
        %v6086 = vand.u32 2147483647, %v5975
        %vm6087 = vcmp.le.f32.partialorder %v6086, 0.7853982
        %vm6088 = vcmp.lt.s32.totalorder %v5975, 0
        %v6089 = vand.u32 %v5975, 2139095040
        %v6090 = vshrl.u32 %v6089, 23
        %v6091 = vsub.s32 %v6090, 127
        %v6092 = vand.u32 2147483647, %v5975
        %v6093 = vand.u32 %v6092, 8388607
        %v6094 = vor.u32 %v6093, 8388608
        %v6095 = vsub.s32 0, %v6094
        %v6096 = vadd.s32 %v6091, 1
        %vm6097 = vcmp.gt.s32.totalorder %v6096, 0
        %v6098 = vsel %vm6097, %v6096, 0
        %v6099 = vshrl.u32 %v6098, 5
        %v6100 = vand.u32 %v6098, 31
        %v6101 = vsub.s32 32, %v6100
        %v6102 = vshrl.u32 683565275, %v6101
        %v6103 = vshll.u32 683565275, %v6100
        %v6104 = vshrl.u32 2475754826, %v6101
        %v6105 = vor.u32 %v6103, %v6104
        %v6106 = vshll.u32 2475754826, %v6100
        %v6107 = vshrl.u32 2131351028, %v6101
        %v6108 = vor.u32 %v6106, %v6107
        %v6109 = vshll.u32 2131351028, %v6100
        %v6110 = vshrl.u32 2102212464, %v6101
        %v6111 = vor.u32 %v6109, %v6110
        %v6112 = vshll.u32 2102212464, %v6100
        %v6113 = vshrl.u32 920167782, %v6101
        %v6114 = vor.u32 %v6112, %v6113
        %v6115 = vshll.u32 920167782, %v6100
        %v6116 = vshrl.u32 1326507024, %v6101
        %v6117 = vor.u32 %v6115, %v6116
        %vm6118 = vcmp.lt.s32.totalorder %v6099, 1
        %vm6119 = vcmp.lt.s32.totalorder %v6099, 2
        %vm6120 = vcmp.lt.s32.totalorder %v6099, 3
        %vm6121 = vcmp.lt.s32.totalorder %v6099, 4
        %v6122 = vsel %vm6118, %v6102, %v6105
        %v6123 = vsel %vm6121, %v6111, 2102212464
        %v6124 = vsel %vm6120, %v6108, %v6123
        %v6125 = vsel %vm6119, %v6122, %v6124
        %v6126 = vsel %vm6118, %v6105, %v6108
        %v6127 = vsel %vm6121, %v6114, 920167782
        %v6128 = vsel %vm6120, %v6111, %v6127
        %v6129 = vsel %vm6119, %v6126, %v6128
        %v6130 = vsel %vm6118, %v6108, %v6111
        %v6131 = vsel %vm6121, %v6117, 1326507024
        %v6132 = vsel %vm6120, %v6114, %v6131
        %v6133 = vsel %vm6119, %v6130, %v6132
        %v6134 = vshll.u32 %v6094, 8
        %v6135 = vmul.u32.u64.compose %v6134, %v6133
        %v6136 = vextract.low.u32 %v6135
        %v6137 = vextract.high.u32 %v6135
        %v6138 = vmul.u32.u64.compose %v6134, %v6129
        %v6139 = vextract.low.u32 %v6138
        %v6140 = vextract.high.u32 %v6138
        %v6141 = vmul.u32 %v6134, %v6125
        %v6142 = vadd.s32 %v6137, %v6139
        %vm6143 = vc.u32 %v6137, %v6139
        %v6144 = vadd.s32 %v6140, 1
        %v6145 = vsel %vm6143, %v6144, %v6140
        %v6146 = vadd.s32 %v6141, %v6145
        %v6147 = vadd.s32 %v6146, 536870912
        %v6148 = vshrl.u32 %v6147, 30
        %v6149 = vshll.u32 %v6148, 30
        %v6150 = vsub.s32 %v6146, %v6149
        %vm6151 = vcmp.lt.s32.totalorder %v6150, 0
        %v6152 = vsub.s32 0, %v6150
        %v6153 = vsel %vm6151, %v6152, %v6150
        %v6154 = vclz %v6153
        %v6155 = vsub.s32 %v6154, 2
        %vm6156 = vcmp.gt.s32.totalorder 0, %v6155
        %v6157 = vsel %vm6156, 0, %v6155
        %v6158 = vsub.s32 32, %v6157
        %v6159 = vshll.u32 %v6150, %v6157
        %v6160 = vshrl.u32 %v6142, %v6158
        %v6161 = vor.u32 %v6159, %v6160
        %v6162 = vsub.s32 4294967266, %v6157
        %v6163 = vadd.s32 %v6162, 127
        %v6164 = vshll.u32 %v6163, 23
        %v6165 = vor.u32 4788187, %v6164
        %v6166 = vand.u32 2147483647, %v6165
        %v6168 = vcvt.s32.f32 %v6161
        %v6169 = vmul.f32 %v6168, %v6166
        %v6170 = vxor.u32 %v6169, 2147483648
        %v6171 = vsel %vm6088, %v6170, %v6169
        %v6172 = vsub.s32 4, %v6148
        %v6173 = vsel %vm6088, %v6172, %v6148
        %v6174 = vsel %vm6087, %v5975, %v6171
        %v6175 = vsel %vm6087, 0, %v6173
        %v6176 = vcosq.f32.pop %v6174
        %v6177 = vsinq.f32.pop %v6174
        %vm6178 = vweird.f32 %v5975
        %v6179 = vadd.s32 %v6175, 3
        %v6180 = vand.u32 %v6179, 3
        %vm6181 = vcmp.lt.s32.totalorder %v6180, 2
        %vm6182 = vcmp.eq.s32.totalorder %v6180, 0
        %v6183 = vxor.u32 %v6177, 2147483648
        %v6184 = vsel %vm6182, %v6176, %v6183
        %vm6185 = vcmp.eq.s32.totalorder %v6180, 2
        %v6186 = vxor.u32 %v6176, 2147483648
        %v6187 = vsel %vm6185, %v6186, %v6177
        %v6188 = vsel %vm6181, %v6184, %v6187
        %v6189 = vsel %vm6178, nan, %v6188
        %v6190 = vand.u32 2147483647, %v5977
        %vm6191 = vcmp.le.f32.partialorder %v6190, 0.7853982
        %vm6192 = vcmp.lt.s32.totalorder %v5977, 0
        %v6193 = vand.u32 %v5977, 2139095040
        %v6194 = vshrl.u32 %v6193, 23
        %v6195 = vsub.s32 %v6194, 127
        %v6196 = vand.u32 2147483647, %v5977
        %v6197 = vand.u32 %v6196, 8388607
        %v6198 = vor.u32 %v6197, 8388608
        %v6199 = vsub.s32 0, %v6198
        %v6200 = vadd.s32 %v6195, 1
        %vm6201 = vcmp.gt.s32.totalorder %v6200, 0
        %v6202 = vsel %vm6201, %v6200, 0
        %v6203 = vshrl.u32 %v6202, 5
        %v6204 = vand.u32 %v6202, 31
        %v6205 = vsub.s32 32, %v6204
        %v6206 = vshrl.u32 683565275, %v6205
        %v6207 = vshll.u32 683565275, %v6204
        %v6208 = vshrl.u32 2475754826, %v6205
        %v6209 = vor.u32 %v6207, %v6208
        %v6210 = vshll.u32 2475754826, %v6204
        %v6211 = vshrl.u32 2131351028, %v6205
        %v6212 = vor.u32 %v6210, %v6211
        %v6213 = vshll.u32 2131351028, %v6204
        %v6214 = vshrl.u32 2102212464, %v6205
        %v6215 = vor.u32 %v6213, %v6214
        %v6216 = vshll.u32 2102212464, %v6204
        %v6217 = vshrl.u32 920167782, %v6205
        %v6218 = vor.u32 %v6216, %v6217
        %v6219 = vshll.u32 920167782, %v6204
        %v6220 = vshrl.u32 1326507024, %v6205
        %v6221 = vor.u32 %v6219, %v6220
        %vm6222 = vcmp.lt.s32.totalorder %v6203, 1
        %vm6223 = vcmp.lt.s32.totalorder %v6203, 2
        %vm6224 = vcmp.lt.s32.totalorder %v6203, 3
        %vm6225 = vcmp.lt.s32.totalorder %v6203, 4
        %v6226 = vsel %vm6222, %v6206, %v6209
        %v6227 = vsel %vm6225, %v6215, 2102212464
        %v6228 = vsel %vm6224, %v6212, %v6227
        %v6229 = vsel %vm6223, %v6226, %v6228
        %v6230 = vsel %vm6222, %v6209, %v6212
        %v6231 = vsel %vm6225, %v6218, 920167782
        %v6232 = vsel %vm6224, %v6215, %v6231
        %v6233 = vsel %vm6223, %v6230, %v6232
        %v6234 = vsel %vm6222, %v6212, %v6215
        %v6235 = vsel %vm6225, %v6221, 1326507024
        %v6236 = vsel %vm6224, %v6218, %v6235
        %v6237 = vsel %vm6223, %v6234, %v6236
        %v6238 = vshll.u32 %v6198, 8
        %v6239 = vmul.u32.u64.compose %v6238, %v6237
        %v6240 = vextract.low.u32 %v6239
        %v6241 = vextract.high.u32 %v6239
        %v6242 = vmul.u32.u64.compose %v6238, %v6233
        %v6243 = vextract.low.u32 %v6242
        %v6244 = vextract.high.u32 %v6242
        %v6245 = vmul.u32 %v6238, %v6229
        %v6246 = vadd.s32 %v6241, %v6243
        %vm6247 = vc.u32 %v6241, %v6243
        %v6248 = vadd.s32 %v6244, 1
        %v6249 = vsel %vm6247, %v6248, %v6244
        %v6250 = vadd.s32 %v6245, %v6249
        %v6251 = vadd.s32 %v6250, 536870912
        %v6252 = vshrl.u32 %v6251, 30
        %v6253 = vshll.u32 %v6252, 30
        %v6254 = vsub.s32 %v6250, %v6253
        %vm6255 = vcmp.lt.s32.totalorder %v6254, 0
        %v6256 = vsub.s32 0, %v6254
        %v6257 = vsel %vm6255, %v6256, %v6254
        %v6258 = vclz %v6257
        %v6259 = vsub.s32 %v6258, 2
        %vm6260 = vcmp.gt.s32.totalorder 0, %v6259
        %v6261 = vsel %vm6260, 0, %v6259
        %v6262 = vsub.s32 32, %v6261
        %v6263 = vshll.u32 %v6254, %v6261
        %v6264 = vshrl.u32 %v6246, %v6262
        %v6265 = vor.u32 %v6263, %v6264
        %v6266 = vsub.s32 4294967266, %v6261
        %v6267 = vadd.s32 %v6266, 127
        %v6268 = vshll.u32 %v6267, 23
        %v6269 = vor.u32 4788187, %v6268
        %v6270 = vand.u32 2147483647, %v6269
        %v6272 = vcvt.s32.f32 %v6265
        %v6273 = vmul.f32 %v6272, %v6270
        %v6274 = vxor.u32 %v6273, 2147483648
        %v6275 = vsel %vm6192, %v6274, %v6273
        %v6276 = vsub.s32 4, %v6252
        %v6277 = vsel %vm6192, %v6276, %v6252
        %v6278 = vsel %vm6191, %v5977, %v6275
        %v6279 = vsel %vm6191, 0, %v6277
        %v6280 = vcosq.f32.pop %v6278
        %v6281 = vsinq.f32.pop %v6278
        %vm6282 = vweird.f32 %v5977
        %v6283 = vadd.s32 %v6279, 3
        %v6284 = vand.u32 %v6283, 3
        %vm6285 = vcmp.lt.s32.totalorder %v6284, 2
        %vm6286 = vcmp.eq.s32.totalorder %v6284, 0
        %v6287 = vxor.u32 %v6281, 2147483648
        %v6288 = vsel %vm6286, %v6280, %v6287
        %vm6289 = vcmp.eq.s32.totalorder %v6284, 2
        %v6290 = vxor.u32 %v6280, 2147483648
        %v6291 = vsel %vm6289, %v6290, %v6281
        %v6292 = vsel %vm6285, %v6288, %v6291
        %v6293 = vsel %vm6282, nan, %v6292
        %v6294 = vand.u32 2147483647, %v6064
        %vm6295 = vcmp.le.f32.partialorder %v6294, 0.7853982
        %vm6296 = vcmp.lt.s32.totalorder %v6064, 0
        %v6297 = vand.u32 %v6064, 2139095040
        %v6298 = vshrl.u32 %v6297, 23
        %v6299 = vsub.s32 %v6298, 127
        %v6300 = vand.u32 2147483647, %v6064
        %v6301 = vand.u32 %v6300, 8388607
        %v6302 = vor.u32 %v6301, 8388608
        %v6303 = vsub.s32 0, %v6302
        %v6304 = vadd.s32 %v6299, 1
        %vm6305 = vcmp.gt.s32.totalorder %v6304, 0
        %v6306 = vsel %vm6305, %v6304, 0
        %v6307 = vshrl.u32 %v6306, 5
        %v6308 = vand.u32 %v6306, 31
        %v6309 = vsub.s32 32, %v6308
        %v6310 = vshrl.u32 683565275, %v6309
        %v6311 = vshll.u32 683565275, %v6308
        %v6312 = vshrl.u32 2475754826, %v6309
        %v6313 = vor.u32 %v6311, %v6312
        %v6314 = vshll.u32 2475754826, %v6308
        %v6315 = vshrl.u32 2131351028, %v6309
        %v6316 = vor.u32 %v6314, %v6315
        %v6317 = vshll.u32 2131351028, %v6308
        %v6318 = vshrl.u32 2102212464, %v6309
        %v6319 = vor.u32 %v6317, %v6318
        %v6320 = vshll.u32 2102212464, %v6308
        %v6321 = vshrl.u32 920167782, %v6309
        %v6322 = vor.u32 %v6320, %v6321
        %v6323 = vshll.u32 920167782, %v6308
        %v6324 = vshrl.u32 1326507024, %v6309
        %v6325 = vor.u32 %v6323, %v6324
        %vm6326 = vcmp.lt.s32.totalorder %v6307, 1
        %vm6327 = vcmp.lt.s32.totalorder %v6307, 2
        %vm6328 = vcmp.lt.s32.totalorder %v6307, 3
        %vm6329 = vcmp.lt.s32.totalorder %v6307, 4
        %v6330 = vsel %vm6326, %v6310, %v6313
        %v6331 = vsel %vm6329, %v6319, 2102212464
        %v6332 = vsel %vm6328, %v6316, %v6331
        %v6333 = vsel %vm6327, %v6330, %v6332
        %v6334 = vsel %vm6326, %v6313, %v6316
        %v6335 = vsel %vm6329, %v6322, 920167782
        %v6336 = vsel %vm6328, %v6319, %v6335
        %v6337 = vsel %vm6327, %v6334, %v6336
        %v6338 = vsel %vm6326, %v6316, %v6319
        %v6339 = vsel %vm6329, %v6325, 1326507024
        %v6340 = vsel %vm6328, %v6322, %v6339
        %v6341 = vsel %vm6327, %v6338, %v6340
        %v6342 = vshll.u32 %v6302, 8
        %v6343 = vmul.u32.u64.compose %v6342, %v6341
        %v6344 = vextract.low.u32 %v6343
        %v6345 = vextract.high.u32 %v6343
        %v6346 = vmul.u32.u64.compose %v6342, %v6337
        %v6347 = vextract.low.u32 %v6346
        %v6348 = vextract.high.u32 %v6346
        %v6349 = vmul.u32 %v6342, %v6333
        %v6350 = vadd.s32 %v6345, %v6347
        %vm6351 = vc.u32 %v6345, %v6347
        %v6352 = vadd.s32 %v6348, 1
        %v6353 = vsel %vm6351, %v6352, %v6348
        %v6354 = vadd.s32 %v6349, %v6353
        %v6355 = vadd.s32 %v6354, 536870912
        %v6356 = vshrl.u32 %v6355, 30
        %v6357 = vshll.u32 %v6356, 30
        %v6358 = vsub.s32 %v6354, %v6357
        %vm6359 = vcmp.lt.s32.totalorder %v6358, 0
        %v6360 = vsub.s32 0, %v6358
        %v6361 = vsel %vm6359, %v6360, %v6358
        %v6362 = vclz %v6361
        %v6363 = vsub.s32 %v6362, 2
        %vm6364 = vcmp.gt.s32.totalorder 0, %v6363
        %v6365 = vsel %vm6364, 0, %v6363
        %v6366 = vsub.s32 32, %v6365
        %v6367 = vshll.u32 %v6358, %v6365
        %v6368 = vshrl.u32 %v6350, %v6366
        %v6369 = vor.u32 %v6367, %v6368
        %v6370 = vsub.s32 4294967266, %v6365
        %v6371 = vadd.s32 %v6370, 127
        %v6372 = vshll.u32 %v6371, 23
        %v6373 = vor.u32 4788187, %v6372
        %v6374 = vand.u32 2147483647, %v6373
        %v6376 = vcvt.s32.f32 %v6369
        %v6377 = vmul.f32 %v6376, %v6374
        %v6378 = vxor.u32 %v6377, 2147483648
        %v6379 = vsel %vm6296, %v6378, %v6377
        %v6380 = vsub.s32 4, %v6356
        %v6381 = vsel %vm6296, %v6380, %v6356
        %v6382 = vsel %vm6295, %v6064, %v6379
        %v6383 = vsel %vm6295, 0, %v6381
        %v6384 = vcosq.f32.pop %v6382
        %v6385 = vsinq.f32.pop %v6382
        %vm6386 = vweird.f32 %v6064
        %v6387 = vadd.s32 %v6383, 3
        %v6388 = vand.u32 %v6387, 3
        %vm6389 = vcmp.lt.s32.totalorder %v6388, 2
        %vm6390 = vcmp.eq.s32.totalorder %v6388, 0
        %v6391 = vxor.u32 %v6385, 2147483648
        %v6392 = vsel %vm6390, %v6384, %v6391
        %vm6393 = vcmp.eq.s32.totalorder %v6388, 2
        %v6394 = vxor.u32 %v6384, 2147483648
        %v6395 = vsel %vm6393, %v6394, %v6385
        %v6396 = vsel %vm6389, %v6392, %v6395
        %v6397 = vsel %vm6386, nan, %v6396
        %v6398 = vand.u32 2147483647, %v6066
        %vm6399 = vcmp.le.f32.partialorder %v6398, 0.7853982
        %vm6400 = vcmp.lt.s32.totalorder %v6066, 0
        %v6401 = vand.u32 %v6066, 2139095040
        %v6402 = vshrl.u32 %v6401, 23
        %v6403 = vsub.s32 %v6402, 127
        %v6404 = vand.u32 2147483647, %v6066
        %v6405 = vand.u32 %v6404, 8388607
        %v6406 = vor.u32 %v6405, 8388608
        %v6407 = vsub.s32 0, %v6406
        %v6408 = vadd.s32 %v6403, 1
        %vm6409 = vcmp.gt.s32.totalorder %v6408, 0
        %v6410 = vsel %vm6409, %v6408, 0
        %v6411 = vshrl.u32 %v6410, 5
        %v6412 = vand.u32 %v6410, 31
        %v6413 = vsub.s32 32, %v6412
        %v6414 = vshrl.u32 683565275, %v6413
        %v6415 = vshll.u32 683565275, %v6412
        %v6416 = vshrl.u32 2475754826, %v6413
        %v6417 = vor.u32 %v6415, %v6416
        %v6418 = vshll.u32 2475754826, %v6412
        %v6419 = vshrl.u32 2131351028, %v6413
        %v6420 = vor.u32 %v6418, %v6419
        %v6421 = vshll.u32 2131351028, %v6412
        %v6422 = vshrl.u32 2102212464, %v6413
        %v6423 = vor.u32 %v6421, %v6422
        %v6424 = vshll.u32 2102212464, %v6412
        %v6425 = vshrl.u32 920167782, %v6413
        %v6426 = vor.u32 %v6424, %v6425
        %v6427 = vshll.u32 920167782, %v6412
        %v6428 = vshrl.u32 1326507024, %v6413
        %v6429 = vor.u32 %v6427, %v6428
        %vm6430 = vcmp.lt.s32.totalorder %v6411, 1
        %vm6431 = vcmp.lt.s32.totalorder %v6411, 2
        %vm6432 = vcmp.lt.s32.totalorder %v6411, 3
        %vm6433 = vcmp.lt.s32.totalorder %v6411, 4
        %v6434 = vsel %vm6430, %v6414, %v6417
        %v6435 = vsel %vm6433, %v6423, 2102212464
        %v6436 = vsel %vm6432, %v6420, %v6435
        %v6437 = vsel %vm6431, %v6434, %v6436
        %v6438 = vsel %vm6430, %v6417, %v6420
        %v6439 = vsel %vm6433, %v6426, 920167782
        %v6440 = vsel %vm6432, %v6423, %v6439
        %v6441 = vsel %vm6431, %v6438, %v6440
        %v6442 = vsel %vm6430, %v6420, %v6423
        %v6443 = vsel %vm6433, %v6429, 1326507024
        %v6444 = vsel %vm6432, %v6426, %v6443
        %v6445 = vsel %vm6431, %v6442, %v6444
        %v6446 = vshll.u32 %v6406, 8
        %v6447 = vmul.u32.u64.compose %v6446, %v6445
        %v6448 = vextract.low.u32 %v6447
        %v6449 = vextract.high.u32 %v6447
        %v6450 = vmul.u32.u64.compose %v6446, %v6441
        %v6451 = vextract.low.u32 %v6450
        %v6452 = vextract.high.u32 %v6450
        %v6453 = vmul.u32 %v6446, %v6437
        %v6454 = vadd.s32 %v6449, %v6451
        %vm6455 = vc.u32 %v6449, %v6451
        %v6456 = vadd.s32 %v6452, 1
        %v6457 = vsel %vm6455, %v6456, %v6452
        %v6458 = vadd.s32 %v6453, %v6457
        %v6459 = vadd.s32 %v6458, 536870912
        %v6460 = vshrl.u32 %v6459, 30
        %v6461 = vshll.u32 %v6460, 30
        %v6462 = vsub.s32 %v6458, %v6461
        %vm6463 = vcmp.lt.s32.totalorder %v6462, 0
        %v6464 = vsub.s32 0, %v6462
        %v6465 = vsel %vm6463, %v6464, %v6462
        %v6466 = vclz %v6465
        %v6467 = vsub.s32 %v6466, 2
        %vm6468 = vcmp.gt.s32.totalorder 0, %v6467
        %v6469 = vsel %vm6468, 0, %v6467
        %v6470 = vsub.s32 32, %v6469
        %v6471 = vshll.u32 %v6462, %v6469
        %v6472 = vshrl.u32 %v6454, %v6470
        %v6473 = vor.u32 %v6471, %v6472
        %v6474 = vsub.s32 4294967266, %v6469
        %v6475 = vadd.s32 %v6474, 127
        %v6476 = vshll.u32 %v6475, 23
        %v6477 = vor.u32 4788187, %v6476
        %v6478 = vand.u32 2147483647, %v6477
        %v6480 = vcvt.s32.f32 %v6473
        %v6481 = vmul.f32 %v6480, %v6478
        %v6482 = vxor.u32 %v6481, 2147483648
        %v6483 = vsel %vm6400, %v6482, %v6481
        %v6484 = vsub.s32 4, %v6460
        %v6485 = vsel %vm6400, %v6484, %v6460
        %v6486 = vsel %vm6399, %v6066, %v6483
        %v6487 = vsel %vm6399, 0, %v6485
        %v6488 = vcosq.f32.pop %v6486
        %v6489 = vsinq.f32.pop %v6486
        %vm6490 = vweird.f32 %v6066
        %v6491 = vadd.s32 %v6487, 3
        %v6492 = vand.u32 %v6491, 3
        %vm6493 = vcmp.lt.s32.totalorder %v6492, 2
        %vm6494 = vcmp.eq.s32.totalorder %v6492, 0
        %v6495 = vxor.u32 %v6489, 2147483648
        %v6496 = vsel %vm6494, %v6488, %v6495
        %vm6497 = vcmp.eq.s32.totalorder %v6492, 2
        %v6498 = vxor.u32 %v6488, 2147483648
        %v6499 = vsel %vm6497, %v6498, %v6489
        %v6500 = vsel %vm6493, %v6496, %v6499
        %v6501 = vsel %vm6490, nan, %v6500
        %v6502 = vand.u32 2147483647, %v5981
        %vm6503 = vcmp.le.f32.partialorder %v6502, 0.7853982
        %vm6504 = vcmp.lt.s32.totalorder %v5981, 0
        %v6505 = vand.u32 %v5981, 2139095040
        %v6506 = vshrl.u32 %v6505, 23
        %v6507 = vsub.s32 %v6506, 127
        %v6508 = vand.u32 2147483647, %v5981
        %v6509 = vand.u32 %v6508, 8388607
        %v6510 = vor.u32 %v6509, 8388608
        %v6511 = vsub.s32 0, %v6510
        %v6512 = vadd.s32 %v6507, 1
        %vm6513 = vcmp.gt.s32.totalorder %v6512, 0
        %v6514 = vsel %vm6513, %v6512, 0
        %v6515 = vshrl.u32 %v6514, 5
        %v6516 = vand.u32 %v6514, 31
        %v6517 = vsub.s32 32, %v6516
        %v6518 = vshrl.u32 683565275, %v6517
        %v6519 = vshll.u32 683565275, %v6516
        %v6520 = vshrl.u32 2475754826, %v6517
        %v6521 = vor.u32 %v6519, %v6520
        %v6522 = vshll.u32 2475754826, %v6516
        %v6523 = vshrl.u32 2131351028, %v6517
        %v6524 = vor.u32 %v6522, %v6523
        %v6525 = vshll.u32 2131351028, %v6516
        %v6526 = vshrl.u32 2102212464, %v6517
        %v6527 = vor.u32 %v6525, %v6526
        %v6528 = vshll.u32 2102212464, %v6516
        %v6529 = vshrl.u32 920167782, %v6517
        %v6530 = vor.u32 %v6528, %v6529
        %v6531 = vshll.u32 920167782, %v6516
        %v6532 = vshrl.u32 1326507024, %v6517
        %v6533 = vor.u32 %v6531, %v6532
        %vm6534 = vcmp.lt.s32.totalorder %v6515, 1
        %vm6535 = vcmp.lt.s32.totalorder %v6515, 2
        %vm6536 = vcmp.lt.s32.totalorder %v6515, 3
        %vm6537 = vcmp.lt.s32.totalorder %v6515, 4
        %v6538 = vsel %vm6534, %v6518, %v6521
        %v6539 = vsel %vm6537, %v6527, 2102212464
        %v6540 = vsel %vm6536, %v6524, %v6539
        %v6541 = vsel %vm6535, %v6538, %v6540
        %v6542 = vsel %vm6534, %v6521, %v6524
        %v6543 = vsel %vm6537, %v6530, 920167782
        %v6544 = vsel %vm6536, %v6527, %v6543
        %v6545 = vsel %vm6535, %v6542, %v6544
        %v6546 = vsel %vm6534, %v6524, %v6527
        %v6547 = vsel %vm6537, %v6533, 1326507024
        %v6548 = vsel %vm6536, %v6530, %v6547
        %v6549 = vsel %vm6535, %v6546, %v6548
        %v6550 = vshll.u32 %v6510, 8
        %v6551 = vmul.u32.u64.compose %v6550, %v6549
        %v6552 = vextract.low.u32 %v6551
        %v6553 = vextract.high.u32 %v6551
        %v6554 = vmul.u32.u64.compose %v6550, %v6545
        %v6555 = vextract.low.u32 %v6554
        %v6556 = vextract.high.u32 %v6554
        %v6557 = vmul.u32 %v6550, %v6541
        %v6558 = vadd.s32 %v6553, %v6555
        %vm6559 = vc.u32 %v6553, %v6555
        %v6560 = vadd.s32 %v6556, 1
        %v6561 = vsel %vm6559, %v6560, %v6556
        %v6562 = vadd.s32 %v6557, %v6561
        %v6563 = vadd.s32 %v6562, 536870912
        %v6564 = vshrl.u32 %v6563, 30
        %v6565 = vshll.u32 %v6564, 30
        %v6566 = vsub.s32 %v6562, %v6565
        %vm6567 = vcmp.lt.s32.totalorder %v6566, 0
        %v6568 = vsub.s32 0, %v6566
        %v6569 = vsel %vm6567, %v6568, %v6566
        %v6570 = vclz %v6569
        %v6571 = vsub.s32 %v6570, 2
        %vm6572 = vcmp.gt.s32.totalorder 0, %v6571
        %v6573 = vsel %vm6572, 0, %v6571
        %v6574 = vsub.s32 32, %v6573
        %v6575 = vshll.u32 %v6566, %v6573
        %v6576 = vshrl.u32 %v6558, %v6574
        %v6577 = vor.u32 %v6575, %v6576
        %v6578 = vsub.s32 4294967266, %v6573
        %v6579 = vadd.s32 %v6578, 127
        %v6580 = vshll.u32 %v6579, 23
        %v6581 = vor.u32 4788187, %v6580
        %v6582 = vand.u32 2147483647, %v6581
        %v6584 = vcvt.s32.f32 %v6577
        %v6585 = vmul.f32 %v6584, %v6582
        %v6586 = vxor.u32 %v6585, 2147483648
        %v6587 = vsel %vm6504, %v6586, %v6585
        %v6588 = vsub.s32 4, %v6564
        %v6589 = vsel %vm6504, %v6588, %v6564
        %v6590 = vsel %vm6503, %v5981, %v6587
        %v6591 = vsel %vm6503, 0, %v6589
        %v6592 = vcosq.f32.pop %v6590
        %v6593 = vsinq.f32.pop %v6590
        %vm6594 = vweird.f32 %v5981
        %v6595 = vadd.s32 %v6591, 3
        %v6596 = vand.u32 %v6595, 3
        %vm6597 = vcmp.lt.s32.totalorder %v6596, 2
        %vm6598 = vcmp.eq.s32.totalorder %v6596, 0
        %v6599 = vxor.u32 %v6593, 2147483648
        %v6600 = vsel %vm6598, %v6592, %v6599
        %vm6601 = vcmp.eq.s32.totalorder %v6596, 2
        %v6602 = vxor.u32 %v6592, 2147483648
        %v6603 = vsel %vm6601, %v6602, %v6593
        %v6604 = vsel %vm6597, %v6600, %v6603
        %v6605 = vsel %vm6594, nan, %v6604
        %v6606 = vand.u32 2147483647, %v5983
        %vm6607 = vcmp.le.f32.partialorder %v6606, 0.7853982
        %vm6608 = vcmp.lt.s32.totalorder %v5983, 0
        %v6609 = vand.u32 %v5983, 2139095040
        %v6610 = vshrl.u32 %v6609, 23
        %v6611 = vsub.s32 %v6610, 127
        %v6612 = vand.u32 2147483647, %v5983
        %v6613 = vand.u32 %v6612, 8388607
        %v6614 = vor.u32 %v6613, 8388608
        %v6615 = vsub.s32 0, %v6614
        %v6616 = vadd.s32 %v6611, 1
        %vm6617 = vcmp.gt.s32.totalorder %v6616, 0
        %v6618 = vsel %vm6617, %v6616, 0
        %v6619 = vshrl.u32 %v6618, 5
        %v6620 = vand.u32 %v6618, 31
        %v6621 = vsub.s32 32, %v6620
        %v6622 = vshrl.u32 683565275, %v6621
        %v6623 = vshll.u32 683565275, %v6620
        %v6624 = vshrl.u32 2475754826, %v6621
        %v6625 = vor.u32 %v6623, %v6624
        %v6626 = vshll.u32 2475754826, %v6620
        %v6627 = vshrl.u32 2131351028, %v6621
        %v6628 = vor.u32 %v6626, %v6627
        %v6629 = vshll.u32 2131351028, %v6620
        %v6630 = vshrl.u32 2102212464, %v6621
        %v6631 = vor.u32 %v6629, %v6630
        %v6632 = vshll.u32 2102212464, %v6620
        %v6633 = vshrl.u32 920167782, %v6621
        %v6634 = vor.u32 %v6632, %v6633
        %v6635 = vshll.u32 920167782, %v6620
        %v6636 = vshrl.u32 1326507024, %v6621
        %v6637 = vor.u32 %v6635, %v6636
        %vm6638 = vcmp.lt.s32.totalorder %v6619, 1
        %vm6639 = vcmp.lt.s32.totalorder %v6619, 2
        %vm6640 = vcmp.lt.s32.totalorder %v6619, 3
        %vm6641 = vcmp.lt.s32.totalorder %v6619, 4
        %v6642 = vsel %vm6638, %v6622, %v6625
        %v6643 = vsel %vm6641, %v6631, 2102212464
        %v6644 = vsel %vm6640, %v6628, %v6643
        %v6645 = vsel %vm6639, %v6642, %v6644
        %v6646 = vsel %vm6638, %v6625, %v6628
        %v6647 = vsel %vm6641, %v6634, 920167782
        %v6648 = vsel %vm6640, %v6631, %v6647
        %v6649 = vsel %vm6639, %v6646, %v6648
        %v6650 = vsel %vm6638, %v6628, %v6631
        %v6651 = vsel %vm6641, %v6637, 1326507024
        %v6652 = vsel %vm6640, %v6634, %v6651
        %v6653 = vsel %vm6639, %v6650, %v6652
        %v6654 = vshll.u32 %v6614, 8
        %v6655 = vmul.u32.u64.compose %v6654, %v6653
        %v6656 = vextract.low.u32 %v6655
        %v6657 = vextract.high.u32 %v6655
        %v6658 = vmul.u32.u64.compose %v6654, %v6649
        %v6659 = vextract.low.u32 %v6658
        %v6660 = vextract.high.u32 %v6658
        %v6661 = vmul.u32 %v6654, %v6645
        %v6662 = vadd.s32 %v6657, %v6659
        %vm6663 = vc.u32 %v6657, %v6659
        %v6664 = vadd.s32 %v6660, 1
        %v6665 = vsel %vm6663, %v6664, %v6660
        %v6666 = vadd.s32 %v6661, %v6665
        %v6667 = vadd.s32 %v6666, 536870912
        %v6668 = vshrl.u32 %v6667, 30
        %v6669 = vshll.u32 %v6668, 30
        %v6670 = vsub.s32 %v6666, %v6669
        %vm6671 = vcmp.lt.s32.totalorder %v6670, 0
        %v6672 = vsub.s32 0, %v6670
        %v6673 = vsel %vm6671, %v6672, %v6670
        %v6674 = vclz %v6673
        %v6675 = vsub.s32 %v6674, 2
        %vm6676 = vcmp.gt.s32.totalorder 0, %v6675
        %v6677 = vsel %vm6676, 0, %v6675
        %v6678 = vsub.s32 32, %v6677
        %v6679 = vshll.u32 %v6670, %v6677
        %v6680 = vshrl.u32 %v6662, %v6678
        %v6681 = vor.u32 %v6679, %v6680
        %v6682 = vsub.s32 4294967266, %v6677
        %v6683 = vadd.s32 %v6682, 127
        %v6684 = vshll.u32 %v6683, 23
        %v6685 = vor.u32 4788187, %v6684
        %v6686 = vand.u32 2147483647, %v6685
        %v6688 = vcvt.s32.f32 %v6681
        %v6689 = vmul.f32 %v6688, %v6686
        %v6690 = vxor.u32 %v6689, 2147483648
        %v6691 = vsel %vm6608, %v6690, %v6689
        %v6692 = vsub.s32 4, %v6668
        %v6693 = vsel %vm6608, %v6692, %v6668
        %v6694 = vsel %vm6607, %v5983, %v6691
        %v6695 = vsel %vm6607, 0, %v6693
        %v6696 = vcosq.f32.pop %v6694
        %v6697 = vsinq.f32.pop %v6694
        %vm6698 = vweird.f32 %v5983
        %v6699 = vadd.s32 %v6695, 3
        %v6700 = vand.u32 %v6699, 3
        %vm6701 = vcmp.lt.s32.totalorder %v6700, 2
        %vm6702 = vcmp.eq.s32.totalorder %v6700, 0
        %v6703 = vxor.u32 %v6697, 2147483648
        %v6704 = vsel %vm6702, %v6696, %v6703
        %vm6705 = vcmp.eq.s32.totalorder %v6700, 2
        %v6706 = vxor.u32 %v6696, 2147483648
        %v6707 = vsel %vm6705, %v6706, %v6697
        %v6708 = vsel %vm6701, %v6704, %v6707
        %v6709 = vsel %vm6698, nan, %v6708
        %v6710 = vand.u32 2147483647, %v6070
        %vm6711 = vcmp.le.f32.partialorder %v6710, 0.7853982
        %vm6712 = vcmp.lt.s32.totalorder %v6070, 0
        %v6713 = vand.u32 %v6070, 2139095040
        %v6714 = vshrl.u32 %v6713, 23
        %v6715 = vsub.s32 %v6714, 127
        %v6716 = vand.u32 2147483647, %v6070
        %v6717 = vand.u32 %v6716, 8388607
        %v6718 = vor.u32 %v6717, 8388608
        %v6719 = vsub.s32 0, %v6718
        %v6720 = vadd.s32 %v6715, 1
        %vm6721 = vcmp.gt.s32.totalorder %v6720, 0
        %v6722 = vsel %vm6721, %v6720, 0
        %v6723 = vshrl.u32 %v6722, 5
        %v6724 = vand.u32 %v6722, 31
        %v6725 = vsub.s32 32, %v6724
        %v6726 = vshrl.u32 683565275, %v6725
        %v6727 = vshll.u32 683565275, %v6724
        %v6728 = vshrl.u32 2475754826, %v6725
        %v6729 = vor.u32 %v6727, %v6728
        %v6730 = vshll.u32 2475754826, %v6724
        %v6731 = vshrl.u32 2131351028, %v6725
        %v6732 = vor.u32 %v6730, %v6731
        %v6733 = vshll.u32 2131351028, %v6724
        %v6734 = vshrl.u32 2102212464, %v6725
        %v6735 = vor.u32 %v6733, %v6734
        %v6736 = vshll.u32 2102212464, %v6724
        %v6737 = vshrl.u32 920167782, %v6725
        %v6738 = vor.u32 %v6736, %v6737
        %v6739 = vshll.u32 920167782, %v6724
        %v6740 = vshrl.u32 1326507024, %v6725
        %v6741 = vor.u32 %v6739, %v6740
        %vm6742 = vcmp.lt.s32.totalorder %v6723, 1
        %vm6743 = vcmp.lt.s32.totalorder %v6723, 2
        %vm6744 = vcmp.lt.s32.totalorder %v6723, 3
        %vm6745 = vcmp.lt.s32.totalorder %v6723, 4
        %v6746 = vsel %vm6742, %v6726, %v6729
        %v6747 = vsel %vm6745, %v6735, 2102212464
        %v6748 = vsel %vm6744, %v6732, %v6747
        %v6749 = vsel %vm6743, %v6746, %v6748
        %v6750 = vsel %vm6742, %v6729, %v6732
        %v6751 = vsel %vm6745, %v6738, 920167782
        %v6752 = vsel %vm6744, %v6735, %v6751
        %v6753 = vsel %vm6743, %v6750, %v6752
        %v6754 = vsel %vm6742, %v6732, %v6735
        %v6755 = vsel %vm6745, %v6741, 1326507024
        %v6756 = vsel %vm6744, %v6738, %v6755
        %v6757 = vsel %vm6743, %v6754, %v6756
        %v6758 = vshll.u32 %v6718, 8
        %v6759 = vmul.u32.u64.compose %v6758, %v6757
        %v6760 = vextract.low.u32 %v6759
        %v6761 = vextract.high.u32 %v6759
        %v6762 = vmul.u32.u64.compose %v6758, %v6753
        %v6763 = vextract.low.u32 %v6762
        %v6764 = vextract.high.u32 %v6762
        %v6765 = vmul.u32 %v6758, %v6749
        %v6766 = vadd.s32 %v6761, %v6763
        %vm6767 = vc.u32 %v6761, %v6763
        %v6768 = vadd.s32 %v6764, 1
        %v6769 = vsel %vm6767, %v6768, %v6764
        %v6770 = vadd.s32 %v6765, %v6769
        %v6771 = vadd.s32 %v6770, 536870912
        %v6772 = vshrl.u32 %v6771, 30
        %v6773 = vshll.u32 %v6772, 30
        %v6774 = vsub.s32 %v6770, %v6773
        %vm6775 = vcmp.lt.s32.totalorder %v6774, 0
        %v6776 = vsub.s32 0, %v6774
        %v6777 = vsel %vm6775, %v6776, %v6774
        %v6778 = vclz %v6777
        %v6779 = vsub.s32 %v6778, 2
        %vm6780 = vcmp.gt.s32.totalorder 0, %v6779
        %v6781 = vsel %vm6780, 0, %v6779
        %v6782 = vsub.s32 32, %v6781
        %v6783 = vshll.u32 %v6774, %v6781
        %v6784 = vshrl.u32 %v6766, %v6782
        %v6785 = vor.u32 %v6783, %v6784
        %v6786 = vsub.s32 4294967266, %v6781
        %v6787 = vadd.s32 %v6786, 127
        %v6788 = vshll.u32 %v6787, 23
        %v6789 = vor.u32 4788187, %v6788
        %v6790 = vand.u32 2147483647, %v6789
        %v6792 = vcvt.s32.f32 %v6785
        %v6793 = vmul.f32 %v6792, %v6790
        %v6794 = vxor.u32 %v6793, 2147483648
        %v6795 = vsel %vm6712, %v6794, %v6793
        %v6796 = vsub.s32 4, %v6772
        %v6797 = vsel %vm6712, %v6796, %v6772
        %v6798 = vsel %vm6711, %v6070, %v6795
        %v6799 = vsel %vm6711, 0, %v6797
        %v6800 = vcosq.f32.pop %v6798
        %v6801 = vsinq.f32.pop %v6798
        %vm6802 = vweird.f32 %v6070
        %v6803 = vadd.s32 %v6799, 3
        %v6804 = vand.u32 %v6803, 3
        %vm6805 = vcmp.lt.s32.totalorder %v6804, 2
        %vm6806 = vcmp.eq.s32.totalorder %v6804, 0
        %v6807 = vxor.u32 %v6801, 2147483648
        %v6808 = vsel %vm6806, %v6800, %v6807
        %vm6809 = vcmp.eq.s32.totalorder %v6804, 2
        %v6810 = vxor.u32 %v6800, 2147483648
        %v6811 = vsel %vm6809, %v6810, %v6801
        %v6812 = vsel %vm6805, %v6808, %v6811
        %v6813 = vsel %vm6802, nan, %v6812
        %v6814 = vand.u32 2147483647, %v6072
        %vm6815 = vcmp.le.f32.partialorder %v6814, 0.7853982
        %vm6816 = vcmp.lt.s32.totalorder %v6072, 0
        %v6817 = vand.u32 %v6072, 2139095040
        %v6818 = vshrl.u32 %v6817, 23
        %v6819 = vsub.s32 %v6818, 127
        %v6820 = vand.u32 2147483647, %v6072
        %v6821 = vand.u32 %v6820, 8388607
        %v6822 = vor.u32 %v6821, 8388608
        %v6823 = vsub.s32 0, %v6822
        %v6824 = vadd.s32 %v6819, 1
        %vm6825 = vcmp.gt.s32.totalorder %v6824, 0
        %v6826 = vsel %vm6825, %v6824, 0
        %v6827 = vshrl.u32 %v6826, 5
        %v6828 = vand.u32 %v6826, 31
        %v6829 = vsub.s32 32, %v6828
        %v6830 = vshrl.u32 683565275, %v6829
        %v6831 = vshll.u32 683565275, %v6828
        %v6832 = vshrl.u32 2475754826, %v6829
        %v6833 = vor.u32 %v6831, %v6832
        %v6834 = vshll.u32 2475754826, %v6828
        %v6835 = vshrl.u32 2131351028, %v6829
        %v6836 = vor.u32 %v6834, %v6835
        %v6837 = vshll.u32 2131351028, %v6828
        %v6838 = vshrl.u32 2102212464, %v6829
        %v6839 = vor.u32 %v6837, %v6838
        %v6840 = vshll.u32 2102212464, %v6828
        %v6841 = vshrl.u32 920167782, %v6829
        %v6842 = vor.u32 %v6840, %v6841
        %v6843 = vshll.u32 920167782, %v6828
        %v6844 = vshrl.u32 1326507024, %v6829
        %v6845 = vor.u32 %v6843, %v6844
        %vm6846 = vcmp.lt.s32.totalorder %v6827, 1
        %vm6847 = vcmp.lt.s32.totalorder %v6827, 2
        %vm6848 = vcmp.lt.s32.totalorder %v6827, 3
        %vm6849 = vcmp.lt.s32.totalorder %v6827, 4
        %v6850 = vsel %vm6846, %v6830, %v6833
        %v6851 = vsel %vm6849, %v6839, 2102212464
        %v6852 = vsel %vm6848, %v6836, %v6851
        %v6853 = vsel %vm6847, %v6850, %v6852
        %v6854 = vsel %vm6846, %v6833, %v6836
        %v6855 = vsel %vm6849, %v6842, 920167782
        %v6856 = vsel %vm6848, %v6839, %v6855
        %v6857 = vsel %vm6847, %v6854, %v6856
        %v6858 = vsel %vm6846, %v6836, %v6839
        %v6859 = vsel %vm6849, %v6845, 1326507024
        %v6860 = vsel %vm6848, %v6842, %v6859
        %v6861 = vsel %vm6847, %v6858, %v6860
        %v6862 = vshll.u32 %v6822, 8
        %v6863 = vmul.u32.u64.compose %v6862, %v6861
        %v6864 = vextract.low.u32 %v6863
        %v6865 = vextract.high.u32 %v6863
        %v6866 = vmul.u32.u64.compose %v6862, %v6857
        %v6867 = vextract.low.u32 %v6866
        %v6868 = vextract.high.u32 %v6866
        %v6869 = vmul.u32 %v6862, %v6853
        %v6870 = vadd.s32 %v6865, %v6867
        %vm6871 = vc.u32 %v6865, %v6867
        %v6872 = vadd.s32 %v6868, 1
        %v6873 = vsel %vm6871, %v6872, %v6868
        %v6874 = vadd.s32 %v6869, %v6873
        %v6875 = vadd.s32 %v6874, 536870912
        %v6876 = vshrl.u32 %v6875, 30
        %v6877 = vshll.u32 %v6876, 30
        %v6878 = vsub.s32 %v6874, %v6877
        %vm6879 = vcmp.lt.s32.totalorder %v6878, 0
        %v6880 = vsub.s32 0, %v6878
        %v6881 = vsel %vm6879, %v6880, %v6878
        %v6882 = vclz %v6881
        %v6883 = vsub.s32 %v6882, 2
        %vm6884 = vcmp.gt.s32.totalorder 0, %v6883
        %v6885 = vsel %vm6884, 0, %v6883
        %v6886 = vsub.s32 32, %v6885
        %v6887 = vshll.u32 %v6878, %v6885
        %v6888 = vshrl.u32 %v6870, %v6886
        %v6889 = vor.u32 %v6887, %v6888
        %v6890 = vsub.s32 4294967266, %v6885
        %v6891 = vadd.s32 %v6890, 127
        %v6892 = vshll.u32 %v6891, 23
        %v6893 = vor.u32 4788187, %v6892
        %v6894 = vand.u32 2147483647, %v6893
        %v6896 = vcvt.s32.f32 %v6889
        %v6897 = vmul.f32 %v6896, %v6894
        %v6898 = vxor.u32 %v6897, 2147483648
        %v6899 = vsel %vm6816, %v6898, %v6897
        %v6900 = vsub.s32 4, %v6876
        %v6901 = vsel %vm6816, %v6900, %v6876
        %v6902 = vsel %vm6815, %v6072, %v6899
        %v6903 = vsel %vm6815, 0, %v6901
        %v6904 = vcosq.f32.pop %v6902
        %v6905 = vsinq.f32.pop %v6902
        %vm6906 = vweird.f32 %v6072
        %v6907 = vadd.s32 %v6903, 3
        %v6908 = vand.u32 %v6907, 3
        %vm6909 = vcmp.lt.s32.totalorder %v6908, 2
        %vm6910 = vcmp.eq.s32.totalorder %v6908, 0
        %v6911 = vxor.u32 %v6905, 2147483648
        %v6912 = vsel %vm6910, %v6904, %v6911
        %vm6913 = vcmp.eq.s32.totalorder %v6908, 2
        %v6914 = vxor.u32 %v6904, 2147483648
        %v6915 = vsel %vm6913, %v6914, %v6905
        %v6916 = vsel %vm6909, %v6912, %v6915
        %v6917 = vsel %vm6906, nan, %v6916
        %v6918 = vand.u32 2147483647, %v5987
        %vm6919 = vcmp.le.f32.partialorder %v6918, 0.7853982
        %vm6920 = vcmp.lt.s32.totalorder %v5987, 0
        %v6921 = vand.u32 %v5987, 2139095040
        %v6922 = vshrl.u32 %v6921, 23
        %v6923 = vsub.s32 %v6922, 127
        %v6924 = vand.u32 2147483647, %v5987
        %v6925 = vand.u32 %v6924, 8388607
        %v6926 = vor.u32 %v6925, 8388608
        %v6927 = vsub.s32 0, %v6926
        %v6928 = vadd.s32 %v6923, 1
        %vm6929 = vcmp.gt.s32.totalorder %v6928, 0
        %v6930 = vsel %vm6929, %v6928, 0
        %v6931 = vshrl.u32 %v6930, 5
        %v6932 = vand.u32 %v6930, 31
        %v6933 = vsub.s32 32, %v6932
        %v6934 = vshrl.u32 683565275, %v6933
        %v6935 = vshll.u32 683565275, %v6932
        %v6936 = vshrl.u32 2475754826, %v6933
        %v6937 = vor.u32 %v6935, %v6936
        %v6938 = vshll.u32 2475754826, %v6932
        %v6939 = vshrl.u32 2131351028, %v6933
        %v6940 = vor.u32 %v6938, %v6939
        %v6941 = vshll.u32 2131351028, %v6932
        %v6942 = vshrl.u32 2102212464, %v6933
        %v6943 = vor.u32 %v6941, %v6942
        %v6944 = vshll.u32 2102212464, %v6932
        %v6945 = vshrl.u32 920167782, %v6933
        %v6946 = vor.u32 %v6944, %v6945
        %v6947 = vshll.u32 920167782, %v6932
        %v6948 = vshrl.u32 1326507024, %v6933
        %v6949 = vor.u32 %v6947, %v6948
        %vm6950 = vcmp.lt.s32.totalorder %v6931, 1
        %vm6951 = vcmp.lt.s32.totalorder %v6931, 2
        %vm6952 = vcmp.lt.s32.totalorder %v6931, 3
        %vm6953 = vcmp.lt.s32.totalorder %v6931, 4
        %v6954 = vsel %vm6950, %v6934, %v6937
        %v6955 = vsel %vm6953, %v6943, 2102212464
        %v6956 = vsel %vm6952, %v6940, %v6955
        %v6957 = vsel %vm6951, %v6954, %v6956
        %v6958 = vsel %vm6950, %v6937, %v6940
        %v6959 = vsel %vm6953, %v6946, 920167782
        %v6960 = vsel %vm6952, %v6943, %v6959
        %v6961 = vsel %vm6951, %v6958, %v6960
        %v6962 = vsel %vm6950, %v6940, %v6943
        %v6963 = vsel %vm6953, %v6949, 1326507024
        %v6964 = vsel %vm6952, %v6946, %v6963
        %v6965 = vsel %vm6951, %v6962, %v6964
        %v6966 = vshll.u32 %v6926, 8
        %v6967 = vmul.u32.u64.compose %v6966, %v6965
        %v6968 = vextract.low.u32 %v6967
        %v6969 = vextract.high.u32 %v6967
        %v6970 = vmul.u32.u64.compose %v6966, %v6961
        %v6971 = vextract.low.u32 %v6970
        %v6972 = vextract.high.u32 %v6970
        %v6973 = vmul.u32 %v6966, %v6957
        %v6974 = vadd.s32 %v6969, %v6971
        %vm6975 = vc.u32 %v6969, %v6971
        %v6976 = vadd.s32 %v6972, 1
        %v6977 = vsel %vm6975, %v6976, %v6972
        %v6978 = vadd.s32 %v6973, %v6977
        %v6979 = vadd.s32 %v6978, 536870912
        %v6980 = vshrl.u32 %v6979, 30
        %v6981 = vshll.u32 %v6980, 30
        %v6982 = vsub.s32 %v6978, %v6981
        %vm6983 = vcmp.lt.s32.totalorder %v6982, 0
        %v6984 = vsub.s32 0, %v6982
        %v6985 = vsel %vm6983, %v6984, %v6982
        %v6986 = vclz %v6985
        %v6987 = vsub.s32 %v6986, 2
        %vm6988 = vcmp.gt.s32.totalorder 0, %v6987
        %v6989 = vsel %vm6988, 0, %v6987
        %v6990 = vsub.s32 32, %v6989
        %v6991 = vshll.u32 %v6982, %v6989
        %v6992 = vshrl.u32 %v6974, %v6990
        %v6993 = vor.u32 %v6991, %v6992
        %v6994 = vsub.s32 4294967266, %v6989
        %v6995 = vadd.s32 %v6994, 127
        %v6996 = vshll.u32 %v6995, 23
        %v6997 = vor.u32 4788187, %v6996
        %v6998 = vand.u32 2147483647, %v6997
        %v7000 = vcvt.s32.f32 %v6993
        %v7001 = vmul.f32 %v7000, %v6998
        %v7002 = vxor.u32 %v7001, 2147483648
        %v7003 = vsel %vm6920, %v7002, %v7001
        %v7004 = vsub.s32 4, %v6980
        %v7005 = vsel %vm6920, %v7004, %v6980
        %v7006 = vsel %vm6919, %v5987, %v7003
        %v7007 = vsel %vm6919, 0, %v7005
        %v7008 = vcosq.f32.pop %v7006
        %v7009 = vsinq.f32.pop %v7006
        %vm7010 = vweird.f32 %v5987
        %v7011 = vadd.s32 %v7007, 3
        %v7012 = vand.u32 %v7011, 3
        %vm7013 = vcmp.lt.s32.totalorder %v7012, 2
        %vm7014 = vcmp.eq.s32.totalorder %v7012, 0
        %v7015 = vxor.u32 %v7009, 2147483648
        %v7016 = vsel %vm7014, %v7008, %v7015
        %vm7017 = vcmp.eq.s32.totalorder %v7012, 2
        %v7018 = vxor.u32 %v7008, 2147483648
        %v7019 = vsel %vm7017, %v7018, %v7009
        %v7020 = vsel %vm7013, %v7016, %v7019
        %v7021 = vsel %vm7010, nan, %v7020
        %v7022 = vand.u32 2147483647, %v5989
        %vm7023 = vcmp.le.f32.partialorder %v7022, 0.7853982
        %vm7024 = vcmp.lt.s32.totalorder %v5989, 0
        %v7025 = vand.u32 %v5989, 2139095040
        %v7026 = vshrl.u32 %v7025, 23
        %v7027 = vsub.s32 %v7026, 127
        %v7028 = vand.u32 2147483647, %v5989
        %v7029 = vand.u32 %v7028, 8388607
        %v7030 = vor.u32 %v7029, 8388608
        %v7031 = vsub.s32 0, %v7030
        %v7032 = vadd.s32 %v7027, 1
        %vm7033 = vcmp.gt.s32.totalorder %v7032, 0
        %v7034 = vsel %vm7033, %v7032, 0
        %v7035 = vshrl.u32 %v7034, 5
        %v7036 = vand.u32 %v7034, 31
        %v7037 = vsub.s32 32, %v7036
        %v7038 = vshrl.u32 683565275, %v7037
        %v7039 = vshll.u32 683565275, %v7036
        %v7040 = vshrl.u32 2475754826, %v7037
        %v7041 = vor.u32 %v7039, %v7040
        %v7042 = vshll.u32 2475754826, %v7036
        %v7043 = vshrl.u32 2131351028, %v7037
        %v7044 = vor.u32 %v7042, %v7043
        %v7045 = vshll.u32 2131351028, %v7036
        %v7046 = vshrl.u32 2102212464, %v7037
        %v7047 = vor.u32 %v7045, %v7046
        %v7048 = vshll.u32 2102212464, %v7036
        %v7049 = vshrl.u32 920167782, %v7037
        %v7050 = vor.u32 %v7048, %v7049
        %v7051 = vshll.u32 920167782, %v7036
        %v7052 = vshrl.u32 1326507024, %v7037
        %v7053 = vor.u32 %v7051, %v7052
        %vm7054 = vcmp.lt.s32.totalorder %v7035, 1
        %vm7055 = vcmp.lt.s32.totalorder %v7035, 2
        %vm7056 = vcmp.lt.s32.totalorder %v7035, 3
        %vm7057 = vcmp.lt.s32.totalorder %v7035, 4
        %v7058 = vsel %vm7054, %v7038, %v7041
        %v7059 = vsel %vm7057, %v7047, 2102212464
        %v7060 = vsel %vm7056, %v7044, %v7059
        %v7061 = vsel %vm7055, %v7058, %v7060
        %v7062 = vsel %vm7054, %v7041, %v7044
        %v7063 = vsel %vm7057, %v7050, 920167782
        %v7064 = vsel %vm7056, %v7047, %v7063
        %v7065 = vsel %vm7055, %v7062, %v7064
        %v7066 = vsel %vm7054, %v7044, %v7047
        %v7067 = vsel %vm7057, %v7053, 1326507024
        %v7068 = vsel %vm7056, %v7050, %v7067
        %v7069 = vsel %vm7055, %v7066, %v7068
        %v7070 = vshll.u32 %v7030, 8
        %v7071 = vmul.u32.u64.compose %v7070, %v7069
        %v7072 = vextract.low.u32 %v7071
        %v7073 = vextract.high.u32 %v7071
        %v7074 = vmul.u32.u64.compose %v7070, %v7065
        %v7075 = vextract.low.u32 %v7074
        %v7076 = vextract.high.u32 %v7074
        %v7077 = vmul.u32 %v7070, %v7061
        %v7078 = vadd.s32 %v7073, %v7075
        %vm7079 = vc.u32 %v7073, %v7075
        %v7080 = vadd.s32 %v7076, 1
        %v7081 = vsel %vm7079, %v7080, %v7076
        %v7082 = vadd.s32 %v7077, %v7081
        %v7083 = vadd.s32 %v7082, 536870912
        %v7084 = vshrl.u32 %v7083, 30
        %v7085 = vshll.u32 %v7084, 30
        %v7086 = vsub.s32 %v7082, %v7085
        %vm7087 = vcmp.lt.s32.totalorder %v7086, 0
        %v7088 = vsub.s32 0, %v7086
        %v7089 = vsel %vm7087, %v7088, %v7086
        %v7090 = vclz %v7089
        %v7091 = vsub.s32 %v7090, 2
        %vm7092 = vcmp.gt.s32.totalorder 0, %v7091
        %v7093 = vsel %vm7092, 0, %v7091
        %v7094 = vsub.s32 32, %v7093
        %v7095 = vshll.u32 %v7086, %v7093
        %v7096 = vshrl.u32 %v7078, %v7094
        %v7097 = vor.u32 %v7095, %v7096
        %v7098 = vsub.s32 4294967266, %v7093
        %v7099 = vadd.s32 %v7098, 127
        %v7100 = vshll.u32 %v7099, 23
        %v7101 = vor.u32 4788187, %v7100
        %v7102 = vand.u32 2147483647, %v7101
        %v7104 = vcvt.s32.f32 %v7097
        %v7105 = vmul.f32 %v7104, %v7102
        %v7106 = vxor.u32 %v7105, 2147483648
        %v7107 = vsel %vm7024, %v7106, %v7105
        %v7108 = vsub.s32 4, %v7084
        %v7109 = vsel %vm7024, %v7108, %v7084
        %v7110 = vsel %vm7023, %v5989, %v7107
        %v7111 = vsel %vm7023, 0, %v7109
        %v7112 = vcosq.f32.pop %v7110
        %v7113 = vsinq.f32.pop %v7110
        %vm7114 = vweird.f32 %v5989
        %v7115 = vadd.s32 %v7111, 3
        %v7116 = vand.u32 %v7115, 3
        %vm7117 = vcmp.lt.s32.totalorder %v7116, 2
        %vm7118 = vcmp.eq.s32.totalorder %v7116, 0
        %v7119 = vxor.u32 %v7113, 2147483648
        %v7120 = vsel %vm7118, %v7112, %v7119
        %vm7121 = vcmp.eq.s32.totalorder %v7116, 2
        %v7122 = vxor.u32 %v7112, 2147483648
        %v7123 = vsel %vm7121, %v7122, %v7113
        %v7124 = vsel %vm7117, %v7120, %v7123
        %v7125 = vsel %vm7114, nan, %v7124
        %v7126 = vand.u32 2147483647, %v6076
        %vm7127 = vcmp.le.f32.partialorder %v7126, 0.7853982
        %vm7128 = vcmp.lt.s32.totalorder %v6076, 0
        %v7129 = vand.u32 %v6076, 2139095040
        %v7130 = vshrl.u32 %v7129, 23
        %v7131 = vsub.s32 %v7130, 127
        %v7132 = vand.u32 2147483647, %v6076
        %v7133 = vand.u32 %v7132, 8388607
        %v7134 = vor.u32 %v7133, 8388608
        %v7135 = vsub.s32 0, %v7134
        %v7136 = vadd.s32 %v7131, 1
        %vm7137 = vcmp.gt.s32.totalorder %v7136, 0
        %v7138 = vsel %vm7137, %v7136, 0
        %v7139 = vshrl.u32 %v7138, 5
        %v7140 = vand.u32 %v7138, 31
        %v7141 = vsub.s32 32, %v7140
        %v7142 = vshrl.u32 683565275, %v7141
        %v7143 = vshll.u32 683565275, %v7140
        %v7144 = vshrl.u32 2475754826, %v7141
        %v7145 = vor.u32 %v7143, %v7144
        %v7146 = vshll.u32 2475754826, %v7140
        %v7147 = vshrl.u32 2131351028, %v7141
        %v7148 = vor.u32 %v7146, %v7147
        %v7149 = vshll.u32 2131351028, %v7140
        %v7150 = vshrl.u32 2102212464, %v7141
        %v7151 = vor.u32 %v7149, %v7150
        %v7152 = vshll.u32 2102212464, %v7140
        %v7153 = vshrl.u32 920167782, %v7141
        %v7154 = vor.u32 %v7152, %v7153
        %v7155 = vshll.u32 920167782, %v7140
        %v7156 = vshrl.u32 1326507024, %v7141
        %v7157 = vor.u32 %v7155, %v7156
        %vm7158 = vcmp.lt.s32.totalorder %v7139, 1
        %vm7159 = vcmp.lt.s32.totalorder %v7139, 2
        %vm7160 = vcmp.lt.s32.totalorder %v7139, 3
        %vm7161 = vcmp.lt.s32.totalorder %v7139, 4
        %v7162 = vsel %vm7158, %v7142, %v7145
        %v7163 = vsel %vm7161, %v7151, 2102212464
        %v7164 = vsel %vm7160, %v7148, %v7163
        %v7165 = vsel %vm7159, %v7162, %v7164
        %v7166 = vsel %vm7158, %v7145, %v7148
        %v7167 = vsel %vm7161, %v7154, 920167782
        %v7168 = vsel %vm7160, %v7151, %v7167
        %v7169 = vsel %vm7159, %v7166, %v7168
        %v7170 = vsel %vm7158, %v7148, %v7151
        %v7171 = vsel %vm7161, %v7157, 1326507024
        %v7172 = vsel %vm7160, %v7154, %v7171
        %v7173 = vsel %vm7159, %v7170, %v7172
        %v7174 = vshll.u32 %v7134, 8
        %v7175 = vmul.u32.u64.compose %v7174, %v7173
        %v7176 = vextract.low.u32 %v7175
        %v7177 = vextract.high.u32 %v7175
        %v7178 = vmul.u32.u64.compose %v7174, %v7169
        %v7179 = vextract.low.u32 %v7178
        %v7180 = vextract.high.u32 %v7178
        %v7181 = vmul.u32 %v7174, %v7165
        %v7182 = vadd.s32 %v7177, %v7179
        %vm7183 = vc.u32 %v7177, %v7179
        %v7184 = vadd.s32 %v7180, 1
        %v7185 = vsel %vm7183, %v7184, %v7180
        %v7186 = vadd.s32 %v7181, %v7185
        %v7187 = vadd.s32 %v7186, 536870912
        %v7188 = vshrl.u32 %v7187, 30
        %v7189 = vshll.u32 %v7188, 30
        %v7190 = vsub.s32 %v7186, %v7189
        %vm7191 = vcmp.lt.s32.totalorder %v7190, 0
        %v7192 = vsub.s32 0, %v7190
        %v7193 = vsel %vm7191, %v7192, %v7190
        %v7194 = vclz %v7193
        %v7195 = vsub.s32 %v7194, 2
        %vm7196 = vcmp.gt.s32.totalorder 0, %v7195
        %v7197 = vsel %vm7196, 0, %v7195
        %v7198 = vsub.s32 32, %v7197
        %v7199 = vshll.u32 %v7190, %v7197
        %v7200 = vshrl.u32 %v7182, %v7198
        %v7201 = vor.u32 %v7199, %v7200
        %v7202 = vsub.s32 4294967266, %v7197
        %v7203 = vadd.s32 %v7202, 127
        %v7204 = vshll.u32 %v7203, 23
        %v7205 = vor.u32 4788187, %v7204
        %v7206 = vand.u32 2147483647, %v7205
        %v7208 = vcvt.s32.f32 %v7201
        %v7209 = vmul.f32 %v7208, %v7206
        %v7210 = vxor.u32 %v7209, 2147483648
        %v7211 = vsel %vm7128, %v7210, %v7209
        %v7212 = vsub.s32 4, %v7188
        %v7213 = vsel %vm7128, %v7212, %v7188
        %v7214 = vsel %vm7127, %v6076, %v7211
        %v7215 = vsel %vm7127, 0, %v7213
        %v7216 = vcosq.f32.pop %v7214
        %v7217 = vsinq.f32.pop %v7214
        %vm7218 = vweird.f32 %v6076
        %v7219 = vadd.s32 %v7215, 3
        %v7220 = vand.u32 %v7219, 3
        %vm7221 = vcmp.lt.s32.totalorder %v7220, 2
        %vm7222 = vcmp.eq.s32.totalorder %v7220, 0
        %v7223 = vxor.u32 %v7217, 2147483648
        %v7224 = vsel %vm7222, %v7216, %v7223
        %vm7225 = vcmp.eq.s32.totalorder %v7220, 2
        %v7226 = vxor.u32 %v7216, 2147483648
        %v7227 = vsel %vm7225, %v7226, %v7217
        %v7228 = vsel %vm7221, %v7224, %v7227
        %v7229 = vsel %vm7218, nan, %v7228
        %v7230 = vand.u32 2147483647, %v6078
        %vm7231 = vcmp.le.f32.partialorder %v7230, 0.7853982
        %vm7232 = vcmp.lt.s32.totalorder %v6078, 0
        %v7233 = vand.u32 %v6078, 2139095040
        %v7234 = vshrl.u32 %v7233, 23
        %v7235 = vsub.s32 %v7234, 127
        %v7236 = vand.u32 2147483647, %v6078
        %v7237 = vand.u32 %v7236, 8388607
        %v7238 = vor.u32 %v7237, 8388608
        %v7239 = vsub.s32 0, %v7238
        %v7240 = vadd.s32 %v7235, 1
        %vm7241 = vcmp.gt.s32.totalorder %v7240, 0
        %v7242 = vsel %vm7241, %v7240, 0
        %v7243 = vshrl.u32 %v7242, 5
        %v7244 = vand.u32 %v7242, 31
        %v7245 = vsub.s32 32, %v7244
        %v7246 = vshrl.u32 683565275, %v7245
        %v7247 = vshll.u32 683565275, %v7244
        %v7248 = vshrl.u32 2475754826, %v7245
        %v7249 = vor.u32 %v7247, %v7248
        %v7250 = vshll.u32 2475754826, %v7244
        %v7251 = vshrl.u32 2131351028, %v7245
        %v7252 = vor.u32 %v7250, %v7251
        %v7253 = vshll.u32 2131351028, %v7244
        %v7254 = vshrl.u32 2102212464, %v7245
        %v7255 = vor.u32 %v7253, %v7254
        %v7256 = vshll.u32 2102212464, %v7244
        %v7257 = vshrl.u32 920167782, %v7245
        %v7258 = vor.u32 %v7256, %v7257
        %v7259 = vshll.u32 920167782, %v7244
        %v7260 = vshrl.u32 1326507024, %v7245
        %v7261 = vor.u32 %v7259, %v7260
        %vm7262 = vcmp.lt.s32.totalorder %v7243, 1
        %vm7263 = vcmp.lt.s32.totalorder %v7243, 2
        %vm7264 = vcmp.lt.s32.totalorder %v7243, 3
        %vm7265 = vcmp.lt.s32.totalorder %v7243, 4
        %v7266 = vsel %vm7262, %v7246, %v7249
        %v7267 = vsel %vm7265, %v7255, 2102212464
        %v7268 = vsel %vm7264, %v7252, %v7267
        %v7269 = vsel %vm7263, %v7266, %v7268
        %v7270 = vsel %vm7262, %v7249, %v7252
        %v7271 = vsel %vm7265, %v7258, 920167782
        %v7272 = vsel %vm7264, %v7255, %v7271
        %v7273 = vsel %vm7263, %v7270, %v7272
        %v7274 = vsel %vm7262, %v7252, %v7255
        %v7275 = vsel %vm7265, %v7261, 1326507024
        %v7276 = vsel %vm7264, %v7258, %v7275
        %v7277 = vsel %vm7263, %v7274, %v7276
        %v7278 = vshll.u32 %v7238, 8
        %v7279 = vmul.u32.u64.compose %v7278, %v7277
        %v7280 = vextract.low.u32 %v7279
        %v7281 = vextract.high.u32 %v7279
        %v7282 = vmul.u32.u64.compose %v7278, %v7273
        %v7283 = vextract.low.u32 %v7282
        %v7284 = vextract.high.u32 %v7282
        %v7285 = vmul.u32 %v7278, %v7269
        %v7286 = vadd.s32 %v7281, %v7283
        %vm7287 = vc.u32 %v7281, %v7283
        %v7288 = vadd.s32 %v7284, 1
        %v7289 = vsel %vm7287, %v7288, %v7284
        %v7290 = vadd.s32 %v7285, %v7289
        %v7291 = vadd.s32 %v7290, 536870912
        %v7292 = vshrl.u32 %v7291, 30
        %v7293 = vshll.u32 %v7292, 30
        %v7294 = vsub.s32 %v7290, %v7293
        %vm7295 = vcmp.lt.s32.totalorder %v7294, 0
        %v7296 = vsub.s32 0, %v7294
        %v7297 = vsel %vm7295, %v7296, %v7294
        %v7298 = vclz %v7297
        %v7299 = vsub.s32 %v7298, 2
        %vm7300 = vcmp.gt.s32.totalorder 0, %v7299
        %v7301 = vsel %vm7300, 0, %v7299
        %v7302 = vsub.s32 32, %v7301
        %v7303 = vshll.u32 %v7294, %v7301
        %v7304 = vshrl.u32 %v7286, %v7302
        %v7305 = vor.u32 %v7303, %v7304
        %v7306 = vsub.s32 4294967266, %v7301
        %v7307 = vadd.s32 %v7306, 127
        %v7308 = vshll.u32 %v7307, 23
        %v7309 = vor.u32 4788187, %v7308
        %v7310 = vand.u32 2147483647, %v7309
        %v7312 = vcvt.s32.f32 %v7305
        %v7313 = vmul.f32 %v7312, %v7310
        %v7314 = vxor.u32 %v7313, 2147483648
        %v7315 = vsel %vm7232, %v7314, %v7313
        %v7316 = vsub.s32 4, %v7292
        %v7317 = vsel %vm7232, %v7316, %v7292
        %v7318 = vsel %vm7231, %v6078, %v7315
        %v7319 = vsel %vm7231, 0, %v7317
        %v7320 = vcosq.f32.pop %v7318
        %v7321 = vsinq.f32.pop %v7318
        %vm7322 = vweird.f32 %v6078
        %v7323 = vadd.s32 %v7319, 3
        %v7324 = vand.u32 %v7323, 3
        %vm7325 = vcmp.lt.s32.totalorder %v7324, 2
        %vm7326 = vcmp.eq.s32.totalorder %v7324, 0
        %v7327 = vxor.u32 %v7321, 2147483648
        %v7328 = vsel %vm7326, %v7320, %v7327
        %vm7329 = vcmp.eq.s32.totalorder %v7324, 2
        %v7330 = vxor.u32 %v7320, 2147483648
        %v7331 = vsel %vm7329, %v7330, %v7321
        %v7332 = vsel %vm7325, %v7328, %v7331
        %v7333 = vsel %vm7322, nan, %v7332
        %v7334 = vand.u32 2147483647, %v5993
        %vm7335 = vcmp.le.f32.partialorder %v7334, 0.7853982
        %vm7336 = vcmp.lt.s32.totalorder %v5993, 0
        %v7337 = vand.u32 %v5993, 2139095040
        %v7338 = vshrl.u32 %v7337, 23
        %v7339 = vsub.s32 %v7338, 127
        %v7340 = vand.u32 2147483647, %v5993
        %v7341 = vand.u32 %v7340, 8388607
        %v7342 = vor.u32 %v7341, 8388608
        %v7343 = vsub.s32 0, %v7342
        %v7344 = vadd.s32 %v7339, 1
        %vm7345 = vcmp.gt.s32.totalorder %v7344, 0
        %v7346 = vsel %vm7345, %v7344, 0
        %v7347 = vshrl.u32 %v7346, 5
        %v7348 = vand.u32 %v7346, 31
        %v7349 = vsub.s32 32, %v7348
        %v7350 = vshrl.u32 683565275, %v7349
        %v7351 = vshll.u32 683565275, %v7348
        %v7352 = vshrl.u32 2475754826, %v7349
        %v7353 = vor.u32 %v7351, %v7352
        %v7354 = vshll.u32 2475754826, %v7348
        %v7355 = vshrl.u32 2131351028, %v7349
        %v7356 = vor.u32 %v7354, %v7355
        %v7357 = vshll.u32 2131351028, %v7348
        %v7358 = vshrl.u32 2102212464, %v7349
        %v7359 = vor.u32 %v7357, %v7358
        %v7360 = vshll.u32 2102212464, %v7348
        %v7361 = vshrl.u32 920167782, %v7349
        %v7362 = vor.u32 %v7360, %v7361
        %v7363 = vshll.u32 920167782, %v7348
        %v7364 = vshrl.u32 1326507024, %v7349
        %v7365 = vor.u32 %v7363, %v7364
        %vm7366 = vcmp.lt.s32.totalorder %v7347, 1
        %vm7367 = vcmp.lt.s32.totalorder %v7347, 2
        %vm7368 = vcmp.lt.s32.totalorder %v7347, 3
        %vm7369 = vcmp.lt.s32.totalorder %v7347, 4
        %v7370 = vsel %vm7366, %v7350, %v7353
        %v7371 = vsel %vm7369, %v7359, 2102212464
        %v7372 = vsel %vm7368, %v7356, %v7371
        %v7373 = vsel %vm7367, %v7370, %v7372
        %v7374 = vsel %vm7366, %v7353, %v7356
        %v7375 = vsel %vm7369, %v7362, 920167782
        %v7376 = vsel %vm7368, %v7359, %v7375
        %v7377 = vsel %vm7367, %v7374, %v7376
        %v7378 = vsel %vm7366, %v7356, %v7359
        %v7379 = vsel %vm7369, %v7365, 1326507024
        %v7380 = vsel %vm7368, %v7362, %v7379
        %v7381 = vsel %vm7367, %v7378, %v7380
        %v7382 = vshll.u32 %v7342, 8
        %v7383 = vmul.u32.u64.compose %v7382, %v7381
        %v7384 = vextract.low.u32 %v7383
        %v7385 = vextract.high.u32 %v7383
        %v7386 = vmul.u32.u64.compose %v7382, %v7377
        %v7387 = vextract.low.u32 %v7386
        %v7388 = vextract.high.u32 %v7386
        %v7389 = vmul.u32 %v7382, %v7373
        %v7390 = vadd.s32 %v7385, %v7387
        %vm7391 = vc.u32 %v7385, %v7387
        %v7392 = vadd.s32 %v7388, 1
        %v7393 = vsel %vm7391, %v7392, %v7388
        %v7394 = vadd.s32 %v7389, %v7393
        %v7395 = vadd.s32 %v7394, 536870912
        %v7396 = vshrl.u32 %v7395, 30
        %v7397 = vshll.u32 %v7396, 30
        %v7398 = vsub.s32 %v7394, %v7397
        %vm7399 = vcmp.lt.s32.totalorder %v7398, 0
        %v7400 = vsub.s32 0, %v7398
        %v7401 = vsel %vm7399, %v7400, %v7398
        %v7402 = vclz %v7401
        %v7403 = vsub.s32 %v7402, 2
        %vm7404 = vcmp.gt.s32.totalorder 0, %v7403
        %v7405 = vsel %vm7404, 0, %v7403
        %v7406 = vsub.s32 32, %v7405
        %v7407 = vshll.u32 %v7398, %v7405
        %v7408 = vshrl.u32 %v7390, %v7406
        %v7409 = vor.u32 %v7407, %v7408
        %v7410 = vsub.s32 4294967266, %v7405
        %v7411 = vadd.s32 %v7410, 127
        %v7412 = vshll.u32 %v7411, 23
        %v7413 = vor.u32 4788187, %v7412
        %v7414 = vand.u32 2147483647, %v7413
        %v7416 = vcvt.s32.f32 %v7409
        %v7417 = vmul.f32 %v7416, %v7414
        %v7418 = vxor.u32 %v7417, 2147483648
        %v7419 = vsel %vm7336, %v7418, %v7417
        %v7420 = vsub.s32 4, %v7396
        %v7421 = vsel %vm7336, %v7420, %v7396
        %v7422 = vsel %vm7335, %v5993, %v7419
        %v7423 = vsel %vm7335, 0, %v7421
        %v7424 = vcosq.f32.pop %v7422
        %v7425 = vsinq.f32.pop %v7422
        %vm7426 = vweird.f32 %v5993
        %v7427 = vadd.s32 %v7423, 3
        %v7428 = vand.u32 %v7427, 3
        %vm7429 = vcmp.lt.s32.totalorder %v7428, 2
        %vm7430 = vcmp.eq.s32.totalorder %v7428, 0
        %v7431 = vxor.u32 %v7425, 2147483648
        %v7432 = vsel %vm7430, %v7424, %v7431
        %vm7433 = vcmp.eq.s32.totalorder %v7428, 2
        %v7434 = vxor.u32 %v7424, 2147483648
        %v7435 = vsel %vm7433, %v7434, %v7425
        %v7436 = vsel %vm7429, %v7432, %v7435
        %v7437 = vsel %vm7426, nan, %v7436
        %v7438 = vand.u32 2147483647, %v5995
        %vm7439 = vcmp.le.f32.partialorder %v7438, 0.7853982
        %vm7440 = vcmp.lt.s32.totalorder %v5995, 0
        %v7441 = vand.u32 %v5995, 2139095040
        %v7442 = vshrl.u32 %v7441, 23
        %v7443 = vsub.s32 %v7442, 127
        %v7444 = vand.u32 2147483647, %v5995
        %v7445 = vand.u32 %v7444, 8388607
        %v7446 = vor.u32 %v7445, 8388608
        %v7447 = vsub.s32 0, %v7446
        %v7448 = vadd.s32 %v7443, 1
        %vm7449 = vcmp.gt.s32.totalorder %v7448, 0
        %v7450 = vsel %vm7449, %v7448, 0
        %v7451 = vshrl.u32 %v7450, 5
        %v7452 = vand.u32 %v7450, 31
        %v7453 = vsub.s32 32, %v7452
        %v7454 = vshrl.u32 683565275, %v7453
        %v7455 = vshll.u32 683565275, %v7452
        %v7456 = vshrl.u32 2475754826, %v7453
        %v7457 = vor.u32 %v7455, %v7456
        %v7458 = vshll.u32 2475754826, %v7452
        %v7459 = vshrl.u32 2131351028, %v7453
        %v7460 = vor.u32 %v7458, %v7459
        %v7461 = vshll.u32 2131351028, %v7452
        %v7462 = vshrl.u32 2102212464, %v7453
        %v7463 = vor.u32 %v7461, %v7462
        %v7464 = vshll.u32 2102212464, %v7452
        %v7465 = vshrl.u32 920167782, %v7453
        %v7466 = vor.u32 %v7464, %v7465
        %v7467 = vshll.u32 920167782, %v7452
        %v7468 = vshrl.u32 1326507024, %v7453
        %v7469 = vor.u32 %v7467, %v7468
        %vm7470 = vcmp.lt.s32.totalorder %v7451, 1
        %vm7471 = vcmp.lt.s32.totalorder %v7451, 2
        %vm7472 = vcmp.lt.s32.totalorder %v7451, 3
        %vm7473 = vcmp.lt.s32.totalorder %v7451, 4
        %v7474 = vsel %vm7470, %v7454, %v7457
        %v7475 = vsel %vm7473, %v7463, 2102212464
        %v7476 = vsel %vm7472, %v7460, %v7475
        %v7477 = vsel %vm7471, %v7474, %v7476
        %v7478 = vsel %vm7470, %v7457, %v7460
        %v7479 = vsel %vm7473, %v7466, 920167782
        %v7480 = vsel %vm7472, %v7463, %v7479
        %v7481 = vsel %vm7471, %v7478, %v7480
        %v7482 = vsel %vm7470, %v7460, %v7463
        %v7483 = vsel %vm7473, %v7469, 1326507024
        %v7484 = vsel %vm7472, %v7466, %v7483
        %v7485 = vsel %vm7471, %v7482, %v7484
        %v7486 = vshll.u32 %v7446, 8
        %v7487 = vmul.u32.u64.compose %v7486, %v7485
        %v7488 = vextract.low.u32 %v7487
        %v7489 = vextract.high.u32 %v7487
        %v7490 = vmul.u32.u64.compose %v7486, %v7481
        %v7491 = vextract.low.u32 %v7490
        %v7492 = vextract.high.u32 %v7490
        %v7493 = vmul.u32 %v7486, %v7477
        %v7494 = vadd.s32 %v7489, %v7491
        %vm7495 = vc.u32 %v7489, %v7491
        %v7496 = vadd.s32 %v7492, 1
        %v7497 = vsel %vm7495, %v7496, %v7492
        %v7498 = vadd.s32 %v7493, %v7497
        %v7499 = vadd.s32 %v7498, 536870912
        %v7500 = vshrl.u32 %v7499, 30
        %v7501 = vshll.u32 %v7500, 30
        %v7502 = vsub.s32 %v7498, %v7501
        %vm7503 = vcmp.lt.s32.totalorder %v7502, 0
        %v7504 = vsub.s32 0, %v7502
        %v7505 = vsel %vm7503, %v7504, %v7502
        %v7506 = vclz %v7505
        %v7507 = vsub.s32 %v7506, 2
        %vm7508 = vcmp.gt.s32.totalorder 0, %v7507
        %v7509 = vsel %vm7508, 0, %v7507
        %v7510 = vsub.s32 32, %v7509
        %v7511 = vshll.u32 %v7502, %v7509
        %v7512 = vshrl.u32 %v7494, %v7510
        %v7513 = vor.u32 %v7511, %v7512
        %v7514 = vsub.s32 4294967266, %v7509
        %v7515 = vadd.s32 %v7514, 127
        %v7516 = vshll.u32 %v7515, 23
        %v7517 = vor.u32 4788187, %v7516
        %v7518 = vand.u32 2147483647, %v7517
        %v7520 = vcvt.s32.f32 %v7513
        %v7521 = vmul.f32 %v7520, %v7518
        %v7522 = vxor.u32 %v7521, 2147483648
        %v7523 = vsel %vm7440, %v7522, %v7521
        %v7524 = vsub.s32 4, %v7500
        %v7525 = vsel %vm7440, %v7524, %v7500
        %v7526 = vsel %vm7439, %v5995, %v7523
        %v7527 = vsel %vm7439, 0, %v7525
        %v7528 = vcosq.f32.pop %v7526
        %v7529 = vsinq.f32.pop %v7526
        %vm7530 = vweird.f32 %v5995
        %v7531 = vadd.s32 %v7527, 3
        %v7532 = vand.u32 %v7531, 3
        %vm7533 = vcmp.lt.s32.totalorder %v7532, 2
        %vm7534 = vcmp.eq.s32.totalorder %v7532, 0
        %v7535 = vxor.u32 %v7529, 2147483648
        %v7536 = vsel %vm7534, %v7528, %v7535
        %vm7537 = vcmp.eq.s32.totalorder %v7532, 2
        %v7538 = vxor.u32 %v7528, 2147483648
        %v7539 = vsel %vm7537, %v7538, %v7529
        %v7540 = vsel %vm7533, %v7536, %v7539
        %v7541 = vsel %vm7530, nan, %v7540
        %v7542 = vand.u32 2147483647, %v6082
        %vm7543 = vcmp.le.f32.partialorder %v7542, 0.7853982
        %vm7544 = vcmp.lt.s32.totalorder %v6082, 0
        %v7545 = vand.u32 %v6082, 2139095040
        %v7546 = vshrl.u32 %v7545, 23
        %v7547 = vsub.s32 %v7546, 127
        %v7548 = vand.u32 2147483647, %v6082
        %v7549 = vand.u32 %v7548, 8388607
        %v7550 = vor.u32 %v7549, 8388608
        %v7551 = vsub.s32 0, %v7550
        %v7552 = vadd.s32 %v7547, 1
        %vm7553 = vcmp.gt.s32.totalorder %v7552, 0
        %v7554 = vsel %vm7553, %v7552, 0
        %v7555 = vshrl.u32 %v7554, 5
        %v7556 = vand.u32 %v7554, 31
        %v7557 = vsub.s32 32, %v7556
        %v7558 = vshrl.u32 683565275, %v7557
        %v7559 = vshll.u32 683565275, %v7556
        %v7560 = vshrl.u32 2475754826, %v7557
        %v7561 = vor.u32 %v7559, %v7560
        %v7562 = vshll.u32 2475754826, %v7556
        %v7563 = vshrl.u32 2131351028, %v7557
        %v7564 = vor.u32 %v7562, %v7563
        %v7565 = vshll.u32 2131351028, %v7556
        %v7566 = vshrl.u32 2102212464, %v7557
        %v7567 = vor.u32 %v7565, %v7566
        %v7568 = vshll.u32 2102212464, %v7556
        %v7569 = vshrl.u32 920167782, %v7557
        %v7570 = vor.u32 %v7568, %v7569
        %v7571 = vshll.u32 920167782, %v7556
        %v7572 = vshrl.u32 1326507024, %v7557
        %v7573 = vor.u32 %v7571, %v7572
        %vm7574 = vcmp.lt.s32.totalorder %v7555, 1
        %vm7575 = vcmp.lt.s32.totalorder %v7555, 2
        %vm7576 = vcmp.lt.s32.totalorder %v7555, 3
        %vm7577 = vcmp.lt.s32.totalorder %v7555, 4
        %v7578 = vsel %vm7574, %v7558, %v7561
        %v7579 = vsel %vm7577, %v7567, 2102212464
        %v7580 = vsel %vm7576, %v7564, %v7579
        %v7581 = vsel %vm7575, %v7578, %v7580
        %v7582 = vsel %vm7574, %v7561, %v7564
        %v7583 = vsel %vm7577, %v7570, 920167782
        %v7584 = vsel %vm7576, %v7567, %v7583
        %v7585 = vsel %vm7575, %v7582, %v7584
        %v7586 = vsel %vm7574, %v7564, %v7567
        %v7587 = vsel %vm7577, %v7573, 1326507024
        %v7588 = vsel %vm7576, %v7570, %v7587
        %v7589 = vsel %vm7575, %v7586, %v7588
        %v7590 = vshll.u32 %v7550, 8
        %v7591 = vmul.u32.u64.compose %v7590, %v7589
        %v7592 = vextract.low.u32 %v7591
        %v7593 = vextract.high.u32 %v7591
        %v7594 = vmul.u32.u64.compose %v7590, %v7585
        %v7595 = vextract.low.u32 %v7594
        %v7596 = vextract.high.u32 %v7594
        %v7597 = vmul.u32 %v7590, %v7581
        %v7598 = vadd.s32 %v7593, %v7595
        %vm7599 = vc.u32 %v7593, %v7595
        %v7600 = vadd.s32 %v7596, 1
        %v7601 = vsel %vm7599, %v7600, %v7596
        %v7602 = vadd.s32 %v7597, %v7601
        %v7603 = vadd.s32 %v7602, 536870912
        %v7604 = vshrl.u32 %v7603, 30
        %v7605 = vshll.u32 %v7604, 30
        %v7606 = vsub.s32 %v7602, %v7605
        %vm7607 = vcmp.lt.s32.totalorder %v7606, 0
        %v7608 = vsub.s32 0, %v7606
        %v7609 = vsel %vm7607, %v7608, %v7606
        %v7610 = vclz %v7609
        %v7611 = vsub.s32 %v7610, 2
        %vm7612 = vcmp.gt.s32.totalorder 0, %v7611
        %v7613 = vsel %vm7612, 0, %v7611
        %v7614 = vsub.s32 32, %v7613
        %v7615 = vshll.u32 %v7606, %v7613
        %v7616 = vshrl.u32 %v7598, %v7614
        %v7617 = vor.u32 %v7615, %v7616
        %v7618 = vsub.s32 4294967266, %v7613
        %v7619 = vadd.s32 %v7618, 127
        %v7620 = vshll.u32 %v7619, 23
        %v7621 = vor.u32 4788187, %v7620
        %v7622 = vand.u32 2147483647, %v7621
        %v7624 = vcvt.s32.f32 %v7617
        %v7625 = vmul.f32 %v7624, %v7622
        %v7626 = vxor.u32 %v7625, 2147483648
        %v7627 = vsel %vm7544, %v7626, %v7625
        %v7628 = vsub.s32 4, %v7604
        %v7629 = vsel %vm7544, %v7628, %v7604
        %v7630 = vsel %vm7543, %v6082, %v7627
        %v7631 = vsel %vm7543, 0, %v7629
        %v7632 = vcosq.f32.pop %v7630
        %v7633 = vsinq.f32.pop %v7630
        %vm7634 = vweird.f32 %v6082
        %v7635 = vadd.s32 %v7631, 3
        %v7636 = vand.u32 %v7635, 3
        %vm7637 = vcmp.lt.s32.totalorder %v7636, 2
        %vm7638 = vcmp.eq.s32.totalorder %v7636, 0
        %v7639 = vxor.u32 %v7633, 2147483648
        %v7640 = vsel %vm7638, %v7632, %v7639
        %vm7641 = vcmp.eq.s32.totalorder %v7636, 2
        %v7642 = vxor.u32 %v7632, 2147483648
        %v7643 = vsel %vm7641, %v7642, %v7633
        %v7644 = vsel %vm7637, %v7640, %v7643
        %v7645 = vsel %vm7634, nan, %v7644
        %v7646 = vand.u32 2147483647, %v6084
        %vm7647 = vcmp.le.f32.partialorder %v7646, 0.7853982
        %vm7648 = vcmp.lt.s32.totalorder %v6084, 0
        %v7649 = vand.u32 %v6084, 2139095040
        %v7650 = vshrl.u32 %v7649, 23
        %v7651 = vsub.s32 %v7650, 127
        %v7652 = vand.u32 2147483647, %v6084
        %v7653 = vand.u32 %v7652, 8388607
        %v7654 = vor.u32 %v7653, 8388608
        %v7655 = vsub.s32 0, %v7654
        %v7656 = vadd.s32 %v7651, 1
        %vm7657 = vcmp.gt.s32.totalorder %v7656, 0
        %v7658 = vsel %vm7657, %v7656, 0
        %v7659 = vshrl.u32 %v7658, 5
        %v7660 = vand.u32 %v7658, 31
        %v7661 = vsub.s32 32, %v7660
        %v7662 = vshrl.u32 683565275, %v7661
        %v7663 = vshll.u32 683565275, %v7660
        %v7664 = vshrl.u32 2475754826, %v7661
        %v7665 = vor.u32 %v7663, %v7664
        %v7666 = vshll.u32 2475754826, %v7660
        %v7667 = vshrl.u32 2131351028, %v7661
        %v7668 = vor.u32 %v7666, %v7667
        %v7669 = vshll.u32 2131351028, %v7660
        %v7670 = vshrl.u32 2102212464, %v7661
        %v7671 = vor.u32 %v7669, %v7670
        %v7672 = vshll.u32 2102212464, %v7660
        %v7673 = vshrl.u32 920167782, %v7661
        %v7674 = vor.u32 %v7672, %v7673
        %v7675 = vshll.u32 920167782, %v7660
        %v7676 = vshrl.u32 1326507024, %v7661
        %v7677 = vor.u32 %v7675, %v7676
        %vm7678 = vcmp.lt.s32.totalorder %v7659, 1
        %vm7679 = vcmp.lt.s32.totalorder %v7659, 2
        %vm7680 = vcmp.lt.s32.totalorder %v7659, 3
        %vm7681 = vcmp.lt.s32.totalorder %v7659, 4
        %v7682 = vsel %vm7678, %v7662, %v7665
        %v7683 = vsel %vm7681, %v7671, 2102212464
        %v7684 = vsel %vm7680, %v7668, %v7683
        %v7685 = vsel %vm7679, %v7682, %v7684
        %v7686 = vsel %vm7678, %v7665, %v7668
        %v7687 = vsel %vm7681, %v7674, 920167782
        %v7688 = vsel %vm7680, %v7671, %v7687
        %v7689 = vsel %vm7679, %v7686, %v7688
        %v7690 = vsel %vm7678, %v7668, %v7671
        %v7691 = vsel %vm7681, %v7677, 1326507024
        %v7692 = vsel %vm7680, %v7674, %v7691
        %v7693 = vsel %vm7679, %v7690, %v7692
        %v7694 = vshll.u32 %v7654, 8
        %v7695 = vmul.u32.u64.compose %v7694, %v7693
        %v7696 = vextract.low.u32 %v7695
        %v7697 = vextract.high.u32 %v7695
        %v7698 = vmul.u32.u64.compose %v7694, %v7689
        %v7699 = vextract.low.u32 %v7698
        %v7700 = vextract.high.u32 %v7698
        %v7701 = vmul.u32 %v7694, %v7685
        %v7702 = vadd.s32 %v7697, %v7699
        %vm7703 = vc.u32 %v7697, %v7699
        %v7704 = vadd.s32 %v7700, 1
        %v7705 = vsel %vm7703, %v7704, %v7700
        %v7706 = vadd.s32 %v7701, %v7705
        %v7707 = vadd.s32 %v7706, 536870912
        %v7708 = vshrl.u32 %v7707, 30
        %v7709 = vshll.u32 %v7708, 30
        %v7710 = vsub.s32 %v7706, %v7709
        %vm7711 = vcmp.lt.s32.totalorder %v7710, 0
        %v7712 = vsub.s32 0, %v7710
        %v7713 = vsel %vm7711, %v7712, %v7710
        %v7714 = vclz %v7713
        %v7715 = vsub.s32 %v7714, 2
        %vm7716 = vcmp.gt.s32.totalorder 0, %v7715
        %v7717 = vsel %vm7716, 0, %v7715
        %v7718 = vsub.s32 32, %v7717
        %v7719 = vshll.u32 %v7710, %v7717
        %v7720 = vshrl.u32 %v7702, %v7718
        %v7721 = vor.u32 %v7719, %v7720
        %v7722 = vsub.s32 4294967266, %v7717
        %v7723 = vadd.s32 %v7722, 127
        %v7724 = vshll.u32 %v7723, 23
        %v7725 = vor.u32 4788187, %v7724
        %v7726 = vand.u32 2147483647, %v7725
        %v7728 = vcvt.s32.f32 %v7721
        %v7729 = vmul.f32 %v7728, %v7726
        %v7730 = vxor.u32 %v7729, 2147483648
        %v7731 = vsel %vm7648, %v7730, %v7729
        %v7732 = vsub.s32 4, %v7708
        %v7733 = vsel %vm7648, %v7732, %v7708
        %v7734 = vsel %vm7647, %v6084, %v7731
        %v7735 = vsel %vm7647, 0, %v7733
        %v7736 = vcosq.f32.pop %v7734
        %v7737 = vsinq.f32.pop %v7734
        %vm7738 = vweird.f32 %v6084
        %v7739 = vadd.s32 %v7735, 3
        %v7740 = vand.u32 %v7739, 3
        %vm7741 = vcmp.lt.s32.totalorder %v7740, 2
        %vm7742 = vcmp.eq.s32.totalorder %v7740, 0
        %v7743 = vxor.u32 %v7737, 2147483648
        %v7744 = vsel %vm7742, %v7736, %v7743
        %vm7745 = vcmp.eq.s32.totalorder %v7740, 2
        %v7746 = vxor.u32 %v7736, 2147483648
        %v7747 = vsel %vm7745, %v7746, %v7737
        %v7748 = vsel %vm7741, %v7744, %v7747
        %v7749 = vsel %vm7738, nan, %v7748
        %v7750 = vadd.f32 %v6189, %v3966
        %v7751 = vadd.f32 %v6293, %v3967
        %v7752 = vadd.f32 %v6397, %v3968
        %v7753 = vadd.f32 %v6501, %v3969
        %v7754 = vadd.f32 %v6605, %v3970
        %v7755 = vadd.f32 %v6709, %v3971
        %v7756 = vadd.f32 %v6813, %v3972
        %v7757 = vadd.f32 %v6917, %v3973
        %v7758 = vadd.f32 %v7021, %v3974
        %v7759 = vadd.f32 %v7125, %v3975
        %v7760 = vadd.f32 %v7229, %v3976
        %v7761 = vadd.f32 %v7333, %v3977
        %v7762 = vadd.f32 %v7437, %v3978
        %v7763 = vadd.f32 %v7541, %v3979
        %v7764 = vadd.f32 %v7645, %v3980
        %v7765 = vadd.f32 %v7749, %v3981
        %s7766 = scalar_lea.vmem %s1, 128
        %v7767 = vld [vmem:[%s7766] sm:$0xff]
        %s7768 = scalar_lea.vmem %s2, 128
        %v7769 = vld [vmem:[%s7768] sm:$0xff]
        %7771 = vset.pattern.permute.xlu0 0
        %7772 = vperm.xlu0 %7771, %v7769
        %v7773 = vpop.permute.xlu0 %7772
        %v7776 = vsel %vm2085, %v7767, 0
        %7778 = vmatprep.subr.mxu0 %v7751
        %7779 = vmatpush1.msra.mxu0 %v7750
        %7780 = vmatprep.subr.mxu0 %v7755
        %7781 = vmatpush1.msra.mxu0 %v7754
        %7782 = vmatprep.subr.mxu0 %v7759
        %7783 = vmatpush1.msra.mxu0 %v7758
        %7784 = vmatprep.subr.mxu0 %v7763
        %7785 = vmatpush1.msra.mxu0 %v7762
        %7786 = vmatprep.subr.mxu0 0.0
        %7787 = vmatpush1.msra.mxu0 0.0
        %7788 = vmatprep.subr.mxu0 0.0
        %7789 = vmatpush1.msra.mxu0 0.0
        %7790 = vmatprep.subr.mxu0 0.0
        %7791 = vmatpush1.msra.mxu0 0.0
        %7792 = vmatprep.subr.mxu0 0.0
        %7793 = vmatpush1.msra.mxu0 0.0
        %7794 = vmatprep.subr.mxu0 0.0
        %7795 = vmatpush1.msra.mxu0 0.0
        %7796 = vmatprep.subr.mxu0 0.0
        %7797 = vmatpush1.msra.mxu0 0.0
        %7798 = vmatprep.subr.mxu0 0.0
        %7799 = vmatpush1.msra.mxu0 0.0
        %7800 = vmatprep.subr.mxu0 0.0
        %7801 = vmatpush1.msra.mxu0 0.0
        %7802 = vmatprep.subr.mxu0 0.0
        %7803 = vmatpush1.msra.mxu0 0.0
        %7804 = vmatprep.subr.mxu0 0.0
        %7805 = vmatpush1.msra.mxu0 0.0
        %7806 = vmatprep.subr.mxu0 0.0
        %7807 = vmatpush1.msra.mxu0 0.0
        %7808 = vmatprep.subr.mxu0 0.0
        %7809 = vmatpush1.msra.mxu0 0.0
        %7810 = vmatprep.subr.mxu0 0.0
        %7811 = vmatpush1.msra.mxu0 0.0
        %7812 = vmatprep.subr.mxu0 0.0
        %7813 = vmatpush1.msra.mxu0 0.0
        %7814 = vmatprep.subr.mxu0 0.0
        %7815 = vmatpush1.msra.mxu0 0.0
        %7816 = vmatprep.subr.mxu0 0.0
        %7817 = vmatpush1.msra.mxu0 0.0
        %7818 = vmatprep.subr.mxu0 0.0
        %7819 = vmatpush1.msra.mxu0 0.0
        %7820 = vmatprep.subr.mxu0 0.0
        %7821 = vmatpush1.msra.mxu0 0.0
        %7822 = vmatprep.subr.mxu0 0.0
        %7823 = vmatpush1.msra.mxu0 0.0
        %7824 = vmatprep.subr.mxu0 0.0
        %7825 = vmatpush1.msra.mxu0 0.0
        %7826 = vmatprep.subr.mxu0 0.0
        %7827 = vmatpush1.msra.mxu0 0.0
        %7828 = vmatprep.subr.mxu0 0.0
        %7829 = vmatpush1.msra.mxu0 0.0
        %7830 = vmatprep.subr.mxu0 0.0
        %7831 = vmatpush1.msra.mxu0 0.0
        %7832 = vmatprep.subr.mxu0 0.0
        %7833 = vmatpush1.msra.mxu0 0.0
        %7834 = vmatprep.subr.mxu0 0.0
        %7835 = vmatpush1.msra.mxu0 0.0
        %7836 = vmatprep.subr.mxu0 0.0
        %7837 = vmatpush1.msra.mxu0 0.0
        %7838 = vmatprep.subr.mxu0 0.0
        %7839 = vmatpush1.msra.mxu0 0.0
        %7840 = vmatprep.subr.mxu0 0.0
        %7841 = vmatpush1.msra.mxu0 0.0
        %7842 = vmatprep.mubr.f32.mxu0 0.0
        %7843 = vmatmul.mubr.f32.gmra.mrb[0].mxu0 %v7776
        %v7844 = vpop.f32.mrb[0].mxu0
        %v7845 = vadd.f32 %v7773, %v7844
        %v7846 = vpop.f32.mrb[0].mxu0
        %v7847 = vadd.f32 %v7773, %v7846
        %7848 = vdwg.mxu0
        %7849 = vmatprep.subr.mxu0 %v7753
        %7850 = vmatpush1.msra.mxu0 %v7752
        %7851 = vmatprep.subr.mxu0 %v7757
        %7852 = vmatpush1.msra.mxu0 %v7756
        %7853 = vmatprep.subr.mxu0 %v7761
        %7854 = vmatpush1.msra.mxu0 %v7760
        %7855 = vmatprep.subr.mxu0 %v7765
        %7856 = vmatpush1.msra.mxu0 %v7764
        %7857 = vmatprep.subr.mxu0 0.0
        %7858 = vmatpush1.msra.mxu0 0.0
        %7859 = vmatprep.subr.mxu0 0.0
        %7860 = vmatpush1.msra.mxu0 0.0
        %7861 = vmatprep.subr.mxu0 0.0
        %7862 = vmatpush1.msra.mxu0 0.0
        %7863 = vmatprep.subr.mxu0 0.0
        %7864 = vmatpush1.msra.mxu0 0.0
        %7865 = vmatprep.subr.mxu0 0.0
        %7866 = vmatpush1.msra.mxu0 0.0
        %7867 = vmatprep.subr.mxu0 0.0
        %7868 = vmatpush1.msra.mxu0 0.0
        %7869 = vmatprep.subr.mxu0 0.0
        %7870 = vmatpush1.msra.mxu0 0.0
        %7871 = vmatprep.subr.mxu0 0.0
        %7872 = vmatpush1.msra.mxu0 0.0
        %7873 = vmatprep.subr.mxu0 0.0
        %7874 = vmatpush1.msra.mxu0 0.0
        %7875 = vmatprep.subr.mxu0 0.0
        %7876 = vmatpush1.msra.mxu0 0.0
        %7877 = vmatprep.subr.mxu0 0.0
        %7878 = vmatpush1.msra.mxu0 0.0
        %7879 = vmatprep.subr.mxu0 0.0
        %7880 = vmatpush1.msra.mxu0 0.0
        %7881 = vmatprep.subr.mxu0 0.0
        %7882 = vmatpush1.msra.mxu0 0.0
        %7883 = vmatprep.subr.mxu0 0.0
        %7884 = vmatpush1.msra.mxu0 0.0
        %7885 = vmatprep.subr.mxu0 0.0
        %7886 = vmatpush1.msra.mxu0 0.0
        %7887 = vmatprep.subr.mxu0 0.0
        %7888 = vmatpush1.msra.mxu0 0.0
        %7889 = vmatprep.subr.mxu0 0.0
        %7890 = vmatpush1.msra.mxu0 0.0
        %7891 = vmatprep.subr.mxu0 0.0
        %7892 = vmatpush1.msra.mxu0 0.0
        %7893 = vmatprep.subr.mxu0 0.0
        %7894 = vmatpush1.msra.mxu0 0.0
        %7895 = vmatprep.subr.mxu0 0.0
        %7896 = vmatpush1.msra.mxu0 0.0
        %7897 = vmatprep.subr.mxu0 0.0
        %7898 = vmatpush1.msra.mxu0 0.0
        %7899 = vmatprep.subr.mxu0 0.0
        %7900 = vmatpush1.msra.mxu0 0.0
        %7901 = vmatprep.subr.mxu0 0.0
        %7902 = vmatpush1.msra.mxu0 0.0
        %7903 = vmatprep.subr.mxu0 0.0
        %7904 = vmatpush1.msra.mxu0 0.0
        %7905 = vmatprep.subr.mxu0 0.0
        %7906 = vmatpush1.msra.mxu0 0.0
        %7907 = vmatprep.subr.mxu0 0.0
        %7908 = vmatpush1.msra.mxu0 0.0
        %7909 = vmatprep.subr.mxu0 0.0
        %7910 = vmatpush1.msra.mxu0 0.0
        %7911 = vmatprep.subr.mxu0 0.0
        %7912 = vmatpush1.msra.mxu0 0.0
        %7913 = vmatprep.mubr.f32.mxu0 0.0
        %7914 = vmatmul.mubr.f32.gmra.mrb[0].mxu0 %v7776
        %v7915 = vpop.f32.mrb[0].mxu0
        %v7916 = vadd.f32 %v7773, %v7915
        %v7917 = vpop.f32.mrb[0].mxu0
        %v7918 = vadd.f32 %v7773, %v7917
        %7919 = vdwg.mxu0
        %v7924 = vcombine.low %v7845, %v7847
        %v7925 = vcombine.low %v7916, %v7918
        %v7927 = vunpack.c.l.s4 1966171168
        %v7928 = vunpack.c.0.s8 %v7927
        %v7929 = vlaneseq
        %v7930 = vshrl.u32 %v7929, 7
        %v7931 = vsub.s32 %v7928, %v7930
        %v7932 = vrot.slane %v7924, %v7931
        %v7934 = vunpack.c.l.s4 1966171168
        %v7935 = vunpack.c.0.s8 %v7934
        %v7936 = vlaneseq
        %v7937 = vshrl.u32 %v7936, 7
        %v7938 = vsub.s32 %v7935, %v7937
        %v7939 = vrot.slane %v7925, %v7938
        %v7940 = vcombine.low %v7932, %v7939
        %v7942 = vunpack.c.l.s4 1966171168
        %v7943 = vunpack.c.0.s8 %v7942
        %v7944 = vlaneseq
        %v7945 = vshrl.u32 %v7944, 7
        %v7946 = vsub.s32 %v7943, %v7945
        %v7947 = vrot.slane %v7940, %v7946
        %v7949 = vlaneseq
        %vm7950 = vcmp.ge.s32.totalorder %v7949, 0
        %vm7951 = vcmp.lt.s32.totalorder %v7949, 512
        %vm7952 = vmand %vm7950, %vm7951
        %7953 = vst.msk [vmem:[%s186] sm:$0xf] %vm7952, %v7947
        %s7954 = sand.u32 %s96, 1
        %s7955 = scalar_lea.sflag [#allocation4], %s7954
        %s7956 = sand.u32 %s96, 1
        %s7957 = smul.addr %s7956, 4
        %s7958 = scalar_lea.vmem [#allocation5], %s7957
        // Predicated region
        $region37: #{tpu_custom_call.1} parent=31 // pred_check
          %p7959 = pneg %p106
        $region38: #{tpu_custom_call.1} parent=31 // pred_check_branch
          %7961 = sbr.rel (%p7959) target = $region40
        $region39: #{tpu_custom_call.1} parent=31 // pred_region
          %s7962 = smul.u32 4, %s20
          %s7964 = ssub.s32 64, 64
          %7965 = vsyncadd %s7955, %s7964
          %s7966 = smul.addr %s7962, 16
          %s7967 = scalar_lea.hbm %s3, %s7966
          %s7969 = sshll.u32 %s7958, 4
          %s7970 = int_to_ptr.vmem [resolvable:$true] %s7969
          %7972 = dma.vmem_to_hbm [thread:$0]  %s7970, 64, %s7967, %s7955
        $region40: #{tpu_custom_call.1} parent=31 // pred_fallthru
          _
      $region32: #{tpu_custom_call.1} parent=5 // pred_fallthru
        _
      %p7973 = scmp.le.s32.totalorder 2, %s15
      // Predicated region
      $region41: #{tpu_custom_call.1} parent=5 // pred_check
        %p7974 = pneg %p7973
      $region42: #{tpu_custom_call.1} parent=5 // pred_check_branch
        %7976 = sbr.rel (%p7974) target = $region44
      $region43: #{tpu_custom_call.1} parent=5 // pred_region
        %s7977 = ssub.s32 %s15, 2
        // Predicated region
        $region45: #{tpu_custom_call.1} parent=43 // pred_check
          %p7978 = pneg %p112
        $region46: #{tpu_custom_call.1} parent=43 // pred_check_branch
          %7980 = sbr.rel (%p7978) target = $region48
        $region47: #{tpu_custom_call.1} parent=43 // pred_region
          %s7981 = sand.u32 %s97, 1
          %s7982 = scalar_lea.sflag [#allocation4], %s7981
          %s7983 = sand.u32 %s97, 1
          %s7984 = smul.addr %s7983, 4
          %s7985 = scalar_lea.vmem [#allocation5], %s7984
          %7986 = dma.done %s7982, 64
        $region48: #{tpu_custom_call.1} parent=43 // pred_fallthru
          _
      $region44: #{tpu_custom_call.1} parent=5 // pred_fallthru
        _
    $region6: #{tpu_custom_call.1} parent=1 // loop_footer
      %s19 = sadd.s32 1, %s15
    $region7: #{tpu_custom_call.1} parent=1 // loop_footer_branch
      %14 = sbr.rel target = $region3
    $region8: #{tpu_custom_call.1} parent=1 // loop_exit
      _
    %7987 = vsyncpa [#allocation3], 1
    %s7988 = scalar_lea.sflag [#allocation3], 1
    %7989 = vsyncpa %s7988, 1
    %7990 = vsyncpa [#allocation4], 1
    %s7991 = scalar_lea.sflag [#allocation4], 1
    %7992 = vsyncpa %s7991, 1

</llo_original>
